<compile_context>
chip_gen: v5e
topology: v5e:2x2
jax: 0.10.0
libtpu: 0.0.40
codegen_flags: <defaults>
</compile_context>

<pallas_src>
import jax
import jax.numpy as jnp
from jax.experimental import pallas as pl
from jax.experimental.pallas import tpu as pltpu


def _round_up(v, m):
    return ((v + m - 1) // m) * m


def _vmem_capacity_bytes():
    try:
        return int(pltpu.get_tpu_info().vmem_capacity_bytes)
    except Exception:
        return 64 << 20  # conservative per-TensorCore fallback (v7x)


def _linear_layer_kernel(x_ref, w_ref, b_ref, o_ref):
    # x_ref: (TILE_B, C*49)   lane-dense NCHW activations (spatial merged into minor dim)
    # w_ref: (C*49, TILE_K)   expanded fc weight (avg-pool 1/49 folded in, class-padded)
    # b_ref: (1, TILE_K)      fc bias (class-padded)
    # o_ref: (TILE_B, TILE_K)
    out = jnp.dot(x_ref[...], w_ref[...], preferred_element_type=jnp.float32)
    o_ref[...] = (out + b_ref[...]).astype(o_ref.dtype)


def prepare_params(w, b, *, hw=49):
    """One-time preprocessing of the fc parameters (hoisted out of the forward).

    w: (num_classes, C); b: (num_classes,).
    Returns (w_exp, b_row) with w_exp[c*hw + s, k] = w[k, c] / hw and the class dim
    zero-padded to a multiple of 128 (lane-dense output stores).
    """
    num_classes, _ = w.shape
    k_pad = _round_up(num_classes, 128)
    w_t = jnp.transpose(w, (1, 0)) * (1.0 / hw)          # (C, K), 1/49 pool scale folded in
    w_exp = jnp.repeat(w_t, hw, axis=0)                  # (C*hw, K), matches reshape(N, C*hw)
    w_exp = jnp.pad(w_exp, ((0, 0), (0, k_pad - num_classes)))
    b_row = jnp.pad(b, (0, k_pad - num_classes)).reshape(1, k_pad)
    return w_exp, b_row


def linear_layer_forward(x_nchw, w_exp, b_row, *, num_classes, tile_b=128):
    """AvgPool2d(7, stride=1) -> flatten -> Linear.  x_nchw: (N, C, 7, 7) float32."""
    n, c, h, wd = x_nchw.shape
    assert h == 7 and wd == 7, "AvgPool2d(7, stride=1) expects 7x7 spatial input"
    hw = h * wd
    cw = c * hw
    k_pad = w_exp.shape[1]
    assert w_exp.shape[0] == cw and k_pad % 128 == 0 and num_classes <= k_pad

    itemsize = 4
    # ---- per-generation tiling from real (layout-padded) VMEM footprints --------------
    vmem_cap = _vmem_capacity_bytes()
    ceiling = (vmem_cap * 7) // 8            # ~56 MiB on v7x, ~112 MiB on v5e/v6e
    cw_lane = _round_up(cw, 128)             # x minor dim as laid out in VMEM (lanes)
    cw_sub = _round_up(cw, 8)                # weight sublane dim as laid out in VMEM

    # classes tile: largest divisor of k_pad in {512, 256, 128} whose double-buffered
    # weight block fits in ~half the budget.
    tk = 128
    for cand in (512, 256, 128):
        if cand <= k_pad and k_pad % cand == 0 and 2 * cw_sub * cand * itemsize <= ceiling // 2:
            tk = cand
            break
    k_tiles = k_pad // tk

    # batch tile: fill the remaining budget, stay a multiple of 8 sublanes, and aim for
    # >= 4 batch tiles when N allows (keeps both v7x cores fed and the pipeline deep).
    fixed = itemsize * 2 * (cw_sub * tk + 8 * tk)      # weight + bias, both pipeline buffers
    per_row = itemsize * 2 * (cw_lane + tk)            # x + out, both pipeline buffers, per row
    tb_budget = max(8, ((ceiling - fixed - (2 << 20)) // per_row) // 8 * 8)
    tb = max(8, (min(tile_b, tb_budget, _round_up(pl.cdiv(n, 4), 8)) // 8) * 8)

    n_pad = _round_up(n, tb)
    footprint = fixed + tb * per_row
    vmem_limit = int(min(max(footprint + (4 << 20), 32 << 20), vmem_cap))

    # ---- activations: free minor-dim merge to the lane-dense (N, C*49) layout ----------
    x_r = x_nchw.reshape(n, cw)
    if n_pad != n:
        x_r = jnp.pad(x_r, ((0, n_pad - n), (0, 0)))

    grid = (n_pad // tb, k_tiles)

    out = pl.pallas_call(
        _linear_layer_kernel,
        out_shape=jax.ShapeDtypeStruct((n_pad, k_pad), jnp.float32),
        grid_spec=pltpu.PrefetchScalarGridSpec(
            num_scalar_prefetch=0,
            grid=grid,
            in_specs=[
                # activation: tiled over batch, constant along the class axis -> fetched
                # once per batch tile and reused for every class tile.
                pl.BlockSpec((tb, cw), lambda i, j: (i, 0)),
                # weight / bias: streamed over the class axis (resident when k_tiles == 1).
                pl.BlockSpec((cw, tk), lambda i, j: (0, j)),
                pl.BlockSpec((1, tk), lambda i, j: (0, j)),
            ],
            out_specs=pl.BlockSpec((tb, tk), lambda i, j: (i, j)),
        ),
        compiler_params=pltpu.CompilerParams(
            dimension_semantics=("parallel", "parallel"),   # megacore sharding on v7x
            vmem_limit_bytes=vmem_limit,
        ),
        cost_estimate=pl.CostEstimate(
            flops=2 * n_pad * cw * k_pad,
            transcendentals=0,
            bytes_accessed=(n_pad * cw + cw * k_pad + k_pad + n_pad * k_pad) * itemsize,
        ),
    )(x_r, w_exp, b_row)

    # strip batch / class padding
    return out[:n, :num_classes]


if __name__ == "__main__":
    # Module config: expansion=1 -> in_features = 512; small num_classes for the demo
    # (the module default is 1000; the class grid axis handles that case too).
    expansion = 1
    in_features = 512 * expansion
    num_classes = 128
    batch = 2

    key = jax.random.PRNGKey(0)
    kx, kw, kb = jax.random.split(key, 3)

    # Input consistent with the forward pass: (N, 512*expansion, 7, 7) NCHW.
    x = jax.random.normal(kx, (batch, in_features, 7, 7), dtype=jnp.float32)

    # Deterministic params (same shapes as torch.nn.Linear(512*expansion, num_classes)).
    bound = 1.0 / (in_features ** 0.5)
    w = jax.random.uniform(kw, (num_classes, in_features),
                           minval=-bound, maxval=bound, dtype=jnp.float32)
    b = jax.random.uniform(kb, (num_classes,),
                           minval=-bound, maxval=bound, dtype=jnp.float32)

    # One-time parameter prep (hoisted out of the forward), jitted forward.
    w_exp, b_row = prepare_params(w, b)
    fwd = jax.jit(linear_layer_forward, static_argnames=("num_classes", "tile_b"))
    out = jax.block_until_ready(fwd(x, w_exp, b_row, num_classes=num_classes))

    # Sanity check vs. pure-JAX reference (avgpool(7) -> flatten -> linear).
    ref = jnp.mean(x, axis=(2, 3)) @ w.T + b
    err = float(jnp.max(jnp.abs(out - ref)))
    assert out.shape == (batch, num_classes)
    assert jnp.allclose(out, ref, atol=1e-3, rtol=1e-3), f"max abs err {err}"

    print("KERNEL_OK")
</pallas_src>

<mosaic_0001>
module attributes {stable_mosaic.version = 11 : i64} {
  func.func @_linear_layer_kernel(%arg0: i32, %arg1: i32, %arg2: memref<8x25088xf32, #tpu.memory_space<vmem>>, %arg3: memref<25088x128xf32, #tpu.memory_space<vmem>>, %arg4: memref<1x128xf32, #tpu.memory_space<vmem>>, %arg5: memref<8x128xf32, #tpu.memory_space<vmem>>) attributes {dimension_semantics = [#tpu.dimension_semantics<parallel>, #tpu.dimension_semantics<parallel>], iteration_bounds = array<i64: 1, 1>, scalar_prefetch = 0 : i64, scratch_operands = 0 : i64, tpu.core_type = #tpu.core_type<tc>, window_params = [{transform_indices = @transform_0, window_bounds = array<i64: 8, 25088>}, {transform_indices = @transform_1, window_bounds = array<i64: 25088, 128>}, {transform_indices = @transform_2, window_bounds = array<i64: 1, 128>}, {transform_indices = @transform_3, window_bounds = array<i64: 8, 128>}]} {
    %c0 = arith.constant 0 : index
    %c0_0 = arith.constant 0 : index
    %0 = vector.load %arg2[%c0, %c0_0] : memref<8x25088xf32, #tpu.memory_space<vmem>>, vector<8x25088xf32>
    %c0_1 = arith.constant 0 : index
    %c0_2 = arith.constant 0 : index
    %1 = vector.load %arg3[%c0_1, %c0_2] : memref<25088x128xf32, #tpu.memory_space<vmem>>, vector<25088x128xf32>
    %cst = arith.constant dense<0.000000e+00> : vector<8x128xf32>
    %2 = tpu.matmul %0, %1, %cst {dimension_numbers = #tpu.dot_dimension_numbers<[1], [0], [0], [1], [0, 0, 1, 1], [], []>} : vector<8x25088xf32>, vector<25088x128xf32>, vector<8x128xf32> -> vector<8x128xf32>
    %c0_3 = arith.constant 0 : index
    %c0_4 = arith.constant 0 : index
    %3 = vector.load %arg4[%c0_3, %c0_4] : memref<1x128xf32, #tpu.memory_space<vmem>>, vector<1x128xf32>
    %4 = vector.broadcast %3 : vector<1x128xf32> to vector<8x128xf32>
    %5 = arith.addf %2, %4 : vector<8x128xf32>
    %c0_5 = arith.constant 0 : index
    %c0_6 = arith.constant 0 : index
    %6 = vector.load %arg5[%c0_5, %c0_6] : memref<8x128xf32, #tpu.memory_space<vmem>>, vector<8x128xf32>
    tpu.vector_store %arg5[%c0_5, %c0_6], %5 {strides = array<i32>} : memref<8x128xf32, #tpu.memory_space<vmem>>, vector<8x128xf32>,
    return
  }
  func.func @transform_0(%arg0: i32, %arg1: i32) -> (i32, i32) {
    %c0_i32 = arith.constant 0 : i32
    %c0_i32_0 = arith.constant 0 : i32
    return %arg0, %c0_i32 : i32, i32
  }
  func.func @transform_1(%arg0: i32, %arg1: i32) -> (i32, i32) {
    %c0_i32 = arith.constant 0 : i32
    %c0_i32_0 = arith.constant 0 : i32
    return %c0_i32, %arg1 : i32, i32
  }
  func.func @transform_2(%arg0: i32, %arg1: i32) -> (i32, i32) {
    %c0_i32 = arith.constant 0 : i32
    %c0_i32_0 = arith.constant 0 : i32
    return %c0_i32, %arg1 : i32, i32
  }
  func.func @transform_3(%arg0: i32, %arg1: i32) -> (i32, i32) {
    %c0_i32 = arith.constant 0 : i32
    return %arg0, %arg1 : i32, i32
  }
}

</mosaic_0001>

<llo_original>
// kernel: linear_layer_forward.1
$region0: #{linear_layer_forward.1}
  #allocation0 [shape = 'u32[]', space=smem, size = 0x4, offset = 0x4, fixed_abs, tag = 'smem constant byte address 0x4 - core index']
  #allocation1 [shape = 'u32[72,128]{1,0:T(1,128)}', space=vmem, size = 0x9000, scoped, tag = 'internal scratch']
  %s0 = inlined_call_operand.vmem [shape: f32[8,25088], index: 0, kind: input, shape index: {}]
  %s1 = inlined_call_operand.hbm [shape: f32[25088,128], index: 1, kind: input, shape index: {}]
  %s2 = inlined_call_operand.hbm [shape: f32[1,128], index: 2, kind: input, shape index: {}]
  %s3 = inlined_call_operand.vmem [shape: f32[8,128], index: 3, kind: output, shape index: {}]
  %s4 = sld [smem:[#allocation0]]
  $region30: #{linear_layer_forward.1} parent=0
    _
  %s6 = ssub.s32 1, %s4
  %s7 = scalar_select 0, %s6, %s4
  $region1: #{linear_layer_forward.1} parent=0
    #allocation2 [shape = 'u8[12845056]{0}', space=vmem, size = 0xc40000, scoped, tag = 'input window, operand 1, single buffered']
    #allocation3 [shape = 's32[1]{0}', space=sflag, size = 0x4, scoped, tag = 'scoped memory for linear_layer_forward.1']
    #allocation4 [shape = 'u8[512]{0}', space=vmem, size = 0x400, scoped, tag = 'input window, operand 2, single buffered']
    #allocation5 [shape = 's32[1]{0}', space=sflag, size = 0x4, scoped, tag = 'scoped memory for linear_layer_forward.1']
    %8 = vsyncpa [#allocation3], 0
    %9 = vsyncpa [#allocation5], 0
    // Predicated region
    $region2: #{linear_layer_forward.1} parent=1 // pred_check
      _
    $region3: #{linear_layer_forward.1} parent=1 // pred_check_branch
      %11 = sbr.rel (0) target = $region5
    $region4: #{linear_layer_forward.1} parent=1 // pred_region
      _
    $region5: #{linear_layer_forward.1} parent=1 // pred_fallthru
      _
    // Predicated region
    $region6: #{linear_layer_forward.1} parent=1 // pred_check
      _
    $region7: #{linear_layer_forward.1} parent=1 // pred_check_branch
      %13 = sbr.rel (0) target = $region9
    $region8: #{linear_layer_forward.1} parent=1 // pred_region
      %15 = vsyncadd [#allocation3], 0
      %s16 = sshll.u32 %s1, 4
      %s17 = int_to_ptr.hbm [resolvable:$true] %s16
      %s18 = sshll.u32 [#allocation2], 4
      %s19 = int_to_ptr.vmem [resolvable:$true] %s18
      %24 = dma.hbm_to_vmem [thread:$0]  %s17, 401408, %s19, [#allocation3], 128, 128, 8
    $region9: #{linear_layer_forward.1} parent=1 // pred_fallthru
      _
    // Predicated region
    $region10: #{linear_layer_forward.1} parent=1 // pred_check
      _
    $region11: #{linear_layer_forward.1} parent=1 // pred_check_branch
      %26 = sbr.rel (0) target = $region13
    $region12: #{linear_layer_forward.1} parent=1 // pred_region
      %28 = vsyncadd [#allocation5], 0
      %s30 = sshll.u32 %s2, 4
      %s31 = int_to_ptr.hbm [resolvable:$true] %s30
      %s32 = sshll.u32 [#allocation4], 4
      %s33 = int_to_ptr.vmem [resolvable:$true] %s32
      %35 = dma.hbm_to_vmem [thread:$0]  %s31, 16, %s33, [#allocation5]
    $region13: #{linear_layer_forward.1} parent=1 // pred_fallthru
      _
    // Predicated region
    $region14: #{linear_layer_forward.1} parent=1 // pred_check
      _
    $region15: #{linear_layer_forward.1} parent=1 // pred_check_branch
      %37 = sbr.rel (0) target = $region17
    $region16: #{linear_layer_forward.1} parent=1 // pred_region
      %39 = dma.done [#allocation3], 401408
    $region17: #{linear_layer_forward.1} parent=1 // pred_fallthru
      _
    // Predicated region
    $region18: #{linear_layer_forward.1} parent=1 // pred_check
      _
    $region19: #{linear_layer_forward.1} parent=1 // pred_check_branch
      %41 = sbr.rel (0) target = $region21
    $region20: #{linear_layer_forward.1} parent=1 // pred_region
      %43 = dma.done [#allocation5], 16
    $region21: #{linear_layer_forward.1} parent=1 // pred_fallthru
      _
    %v44 = vld [vmem:[%s0] sm:$0xff]
    %v45 = vld [vmem:[%s0 + $0x8] sm:$0xff]
    %v46 = vld [vmem:[%s0 + $0x10] sm:$0xff]
    %v47 = vld [vmem:[%s0 + $0x18] sm:$0xff]
    %v48 = vld [vmem:[%s0 + $0x20] sm:$0xff]
    %v49 = vld [vmem:[%s0 + $0x28] sm:$0xff]
    %v50 = vld [vmem:[%s0 + $0x30] sm:$0xff]
    %v51 = vld [vmem:[%s0 + $0x38] sm:$0xff]
    %v52 = vld [vmem:[%s0 + $0x40] sm:$0xff]
    %v53 = vld [vmem:[%s0 + $0x48] sm:$0xff]
    %v54 = vld [vmem:[%s0 + $0x50] sm:$0xff]
    %v55 = vld [vmem:[%s0 + $0x58] sm:$0xff]
    %v56 = vld [vmem:[%s0 + $0x60] sm:$0xff]
    %v57 = vld [vmem:[%s0 + $0x68] sm:$0xff]
    %v58 = vld [vmem:[%s0 + $0x70] sm:$0xff]
    %v59 = vld [vmem:[%s0 + $0x78] sm:$0xff]
    %v60 = vld [vmem:[%s0 + $0x80] sm:$0xff]
    %v61 = vld [vmem:[%s0 + $0x88] sm:$0xff]
    %v62 = vld [vmem:[%s0 + $0x90] sm:$0xff]
    %v63 = vld [vmem:[%s0 + $0x98] sm:$0xff]
    %v64 = vld [vmem:[%s0 + $0xa0] sm:$0xff]
    %v65 = vld [vmem:[%s0 + $0xa8] sm:$0xff]
    %v66 = vld [vmem:[%s0 + $0xb0] sm:$0xff]
    %v67 = vld [vmem:[%s0 + $0xb8] sm:$0xff]
    %v68 = vld [vmem:[%s0 + $0xc0] sm:$0xff]
    %v69 = vld [vmem:[%s0 + $0xc8] sm:$0xff]
    %v70 = vld [vmem:[%s0 + $0xd0] sm:$0xff]
    %v71 = vld [vmem:[%s0 + $0xd8] sm:$0xff]
    %v72 = vld [vmem:[%s0 + $0xe0] sm:$0xff]
    %v73 = vld [vmem:[%s0 + $0xe8] sm:$0xff]
    %v74 = vld [vmem:[%s0 + $0xf0] sm:$0xff]
    %v75 = vld [vmem:[%s0 + $0xf8] sm:$0xff]
    %v76 = vld [vmem:[%s0 + $0x100] sm:$0xff]
    %v77 = vld [vmem:[%s0 + $0x108] sm:$0xff]
    %v78 = vld [vmem:[%s0 + $0x110] sm:$0xff]
    %v79 = vld [vmem:[%s0 + $0x118] sm:$0xff]
    %v80 = vld [vmem:[%s0 + $0x120] sm:$0xff]
    %v81 = vld [vmem:[%s0 + $0x128] sm:$0xff]
    %v82 = vld [vmem:[%s0 + $0x130] sm:$0xff]
    %v83 = vld [vmem:[%s0 + $0x138] sm:$0xff]
    %v84 = vld [vmem:[%s0 + $0x140] sm:$0xff]
    %v85 = vld [vmem:[%s0 + $0x148] sm:$0xff]
    %v86 = vld [vmem:[%s0 + $0x150] sm:$0xff]
    %v87 = vld [vmem:[%s0 + $0x158] sm:$0xff]
    %v88 = vld [vmem:[%s0 + $0x160] sm:$0xff]
    %v89 = vld [vmem:[%s0 + $0x168] sm:$0xff]
    %v90 = vld [vmem:[%s0 + $0x170] sm:$0xff]
    %v91 = vld [vmem:[%s0 + $0x178] sm:$0xff]
    %v92 = vld [vmem:[%s0 + $0x180] sm:$0xff]
    %v93 = vld [vmem:[%s0 + $0x188] sm:$0xff]
    %v94 = vld [vmem:[%s0 + $0x190] sm:$0xff]
    %v95 = vld [vmem:[%s0 + $0x198] sm:$0xff]
    %v96 = vld [vmem:[%s0 + $0x1a0] sm:$0xff]
    %v97 = vld [vmem:[%s0 + $0x1a8] sm:$0xff]
    %v98 = vld [vmem:[%s0 + $0x1b0] sm:$0xff]
    %v99 = vld [vmem:[%s0 + $0x1b8] sm:$0xff]
    %v100 = vld [vmem:[%s0 + $0x1c0] sm:$0xff]
    %v101 = vld [vmem:[%s0 + $0x1c8] sm:$0xff]
    %v102 = vld [vmem:[%s0 + $0x1d0] sm:$0xff]
    %v103 = vld [vmem:[%s0 + $0x1d8] sm:$0xff]
    %v104 = vld [vmem:[%s0 + $0x1e0] sm:$0xff]
    %v105 = vld [vmem:[%s0 + $0x1e8] sm:$0xff]
    %v106 = vld [vmem:[%s0 + $0x1f0] sm:$0xff]
    %v107 = vld [vmem:[%s0 + $0x1f8] sm:$0xff]
    %v108 = vld [vmem:[%s0 + $0x200] sm:$0xff]
    %v109 = vld [vmem:[%s0 + $0x208] sm:$0xff]
    %v110 = vld [vmem:[%s0 + $0x210] sm:$0xff]
    %v111 = vld [vmem:[%s0 + $0x218] sm:$0xff]
    %v112 = vld [vmem:[%s0 + $0x220] sm:$0xff]
    %v113 = vld [vmem:[%s0 + $0x228] sm:$0xff]
    %v114 = vld [vmem:[%s0 + $0x230] sm:$0xff]
    %v115 = vld [vmem:[%s0 + $0x238] sm:$0xff]
    %v116 = vld [vmem:[%s0 + $0x240] sm:$0xff]
    %v117 = vld [vmem:[%s0 + $0x248] sm:$0xff]
    %v118 = vld [vmem:[%s0 + $0x250] sm:$0xff]
    %v119 = vld [vmem:[%s0 + $0x258] sm:$0xff]
    %v120 = vld [vmem:[%s0 + $0x260] sm:$0xff]
    %v121 = vld [vmem:[%s0 + $0x268] sm:$0xff]
    %v122 = vld [vmem:[%s0 + $0x270] sm:$0xff]
    %v123 = vld [vmem:[%s0 + $0x278] sm:$0xff]
    %v124 = vld [vmem:[%s0 + $0x280] sm:$0xff]
    %v125 = vld [vmem:[%s0 + $0x288] sm:$0xff]
    %v126 = vld [vmem:[%s0 + $0x290] sm:$0xff]
    %v127 = vld [vmem:[%s0 + $0x298] sm:$0xff]
    %v128 = vld [vmem:[%s0 + $0x2a0] sm:$0xff]
    %v129 = vld [vmem:[%s0 + $0x2a8] sm:$0xff]
    %v130 = vld [vmem:[%s0 + $0x2b0] sm:$0xff]
    %v131 = vld [vmem:[%s0 + $0x2b8] sm:$0xff]
    %v132 = vld [vmem:[%s0 + $0x2c0] sm:$0xff]
    %v133 = vld [vmem:[%s0 + $0x2c8] sm:$0xff]
    %v134 = vld [vmem:[%s0 + $0x2d0] sm:$0xff]
    %v135 = vld [vmem:[%s0 + $0x2d8] sm:$0xff]
    %v136 = vld [vmem:[%s0 + $0x2e0] sm:$0xff]
    %v137 = vld [vmem:[%s0 + $0x2e8] sm:$0xff]
    %v138 = vld [vmem:[%s0 + $0x2f0] sm:$0xff]
    %v139 = vld [vmem:[%s0 + $0x2f8] sm:$0xff]
    %v140 = vld [vmem:[%s0 + $0x300] sm:$0xff]
    %v141 = vld [vmem:[%s0 + $0x308] sm:$0xff]
    %v142 = vld [vmem:[%s0 + $0x310] sm:$0xff]
    %v143 = vld [vmem:[%s0 + $0x318] sm:$0xff]
    %v144 = vld [vmem:[%s0 + $0x320] sm:$0xff]
    %v145 = vld [vmem:[%s0 + $0x328] sm:$0xff]
    %v146 = vld [vmem:[%s0 + $0x330] sm:$0xff]
    %v147 = vld [vmem:[%s0 + $0x338] sm:$0xff]
    %v148 = vld [vmem:[%s0 + $0x340] sm:$0xff]
    %v149 = vld [vmem:[%s0 + $0x348] sm:$0xff]
    %v150 = vld [vmem:[%s0 + $0x350] sm:$0xff]
    %v151 = vld [vmem:[%s0 + $0x358] sm:$0xff]
    %v152 = vld [vmem:[%s0 + $0x360] sm:$0xff]
    %v153 = vld [vmem:[%s0 + $0x368] sm:$0xff]
    %v154 = vld [vmem:[%s0 + $0x370] sm:$0xff]
    %v155 = vld [vmem:[%s0 + $0x378] sm:$0xff]
    %v156 = vld [vmem:[%s0 + $0x380] sm:$0xff]
    %v157 = vld [vmem:[%s0 + $0x388] sm:$0xff]
    %v158 = vld [vmem:[%s0 + $0x390] sm:$0xff]
    %v159 = vld [vmem:[%s0 + $0x398] sm:$0xff]
    %v160 = vld [vmem:[%s0 + $0x3a0] sm:$0xff]
    %v161 = vld [vmem:[%s0 + $0x3a8] sm:$0xff]
    %v162 = vld [vmem:[%s0 + $0x3b0] sm:$0xff]
    %v163 = vld [vmem:[%s0 + $0x3b8] sm:$0xff]
    %v164 = vld [vmem:[%s0 + $0x3c0] sm:$0xff]
    %v165 = vld [vmem:[%s0 + $0x3c8] sm:$0xff]
    %v166 = vld [vmem:[%s0 + $0x3d0] sm:$0xff]
    %v167 = vld [vmem:[%s0 + $0x3d8] sm:$0xff]
    %v168 = vld [vmem:[%s0 + $0x3e0] sm:$0xff]
    %v169 = vld [vmem:[%s0 + $0x3e8] sm:$0xff]
    %v170 = vld [vmem:[%s0 + $0x3f0] sm:$0xff]
    %v171 = vld [vmem:[%s0 + $0x3f8] sm:$0xff]
    %v172 = vld [vmem:[%s0 + $0x400] sm:$0xff]
    %v173 = vld [vmem:[%s0 + $0x408] sm:$0xff]
    %v174 = vld [vmem:[%s0 + $0x410] sm:$0xff]
    %v175 = vld [vmem:[%s0 + $0x418] sm:$0xff]
    %v176 = vld [vmem:[%s0 + $0x420] sm:$0xff]
    %v177 = vld [vmem:[%s0 + $0x428] sm:$0xff]
    %v178 = vld [vmem:[%s0 + $0x430] sm:$0xff]
    %v179 = vld [vmem:[%s0 + $0x438] sm:$0xff]
    %v180 = vld [vmem:[%s0 + $0x440] sm:$0xff]
    %v181 = vld [vmem:[%s0 + $0x448] sm:$0xff]
    %v182 = vld [vmem:[%s0 + $0x450] sm:$0xff]
    %v183 = vld [vmem:[%s0 + $0x458] sm:$0xff]
    %v184 = vld [vmem:[%s0 + $0x460] sm:$0xff]
    %v185 = vld [vmem:[%s0 + $0x468] sm:$0xff]
    %v186 = vld [vmem:[%s0 + $0x470] sm:$0xff]
    %v187 = vld [vmem:[%s0 + $0x478] sm:$0xff]
    %v188 = vld [vmem:[%s0 + $0x480] sm:$0xff]
    %v189 = vld [vmem:[%s0 + $0x488] sm:$0xff]
    %v190 = vld [vmem:[%s0 + $0x490] sm:$0xff]
    %v191 = vld [vmem:[%s0 + $0x498] sm:$0xff]
    %v192 = vld [vmem:[%s0 + $0x4a0] sm:$0xff]
    %v193 = vld [vmem:[%s0 + $0x4a8] sm:$0xff]
    %v194 = vld [vmem:[%s0 + $0x4b0] sm:$0xff]
    %v195 = vld [vmem:[%s0 + $0x4b8] sm:$0xff]
    %v196 = vld [vmem:[%s0 + $0x4c0] sm:$0xff]
    %v197 = vld [vmem:[%s0 + $0x4c8] sm:$0xff]
    %v198 = vld [vmem:[%s0 + $0x4d0] sm:$0xff]
    %v199 = vld [vmem:[%s0 + $0x4d8] sm:$0xff]
    %v200 = vld [vmem:[%s0 + $0x4e0] sm:$0xff]
    %v201 = vld [vmem:[%s0 + $0x4e8] sm:$0xff]
    %v202 = vld [vmem:[%s0 + $0x4f0] sm:$0xff]
    %v203 = vld [vmem:[%s0 + $0x4f8] sm:$0xff]
    %v204 = vld [vmem:[%s0 + $0x500] sm:$0xff]
    %v205 = vld [vmem:[%s0 + $0x508] sm:$0xff]
    %v206 = vld [vmem:[%s0 + $0x510] sm:$0xff]
    %v207 = vld [vmem:[%s0 + $0x518] sm:$0xff]
    %v208 = vld [vmem:[%s0 + $0x520] sm:$0xff]
    %v209 = vld [vmem:[%s0 + $0x528] sm:$0xff]
    %v210 = vld [vmem:[%s0 + $0x530] sm:$0xff]
    %v211 = vld [vmem:[%s0 + $0x538] sm:$0xff]
    %v212 = vld [vmem:[%s0 + $0x540] sm:$0xff]
    %v213 = vld [vmem:[%s0 + $0x548] sm:$0xff]
    %v214 = vld [vmem:[%s0 + $0x550] sm:$0xff]
    %v215 = vld [vmem:[%s0 + $0x558] sm:$0xff]
    %v216 = vld [vmem:[%s0 + $0x560] sm:$0xff]
    %v217 = vld [vmem:[%s0 + $0x568] sm:$0xff]
    %v218 = vld [vmem:[%s0 + $0x570] sm:$0xff]
    %v219 = vld [vmem:[%s0 + $0x578] sm:$0xff]
    %v220 = vld [vmem:[%s0 + $0x580] sm:$0xff]
    %v221 = vld [vmem:[%s0 + $0x588] sm:$0xff]
    %v222 = vld [vmem:[%s0 + $0x590] sm:$0xff]
    %v223 = vld [vmem:[%s0 + $0x598] sm:$0xff]
    %v224 = vld [vmem:[%s0 + $0x5a0] sm:$0xff]
    %v225 = vld [vmem:[%s0 + $0x5a8] sm:$0xff]
    %v226 = vld [vmem:[%s0 + $0x5b0] sm:$0xff]
    %v227 = vld [vmem:[%s0 + $0x5b8] sm:$0xff]
    %v228 = vld [vmem:[%s0 + $0x5c0] sm:$0xff]
    %v229 = vld [vmem:[%s0 + $0x5c8] sm:$0xff]
    %v230 = vld [vmem:[%s0 + $0x5d0] sm:$0xff]
    %v231 = vld [vmem:[%s0 + $0x5d8] sm:$0xff]
    %v232 = vld [vmem:[%s0 + $0x5e0] sm:$0xff]
    %v233 = vld [vmem:[%s0 + $0x5e8] sm:$0xff]
    %v234 = vld [vmem:[%s0 + $0x5f0] sm:$0xff]
    %v235 = vld [vmem:[%s0 + $0x5f8] sm:$0xff]
    %v236 = vld [vmem:[%s0 + $0x600] sm:$0xff]
    %v237 = vld [vmem:[%s0 + $0x608] sm:$0xff]
    %v238 = vld [vmem:[%s0 + $0x610] sm:$0xff]
    %v239 = vld [vmem:[%s0 + $0x618] sm:$0xff]
    %v240 = vld [vmem:[#allocation2] sm:$0xff]
    %v241 = vld [vmem:[#allocation2 + $0x8] sm:$0xff]
    %v242 = vld [vmem:[#allocation2 + $0x10] sm:$0xff]
    %v243 = vld [vmem:[#allocation2 + $0x18] sm:$0xff]
    %v244 = vld [vmem:[#allocation2 + $0x20] sm:$0xff]
    %v245 = vld [vmem:[#allocation2 + $0x28] sm:$0xff]
    %v246 = vld [vmem:[#allocation2 + $0x30] sm:$0xff]
    %v247 = vld [vmem:[#allocation2 + $0x38] sm:$0xff]
    %v248 = vld [vmem:[#allocation2 + $0x40] sm:$0xff]
    %v249 = vld [vmem:[#allocation2 + $0x48] sm:$0xff]
    %v250 = vld [vmem:[#allocation2 + $0x50] sm:$0xff]
    %v251 = vld [vmem:[#allocation2 + $0x58] sm:$0xff]
    %v252 = vld [vmem:[#allocation2 + $0x60] sm:$0xff]
    %v253 = vld [vmem:[#allocation2 + $0x68] sm:$0xff]
    %v254 = vld [vmem:[#allocation2 + $0x70] sm:$0xff]
    %v255 = vld [vmem:[#allocation2 + $0x78] sm:$0xff]
    %v256 = vld [vmem:[#allocation2 + $0x80] sm:$0xff]
    %v257 = vld [vmem:[#allocation2 + $0x88] sm:$0xff]
    %v258 = vld [vmem:[#allocation2 + $0x90] sm:$0xff]
    %v259 = vld [vmem:[#allocation2 + $0x98] sm:$0xff]
    %v260 = vld [vmem:[#allocation2 + $0xa0] sm:$0xff]
    %v261 = vld [vmem:[#allocation2 + $0xa8] sm:$0xff]
    %v262 = vld [vmem:[#allocation2 + $0xb0] sm:$0xff]
    %v263 = vld [vmem:[#allocation2 + $0xb8] sm:$0xff]
    %v264 = vld [vmem:[#allocation2 + $0xc0] sm:$0xff]
    %v265 = vld [vmem:[#allocation2 + $0xc8] sm:$0xff]
    %v266 = vld [vmem:[#allocation2 + $0xd0] sm:$0xff]
    %v267 = vld [vmem:[#allocation2 + $0xd8] sm:$0xff]
    %v268 = vld [vmem:[#allocation2 + $0xe0] sm:$0xff]
    %v269 = vld [vmem:[#allocation2 + $0xe8] sm:$0xff]
    %v270 = vld [vmem:[#allocation2 + $0xf0] sm:$0xff]
    %v271 = vld [vmem:[#allocation2 + $0xf8] sm:$0xff]
    %v272 = vld [vmem:[#allocation2 + $0x100] sm:$0xff]
    %v273 = vld [vmem:[#allocation2 + $0x108] sm:$0xff]
    %v274 = vld [vmem:[#allocation2 + $0x110] sm:$0xff]
    %v275 = vld [vmem:[#allocation2 + $0x118] sm:$0xff]
    %v276 = vld [vmem:[#allocation2 + $0x120] sm:$0xff]
    %v277 = vld [vmem:[#allocation2 + $0x128] sm:$0xff]
    %v278 = vld [vmem:[#allocation2 + $0x130] sm:$0xff]
    %v279 = vld [vmem:[#allocation2 + $0x138] sm:$0xff]
    %v280 = vld [vmem:[#allocation2 + $0x140] sm:$0xff]
    %v281 = vld [vmem:[#allocation2 + $0x148] sm:$0xff]
    %v282 = vld [vmem:[#allocation2 + $0x150] sm:$0xff]
    %v283 = vld [vmem:[#allocation2 + $0x158] sm:$0xff]
    %v284 = vld [vmem:[#allocation2 + $0x160] sm:$0xff]
    %v285 = vld [vmem:[#allocation2 + $0x168] sm:$0xff]
    %v286 = vld [vmem:[#allocation2 + $0x170] sm:$0xff]
    %v287 = vld [vmem:[#allocation2 + $0x178] sm:$0xff]
    %v288 = vld [vmem:[#allocation2 + $0x180] sm:$0xff]
    %v289 = vld [vmem:[#allocation2 + $0x188] sm:$0xff]
    %v290 = vld [vmem:[#allocation2 + $0x190] sm:$0xff]
    %v291 = vld [vmem:[#allocation2 + $0x198] sm:$0xff]
    %v292 = vld [vmem:[#allocation2 + $0x1a0] sm:$0xff]
    %v293 = vld [vmem:[#allocation2 + $0x1a8] sm:$0xff]
    %v294 = vld [vmem:[#allocation2 + $0x1b0] sm:$0xff]
    %v295 = vld [vmem:[#allocation2 + $0x1b8] sm:$0xff]
    %v296 = vld [vmem:[#allocation2 + $0x1c0] sm:$0xff]
    %v297 = vld [vmem:[#allocation2 + $0x1c8] sm:$0xff]
    %v298 = vld [vmem:[#allocation2 + $0x1d0] sm:$0xff]
    %v299 = vld [vmem:[#allocation2 + $0x1d8] sm:$0xff]
    %v300 = vld [vmem:[#allocation2 + $0x1e0] sm:$0xff]
    %v301 = vld [vmem:[#allocation2 + $0x1e8] sm:$0xff]
    %v302 = vld [vmem:[#allocation2 + $0x1f0] sm:$0xff]
    %v303 = vld [vmem:[#allocation2 + $0x1f8] sm:$0xff]
    %v304 = vld [vmem:[#allocation2 + $0x200] sm:$0xff]
    %v305 = vld [vmem:[#allocation2 + $0x208] sm:$0xff]
    %v306 = vld [vmem:[#allocation2 + $0x210] sm:$0xff]
    %v307 = vld [vmem:[#allocation2 + $0x218] sm:$0xff]
    %v308 = vld [vmem:[#allocation2 + $0x220] sm:$0xff]
    %v309 = vld [vmem:[#allocation2 + $0x228] sm:$0xff]
    %v310 = vld [vmem:[#allocation2 + $0x230] sm:$0xff]
    %v311 = vld [vmem:[#allocation2 + $0x238] sm:$0xff]
    %v312 = vld [vmem:[#allocation2 + $0x240] sm:$0xff]
    %v313 = vld [vmem:[#allocation2 + $0x248] sm:$0xff]
    %v314 = vld [vmem:[#allocation2 + $0x250] sm:$0xff]
    %v315 = vld [vmem:[#allocation2 + $0x258] sm:$0xff]
    %v316 = vld [vmem:[#allocation2 + $0x260] sm:$0xff]
    %v317 = vld [vmem:[#allocation2 + $0x268] sm:$0xff]
    %v318 = vld [vmem:[#allocation2 + $0x270] sm:$0xff]
    %v319 = vld [vmem:[#allocation2 + $0x278] sm:$0xff]
    %v320 = vld [vmem:[#allocation2 + $0x280] sm:$0xff]
    %v321 = vld [vmem:[#allocation2 + $0x288] sm:$0xff]
    %v322 = vld [vmem:[#allocation2 + $0x290] sm:$0xff]
    %v323 = vld [vmem:[#allocation2 + $0x298] sm:$0xff]
    %v324 = vld [vmem:[#allocation2 + $0x2a0] sm:$0xff]
    %v325 = vld [vmem:[#allocation2 + $0x2a8] sm:$0xff]
    %v326 = vld [vmem:[#allocation2 + $0x2b0] sm:$0xff]
    %v327 = vld [vmem:[#allocation2 + $0x2b8] sm:$0xff]
    %v328 = vld [vmem:[#allocation2 + $0x2c0] sm:$0xff]
    %v329 = vld [vmem:[#allocation2 + $0x2c8] sm:$0xff]
    %v330 = vld [vmem:[#allocation2 + $0x2d0] sm:$0xff]
    %v331 = vld [vmem:[#allocation2 + $0x2d8] sm:$0xff]
    %v332 = vld [vmem:[#allocation2 + $0x2e0] sm:$0xff]
    %v333 = vld [vmem:[#allocation2 + $0x2e8] sm:$0xff]
    %v334 = vld [vmem:[#allocation2 + $0x2f0] sm:$0xff]
    %v335 = vld [vmem:[#allocation2 + $0x2f8] sm:$0xff]
    %v336 = vld [vmem:[#allocation2 + $0x300] sm:$0xff]
    %v337 = vld [vmem:[#allocation2 + $0x308] sm:$0xff]
    %v338 = vld [vmem:[#allocation2 + $0x310] sm:$0xff]
    %v339 = vld [vmem:[#allocation2 + $0x318] sm:$0xff]
    %v340 = vld [vmem:[#allocation2 + $0x320] sm:$0xff]
    %v341 = vld [vmem:[#allocation2 + $0x328] sm:$0xff]
    %v342 = vld [vmem:[#allocation2 + $0x330] sm:$0xff]
    %v343 = vld [vmem:[#allocation2 + $0x338] sm:$0xff]
    %v344 = vld [vmem:[#allocation2 + $0x340] sm:$0xff]
    %v345 = vld [vmem:[#allocation2 + $0x348] sm:$0xff]
    %v346 = vld [vmem:[#allocation2 + $0x350] sm:$0xff]
    %v347 = vld [vmem:[#allocation2 + $0x358] sm:$0xff]
    %v348 = vld [vmem:[#allocation2 + $0x360] sm:$0xff]
    %v349 = vld [vmem:[#allocation2 + $0x368] sm:$0xff]
    %v350 = vld [vmem:[#allocation2 + $0x370] sm:$0xff]
    %v351 = vld [vmem:[#allocation2 + $0x378] sm:$0xff]
    %v352 = vld [vmem:[#allocation2 + $0x380] sm:$0xff]
    %v353 = vld [vmem:[#allocation2 + $0x388] sm:$0xff]
    %v354 = vld [vmem:[#allocation2 + $0x390] sm:$0xff]
    %v355 = vld [vmem:[#allocation2 + $0x398] sm:$0xff]
    %v356 = vld [vmem:[#allocation2 + $0x3a0] sm:$0xff]
    %v357 = vld [vmem:[#allocation2 + $0x3a8] sm:$0xff]
    %v358 = vld [vmem:[#allocation2 + $0x3b0] sm:$0xff]
    %v359 = vld [vmem:[#allocation2 + $0x3b8] sm:$0xff]
    %v360 = vld [vmem:[#allocation2 + $0x3c0] sm:$0xff]
    %v361 = vld [vmem:[#allocation2 + $0x3c8] sm:$0xff]
    %v362 = vld [vmem:[#allocation2 + $0x3d0] sm:$0xff]
    %v363 = vld [vmem:[#allocation2 + $0x3d8] sm:$0xff]
    %v364 = vld [vmem:[#allocation2 + $0x3e0] sm:$0xff]
    %v365 = vld [vmem:[#allocation2 + $0x3e8] sm:$0xff]
    %v366 = vld [vmem:[#allocation2 + $0x3f0] sm:$0xff]
    %v367 = vld [vmem:[#allocation2 + $0x3f8] sm:$0xff]
    %v368 = vld [vmem:[#allocation2 + $0x400] sm:$0xff]
    %v369 = vld [vmem:[#allocation2 + $0x408] sm:$0xff]
    %v370 = vld [vmem:[#allocation2 + $0x410] sm:$0xff]
    %v371 = vld [vmem:[#allocation2 + $0x418] sm:$0xff]
    %v372 = vld [vmem:[#allocation2 + $0x420] sm:$0xff]
    %v373 = vld [vmem:[#allocation2 + $0x428] sm:$0xff]
    %v374 = vld [vmem:[#allocation2 + $0x430] sm:$0xff]
    %v375 = vld [vmem:[#allocation2 + $0x438] sm:$0xff]
    %v376 = vld [vmem:[#allocation2 + $0x440] sm:$0xff]
    %v377 = vld [vmem:[#allocation2 + $0x448] sm:$0xff]
    %v378 = vld [vmem:[#allocation2 + $0x450] sm:$0xff]
    %v379 = vld [vmem:[#allocation2 + $0x458] sm:$0xff]
    %v380 = vld [vmem:[#allocation2 + $0x460] sm:$0xff]
    %v381 = vld [vmem:[#allocation2 + $0x468] sm:$0xff]
    %v382 = vld [vmem:[#allocation2 + $0x470] sm:$0xff]
    %v383 = vld [vmem:[#allocation2 + $0x478] sm:$0xff]
    %v384 = vld [vmem:[#allocation2 + $0x480] sm:$0xff]
    %v385 = vld [vmem:[#allocation2 + $0x488] sm:$0xff]
    %v386 = vld [vmem:[#allocation2 + $0x490] sm:$0xff]
    %v387 = vld [vmem:[#allocation2 + $0x498] sm:$0xff]
    %v388 = vld [vmem:[#allocation2 + $0x4a0] sm:$0xff]
    %v389 = vld [vmem:[#allocation2 + $0x4a8] sm:$0xff]
    %v390 = vld [vmem:[#allocation2 + $0x4b0] sm:$0xff]
    %v391 = vld [vmem:[#allocation2 + $0x4b8] sm:$0xff]
    %v392 = vld [vmem:[#allocation2 + $0x4c0] sm:$0xff]
    %v393 = vld [vmem:[#allocation2 + $0x4c8] sm:$0xff]
    %v394 = vld [vmem:[#allocation2 + $0x4d0] sm:$0xff]
    %v395 = vld [vmem:[#allocation2 + $0x4d8] sm:$0xff]
    %v396 = vld [vmem:[#allocation2 + $0x4e0] sm:$0xff]
    %v397 = vld [vmem:[#allocation2 + $0x4e8] sm:$0xff]
    %v398 = vld [vmem:[#allocation2 + $0x4f0] sm:$0xff]
    %v399 = vld [vmem:[#allocation2 + $0x4f8] sm:$0xff]
    %v400 = vld [vmem:[#allocation2 + $0x500] sm:$0xff]
    %v401 = vld [vmem:[#allocation2 + $0x508] sm:$0xff]
    %v402 = vld [vmem:[#allocation2 + $0x510] sm:$0xff]
    %v403 = vld [vmem:[#allocation2 + $0x518] sm:$0xff]
    %v404 = vld [vmem:[#allocation2 + $0x520] sm:$0xff]
    %v405 = vld [vmem:[#allocation2 + $0x528] sm:$0xff]
    %v406 = vld [vmem:[#allocation2 + $0x530] sm:$0xff]
    %v407 = vld [vmem:[#allocation2 + $0x538] sm:$0xff]
    %v408 = vld [vmem:[#allocation2 + $0x540] sm:$0xff]
    %v409 = vld [vmem:[#allocation2 + $0x548] sm:$0xff]
    %v410 = vld [vmem:[#allocation2 + $0x550] sm:$0xff]
    %v411 = vld [vmem:[#allocation2 + $0x558] sm:$0xff]
    %v412 = vld [vmem:[#allocation2 + $0x560] sm:$0xff]
    %v413 = vld [vmem:[#allocation2 + $0x568] sm:$0xff]
    %v414 = vld [vmem:[#allocation2 + $0x570] sm:$0xff]
    %v415 = vld [vmem:[#allocation2 + $0x578] sm:$0xff]
    %v416 = vld [vmem:[#allocation2 + $0x580] sm:$0xff]
    %v417 = vld [vmem:[#allocation2 + $0x588] sm:$0xff]
    %v418 = vld [vmem:[#allocation2 + $0x590] sm:$0xff]
    %v419 = vld [vmem:[#allocation2 + $0x598] sm:$0xff]
    %v420 = vld [vmem:[#allocation2 + $0x5a0] sm:$0xff]
    %v421 = vld [vmem:[#allocation2 + $0x5a8] sm:$0xff]
    %v422 = vld [vmem:[#allocation2 + $0x5b0] sm:$0xff]
    %v423 = vld [vmem:[#allocation2 + $0x5b8] sm:$0xff]
    %v424 = vld [vmem:[#allocation2 + $0x5c0] sm:$0xff]
    %v425 = vld [vmem:[#allocation2 + $0x5c8] sm:$0xff]
    %v426 = vld [vmem:[#allocation2 + $0x5d0] sm:$0xff]
    %v427 = vld [vmem:[#allocation2 + $0x5d8] sm:$0xff]
    %v428 = vld [vmem:[#allocation2 + $0x5e0] sm:$0xff]
    %v429 = vld [vmem:[#allocation2 + $0x5e8] sm:$0xff]
    %v430 = vld [vmem:[#allocation2 + $0x5f0] sm:$0xff]
    %v431 = vld [vmem:[#allocation2 + $0x5f8] sm:$0xff]
    %v432 = vld [vmem:[#allocation2 + $0x600] sm:$0xff]
    %v433 = vld [vmem:[#allocation2 + $0x608] sm:$0xff]
    %v434 = vld [vmem:[#allocation2 + $0x610] sm:$0xff]
    %v435 = vld [vmem:[#allocation2 + $0x618] sm:$0xff]
    %v436 = vld [vmem:[#allocation2 + $0x620] sm:$0xff]
    %v437 = vld [vmem:[#allocation2 + $0x628] sm:$0xff]
    %v438 = vld [vmem:[#allocation2 + $0x630] sm:$0xff]
    %v439 = vld [vmem:[#allocation2 + $0x638] sm:$0xff]
    %v440 = vld [vmem:[#allocation2 + $0x640] sm:$0xff]
    %v441 = vld [vmem:[#allocation2 + $0x648] sm:$0xff]
    %v442 = vld [vmem:[#allocation2 + $0x650] sm:$0xff]
    %v443 = vld [vmem:[#allocation2 + $0x658] sm:$0xff]
    %v444 = vld [vmem:[#allocation2 + $0x660] sm:$0xff]
    %v445 = vld [vmem:[#allocation2 + $0x668] sm:$0xff]
    %v446 = vld [vmem:[#allocation2 + $0x670] sm:$0xff]
    %v447 = vld [vmem:[#allocation2 + $0x678] sm:$0xff]
    %v448 = vld [vmem:[#allocation2 + $0x680] sm:$0xff]
    %v449 = vld [vmem:[#allocation2 + $0x688] sm:$0xff]
    %v450 = vld [vmem:[#allocation2 + $0x690] sm:$0xff]
    %v451 = vld [vmem:[#allocation2 + $0x698] sm:$0xff]
    %v452 = vld [vmem:[#allocation2 + $0x6a0] sm:$0xff]
    %v453 = vld [vmem:[#allocation2 + $0x6a8] sm:$0xff]
    %v454 = vld [vmem:[#allocation2 + $0x6b0] sm:$0xff]
    %v455 = vld [vmem:[#allocation2 + $0x6b8] sm:$0xff]
    %v456 = vld [vmem:[#allocation2 + $0x6c0] sm:$0xff]
    %v457 = vld [vmem:[#allocation2 + $0x6c8] sm:$0xff]
    %v458 = vld [vmem:[#allocation2 + $0x6d0] sm:$0xff]
    %v459 = vld [vmem:[#allocation2 + $0x6d8] sm:$0xff]
    %v460 = vld [vmem:[#allocation2 + $0x6e0] sm:$0xff]
    %v461 = vld [vmem:[#allocation2 + $0x6e8] sm:$0xff]
    %v462 = vld [vmem:[#allocation2 + $0x6f0] sm:$0xff]
    %v463 = vld [vmem:[#allocation2 + $0x6f8] sm:$0xff]
    %v464 = vld [vmem:[#allocation2 + $0x700] sm:$0xff]
    %v465 = vld [vmem:[#allocation2 + $0x708] sm:$0xff]
    %v466 = vld [vmem:[#allocation2 + $0x710] sm:$0xff]
    %v467 = vld [vmem:[#allocation2 + $0x718] sm:$0xff]
    %v468 = vld [vmem:[#allocation2 + $0x720] sm:$0xff]
    %v469 = vld [vmem:[#allocation2 + $0x728] sm:$0xff]
    %v470 = vld [vmem:[#allocation2 + $0x730] sm:$0xff]
    %v471 = vld [vmem:[#allocation2 + $0x738] sm:$0xff]
    %v472 = vld [vmem:[#allocation2 + $0x740] sm:$0xff]
    %v473 = vld [vmem:[#allocation2 + $0x748] sm:$0xff]
    %v474 = vld [vmem:[#allocation2 + $0x750] sm:$0xff]
    %v475 = vld [vmem:[#allocation2 + $0x758] sm:$0xff]
    %v476 = vld [vmem:[#allocation2 + $0x760] sm:$0xff]
    %v477 = vld [vmem:[#allocation2 + $0x768] sm:$0xff]
    %v478 = vld [vmem:[#allocation2 + $0x770] sm:$0xff]
    %v479 = vld [vmem:[#allocation2 + $0x778] sm:$0xff]
    %v480 = vld [vmem:[#allocation2 + $0x780] sm:$0xff]
    %v481 = vld [vmem:[#allocation2 + $0x788] sm:$0xff]
    %v482 = vld [vmem:[#allocation2 + $0x790] sm:$0xff]
    %v483 = vld [vmem:[#allocation2 + $0x798] sm:$0xff]
    %v484 = vld [vmem:[#allocation2 + $0x7a0] sm:$0xff]
    %v485 = vld [vmem:[#allocation2 + $0x7a8] sm:$0xff]
    %v486 = vld [vmem:[#allocation2 + $0x7b0] sm:$0xff]
    %v487 = vld [vmem:[#allocation2 + $0x7b8] sm:$0xff]
    %v488 = vld [vmem:[#allocation2 + $0x7c0] sm:$0xff]
    %v489 = vld [vmem:[#allocation2 + $0x7c8] sm:$0xff]
    %v490 = vld [vmem:[#allocation2 + $0x7d0] sm:$0xff]
    %v491 = vld [vmem:[#allocation2 + $0x7d8] sm:$0xff]
    %v492 = vld [vmem:[#allocation2 + $0x7e0] sm:$0xff]
    %v493 = vld [vmem:[#allocation2 + $0x7e8] sm:$0xff]
    %v494 = vld [vmem:[#allocation2 + $0x7f0] sm:$0xff]
    %v495 = vld [vmem:[#allocation2 + $0x7f8] sm:$0xff]
    %v496 = vld [vmem:[#allocation2 + $0x800] sm:$0xff]
    %v497 = vld [vmem:[#allocation2 + $0x808] sm:$0xff]
    %v498 = vld [vmem:[#allocation2 + $0x810] sm:$0xff]
    %v499 = vld [vmem:[#allocation2 + $0x818] sm:$0xff]
    %v500 = vld [vmem:[#allocation2 + $0x820] sm:$0xff]
    %v501 = vld [vmem:[#allocation2 + $0x828] sm:$0xff]
    %v502 = vld [vmem:[#allocation2 + $0x830] sm:$0xff]
    %v503 = vld [vmem:[#allocation2 + $0x838] sm:$0xff]
    %v504 = vld [vmem:[#allocation2 + $0x840] sm:$0xff]
    %v505 = vld [vmem:[#allocation2 + $0x848] sm:$0xff]
    %v506 = vld [vmem:[#allocation2 + $0x850] sm:$0xff]
    %v507 = vld [vmem:[#allocation2 + $0x858] sm:$0xff]
    %v508 = vld [vmem:[#allocation2 + $0x860] sm:$0xff]
    %v509 = vld [vmem:[#allocation2 + $0x868] sm:$0xff]
    %v510 = vld [vmem:[#allocation2 + $0x870] sm:$0xff]
    %v511 = vld [vmem:[#allocation2 + $0x878] sm:$0xff]
    %v512 = vld [vmem:[#allocation2 + $0x880] sm:$0xff]
    %v513 = vld [vmem:[#allocation2 + $0x888] sm:$0xff]
    %v514 = vld [vmem:[#allocation2 + $0x890] sm:$0xff]
    %v515 = vld [vmem:[#allocation2 + $0x898] sm:$0xff]
    %v516 = vld [vmem:[#allocation2 + $0x8a0] sm:$0xff]
    %v517 = vld [vmem:[#allocation2 + $0x8a8] sm:$0xff]
    %v518 = vld [vmem:[#allocation2 + $0x8b0] sm:$0xff]
    %v519 = vld [vmem:[#allocation2 + $0x8b8] sm:$0xff]
    %v520 = vld [vmem:[#allocation2 + $0x8c0] sm:$0xff]
    %v521 = vld [vmem:[#allocation2 + $0x8c8] sm:$0xff]
    %v522 = vld [vmem:[#allocation2 + $0x8d0] sm:$0xff]
    %v523 = vld [vmem:[#allocation2 + $0x8d8] sm:$0xff]
    %v524 = vld [vmem:[#allocation2 + $0x8e0] sm:$0xff]
    %v525 = vld [vmem:[#allocation2 + $0x8e8] sm:$0xff]
    %v526 = vld [vmem:[#allocation2 + $0x8f0] sm:$0xff]
    %v527 = vld [vmem:[#allocation2 + $0x8f8] sm:$0xff]
    %v528 = vld [vmem:[#allocation2 + $0x900] sm:$0xff]
    %v529 = vld [vmem:[#allocation2 + $0x908] sm:$0xff]
    %v530 = vld [vmem:[#allocation2 + $0x910] sm:$0xff]
    %v531 = vld [vmem:[#allocation2 + $0x918] sm:$0xff]
    %v532 = vld [vmem:[#allocation2 + $0x920] sm:$0xff]
    %v533 = vld [vmem:[#allocation2 + $0x928] sm:$0xff]
    %v534 = vld [vmem:[#allocation2 + $0x930] sm:$0xff]
    %v535 = vld [vmem:[#allocation2 + $0x938] sm:$0xff]
    %v536 = vld [vmem:[#allocation2 + $0x940] sm:$0xff]
    %v537 = vld [vmem:[#allocation2 + $0x948] sm:$0xff]
    %v538 = vld [vmem:[#allocation2 + $0x950] sm:$0xff]
    %v539 = vld [vmem:[#allocation2 + $0x958] sm:$0xff]
    %v540 = vld [vmem:[#allocation2 + $0x960] sm:$0xff]
    %v541 = vld [vmem:[#allocation2 + $0x968] sm:$0xff]
    %v542 = vld [vmem:[#allocation2 + $0x970] sm:$0xff]
    %v543 = vld [vmem:[#allocation2 + $0x978] sm:$0xff]
    %v544 = vld [vmem:[#allocation2 + $0x980] sm:$0xff]
    %v545 = vld [vmem:[#allocation2 + $0x988] sm:$0xff]
    %v546 = vld [vmem:[#allocation2 + $0x990] sm:$0xff]
    %v547 = vld [vmem:[#allocation2 + $0x998] sm:$0xff]
    %v548 = vld [vmem:[#allocation2 + $0x9a0] sm:$0xff]
    %v549 = vld [vmem:[#allocation2 + $0x9a8] sm:$0xff]
    %v550 = vld [vmem:[#allocation2 + $0x9b0] sm:$0xff]
    %v551 = vld [vmem:[#allocation2 + $0x9b8] sm:$0xff]
    %v552 = vld [vmem:[#allocation2 + $0x9c0] sm:$0xff]
    %v553 = vld [vmem:[#allocation2 + $0x9c8] sm:$0xff]
    %v554 = vld [vmem:[#allocation2 + $0x9d0] sm:$0xff]
    %v555 = vld [vmem:[#allocation2 + $0x9d8] sm:$0xff]
    %v556 = vld [vmem:[#allocation2 + $0x9e0] sm:$0xff]
    %v557 = vld [vmem:[#allocation2 + $0x9e8] sm:$0xff]
    %v558 = vld [vmem:[#allocation2 + $0x9f0] sm:$0xff]
    %v559 = vld [vmem:[#allocation2 + $0x9f8] sm:$0xff]
    %v560 = vld [vmem:[#allocation2 + $0xa00] sm:$0xff]
    %v561 = vld [vmem:[#allocation2 + $0xa08] sm:$0xff]
    %v562 = vld [vmem:[#allocation2 + $0xa10] sm:$0xff]
    %v563 = vld [vmem:[#allocation2 + $0xa18] sm:$0xff]
    %v564 = vld [vmem:[#allocation2 + $0xa20] sm:$0xff]
    %v565 = vld [vmem:[#allocation2 + $0xa28] sm:$0xff]
    %v566 = vld [vmem:[#allocation2 + $0xa30] sm:$0xff]
    %v567 = vld [vmem:[#allocation2 + $0xa38] sm:$0xff]
    %v568 = vld [vmem:[#allocation2 + $0xa40] sm:$0xff]
    %v569 = vld [vmem:[#allocation2 + $0xa48] sm:$0xff]
    %v570 = vld [vmem:[#allocation2 + $0xa50] sm:$0xff]
    %v571 = vld [vmem:[#allocation2 + $0xa58] sm:$0xff]
    %v572 = vld [vmem:[#allocation2 + $0xa60] sm:$0xff]
    %v573 = vld [vmem:[#allocation2 + $0xa68] sm:$0xff]
    %v574 = vld [vmem:[#allocation2 + $0xa70] sm:$0xff]
    %v575 = vld [vmem:[#allocation2 + $0xa78] sm:$0xff]
    %v576 = vld [vmem:[#allocation2 + $0xa80] sm:$0xff]
    %v577 = vld [vmem:[#allocation2 + $0xa88] sm:$0xff]
    %v578 = vld [vmem:[#allocation2 + $0xa90] sm:$0xff]
    %v579 = vld [vmem:[#allocation2 + $0xa98] sm:$0xff]
    %v580 = vld [vmem:[#allocation2 + $0xaa0] sm:$0xff]
    %v581 = vld [vmem:[#allocation2 + $0xaa8] sm:$0xff]
    %v582 = vld [vmem:[#allocation2 + $0xab0] sm:$0xff]
    %v583 = vld [vmem:[#allocation2 + $0xab8] sm:$0xff]
    %v584 = vld [vmem:[#allocation2 + $0xac0] sm:$0xff]
    %v585 = vld [vmem:[#allocation2 + $0xac8] sm:$0xff]
    %v586 = vld [vmem:[#allocation2 + $0xad0] sm:$0xff]
    %v587 = vld [vmem:[#allocation2 + $0xad8] sm:$0xff]
    %v588 = vld [vmem:[#allocation2 + $0xae0] sm:$0xff]
    %v589 = vld [vmem:[#allocation2 + $0xae8] sm:$0xff]
    %v590 = vld [vmem:[#allocation2 + $0xaf0] sm:$0xff]
    %v591 = vld [vmem:[#allocation2 + $0xaf8] sm:$0xff]
    %v592 = vld [vmem:[#allocation2 + $0xb00] sm:$0xff]
    %v593 = vld [vmem:[#allocation2 + $0xb08] sm:$0xff]
    %v594 = vld [vmem:[#allocation2 + $0xb10] sm:$0xff]
    %v595 = vld [vmem:[#allocation2 + $0xb18] sm:$0xff]
    %v596 = vld [vmem:[#allocation2 + $0xb20] sm:$0xff]
    %v597 = vld [vmem:[#allocation2 + $0xb28] sm:$0xff]
    %v598 = vld [vmem:[#allocation2 + $0xb30] sm:$0xff]
    %v599 = vld [vmem:[#allocation2 + $0xb38] sm:$0xff]
    %v600 = vld [vmem:[#allocation2 + $0xb40] sm:$0xff]
    %v601 = vld [vmem:[#allocation2 + $0xb48] sm:$0xff]
    %v602 = vld [vmem:[#allocation2 + $0xb50] sm:$0xff]
    %v603 = vld [vmem:[#allocation2 + $0xb58] sm:$0xff]
    %v604 = vld [vmem:[#allocation2 + $0xb60] sm:$0xff]
    %v605 = vld [vmem:[#allocation2 + $0xb68] sm:$0xff]
    %v606 = vld [vmem:[#allocation2 + $0xb70] sm:$0xff]
    %v607 = vld [vmem:[#allocation2 + $0xb78] sm:$0xff]
    %v608 = vld [vmem:[#allocation2 + $0xb80] sm:$0xff]
    %v609 = vld [vmem:[#allocation2 + $0xb88] sm:$0xff]
    %v610 = vld [vmem:[#allocation2 + $0xb90] sm:$0xff]
    %v611 = vld [vmem:[#allocation2 + $0xb98] sm:$0xff]
    %v612 = vld [vmem:[#allocation2 + $0xba0] sm:$0xff]
    %v613 = vld [vmem:[#allocation2 + $0xba8] sm:$0xff]
    %v614 = vld [vmem:[#allocation2 + $0xbb0] sm:$0xff]
    %v615 = vld [vmem:[#allocation2 + $0xbb8] sm:$0xff]
    %v616 = vld [vmem:[#allocation2 + $0xbc0] sm:$0xff]
    %v617 = vld [vmem:[#allocation2 + $0xbc8] sm:$0xff]
    %v618 = vld [vmem:[#allocation2 + $0xbd0] sm:$0xff]
    %v619 = vld [vmem:[#allocation2 + $0xbd8] sm:$0xff]
    %v620 = vld [vmem:[#allocation2 + $0xbe0] sm:$0xff]
    %v621 = vld [vmem:[#allocation2 + $0xbe8] sm:$0xff]
    %v622 = vld [vmem:[#allocation2 + $0xbf0] sm:$0xff]
    %v623 = vld [vmem:[#allocation2 + $0xbf8] sm:$0xff]
    %v624 = vld [vmem:[#allocation2 + $0xc00] sm:$0xff]
    %v625 = vld [vmem:[#allocation2 + $0xc08] sm:$0xff]
    %v626 = vld [vmem:[#allocation2 + $0xc10] sm:$0xff]
    %v627 = vld [vmem:[#allocation2 + $0xc18] sm:$0xff]
    %v628 = vld [vmem:[#allocation2 + $0xc20] sm:$0xff]
    %v629 = vld [vmem:[#allocation2 + $0xc28] sm:$0xff]
    %v630 = vld [vmem:[#allocation2 + $0xc30] sm:$0xff]
    %v631 = vld [vmem:[#allocation2 + $0xc38] sm:$0xff]
    %v632 = vld [vmem:[#allocation2 + $0xc40] sm:$0xff]
    %v633 = vld [vmem:[#allocation2 + $0xc48] sm:$0xff]
    %v634 = vld [vmem:[#allocation2 + $0xc50] sm:$0xff]
    %v635 = vld [vmem:[#allocation2 + $0xc58] sm:$0xff]
    %v636 = vld [vmem:[#allocation2 + $0xc60] sm:$0xff]
    %v637 = vld [vmem:[#allocation2 + $0xc68] sm:$0xff]
    %v638 = vld [vmem:[#allocation2 + $0xc70] sm:$0xff]
    %v639 = vld [vmem:[#allocation2 + $0xc78] sm:$0xff]
    %v640 = vld [vmem:[#allocation2 + $0xc80] sm:$0xff]
    %v641 = vld [vmem:[#allocation2 + $0xc88] sm:$0xff]
    %v642 = vld [vmem:[#allocation2 + $0xc90] sm:$0xff]
    %v643 = vld [vmem:[#allocation2 + $0xc98] sm:$0xff]
    %v644 = vld [vmem:[#allocation2 + $0xca0] sm:$0xff]
    %v645 = vld [vmem:[#allocation2 + $0xca8] sm:$0xff]
    %v646 = vld [vmem:[#allocation2 + $0xcb0] sm:$0xff]
    %v647 = vld [vmem:[#allocation2 + $0xcb8] sm:$0xff]
    %v648 = vld [vmem:[#allocation2 + $0xcc0] sm:$0xff]
    %v649 = vld [vmem:[#allocation2 + $0xcc8] sm:$0xff]
    %v650 = vld [vmem:[#allocation2 + $0xcd0] sm:$0xff]
    %v651 = vld [vmem:[#allocation2 + $0xcd8] sm:$0xff]
    %v652 = vld [vmem:[#allocation2 + $0xce0] sm:$0xff]
    %v653 = vld [vmem:[#allocation2 + $0xce8] sm:$0xff]
    %v654 = vld [vmem:[#allocation2 + $0xcf0] sm:$0xff]
    %v655 = vld [vmem:[#allocation2 + $0xcf8] sm:$0xff]
    %v656 = vld [vmem:[#allocation2 + $0xd00] sm:$0xff]
    %v657 = vld [vmem:[#allocation2 + $0xd08] sm:$0xff]
    %v658 = vld [vmem:[#allocation2 + $0xd10] sm:$0xff]
    %v659 = vld [vmem:[#allocation2 + $0xd18] sm:$0xff]
    %v660 = vld [vmem:[#allocation2 + $0xd20] sm:$0xff]
    %v661 = vld [vmem:[#allocation2 + $0xd28] sm:$0xff]
    %v662 = vld [vmem:[#allocation2 + $0xd30] sm:$0xff]
    %v663 = vld [vmem:[#allocation2 + $0xd38] sm:$0xff]
    %v664 = vld [vmem:[#allocation2 + $0xd40] sm:$0xff]
    %v665 = vld [vmem:[#allocation2 + $0xd48] sm:$0xff]
    %v666 = vld [vmem:[#allocation2 + $0xd50] sm:$0xff]
    %v667 = vld [vmem:[#allocation2 + $0xd58] sm:$0xff]
    %v668 = vld [vmem:[#allocation2 + $0xd60] sm:$0xff]
    %v669 = vld [vmem:[#allocation2 + $0xd68] sm:$0xff]
    %v670 = vld [vmem:[#allocation2 + $0xd70] sm:$0xff]
    %v671 = vld [vmem:[#allocation2 + $0xd78] sm:$0xff]
    %v672 = vld [vmem:[#allocation2 + $0xd80] sm:$0xff]
    %v673 = vld [vmem:[#allocation2 + $0xd88] sm:$0xff]
    %v674 = vld [vmem:[#allocation2 + $0xd90] sm:$0xff]
    %v675 = vld [vmem:[#allocation2 + $0xd98] sm:$0xff]
    %v676 = vld [vmem:[#allocation2 + $0xda0] sm:$0xff]
    %v677 = vld [vmem:[#allocation2 + $0xda8] sm:$0xff]
    %v678 = vld [vmem:[#allocation2 + $0xdb0] sm:$0xff]
    %v679 = vld [vmem:[#allocation2 + $0xdb8] sm:$0xff]
    %v680 = vld [vmem:[#allocation2 + $0xdc0] sm:$0xff]
    %v681 = vld [vmem:[#allocation2 + $0xdc8] sm:$0xff]
    %v682 = vld [vmem:[#allocation2 + $0xdd0] sm:$0xff]
    %v683 = vld [vmem:[#allocation2 + $0xdd8] sm:$0xff]
    %v684 = vld [vmem:[#allocation2 + $0xde0] sm:$0xff]
    %v685 = vld [vmem:[#allocation2 + $0xde8] sm:$0xff]
    %v686 = vld [vmem:[#allocation2 + $0xdf0] sm:$0xff]
    %v687 = vld [vmem:[#allocation2 + $0xdf8] sm:$0xff]
    %v688 = vld [vmem:[#allocation2 + $0xe00] sm:$0xff]
    %v689 = vld [vmem:[#allocation2 + $0xe08] sm:$0xff]
    %v690 = vld [vmem:[#allocation2 + $0xe10] sm:$0xff]
    %v691 = vld [vmem:[#allocation2 + $0xe18] sm:$0xff]
    %v692 = vld [vmem:[#allocation2 + $0xe20] sm:$0xff]
    %v693 = vld [vmem:[#allocation2 + $0xe28] sm:$0xff]
    %v694 = vld [vmem:[#allocation2 + $0xe30] sm:$0xff]
    %v695 = vld [vmem:[#allocation2 + $0xe38] sm:$0xff]
    %v696 = vld [vmem:[#allocation2 + $0xe40] sm:$0xff]
    %v697 = vld [vmem:[#allocation2 + $0xe48] sm:$0xff]
    %v698 = vld [vmem:[#allocation2 + $0xe50] sm:$0xff]
    %v699 = vld [vmem:[#allocation2 + $0xe58] sm:$0xff]
    %v700 = vld [vmem:[#allocation2 + $0xe60] sm:$0xff]
    %v701 = vld [vmem:[#allocation2 + $0xe68] sm:$0xff]
    %v702 = vld [vmem:[#allocation2 + $0xe70] sm:$0xff]
    %v703 = vld [vmem:[#allocation2 + $0xe78] sm:$0xff]
    %v704 = vld [vmem:[#allocation2 + $0xe80] sm:$0xff]
    %v705 = vld [vmem:[#allocation2 + $0xe88] sm:$0xff]
    %v706 = vld [vmem:[#allocation2 + $0xe90] sm:$0xff]
    %v707 = vld [vmem:[#allocation2 + $0xe98] sm:$0xff]
    %v708 = vld [vmem:[#allocation2 + $0xea0] sm:$0xff]
    %v709 = vld [vmem:[#allocation2 + $0xea8] sm:$0xff]
    %v710 = vld [vmem:[#allocation2 + $0xeb0] sm:$0xff]
    %v711 = vld [vmem:[#allocation2 + $0xeb8] sm:$0xff]
    %v712 = vld [vmem:[#allocation2 + $0xec0] sm:$0xff]
    %v713 = vld [vmem:[#allocation2 + $0xec8] sm:$0xff]
    %v714 = vld [vmem:[#allocation2 + $0xed0] sm:$0xff]
    %v715 = vld [vmem:[#allocation2 + $0xed8] sm:$0xff]
    %v716 = vld [vmem:[#allocation2 + $0xee0] sm:$0xff]
    %v717 = vld [vmem:[#allocation2 + $0xee8] sm:$0xff]
    %v718 = vld [vmem:[#allocation2 + $0xef0] sm:$0xff]
    %v719 = vld [vmem:[#allocation2 + $0xef8] sm:$0xff]
    %v720 = vld [vmem:[#allocation2 + $0xf00] sm:$0xff]
    %v721 = vld [vmem:[#allocation2 + $0xf08] sm:$0xff]
    %v722 = vld [vmem:[#allocation2 + $0xf10] sm:$0xff]
    %v723 = vld [vmem:[#allocation2 + $0xf18] sm:$0xff]
    %v724 = vld [vmem:[#allocation2 + $0xf20] sm:$0xff]
    %v725 = vld [vmem:[#allocation2 + $0xf28] sm:$0xff]
    %v726 = vld [vmem:[#allocation2 + $0xf30] sm:$0xff]
    %v727 = vld [vmem:[#allocation2 + $0xf38] sm:$0xff]
    %v728 = vld [vmem:[#allocation2 + $0xf40] sm:$0xff]
    %v729 = vld [vmem:[#allocation2 + $0xf48] sm:$0xff]
    %v730 = vld [vmem:[#allocation2 + $0xf50] sm:$0xff]
    %v731 = vld [vmem:[#allocation2 + $0xf58] sm:$0xff]
    %v732 = vld [vmem:[#allocation2 + $0xf60] sm:$0xff]
    %v733 = vld [vmem:[#allocation2 + $0xf68] sm:$0xff]
    %v734 = vld [vmem:[#allocation2 + $0xf70] sm:$0xff]
    %v735 = vld [vmem:[#allocation2 + $0xf78] sm:$0xff]
    %v736 = vld [vmem:[#allocation2 + $0xf80] sm:$0xff]
    %v737 = vld [vmem:[#allocation2 + $0xf88] sm:$0xff]
    %v738 = vld [vmem:[#allocation2 + $0xf90] sm:$0xff]
    %v739 = vld [vmem:[#allocation2 + $0xf98] sm:$0xff]
    %v740 = vld [vmem:[#allocation2 + $0xfa0] sm:$0xff]
    %v741 = vld [vmem:[#allocation2 + $0xfa8] sm:$0xff]
    %v742 = vld [vmem:[#allocation2 + $0xfb0] sm:$0xff]
    %v743 = vld [vmem:[#allocation2 + $0xfb8] sm:$0xff]
    %v744 = vld [vmem:[#allocation2 + $0xfc0] sm:$0xff]
    %v745 = vld [vmem:[#allocation2 + $0xfc8] sm:$0xff]
    %v746 = vld [vmem:[#allocation2 + $0xfd0] sm:$0xff]
    %v747 = vld [vmem:[#allocation2 + $0xfd8] sm:$0xff]
    %v748 = vld [vmem:[#allocation2 + $0xfe0] sm:$0xff]
    %v749 = vld [vmem:[#allocation2 + $0xfe8] sm:$0xff]
    %v750 = vld [vmem:[#allocation2 + $0xff0] sm:$0xff]
    %v751 = vld [vmem:[#allocation2 + $0xff8] sm:$0xff]
    %v752 = vld [vmem:[#allocation2 + $0x1000] sm:$0xff]
    %v753 = vld [vmem:[#allocation2 + $0x1008] sm:$0xff]
    %v754 = vld [vmem:[#allocation2 + $0x1010] sm:$0xff]
    %v755 = vld [vmem:[#allocation2 + $0x1018] sm:$0xff]
    %v756 = vld [vmem:[#allocation2 + $0x1020] sm:$0xff]
    %v757 = vld [vmem:[#allocation2 + $0x1028] sm:$0xff]
    %v758 = vld [vmem:[#allocation2 + $0x1030] sm:$0xff]
    %v759 = vld [vmem:[#allocation2 + $0x1038] sm:$0xff]
    %v760 = vld [vmem:[#allocation2 + $0x1040] sm:$0xff]
    %v761 = vld [vmem:[#allocation2 + $0x1048] sm:$0xff]
    %v762 = vld [vmem:[#allocation2 + $0x1050] sm:$0xff]
    %v763 = vld [vmem:[#allocation2 + $0x1058] sm:$0xff]
    %v764 = vld [vmem:[#allocation2 + $0x1060] sm:$0xff]
    %v765 = vld [vmem:[#allocation2 + $0x1068] sm:$0xff]
    %v766 = vld [vmem:[#allocation2 + $0x1070] sm:$0xff]
    %v767 = vld [vmem:[#allocation2 + $0x1078] sm:$0xff]
    %v768 = vld [vmem:[#allocation2 + $0x1080] sm:$0xff]
    %v769 = vld [vmem:[#allocation2 + $0x1088] sm:$0xff]
    %v770 = vld [vmem:[#allocation2 + $0x1090] sm:$0xff]
    %v771 = vld [vmem:[#allocation2 + $0x1098] sm:$0xff]
    %v772 = vld [vmem:[#allocation2 + $0x10a0] sm:$0xff]
    %v773 = vld [vmem:[#allocation2 + $0x10a8] sm:$0xff]
    %v774 = vld [vmem:[#allocation2 + $0x10b0] sm:$0xff]
    %v775 = vld [vmem:[#allocation2 + $0x10b8] sm:$0xff]
    %v776 = vld [vmem:[#allocation2 + $0x10c0] sm:$0xff]
    %v777 = vld [vmem:[#allocation2 + $0x10c8] sm:$0xff]
    %v778 = vld [vmem:[#allocation2 + $0x10d0] sm:$0xff]
    %v779 = vld [vmem:[#allocation2 + $0x10d8] sm:$0xff]
    %v780 = vld [vmem:[#allocation2 + $0x10e0] sm:$0xff]
    %v781 = vld [vmem:[#allocation2 + $0x10e8] sm:$0xff]
    %v782 = vld [vmem:[#allocation2 + $0x10f0] sm:$0xff]
    %v783 = vld [vmem:[#allocation2 + $0x10f8] sm:$0xff]
    %v784 = vld [vmem:[#allocation2 + $0x1100] sm:$0xff]
    %v785 = vld [vmem:[#allocation2 + $0x1108] sm:$0xff]
    %v786 = vld [vmem:[#allocation2 + $0x1110] sm:$0xff]
    %v787 = vld [vmem:[#allocation2 + $0x1118] sm:$0xff]
    %v788 = vld [vmem:[#allocation2 + $0x1120] sm:$0xff]
    %v789 = vld [vmem:[#allocation2 + $0x1128] sm:$0xff]
    %v790 = vld [vmem:[#allocation2 + $0x1130] sm:$0xff]
    %v791 = vld [vmem:[#allocation2 + $0x1138] sm:$0xff]
    %v792 = vld [vmem:[#allocation2 + $0x1140] sm:$0xff]
    %v793 = vld [vmem:[#allocation2 + $0x1148] sm:$0xff]
    %v794 = vld [vmem:[#allocation2 + $0x1150] sm:$0xff]
    %v795 = vld [vmem:[#allocation2 + $0x1158] sm:$0xff]
    %v796 = vld [vmem:[#allocation2 + $0x1160] sm:$0xff]
    %v797 = vld [vmem:[#allocation2 + $0x1168] sm:$0xff]
    %v798 = vld [vmem:[#allocation2 + $0x1170] sm:$0xff]
    %v799 = vld [vmem:[#allocation2 + $0x1178] sm:$0xff]
    %v800 = vld [vmem:[#allocation2 + $0x1180] sm:$0xff]
    %v801 = vld [vmem:[#allocation2 + $0x1188] sm:$0xff]
    %v802 = vld [vmem:[#allocation2 + $0x1190] sm:$0xff]
    %v803 = vld [vmem:[#allocation2 + $0x1198] sm:$0xff]
    %v804 = vld [vmem:[#allocation2 + $0x11a0] sm:$0xff]
    %v805 = vld [vmem:[#allocation2 + $0x11a8] sm:$0xff]
    %v806 = vld [vmem:[#allocation2 + $0x11b0] sm:$0xff]
    %v807 = vld [vmem:[#allocation2 + $0x11b8] sm:$0xff]
    %v808 = vld [vmem:[#allocation2 + $0x11c0] sm:$0xff]
    %v809 = vld [vmem:[#allocation2 + $0x11c8] sm:$0xff]
    %v810 = vld [vmem:[#allocation2 + $0x11d0] sm:$0xff]
    %v811 = vld [vmem:[#allocation2 + $0x11d8] sm:$0xff]
    %v812 = vld [vmem:[#allocation2 + $0x11e0] sm:$0xff]
    %v813 = vld [vmem:[#allocation2 + $0x11e8] sm:$0xff]
    %v814 = vld [vmem:[#allocation2 + $0x11f0] sm:$0xff]
    %v815 = vld [vmem:[#allocation2 + $0x11f8] sm:$0xff]
    %v816 = vld [vmem:[#allocation2 + $0x1200] sm:$0xff]
    %v817 = vld [vmem:[#allocation2 + $0x1208] sm:$0xff]
    %v818 = vld [vmem:[#allocation2 + $0x1210] sm:$0xff]
    %v819 = vld [vmem:[#allocation2 + $0x1218] sm:$0xff]
    %v820 = vld [vmem:[#allocation2 + $0x1220] sm:$0xff]
    %v821 = vld [vmem:[#allocation2 + $0x1228] sm:$0xff]
    %v822 = vld [vmem:[#allocation2 + $0x1230] sm:$0xff]
    %v823 = vld [vmem:[#allocation2 + $0x1238] sm:$0xff]
    %v824 = vld [vmem:[#allocation2 + $0x1240] sm:$0xff]
    %v825 = vld [vmem:[#allocation2 + $0x1248] sm:$0xff]
    %v826 = vld [vmem:[#allocation2 + $0x1250] sm:$0xff]
    %v827 = vld [vmem:[#allocation2 + $0x1258] sm:$0xff]
    %v828 = vld [vmem:[#allocation2 + $0x1260] sm:$0xff]
    %v829 = vld [vmem:[#allocation2 + $0x1268] sm:$0xff]
    %v830 = vld [vmem:[#allocation2 + $0x1270] sm:$0xff]
    %v831 = vld [vmem:[#allocation2 + $0x1278] sm:$0xff]
    %v832 = vld [vmem:[#allocation2 + $0x1280] sm:$0xff]
    %v833 = vld [vmem:[#allocation2 + $0x1288] sm:$0xff]
    %v834 = vld [vmem:[#allocation2 + $0x1290] sm:$0xff]
    %v835 = vld [vmem:[#allocation2 + $0x1298] sm:$0xff]
    %v836 = vld [vmem:[#allocation2 + $0x12a0] sm:$0xff]
    %v837 = vld [vmem:[#allocation2 + $0x12a8] sm:$0xff]
    %v838 = vld [vmem:[#allocation2 + $0x12b0] sm:$0xff]
    %v839 = vld [vmem:[#allocation2 + $0x12b8] sm:$0xff]
    %v840 = vld [vmem:[#allocation2 + $0x12c0] sm:$0xff]
    %v841 = vld [vmem:[#allocation2 + $0x12c8] sm:$0xff]
    %v842 = vld [vmem:[#allocation2 + $0x12d0] sm:$0xff]
    %v843 = vld [vmem:[#allocation2 + $0x12d8] sm:$0xff]
    %v844 = vld [vmem:[#allocation2 + $0x12e0] sm:$0xff]
    %v845 = vld [vmem:[#allocation2 + $0x12e8] sm:$0xff]
    %v846 = vld [vmem:[#allocation2 + $0x12f0] sm:$0xff]
    %v847 = vld [vmem:[#allocation2 + $0x12f8] sm:$0xff]
    %v848 = vld [vmem:[#allocation2 + $0x1300] sm:$0xff]
    %v849 = vld [vmem:[#allocation2 + $0x1308] sm:$0xff]
    %v850 = vld [vmem:[#allocation2 + $0x1310] sm:$0xff]
    %v851 = vld [vmem:[#allocation2 + $0x1318] sm:$0xff]
    %v852 = vld [vmem:[#allocation2 + $0x1320] sm:$0xff]
    %v853 = vld [vmem:[#allocation2 + $0x1328] sm:$0xff]
    %v854 = vld [vmem:[#allocation2 + $0x1330] sm:$0xff]
    %v855 = vld [vmem:[#allocation2 + $0x1338] sm:$0xff]
    %v856 = vld [vmem:[#allocation2 + $0x1340] sm:$0xff]
    %v857 = vld [vmem:[#allocation2 + $0x1348] sm:$0xff]
    %v858 = vld [vmem:[#allocation2 + $0x1350] sm:$0xff]
    %v859 = vld [vmem:[#allocation2 + $0x1358] sm:$0xff]
    %v860 = vld [vmem:[#allocation2 + $0x1360] sm:$0xff]
    %v861 = vld [vmem:[#allocation2 + $0x1368] sm:$0xff]
    %v862 = vld [vmem:[#allocation2 + $0x1370] sm:$0xff]
    %v863 = vld [vmem:[#allocation2 + $0x1378] sm:$0xff]
    %v864 = vld [vmem:[#allocation2 + $0x1380] sm:$0xff]
    %v865 = vld [vmem:[#allocation2 + $0x1388] sm:$0xff]
    %v866 = vld [vmem:[#allocation2 + $0x1390] sm:$0xff]
    %v867 = vld [vmem:[#allocation2 + $0x1398] sm:$0xff]
    %v868 = vld [vmem:[#allocation2 + $0x13a0] sm:$0xff]
    %v869 = vld [vmem:[#allocation2 + $0x13a8] sm:$0xff]
    %v870 = vld [vmem:[#allocation2 + $0x13b0] sm:$0xff]
    %v871 = vld [vmem:[#allocation2 + $0x13b8] sm:$0xff]
    %v872 = vld [vmem:[#allocation2 + $0x13c0] sm:$0xff]
    %v873 = vld [vmem:[#allocation2 + $0x13c8] sm:$0xff]
    %v874 = vld [vmem:[#allocation2 + $0x13d0] sm:$0xff]
    %v875 = vld [vmem:[#allocation2 + $0x13d8] sm:$0xff]
    %v876 = vld [vmem:[#allocation2 + $0x13e0] sm:$0xff]
    %v877 = vld [vmem:[#allocation2 + $0x13e8] sm:$0xff]
    %v878 = vld [vmem:[#allocation2 + $0x13f0] sm:$0xff]
    %v879 = vld [vmem:[#allocation2 + $0x13f8] sm:$0xff]
    %v880 = vld [vmem:[#allocation2 + $0x1400] sm:$0xff]
    %v881 = vld [vmem:[#allocation2 + $0x1408] sm:$0xff]
    %v882 = vld [vmem:[#allocation2 + $0x1410] sm:$0xff]
    %v883 = vld [vmem:[#allocation2 + $0x1418] sm:$0xff]
    %v884 = vld [vmem:[#allocation2 + $0x1420] sm:$0xff]
    %v885 = vld [vmem:[#allocation2 + $0x1428] sm:$0xff]
    %v886 = vld [vmem:[#allocation2 + $0x1430] sm:$0xff]
    %v887 = vld [vmem:[#allocation2 + $0x1438] sm:$0xff]
    %v888 = vld [vmem:[#allocation2 + $0x1440] sm:$0xff]
    %v889 = vld [vmem:[#allocation2 + $0x1448] sm:$0xff]
    %v890 = vld [vmem:[#allocation2 + $0x1450] sm:$0xff]
    %v891 = vld [vmem:[#allocation2 + $0x1458] sm:$0xff]
    %v892 = vld [vmem:[#allocation2 + $0x1460] sm:$0xff]
    %v893 = vld [vmem:[#allocation2 + $0x1468] sm:$0xff]
    %v894 = vld [vmem:[#allocation2 + $0x1470] sm:$0xff]
    %v895 = vld [vmem:[#allocation2 + $0x1478] sm:$0xff]
    %v896 = vld [vmem:[#allocation2 + $0x1480] sm:$0xff]
    %v897 = vld [vmem:[#allocation2 + $0x1488] sm:$0xff]
    %v898 = vld [vmem:[#allocation2 + $0x1490] sm:$0xff]
    %v899 = vld [vmem:[#allocation2 + $0x1498] sm:$0xff]
    %v900 = vld [vmem:[#allocation2 + $0x14a0] sm:$0xff]
    %v901 = vld [vmem:[#allocation2 + $0x14a8] sm:$0xff]
    %v902 = vld [vmem:[#allocation2 + $0x14b0] sm:$0xff]
    %v903 = vld [vmem:[#allocation2 + $0x14b8] sm:$0xff]
    %v904 = vld [vmem:[#allocation2 + $0x14c0] sm:$0xff]
    %v905 = vld [vmem:[#allocation2 + $0x14c8] sm:$0xff]
    %v906 = vld [vmem:[#allocation2 + $0x14d0] sm:$0xff]
    %v907 = vld [vmem:[#allocation2 + $0x14d8] sm:$0xff]
    %v908 = vld [vmem:[#allocation2 + $0x14e0] sm:$0xff]
    %v909 = vld [vmem:[#allocation2 + $0x14e8] sm:$0xff]
    %v910 = vld [vmem:[#allocation2 + $0x14f0] sm:$0xff]
    %v911 = vld [vmem:[#allocation2 + $0x14f8] sm:$0xff]
    %v912 = vld [vmem:[#allocation2 + $0x1500] sm:$0xff]
    %v913 = vld [vmem:[#allocation2 + $0x1508] sm:$0xff]
    %v914 = vld [vmem:[#allocation2 + $0x1510] sm:$0xff]
    %v915 = vld [vmem:[#allocation2 + $0x1518] sm:$0xff]
    %v916 = vld [vmem:[#allocation2 + $0x1520] sm:$0xff]
    %v917 = vld [vmem:[#allocation2 + $0x1528] sm:$0xff]
    %v918 = vld [vmem:[#allocation2 + $0x1530] sm:$0xff]
    %v919 = vld [vmem:[#allocation2 + $0x1538] sm:$0xff]
    %v920 = vld [vmem:[#allocation2 + $0x1540] sm:$0xff]
    %v921 = vld [vmem:[#allocation2 + $0x1548] sm:$0xff]
    %v922 = vld [vmem:[#allocation2 + $0x1550] sm:$0xff]
    %v923 = vld [vmem:[#allocation2 + $0x1558] sm:$0xff]
    %v924 = vld [vmem:[#allocation2 + $0x1560] sm:$0xff]
    %v925 = vld [vmem:[#allocation2 + $0x1568] sm:$0xff]
    %v926 = vld [vmem:[#allocation2 + $0x1570] sm:$0xff]
    %v927 = vld [vmem:[#allocation2 + $0x1578] sm:$0xff]
    %v928 = vld [vmem:[#allocation2 + $0x1580] sm:$0xff]
    %v929 = vld [vmem:[#allocation2 + $0x1588] sm:$0xff]
    %v930 = vld [vmem:[#allocation2 + $0x1590] sm:$0xff]
    %v931 = vld [vmem:[#allocation2 + $0x1598] sm:$0xff]
    %v932 = vld [vmem:[#allocation2 + $0x15a0] sm:$0xff]
    %v933 = vld [vmem:[#allocation2 + $0x15a8] sm:$0xff]
    %v934 = vld [vmem:[#allocation2 + $0x15b0] sm:$0xff]
    %v935 = vld [vmem:[#allocation2 + $0x15b8] sm:$0xff]
    %v936 = vld [vmem:[#allocation2 + $0x15c0] sm:$0xff]
    %v937 = vld [vmem:[#allocation2 + $0x15c8] sm:$0xff]
    %v938 = vld [vmem:[#allocation2 + $0x15d0] sm:$0xff]
    %v939 = vld [vmem:[#allocation2 + $0x15d8] sm:$0xff]
    %v940 = vld [vmem:[#allocation2 + $0x15e0] sm:$0xff]
    %v941 = vld [vmem:[#allocation2 + $0x15e8] sm:$0xff]
    %v942 = vld [vmem:[#allocation2 + $0x15f0] sm:$0xff]
    %v943 = vld [vmem:[#allocation2 + $0x15f8] sm:$0xff]
    %v944 = vld [vmem:[#allocation2 + $0x1600] sm:$0xff]
    %v945 = vld [vmem:[#allocation2 + $0x1608] sm:$0xff]
    %v946 = vld [vmem:[#allocation2 + $0x1610] sm:$0xff]
    %v947 = vld [vmem:[#allocation2 + $0x1618] sm:$0xff]
    %v948 = vld [vmem:[#allocation2 + $0x1620] sm:$0xff]
    %v949 = vld [vmem:[#allocation2 + $0x1628] sm:$0xff]
    %v950 = vld [vmem:[#allocation2 + $0x1630] sm:$0xff]
    %v951 = vld [vmem:[#allocation2 + $0x1638] sm:$0xff]
    %v952 = vld [vmem:[#allocation2 + $0x1640] sm:$0xff]
    %v953 = vld [vmem:[#allocation2 + $0x1648] sm:$0xff]
    %v954 = vld [vmem:[#allocation2 + $0x1650] sm:$0xff]
    %v955 = vld [vmem:[#allocation2 + $0x1658] sm:$0xff]
    %v956 = vld [vmem:[#allocation2 + $0x1660] sm:$0xff]
    %v957 = vld [vmem:[#allocation2 + $0x1668] sm:$0xff]
    %v958 = vld [vmem:[#allocation2 + $0x1670] sm:$0xff]
    %v959 = vld [vmem:[#allocation2 + $0x1678] sm:$0xff]
    %v960 = vld [vmem:[#allocation2 + $0x1680] sm:$0xff]
    %v961 = vld [vmem:[#allocation2 + $0x1688] sm:$0xff]
    %v962 = vld [vmem:[#allocation2 + $0x1690] sm:$0xff]
    %v963 = vld [vmem:[#allocation2 + $0x1698] sm:$0xff]
    %v964 = vld [vmem:[#allocation2 + $0x16a0] sm:$0xff]
    %v965 = vld [vmem:[#allocation2 + $0x16a8] sm:$0xff]
    %v966 = vld [vmem:[#allocation2 + $0x16b0] sm:$0xff]
    %v967 = vld [vmem:[#allocation2 + $0x16b8] sm:$0xff]
    %v968 = vld [vmem:[#allocation2 + $0x16c0] sm:$0xff]
    %v969 = vld [vmem:[#allocation2 + $0x16c8] sm:$0xff]
    %v970 = vld [vmem:[#allocation2 + $0x16d0] sm:$0xff]
    %v971 = vld [vmem:[#allocation2 + $0x16d8] sm:$0xff]
    %v972 = vld [vmem:[#allocation2 + $0x16e0] sm:$0xff]
    %v973 = vld [vmem:[#allocation2 + $0x16e8] sm:$0xff]
    %v974 = vld [vmem:[#allocation2 + $0x16f0] sm:$0xff]
    %v975 = vld [vmem:[#allocation2 + $0x16f8] sm:$0xff]
    %v976 = vld [vmem:[#allocation2 + $0x1700] sm:$0xff]
    %v977 = vld [vmem:[#allocation2 + $0x1708] sm:$0xff]
    %v978 = vld [vmem:[#allocation2 + $0x1710] sm:$0xff]
    %v979 = vld [vmem:[#allocation2 + $0x1718] sm:$0xff]
    %v980 = vld [vmem:[#allocation2 + $0x1720] sm:$0xff]
    %v981 = vld [vmem:[#allocation2 + $0x1728] sm:$0xff]
    %v982 = vld [vmem:[#allocation2 + $0x1730] sm:$0xff]
    %v983 = vld [vmem:[#allocation2 + $0x1738] sm:$0xff]
    %v984 = vld [vmem:[#allocation2 + $0x1740] sm:$0xff]
    %v985 = vld [vmem:[#allocation2 + $0x1748] sm:$0xff]
    %v986 = vld [vmem:[#allocation2 + $0x1750] sm:$0xff]
    %v987 = vld [vmem:[#allocation2 + $0x1758] sm:$0xff]
    %v988 = vld [vmem:[#allocation2 + $0x1760] sm:$0xff]
    %v989 = vld [vmem:[#allocation2 + $0x1768] sm:$0xff]
    %v990 = vld [vmem:[#allocation2 + $0x1770] sm:$0xff]
    %v991 = vld [vmem:[#allocation2 + $0x1778] sm:$0xff]
    %v992 = vld [vmem:[#allocation2 + $0x1780] sm:$0xff]
    %v993 = vld [vmem:[#allocation2 + $0x1788] sm:$0xff]
    %v994 = vld [vmem:[#allocation2 + $0x1790] sm:$0xff]
    %v995 = vld [vmem:[#allocation2 + $0x1798] sm:$0xff]
    %v996 = vld [vmem:[#allocation2 + $0x17a0] sm:$0xff]
    %v997 = vld [vmem:[#allocation2 + $0x17a8] sm:$0xff]
    %v998 = vld [vmem:[#allocation2 + $0x17b0] sm:$0xff]
    %v999 = vld [vmem:[#allocation2 + $0x17b8] sm:$0xff]
    %v1000 = vld [vmem:[#allocation2 + $0x17c0] sm:$0xff]
    %v1001 = vld [vmem:[#allocation2 + $0x17c8] sm:$0xff]
    %v1002 = vld [vmem:[#allocation2 + $0x17d0] sm:$0xff]
    %v1003 = vld [vmem:[#allocation2 + $0x17d8] sm:$0xff]
    %v1004 = vld [vmem:[#allocation2 + $0x17e0] sm:$0xff]
    %v1005 = vld [vmem:[#allocation2 + $0x17e8] sm:$0xff]
    %v1006 = vld [vmem:[#allocation2 + $0x17f0] sm:$0xff]
    %v1007 = vld [vmem:[#allocation2 + $0x17f8] sm:$0xff]
    %v1008 = vld [vmem:[#allocation2 + $0x1800] sm:$0xff]
    %v1009 = vld [vmem:[#allocation2 + $0x1808] sm:$0xff]
    %v1010 = vld [vmem:[#allocation2 + $0x1810] sm:$0xff]
    %v1011 = vld [vmem:[#allocation2 + $0x1818] sm:$0xff]
    %v1012 = vld [vmem:[#allocation2 + $0x1820] sm:$0xff]
    %v1013 = vld [vmem:[#allocation2 + $0x1828] sm:$0xff]
    %v1014 = vld [vmem:[#allocation2 + $0x1830] sm:$0xff]
    %v1015 = vld [vmem:[#allocation2 + $0x1838] sm:$0xff]
    %v1016 = vld [vmem:[#allocation2 + $0x1840] sm:$0xff]
    %v1017 = vld [vmem:[#allocation2 + $0x1848] sm:$0xff]
    %v1018 = vld [vmem:[#allocation2 + $0x1850] sm:$0xff]
    %v1019 = vld [vmem:[#allocation2 + $0x1858] sm:$0xff]
    %v1020 = vld [vmem:[#allocation2 + $0x1860] sm:$0xff]
    %v1021 = vld [vmem:[#allocation2 + $0x1868] sm:$0xff]
    %v1022 = vld [vmem:[#allocation2 + $0x1870] sm:$0xff]
    %v1023 = vld [vmem:[#allocation2 + $0x1878] sm:$0xff]
    %v1024 = vld [vmem:[#allocation2 + $0x1880] sm:$0xff]
    %v1025 = vld [vmem:[#allocation2 + $0x1888] sm:$0xff]
    %v1026 = vld [vmem:[#allocation2 + $0x1890] sm:$0xff]
    %v1027 = vld [vmem:[#allocation2 + $0x1898] sm:$0xff]
    %v1028 = vld [vmem:[#allocation2 + $0x18a0] sm:$0xff]
    %v1029 = vld [vmem:[#allocation2 + $0x18a8] sm:$0xff]
    %v1030 = vld [vmem:[#allocation2 + $0x18b0] sm:$0xff]
    %v1031 = vld [vmem:[#allocation2 + $0x18b8] sm:$0xff]
    %v1032 = vld [vmem:[#allocation2 + $0x18c0] sm:$0xff]
    %v1033 = vld [vmem:[#allocation2 + $0x18c8] sm:$0xff]
    %v1034 = vld [vmem:[#allocation2 + $0x18d0] sm:$0xff]
    %v1035 = vld [vmem:[#allocation2 + $0x18d8] sm:$0xff]
    %v1036 = vld [vmem:[#allocation2 + $0x18e0] sm:$0xff]
    %v1037 = vld [vmem:[#allocation2 + $0x18e8] sm:$0xff]
    %v1038 = vld [vmem:[#allocation2 + $0x18f0] sm:$0xff]
    %v1039 = vld [vmem:[#allocation2 + $0x18f8] sm:$0xff]
    %v1040 = vld [vmem:[#allocation2 + $0x1900] sm:$0xff]
    %v1041 = vld [vmem:[#allocation2 + $0x1908] sm:$0xff]
    %v1042 = vld [vmem:[#allocation2 + $0x1910] sm:$0xff]
    %v1043 = vld [vmem:[#allocation2 + $0x1918] sm:$0xff]
    %v1044 = vld [vmem:[#allocation2 + $0x1920] sm:$0xff]
    %v1045 = vld [vmem:[#allocation2 + $0x1928] sm:$0xff]
    %v1046 = vld [vmem:[#allocation2 + $0x1930] sm:$0xff]
    %v1047 = vld [vmem:[#allocation2 + $0x1938] sm:$0xff]
    %v1048 = vld [vmem:[#allocation2 + $0x1940] sm:$0xff]
    %v1049 = vld [vmem:[#allocation2 + $0x1948] sm:$0xff]
    %v1050 = vld [vmem:[#allocation2 + $0x1950] sm:$0xff]
    %v1051 = vld [vmem:[#allocation2 + $0x1958] sm:$0xff]
    %v1052 = vld [vmem:[#allocation2 + $0x1960] sm:$0xff]
    %v1053 = vld [vmem:[#allocation2 + $0x1968] sm:$0xff]
    %v1054 = vld [vmem:[#allocation2 + $0x1970] sm:$0xff]
    %v1055 = vld [vmem:[#allocation2 + $0x1978] sm:$0xff]
    %v1056 = vld [vmem:[#allocation2 + $0x1980] sm:$0xff]
    %v1057 = vld [vmem:[#allocation2 + $0x1988] sm:$0xff]
    %v1058 = vld [vmem:[#allocation2 + $0x1990] sm:$0xff]
    %v1059 = vld [vmem:[#allocation2 + $0x1998] sm:$0xff]
    %v1060 = vld [vmem:[#allocation2 + $0x19a0] sm:$0xff]
    %v1061 = vld [vmem:[#allocation2 + $0x19a8] sm:$0xff]
    %v1062 = vld [vmem:[#allocation2 + $0x19b0] sm:$0xff]
    %v1063 = vld [vmem:[#allocation2 + $0x19b8] sm:$0xff]
    %v1064 = vld [vmem:[#allocation2 + $0x19c0] sm:$0xff]
    %v1065 = vld [vmem:[#allocation2 + $0x19c8] sm:$0xff]
    %v1066 = vld [vmem:[#allocation2 + $0x19d0] sm:$0xff]
    %v1067 = vld [vmem:[#allocation2 + $0x19d8] sm:$0xff]
    %v1068 = vld [vmem:[#allocation2 + $0x19e0] sm:$0xff]
    %v1069 = vld [vmem:[#allocation2 + $0x19e8] sm:$0xff]
    %v1070 = vld [vmem:[#allocation2 + $0x19f0] sm:$0xff]
    %v1071 = vld [vmem:[#allocation2 + $0x19f8] sm:$0xff]
    %v1072 = vld [vmem:[#allocation2 + $0x1a00] sm:$0xff]
    %v1073 = vld [vmem:[#allocation2 + $0x1a08] sm:$0xff]
    %v1074 = vld [vmem:[#allocation2 + $0x1a10] sm:$0xff]
    %v1075 = vld [vmem:[#allocation2 + $0x1a18] sm:$0xff]
    %v1076 = vld [vmem:[#allocation2 + $0x1a20] sm:$0xff]
    %v1077 = vld [vmem:[#allocation2 + $0x1a28] sm:$0xff]
    %v1078 = vld [vmem:[#allocation2 + $0x1a30] sm:$0xff]
    %v1079 = vld [vmem:[#allocation2 + $0x1a38] sm:$0xff]
    %v1080 = vld [vmem:[#allocation2 + $0x1a40] sm:$0xff]
    %v1081 = vld [vmem:[#allocation2 + $0x1a48] sm:$0xff]
    %v1082 = vld [vmem:[#allocation2 + $0x1a50] sm:$0xff]
    %v1083 = vld [vmem:[#allocation2 + $0x1a58] sm:$0xff]
    %v1084 = vld [vmem:[#allocation2 + $0x1a60] sm:$0xff]
    %v1085 = vld [vmem:[#allocation2 + $0x1a68] sm:$0xff]
    %v1086 = vld [vmem:[#allocation2 + $0x1a70] sm:$0xff]
    %v1087 = vld [vmem:[#allocation2 + $0x1a78] sm:$0xff]
    %v1088 = vld [vmem:[#allocation2 + $0x1a80] sm:$0xff]
    %v1089 = vld [vmem:[#allocation2 + $0x1a88] sm:$0xff]
    %v1090 = vld [vmem:[#allocation2 + $0x1a90] sm:$0xff]
    %v1091 = vld [vmem:[#allocation2 + $0x1a98] sm:$0xff]
    %v1092 = vld [vmem:[#allocation2 + $0x1aa0] sm:$0xff]
    %v1093 = vld [vmem:[#allocation2 + $0x1aa8] sm:$0xff]
    %v1094 = vld [vmem:[#allocation2 + $0x1ab0] sm:$0xff]
    %v1095 = vld [vmem:[#allocation2 + $0x1ab8] sm:$0xff]
    %v1096 = vld [vmem:[#allocation2 + $0x1ac0] sm:$0xff]
    %v1097 = vld [vmem:[#allocation2 + $0x1ac8] sm:$0xff]
    %v1098 = vld [vmem:[#allocation2 + $0x1ad0] sm:$0xff]
    %v1099 = vld [vmem:[#allocation2 + $0x1ad8] sm:$0xff]
    %v1100 = vld [vmem:[#allocation2 + $0x1ae0] sm:$0xff]
    %v1101 = vld [vmem:[#allocation2 + $0x1ae8] sm:$0xff]
    %v1102 = vld [vmem:[#allocation2 + $0x1af0] sm:$0xff]
    %v1103 = vld [vmem:[#allocation2 + $0x1af8] sm:$0xff]
    %v1104 = vld [vmem:[#allocation2 + $0x1b00] sm:$0xff]
    %v1105 = vld [vmem:[#allocation2 + $0x1b08] sm:$0xff]
    %v1106 = vld [vmem:[#allocation2 + $0x1b10] sm:$0xff]
    %v1107 = vld [vmem:[#allocation2 + $0x1b18] sm:$0xff]
    %v1108 = vld [vmem:[#allocation2 + $0x1b20] sm:$0xff]
    %v1109 = vld [vmem:[#allocation2 + $0x1b28] sm:$0xff]
    %v1110 = vld [vmem:[#allocation2 + $0x1b30] sm:$0xff]
    %v1111 = vld [vmem:[#allocation2 + $0x1b38] sm:$0xff]
    %v1112 = vld [vmem:[#allocation2 + $0x1b40] sm:$0xff]
    %v1113 = vld [vmem:[#allocation2 + $0x1b48] sm:$0xff]
    %v1114 = vld [vmem:[#allocation2 + $0x1b50] sm:$0xff]
    %v1115 = vld [vmem:[#allocation2 + $0x1b58] sm:$0xff]
    %v1116 = vld [vmem:[#allocation2 + $0x1b60] sm:$0xff]
    %v1117 = vld [vmem:[#allocation2 + $0x1b68] sm:$0xff]
    %v1118 = vld [vmem:[#allocation2 + $0x1b70] sm:$0xff]
    %v1119 = vld [vmem:[#allocation2 + $0x1b78] sm:$0xff]
    %v1120 = vld [vmem:[#allocation2 + $0x1b80] sm:$0xff]
    %v1121 = vld [vmem:[#allocation2 + $0x1b88] sm:$0xff]
    %v1122 = vld [vmem:[#allocation2 + $0x1b90] sm:$0xff]
    %v1123 = vld [vmem:[#allocation2 + $0x1b98] sm:$0xff]
    %v1124 = vld [vmem:[#allocation2 + $0x1ba0] sm:$0xff]
    %v1125 = vld [vmem:[#allocation2 + $0x1ba8] sm:$0xff]
    %v1126 = vld [vmem:[#allocation2 + $0x1bb0] sm:$0xff]
    %v1127 = vld [vmem:[#allocation2 + $0x1bb8] sm:$0xff]
    %v1128 = vld [vmem:[#allocation2 + $0x1bc0] sm:$0xff]
    %v1129 = vld [vmem:[#allocation2 + $0x1bc8] sm:$0xff]
    %v1130 = vld [vmem:[#allocation2 + $0x1bd0] sm:$0xff]
    %v1131 = vld [vmem:[#allocation2 + $0x1bd8] sm:$0xff]
    %v1132 = vld [vmem:[#allocation2 + $0x1be0] sm:$0xff]
    %v1133 = vld [vmem:[#allocation2 + $0x1be8] sm:$0xff]
    %v1134 = vld [vmem:[#allocation2 + $0x1bf0] sm:$0xff]
    %v1135 = vld [vmem:[#allocation2 + $0x1bf8] sm:$0xff]
    %v1136 = vld [vmem:[#allocation2 + $0x1c00] sm:$0xff]
    %v1137 = vld [vmem:[#allocation2 + $0x1c08] sm:$0xff]
    %v1138 = vld [vmem:[#allocation2 + $0x1c10] sm:$0xff]
    %v1139 = vld [vmem:[#allocation2 + $0x1c18] sm:$0xff]
    %v1140 = vld [vmem:[#allocation2 + $0x1c20] sm:$0xff]
    %v1141 = vld [vmem:[#allocation2 + $0x1c28] sm:$0xff]
    %v1142 = vld [vmem:[#allocation2 + $0x1c30] sm:$0xff]
    %v1143 = vld [vmem:[#allocation2 + $0x1c38] sm:$0xff]
    %v1144 = vld [vmem:[#allocation2 + $0x1c40] sm:$0xff]
    %v1145 = vld [vmem:[#allocation2 + $0x1c48] sm:$0xff]
    %v1146 = vld [vmem:[#allocation2 + $0x1c50] sm:$0xff]
    %v1147 = vld [vmem:[#allocation2 + $0x1c58] sm:$0xff]
    %v1148 = vld [vmem:[#allocation2 + $0x1c60] sm:$0xff]
    %v1149 = vld [vmem:[#allocation2 + $0x1c68] sm:$0xff]
    %v1150 = vld [vmem:[#allocation2 + $0x1c70] sm:$0xff]
    %v1151 = vld [vmem:[#allocation2 + $0x1c78] sm:$0xff]
    %v1152 = vld [vmem:[#allocation2 + $0x1c80] sm:$0xff]
    %v1153 = vld [vmem:[#allocation2 + $0x1c88] sm:$0xff]
    %v1154 = vld [vmem:[#allocation2 + $0x1c90] sm:$0xff]
    %v1155 = vld [vmem:[#allocation2 + $0x1c98] sm:$0xff]
    %v1156 = vld [vmem:[#allocation2 + $0x1ca0] sm:$0xff]
    %v1157 = vld [vmem:[#allocation2 + $0x1ca8] sm:$0xff]
    %v1158 = vld [vmem:[#allocation2 + $0x1cb0] sm:$0xff]
    %v1159 = vld [vmem:[#allocation2 + $0x1cb8] sm:$0xff]
    %v1160 = vld [vmem:[#allocation2 + $0x1cc0] sm:$0xff]
    %v1161 = vld [vmem:[#allocation2 + $0x1cc8] sm:$0xff]
    %v1162 = vld [vmem:[#allocation2 + $0x1cd0] sm:$0xff]
    %v1163 = vld [vmem:[#allocation2 + $0x1cd8] sm:$0xff]
    %v1164 = vld [vmem:[#allocation2 + $0x1ce0] sm:$0xff]
    %v1165 = vld [vmem:[#allocation2 + $0x1ce8] sm:$0xff]
    %v1166 = vld [vmem:[#allocation2 + $0x1cf0] sm:$0xff]
    %v1167 = vld [vmem:[#allocation2 + $0x1cf8] sm:$0xff]
    %v1168 = vld [vmem:[#allocation2 + $0x1d00] sm:$0xff]
    %v1169 = vld [vmem:[#allocation2 + $0x1d08] sm:$0xff]
    %v1170 = vld [vmem:[#allocation2 + $0x1d10] sm:$0xff]
    %v1171 = vld [vmem:[#allocation2 + $0x1d18] sm:$0xff]
    %v1172 = vld [vmem:[#allocation2 + $0x1d20] sm:$0xff]
    %v1173 = vld [vmem:[#allocation2 + $0x1d28] sm:$0xff]
    %v1174 = vld [vmem:[#allocation2 + $0x1d30] sm:$0xff]
    %v1175 = vld [vmem:[#allocation2 + $0x1d38] sm:$0xff]
    %v1176 = vld [vmem:[#allocation2 + $0x1d40] sm:$0xff]
    %v1177 = vld [vmem:[#allocation2 + $0x1d48] sm:$0xff]
    %v1178 = vld [vmem:[#allocation2 + $0x1d50] sm:$0xff]
    %v1179 = vld [vmem:[#allocation2 + $0x1d58] sm:$0xff]
    %v1180 = vld [vmem:[#allocation2 + $0x1d60] sm:$0xff]
    %v1181 = vld [vmem:[#allocation2 + $0x1d68] sm:$0xff]
    %v1182 = vld [vmem:[#allocation2 + $0x1d70] sm:$0xff]
    %v1183 = vld [vmem:[#allocation2 + $0x1d78] sm:$0xff]
    %v1184 = vld [vmem:[#allocation2 + $0x1d80] sm:$0xff]
    %v1185 = vld [vmem:[#allocation2 + $0x1d88] sm:$0xff]
    %v1186 = vld [vmem:[#allocation2 + $0x1d90] sm:$0xff]
    %v1187 = vld [vmem:[#allocation2 + $0x1d98] sm:$0xff]
    %v1188 = vld [vmem:[#allocation2 + $0x1da0] sm:$0xff]
    %v1189 = vld [vmem:[#allocation2 + $0x1da8] sm:$0xff]
    %v1190 = vld [vmem:[#allocation2 + $0x1db0] sm:$0xff]
    %v1191 = vld [vmem:[#allocation2 + $0x1db8] sm:$0xff]
    %v1192 = vld [vmem:[#allocation2 + $0x1dc0] sm:$0xff]
    %v1193 = vld [vmem:[#allocation2 + $0x1dc8] sm:$0xff]
    %v1194 = vld [vmem:[#allocation2 + $0x1dd0] sm:$0xff]
    %v1195 = vld [vmem:[#allocation2 + $0x1dd8] sm:$0xff]
    %v1196 = vld [vmem:[#allocation2 + $0x1de0] sm:$0xff]
    %v1197 = vld [vmem:[#allocation2 + $0x1de8] sm:$0xff]
    %v1198 = vld [vmem:[#allocation2 + $0x1df0] sm:$0xff]
    %v1199 = vld [vmem:[#allocation2 + $0x1df8] sm:$0xff]
    %v1200 = vld [vmem:[#allocation2 + $0x1e00] sm:$0xff]
    %v1201 = vld [vmem:[#allocation2 + $0x1e08] sm:$0xff]
    %v1202 = vld [vmem:[#allocation2 + $0x1e10] sm:$0xff]
    %v1203 = vld [vmem:[#allocation2 + $0x1e18] sm:$0xff]
    %v1204 = vld [vmem:[#allocation2 + $0x1e20] sm:$0xff]
    %v1205 = vld [vmem:[#allocation2 + $0x1e28] sm:$0xff]
    %v1206 = vld [vmem:[#allocation2 + $0x1e30] sm:$0xff]
    %v1207 = vld [vmem:[#allocation2 + $0x1e38] sm:$0xff]
    %v1208 = vld [vmem:[#allocation2 + $0x1e40] sm:$0xff]
    %v1209 = vld [vmem:[#allocation2 + $0x1e48] sm:$0xff]
    %v1210 = vld [vmem:[#allocation2 + $0x1e50] sm:$0xff]
    %v1211 = vld [vmem:[#allocation2 + $0x1e58] sm:$0xff]
    %v1212 = vld [vmem:[#allocation2 + $0x1e60] sm:$0xff]
    %v1213 = vld [vmem:[#allocation2 + $0x1e68] sm:$0xff]
    %v1214 = vld [vmem:[#allocation2 + $0x1e70] sm:$0xff]
    %v1215 = vld [vmem:[#allocation2 + $0x1e78] sm:$0xff]
    %v1216 = vld [vmem:[#allocation2 + $0x1e80] sm:$0xff]
    %v1217 = vld [vmem:[#allocation2 + $0x1e88] sm:$0xff]
    %v1218 = vld [vmem:[#allocation2 + $0x1e90] sm:$0xff]
    %v1219 = vld [vmem:[#allocation2 + $0x1e98] sm:$0xff]
    %v1220 = vld [vmem:[#allocation2 + $0x1ea0] sm:$0xff]
    %v1221 = vld [vmem:[#allocation2 + $0x1ea8] sm:$0xff]
    %v1222 = vld [vmem:[#allocation2 + $0x1eb0] sm:$0xff]
    %v1223 = vld [vmem:[#allocation2 + $0x1eb8] sm:$0xff]
    %v1224 = vld [vmem:[#allocation2 + $0x1ec0] sm:$0xff]
    %v1225 = vld [vmem:[#allocation2 + $0x1ec8] sm:$0xff]
    %v1226 = vld [vmem:[#allocation2 + $0x1ed0] sm:$0xff]
    %v1227 = vld [vmem:[#allocation2 + $0x1ed8] sm:$0xff]
    %v1228 = vld [vmem:[#allocation2 + $0x1ee0] sm:$0xff]
    %v1229 = vld [vmem:[#allocation2 + $0x1ee8] sm:$0xff]
    %v1230 = vld [vmem:[#allocation2 + $0x1ef0] sm:$0xff]
    %v1231 = vld [vmem:[#allocation2 + $0x1ef8] sm:$0xff]
    %v1232 = vld [vmem:[#allocation2 + $0x1f00] sm:$0xff]
    %v1233 = vld [vmem:[#allocation2 + $0x1f08] sm:$0xff]
    %v1234 = vld [vmem:[#allocation2 + $0x1f10] sm:$0xff]
    %v1235 = vld [vmem:[#allocation2 + $0x1f18] sm:$0xff]
    %v1236 = vld [vmem:[#allocation2 + $0x1f20] sm:$0xff]
    %v1237 = vld [vmem:[#allocation2 + $0x1f28] sm:$0xff]
    %v1238 = vld [vmem:[#allocation2 + $0x1f30] sm:$0xff]
    %v1239 = vld [vmem:[#allocation2 + $0x1f38] sm:$0xff]
    %v1240 = vld [vmem:[#allocation2 + $0x1f40] sm:$0xff]
    %v1241 = vld [vmem:[#allocation2 + $0x1f48] sm:$0xff]
    %v1242 = vld [vmem:[#allocation2 + $0x1f50] sm:$0xff]
    %v1243 = vld [vmem:[#allocation2 + $0x1f58] sm:$0xff]
    %v1244 = vld [vmem:[#allocation2 + $0x1f60] sm:$0xff]
    %v1245 = vld [vmem:[#allocation2 + $0x1f68] sm:$0xff]
    %v1246 = vld [vmem:[#allocation2 + $0x1f70] sm:$0xff]
    %v1247 = vld [vmem:[#allocation2 + $0x1f78] sm:$0xff]
    %v1248 = vld [vmem:[#allocation2 + $0x1f80] sm:$0xff]
    %v1249 = vld [vmem:[#allocation2 + $0x1f88] sm:$0xff]
    %v1250 = vld [vmem:[#allocation2 + $0x1f90] sm:$0xff]
    %v1251 = vld [vmem:[#allocation2 + $0x1f98] sm:$0xff]
    %v1252 = vld [vmem:[#allocation2 + $0x1fa0] sm:$0xff]
    %v1253 = vld [vmem:[#allocation2 + $0x1fa8] sm:$0xff]
    %v1254 = vld [vmem:[#allocation2 + $0x1fb0] sm:$0xff]
    %v1255 = vld [vmem:[#allocation2 + $0x1fb8] sm:$0xff]
    %v1256 = vld [vmem:[#allocation2 + $0x1fc0] sm:$0xff]
    %v1257 = vld [vmem:[#allocation2 + $0x1fc8] sm:$0xff]
    %v1258 = vld [vmem:[#allocation2 + $0x1fd0] sm:$0xff]
    %v1259 = vld [vmem:[#allocation2 + $0x1fd8] sm:$0xff]
    %v1260 = vld [vmem:[#allocation2 + $0x1fe0] sm:$0xff]
    %v1261 = vld [vmem:[#allocation2 + $0x1fe8] sm:$0xff]
    %v1262 = vld [vmem:[#allocation2 + $0x1ff0] sm:$0xff]
    %v1263 = vld [vmem:[#allocation2 + $0x1ff8] sm:$0xff]
    %v1264 = vld [vmem:[#allocation2 + $0x2000] sm:$0xff]
    %v1265 = vld [vmem:[#allocation2 + $0x2008] sm:$0xff]
    %v1266 = vld [vmem:[#allocation2 + $0x2010] sm:$0xff]
    %v1267 = vld [vmem:[#allocation2 + $0x2018] sm:$0xff]
    %v1268 = vld [vmem:[#allocation2 + $0x2020] sm:$0xff]
    %v1269 = vld [vmem:[#allocation2 + $0x2028] sm:$0xff]
    %v1270 = vld [vmem:[#allocation2 + $0x2030] sm:$0xff]
    %v1271 = vld [vmem:[#allocation2 + $0x2038] sm:$0xff]
    %v1272 = vld [vmem:[#allocation2 + $0x2040] sm:$0xff]
    %v1273 = vld [vmem:[#allocation2 + $0x2048] sm:$0xff]
    %v1274 = vld [vmem:[#allocation2 + $0x2050] sm:$0xff]
    %v1275 = vld [vmem:[#allocation2 + $0x2058] sm:$0xff]
    %v1276 = vld [vmem:[#allocation2 + $0x2060] sm:$0xff]
    %v1277 = vld [vmem:[#allocation2 + $0x2068] sm:$0xff]
    %v1278 = vld [vmem:[#allocation2 + $0x2070] sm:$0xff]
    %v1279 = vld [vmem:[#allocation2 + $0x2078] sm:$0xff]
    %v1280 = vld [vmem:[#allocation2 + $0x2080] sm:$0xff]
    %v1281 = vld [vmem:[#allocation2 + $0x2088] sm:$0xff]
    %v1282 = vld [vmem:[#allocation2 + $0x2090] sm:$0xff]
    %v1283 = vld [vmem:[#allocation2 + $0x2098] sm:$0xff]
    %v1284 = vld [vmem:[#allocation2 + $0x20a0] sm:$0xff]
    %v1285 = vld [vmem:[#allocation2 + $0x20a8] sm:$0xff]
    %v1286 = vld [vmem:[#allocation2 + $0x20b0] sm:$0xff]
    %v1287 = vld [vmem:[#allocation2 + $0x20b8] sm:$0xff]
    %v1288 = vld [vmem:[#allocation2 + $0x20c0] sm:$0xff]
    %v1289 = vld [vmem:[#allocation2 + $0x20c8] sm:$0xff]
    %v1290 = vld [vmem:[#allocation2 + $0x20d0] sm:$0xff]
    %v1291 = vld [vmem:[#allocation2 + $0x20d8] sm:$0xff]
    %v1292 = vld [vmem:[#allocation2 + $0x20e0] sm:$0xff]
    %v1293 = vld [vmem:[#allocation2 + $0x20e8] sm:$0xff]
    %v1294 = vld [vmem:[#allocation2 + $0x20f0] sm:$0xff]
    %v1295 = vld [vmem:[#allocation2 + $0x20f8] sm:$0xff]
    %v1296 = vld [vmem:[#allocation2 + $0x2100] sm:$0xff]
    %v1297 = vld [vmem:[#allocation2 + $0x2108] sm:$0xff]
    %v1298 = vld [vmem:[#allocation2 + $0x2110] sm:$0xff]
    %v1299 = vld [vmem:[#allocation2 + $0x2118] sm:$0xff]
    %v1300 = vld [vmem:[#allocation2 + $0x2120] sm:$0xff]
    %v1301 = vld [vmem:[#allocation2 + $0x2128] sm:$0xff]
    %v1302 = vld [vmem:[#allocation2 + $0x2130] sm:$0xff]
    %v1303 = vld [vmem:[#allocation2 + $0x2138] sm:$0xff]
    %v1304 = vld [vmem:[#allocation2 + $0x2140] sm:$0xff]
    %v1305 = vld [vmem:[#allocation2 + $0x2148] sm:$0xff]
    %v1306 = vld [vmem:[#allocation2 + $0x2150] sm:$0xff]
    %v1307 = vld [vmem:[#allocation2 + $0x2158] sm:$0xff]
    %v1308 = vld [vmem:[#allocation2 + $0x2160] sm:$0xff]
    %v1309 = vld [vmem:[#allocation2 + $0x2168] sm:$0xff]
    %v1310 = vld [vmem:[#allocation2 + $0x2170] sm:$0xff]
    %v1311 = vld [vmem:[#allocation2 + $0x2178] sm:$0xff]
    %v1312 = vld [vmem:[#allocation2 + $0x2180] sm:$0xff]
    %v1313 = vld [vmem:[#allocation2 + $0x2188] sm:$0xff]
    %v1314 = vld [vmem:[#allocation2 + $0x2190] sm:$0xff]
    %v1315 = vld [vmem:[#allocation2 + $0x2198] sm:$0xff]
    %v1316 = vld [vmem:[#allocation2 + $0x21a0] sm:$0xff]
    %v1317 = vld [vmem:[#allocation2 + $0x21a8] sm:$0xff]
    %v1318 = vld [vmem:[#allocation2 + $0x21b0] sm:$0xff]
    %v1319 = vld [vmem:[#allocation2 + $0x21b8] sm:$0xff]
    %v1320 = vld [vmem:[#allocation2 + $0x21c0] sm:$0xff]
    %v1321 = vld [vmem:[#allocation2 + $0x21c8] sm:$0xff]
    %v1322 = vld [vmem:[#allocation2 + $0x21d0] sm:$0xff]
    %v1323 = vld [vmem:[#allocation2 + $0x21d8] sm:$0xff]
    %v1324 = vld [vmem:[#allocation2 + $0x21e0] sm:$0xff]
    %v1325 = vld [vmem:[#allocation2 + $0x21e8] sm:$0xff]
    %v1326 = vld [vmem:[#allocation2 + $0x21f0] sm:$0xff]
    %v1327 = vld [vmem:[#allocation2 + $0x21f8] sm:$0xff]
    %v1328 = vld [vmem:[#allocation2 + $0x2200] sm:$0xff]
    %v1329 = vld [vmem:[#allocation2 + $0x2208] sm:$0xff]
    %v1330 = vld [vmem:[#allocation2 + $0x2210] sm:$0xff]
    %v1331 = vld [vmem:[#allocation2 + $0x2218] sm:$0xff]
    %v1332 = vld [vmem:[#allocation2 + $0x2220] sm:$0xff]
    %v1333 = vld [vmem:[#allocation2 + $0x2228] sm:$0xff]
    %v1334 = vld [vmem:[#allocation2 + $0x2230] sm:$0xff]
    %v1335 = vld [vmem:[#allocation2 + $0x2238] sm:$0xff]
    %v1336 = vld [vmem:[#allocation2 + $0x2240] sm:$0xff]
    %v1337 = vld [vmem:[#allocation2 + $0x2248] sm:$0xff]
    %v1338 = vld [vmem:[#allocation2 + $0x2250] sm:$0xff]
    %v1339 = vld [vmem:[#allocation2 + $0x2258] sm:$0xff]
    %v1340 = vld [vmem:[#allocation2 + $0x2260] sm:$0xff]
    %v1341 = vld [vmem:[#allocation2 + $0x2268] sm:$0xff]
    %v1342 = vld [vmem:[#allocation2 + $0x2270] sm:$0xff]
    %v1343 = vld [vmem:[#allocation2 + $0x2278] sm:$0xff]
    %v1344 = vld [vmem:[#allocation2 + $0x2280] sm:$0xff]
    %v1345 = vld [vmem:[#allocation2 + $0x2288] sm:$0xff]
    %v1346 = vld [vmem:[#allocation2 + $0x2290] sm:$0xff]
    %v1347 = vld [vmem:[#allocation2 + $0x2298] sm:$0xff]
    %v1348 = vld [vmem:[#allocation2 + $0x22a0] sm:$0xff]
    %v1349 = vld [vmem:[#allocation2 + $0x22a8] sm:$0xff]
    %v1350 = vld [vmem:[#allocation2 + $0x22b0] sm:$0xff]
    %v1351 = vld [vmem:[#allocation2 + $0x22b8] sm:$0xff]
    %v1352 = vld [vmem:[#allocation2 + $0x22c0] sm:$0xff]
    %v1353 = vld [vmem:[#allocation2 + $0x22c8] sm:$0xff]
    %v1354 = vld [vmem:[#allocation2 + $0x22d0] sm:$0xff]
    %v1355 = vld [vmem:[#allocation2 + $0x22d8] sm:$0xff]
    %v1356 = vld [vmem:[#allocation2 + $0x22e0] sm:$0xff]
    %v1357 = vld [vmem:[#allocation2 + $0x22e8] sm:$0xff]
    %v1358 = vld [vmem:[#allocation2 + $0x22f0] sm:$0xff]
    %v1359 = vld [vmem:[#allocation2 + $0x22f8] sm:$0xff]
    %v1360 = vld [vmem:[#allocation2 + $0x2300] sm:$0xff]
    %v1361 = vld [vmem:[#allocation2 + $0x2308] sm:$0xff]
    %v1362 = vld [vmem:[#allocation2 + $0x2310] sm:$0xff]
    %v1363 = vld [vmem:[#allocation2 + $0x2318] sm:$0xff]
    %v1364 = vld [vmem:[#allocation2 + $0x2320] sm:$0xff]
    %v1365 = vld [vmem:[#allocation2 + $0x2328] sm:$0xff]
    %v1366 = vld [vmem:[#allocation2 + $0x2330] sm:$0xff]
    %v1367 = vld [vmem:[#allocation2 + $0x2338] sm:$0xff]
    %v1368 = vld [vmem:[#allocation2 + $0x2340] sm:$0xff]
    %v1369 = vld [vmem:[#allocation2 + $0x2348] sm:$0xff]
    %v1370 = vld [vmem:[#allocation2 + $0x2350] sm:$0xff]
    %v1371 = vld [vmem:[#allocation2 + $0x2358] sm:$0xff]
    %v1372 = vld [vmem:[#allocation2 + $0x2360] sm:$0xff]
    %v1373 = vld [vmem:[#allocation2 + $0x2368] sm:$0xff]
    %v1374 = vld [vmem:[#allocation2 + $0x2370] sm:$0xff]
    %v1375 = vld [vmem:[#allocation2 + $0x2378] sm:$0xff]
    %v1376 = vld [vmem:[#allocation2 + $0x2380] sm:$0xff]
    %v1377 = vld [vmem:[#allocation2 + $0x2388] sm:$0xff]
    %v1378 = vld [vmem:[#allocation2 + $0x2390] sm:$0xff]
    %v1379 = vld [vmem:[#allocation2 + $0x2398] sm:$0xff]
    %v1380 = vld [vmem:[#allocation2 + $0x23a0] sm:$0xff]
    %v1381 = vld [vmem:[#allocation2 + $0x23a8] sm:$0xff]
    %v1382 = vld [vmem:[#allocation2 + $0x23b0] sm:$0xff]
    %v1383 = vld [vmem:[#allocation2 + $0x23b8] sm:$0xff]
    %v1384 = vld [vmem:[#allocation2 + $0x23c0] sm:$0xff]
    %v1385 = vld [vmem:[#allocation2 + $0x23c8] sm:$0xff]
    %v1386 = vld [vmem:[#allocation2 + $0x23d0] sm:$0xff]
    %v1387 = vld [vmem:[#allocation2 + $0x23d8] sm:$0xff]
    %v1388 = vld [vmem:[#allocation2 + $0x23e0] sm:$0xff]
    %v1389 = vld [vmem:[#allocation2 + $0x23e8] sm:$0xff]
    %v1390 = vld [vmem:[#allocation2 + $0x23f0] sm:$0xff]
    %v1391 = vld [vmem:[#allocation2 + $0x23f8] sm:$0xff]
    %v1392 = vld [vmem:[#allocation2 + $0x2400] sm:$0xff]
    %v1393 = vld [vmem:[#allocation2 + $0x2408] sm:$0xff]
    %v1394 = vld [vmem:[#allocation2 + $0x2410] sm:$0xff]
    %v1395 = vld [vmem:[#allocation2 + $0x2418] sm:$0xff]
    %v1396 = vld [vmem:[#allocation2 + $0x2420] sm:$0xff]
    %v1397 = vld [vmem:[#allocation2 + $0x2428] sm:$0xff]
    %v1398 = vld [vmem:[#allocation2 + $0x2430] sm:$0xff]
    %v1399 = vld [vmem:[#allocation2 + $0x2438] sm:$0xff]
    %v1400 = vld [vmem:[#allocation2 + $0x2440] sm:$0xff]
    %v1401 = vld [vmem:[#allocation2 + $0x2448] sm:$0xff]
    %v1402 = vld [vmem:[#allocation2 + $0x2450] sm:$0xff]
    %v1403 = vld [vmem:[#allocation2 + $0x2458] sm:$0xff]
    %v1404 = vld [vmem:[#allocation2 + $0x2460] sm:$0xff]
    %v1405 = vld [vmem:[#allocation2 + $0x2468] sm:$0xff]
    %v1406 = vld [vmem:[#allocation2 + $0x2470] sm:$0xff]
    %v1407 = vld [vmem:[#allocation2 + $0x2478] sm:$0xff]
    %v1408 = vld [vmem:[#allocation2 + $0x2480] sm:$0xff]
    %v1409 = vld [vmem:[#allocation2 + $0x2488] sm:$0xff]
    %v1410 = vld [vmem:[#allocation2 + $0x2490] sm:$0xff]
    %v1411 = vld [vmem:[#allocation2 + $0x2498] sm:$0xff]
    %v1412 = vld [vmem:[#allocation2 + $0x24a0] sm:$0xff]
    %v1413 = vld [vmem:[#allocation2 + $0x24a8] sm:$0xff]
    %v1414 = vld [vmem:[#allocation2 + $0x24b0] sm:$0xff]
    %v1415 = vld [vmem:[#allocation2 + $0x24b8] sm:$0xff]
    %v1416 = vld [vmem:[#allocation2 + $0x24c0] sm:$0xff]
    %v1417 = vld [vmem:[#allocation2 + $0x24c8] sm:$0xff]
    %v1418 = vld [vmem:[#allocation2 + $0x24d0] sm:$0xff]
    %v1419 = vld [vmem:[#allocation2 + $0x24d8] sm:$0xff]
    %v1420 = vld [vmem:[#allocation2 + $0x24e0] sm:$0xff]
    %v1421 = vld [vmem:[#allocation2 + $0x24e8] sm:$0xff]
    %v1422 = vld [vmem:[#allocation2 + $0x24f0] sm:$0xff]
    %v1423 = vld [vmem:[#allocation2 + $0x24f8] sm:$0xff]
    %v1424 = vld [vmem:[#allocation2 + $0x2500] sm:$0xff]
    %v1425 = vld [vmem:[#allocation2 + $0x2508] sm:$0xff]
    %v1426 = vld [vmem:[#allocation2 + $0x2510] sm:$0xff]
    %v1427 = vld [vmem:[#allocation2 + $0x2518] sm:$0xff]
    %v1428 = vld [vmem:[#allocation2 + $0x2520] sm:$0xff]
    %v1429 = vld [vmem:[#allocation2 + $0x2528] sm:$0xff]
    %v1430 = vld [vmem:[#allocation2 + $0x2530] sm:$0xff]
    %v1431 = vld [vmem:[#allocation2 + $0x2538] sm:$0xff]
    %v1432 = vld [vmem:[#allocation2 + $0x2540] sm:$0xff]
    %v1433 = vld [vmem:[#allocation2 + $0x2548] sm:$0xff]
    %v1434 = vld [vmem:[#allocation2 + $0x2550] sm:$0xff]
    %v1435 = vld [vmem:[#allocation2 + $0x2558] sm:$0xff]
    %v1436 = vld [vmem:[#allocation2 + $0x2560] sm:$0xff]
    %v1437 = vld [vmem:[#allocation2 + $0x2568] sm:$0xff]
    %v1438 = vld [vmem:[#allocation2 + $0x2570] sm:$0xff]
    %v1439 = vld [vmem:[#allocation2 + $0x2578] sm:$0xff]
    %v1440 = vld [vmem:[#allocation2 + $0x2580] sm:$0xff]
    %v1441 = vld [vmem:[#allocation2 + $0x2588] sm:$0xff]
    %v1442 = vld [vmem:[#allocation2 + $0x2590] sm:$0xff]
    %v1443 = vld [vmem:[#allocation2 + $0x2598] sm:$0xff]
    %v1444 = vld [vmem:[#allocation2 + $0x25a0] sm:$0xff]
    %v1445 = vld [vmem:[#allocation2 + $0x25a8] sm:$0xff]
    %v1446 = vld [vmem:[#allocation2 + $0x25b0] sm:$0xff]
    %v1447 = vld [vmem:[#allocation2 + $0x25b8] sm:$0xff]
    %v1448 = vld [vmem:[#allocation2 + $0x25c0] sm:$0xff]
    %v1449 = vld [vmem:[#allocation2 + $0x25c8] sm:$0xff]
    %v1450 = vld [vmem:[#allocation2 + $0x25d0] sm:$0xff]
    %v1451 = vld [vmem:[#allocation2 + $0x25d8] sm:$0xff]
    %v1452 = vld [vmem:[#allocation2 + $0x25e0] sm:$0xff]
    %v1453 = vld [vmem:[#allocation2 + $0x25e8] sm:$0xff]
    %v1454 = vld [vmem:[#allocation2 + $0x25f0] sm:$0xff]
    %v1455 = vld [vmem:[#allocation2 + $0x25f8] sm:$0xff]
    %v1456 = vld [vmem:[#allocation2 + $0x2600] sm:$0xff]
    %v1457 = vld [vmem:[#allocation2 + $0x2608] sm:$0xff]
    %v1458 = vld [vmem:[#allocation2 + $0x2610] sm:$0xff]
    %v1459 = vld [vmem:[#allocation2 + $0x2618] sm:$0xff]
    %v1460 = vld [vmem:[#allocation2 + $0x2620] sm:$0xff]
    %v1461 = vld [vmem:[#allocation2 + $0x2628] sm:$0xff]
    %v1462 = vld [vmem:[#allocation2 + $0x2630] sm:$0xff]
    %v1463 = vld [vmem:[#allocation2 + $0x2638] sm:$0xff]
    %v1464 = vld [vmem:[#allocation2 + $0x2640] sm:$0xff]
    %v1465 = vld [vmem:[#allocation2 + $0x2648] sm:$0xff]
    %v1466 = vld [vmem:[#allocation2 + $0x2650] sm:$0xff]
    %v1467 = vld [vmem:[#allocation2 + $0x2658] sm:$0xff]
    %v1468 = vld [vmem:[#allocation2 + $0x2660] sm:$0xff]
    %v1469 = vld [vmem:[#allocation2 + $0x2668] sm:$0xff]
    %v1470 = vld [vmem:[#allocation2 + $0x2670] sm:$0xff]
    %v1471 = vld [vmem:[#allocation2 + $0x2678] sm:$0xff]
    %v1472 = vld [vmem:[#allocation2 + $0x2680] sm:$0xff]
    %v1473 = vld [vmem:[#allocation2 + $0x2688] sm:$0xff]
    %v1474 = vld [vmem:[#allocation2 + $0x2690] sm:$0xff]
    %v1475 = vld [vmem:[#allocation2 + $0x2698] sm:$0xff]
    %v1476 = vld [vmem:[#allocation2 + $0x26a0] sm:$0xff]
    %v1477 = vld [vmem:[#allocation2 + $0x26a8] sm:$0xff]
    %v1478 = vld [vmem:[#allocation2 + $0x26b0] sm:$0xff]
    %v1479 = vld [vmem:[#allocation2 + $0x26b8] sm:$0xff]
    %v1480 = vld [vmem:[#allocation2 + $0x26c0] sm:$0xff]
    %v1481 = vld [vmem:[#allocation2 + $0x26c8] sm:$0xff]
    %v1482 = vld [vmem:[#allocation2 + $0x26d0] sm:$0xff]
    %v1483 = vld [vmem:[#allocation2 + $0x26d8] sm:$0xff]
    %v1484 = vld [vmem:[#allocation2 + $0x26e0] sm:$0xff]
    %v1485 = vld [vmem:[#allocation2 + $0x26e8] sm:$0xff]
    %v1486 = vld [vmem:[#allocation2 + $0x26f0] sm:$0xff]
    %v1487 = vld [vmem:[#allocation2 + $0x26f8] sm:$0xff]
    %v1488 = vld [vmem:[#allocation2 + $0x2700] sm:$0xff]
    %v1489 = vld [vmem:[#allocation2 + $0x2708] sm:$0xff]
    %v1490 = vld [vmem:[#allocation2 + $0x2710] sm:$0xff]
    %v1491 = vld [vmem:[#allocation2 + $0x2718] sm:$0xff]
    %v1492 = vld [vmem:[#allocation2 + $0x2720] sm:$0xff]
    %v1493 = vld [vmem:[#allocation2 + $0x2728] sm:$0xff]
    %v1494 = vld [vmem:[#allocation2 + $0x2730] sm:$0xff]
    %v1495 = vld [vmem:[#allocation2 + $0x2738] sm:$0xff]
    %v1496 = vld [vmem:[#allocation2 + $0x2740] sm:$0xff]
    %v1497 = vld [vmem:[#allocation2 + $0x2748] sm:$0xff]
    %v1498 = vld [vmem:[#allocation2 + $0x2750] sm:$0xff]
    %v1499 = vld [vmem:[#allocation2 + $0x2758] sm:$0xff]
    %v1500 = vld [vmem:[#allocation2 + $0x2760] sm:$0xff]
    %v1501 = vld [vmem:[#allocation2 + $0x2768] sm:$0xff]
    %v1502 = vld [vmem:[#allocation2 + $0x2770] sm:$0xff]
    %v1503 = vld [vmem:[#allocation2 + $0x2778] sm:$0xff]
    %v1504 = vld [vmem:[#allocation2 + $0x2780] sm:$0xff]
    %v1505 = vld [vmem:[#allocation2 + $0x2788] sm:$0xff]
    %v1506 = vld [vmem:[#allocation2 + $0x2790] sm:$0xff]
    %v1507 = vld [vmem:[#allocation2 + $0x2798] sm:$0xff]
    %v1508 = vld [vmem:[#allocation2 + $0x27a0] sm:$0xff]
    %v1509 = vld [vmem:[#allocation2 + $0x27a8] sm:$0xff]
    %v1510 = vld [vmem:[#allocation2 + $0x27b0] sm:$0xff]
    %v1511 = vld [vmem:[#allocation2 + $0x27b8] sm:$0xff]
    %v1512 = vld [vmem:[#allocation2 + $0x27c0] sm:$0xff]
    %v1513 = vld [vmem:[#allocation2 + $0x27c8] sm:$0xff]
    %v1514 = vld [vmem:[#allocation2 + $0x27d0] sm:$0xff]
    %v1515 = vld [vmem:[#allocation2 + $0x27d8] sm:$0xff]
    %v1516 = vld [vmem:[#allocation2 + $0x27e0] sm:$0xff]
    %v1517 = vld [vmem:[#allocation2 + $0x27e8] sm:$0xff]
    %v1518 = vld [vmem:[#allocation2 + $0x27f0] sm:$0xff]
    %v1519 = vld [vmem:[#allocation2 + $0x27f8] sm:$0xff]
    %v1520 = vld [vmem:[#allocation2 + $0x2800] sm:$0xff]
    %v1521 = vld [vmem:[#allocation2 + $0x2808] sm:$0xff]
    %v1522 = vld [vmem:[#allocation2 + $0x2810] sm:$0xff]
    %v1523 = vld [vmem:[#allocation2 + $0x2818] sm:$0xff]
    %v1524 = vld [vmem:[#allocation2 + $0x2820] sm:$0xff]
    %v1525 = vld [vmem:[#allocation2 + $0x2828] sm:$0xff]
    %v1526 = vld [vmem:[#allocation2 + $0x2830] sm:$0xff]
    %v1527 = vld [vmem:[#allocation2 + $0x2838] sm:$0xff]
    %v1528 = vld [vmem:[#allocation2 + $0x2840] sm:$0xff]
    %v1529 = vld [vmem:[#allocation2 + $0x2848] sm:$0xff]
    %v1530 = vld [vmem:[#allocation2 + $0x2850] sm:$0xff]
    %v1531 = vld [vmem:[#allocation2 + $0x2858] sm:$0xff]
    %v1532 = vld [vmem:[#allocation2 + $0x2860] sm:$0xff]
    %v1533 = vld [vmem:[#allocation2 + $0x2868] sm:$0xff]
    %v1534 = vld [vmem:[#allocation2 + $0x2870] sm:$0xff]
    %v1535 = vld [vmem:[#allocation2 + $0x2878] sm:$0xff]
    %v1536 = vld [vmem:[#allocation2 + $0x2880] sm:$0xff]
    %v1537 = vld [vmem:[#allocation2 + $0x2888] sm:$0xff]
    %v1538 = vld [vmem:[#allocation2 + $0x2890] sm:$0xff]
    %v1539 = vld [vmem:[#allocation2 + $0x2898] sm:$0xff]
    %v1540 = vld [vmem:[#allocation2 + $0x28a0] sm:$0xff]
    %v1541 = vld [vmem:[#allocation2 + $0x28a8] sm:$0xff]
    %v1542 = vld [vmem:[#allocation2 + $0x28b0] sm:$0xff]
    %v1543 = vld [vmem:[#allocation2 + $0x28b8] sm:$0xff]
    %v1544 = vld [vmem:[#allocation2 + $0x28c0] sm:$0xff]
    %v1545 = vld [vmem:[#allocation2 + $0x28c8] sm:$0xff]
    %v1546 = vld [vmem:[#allocation2 + $0x28d0] sm:$0xff]
    %v1547 = vld [vmem:[#allocation2 + $0x28d8] sm:$0xff]
    %v1548 = vld [vmem:[#allocation2 + $0x28e0] sm:$0xff]
    %v1549 = vld [vmem:[#allocation2 + $0x28e8] sm:$0xff]
    %v1550 = vld [vmem:[#allocation2 + $0x28f0] sm:$0xff]
    %v1551 = vld [vmem:[#allocation2 + $0x28f8] sm:$0xff]
    %v1552 = vld [vmem:[#allocation2 + $0x2900] sm:$0xff]
    %v1553 = vld [vmem:[#allocation2 + $0x2908] sm:$0xff]
    %v1554 = vld [vmem:[#allocation2 + $0x2910] sm:$0xff]
    %v1555 = vld [vmem:[#allocation2 + $0x2918] sm:$0xff]
    %v1556 = vld [vmem:[#allocation2 + $0x2920] sm:$0xff]
    %v1557 = vld [vmem:[#allocation2 + $0x2928] sm:$0xff]
    %v1558 = vld [vmem:[#allocation2 + $0x2930] sm:$0xff]
    %v1559 = vld [vmem:[#allocation2 + $0x2938] sm:$0xff]
    %v1560 = vld [vmem:[#allocation2 + $0x2940] sm:$0xff]
    %v1561 = vld [vmem:[#allocation2 + $0x2948] sm:$0xff]
    %v1562 = vld [vmem:[#allocation2 + $0x2950] sm:$0xff]
    %v1563 = vld [vmem:[#allocation2 + $0x2958] sm:$0xff]
    %v1564 = vld [vmem:[#allocation2 + $0x2960] sm:$0xff]
    %v1565 = vld [vmem:[#allocation2 + $0x2968] sm:$0xff]
    %v1566 = vld [vmem:[#allocation2 + $0x2970] sm:$0xff]
    %v1567 = vld [vmem:[#allocation2 + $0x2978] sm:$0xff]
    %v1568 = vld [vmem:[#allocation2 + $0x2980] sm:$0xff]
    %v1569 = vld [vmem:[#allocation2 + $0x2988] sm:$0xff]
    %v1570 = vld [vmem:[#allocation2 + $0x2990] sm:$0xff]
    %v1571 = vld [vmem:[#allocation2 + $0x2998] sm:$0xff]
    %v1572 = vld [vmem:[#allocation2 + $0x29a0] sm:$0xff]
    %v1573 = vld [vmem:[#allocation2 + $0x29a8] sm:$0xff]
    %v1574 = vld [vmem:[#allocation2 + $0x29b0] sm:$0xff]
    %v1575 = vld [vmem:[#allocation2 + $0x29b8] sm:$0xff]
    %v1576 = vld [vmem:[#allocation2 + $0x29c0] sm:$0xff]
    %v1577 = vld [vmem:[#allocation2 + $0x29c8] sm:$0xff]
    %v1578 = vld [vmem:[#allocation2 + $0x29d0] sm:$0xff]
    %v1579 = vld [vmem:[#allocation2 + $0x29d8] sm:$0xff]
    %v1580 = vld [vmem:[#allocation2 + $0x29e0] sm:$0xff]
    %v1581 = vld [vmem:[#allocation2 + $0x29e8] sm:$0xff]
    %v1582 = vld [vmem:[#allocation2 + $0x29f0] sm:$0xff]
    %v1583 = vld [vmem:[#allocation2 + $0x29f8] sm:$0xff]
    %v1584 = vld [vmem:[#allocation2 + $0x2a00] sm:$0xff]
    %v1585 = vld [vmem:[#allocation2 + $0x2a08] sm:$0xff]
    %v1586 = vld [vmem:[#allocation2 + $0x2a10] sm:$0xff]
    %v1587 = vld [vmem:[#allocation2 + $0x2a18] sm:$0xff]
    %v1588 = vld [vmem:[#allocation2 + $0x2a20] sm:$0xff]
    %v1589 = vld [vmem:[#allocation2 + $0x2a28] sm:$0xff]
    %v1590 = vld [vmem:[#allocation2 + $0x2a30] sm:$0xff]
    %v1591 = vld [vmem:[#allocation2 + $0x2a38] sm:$0xff]
    %v1592 = vld [vmem:[#allocation2 + $0x2a40] sm:$0xff]
    %v1593 = vld [vmem:[#allocation2 + $0x2a48] sm:$0xff]
    %v1594 = vld [vmem:[#allocation2 + $0x2a50] sm:$0xff]
    %v1595 = vld [vmem:[#allocation2 + $0x2a58] sm:$0xff]
    %v1596 = vld [vmem:[#allocation2 + $0x2a60] sm:$0xff]
    %v1597 = vld [vmem:[#allocation2 + $0x2a68] sm:$0xff]
    %v1598 = vld [vmem:[#allocation2 + $0x2a70] sm:$0xff]
    %v1599 = vld [vmem:[#allocation2 + $0x2a78] sm:$0xff]
    %v1600 = vld [vmem:[#allocation2 + $0x2a80] sm:$0xff]
    %v1601 = vld [vmem:[#allocation2 + $0x2a88] sm:$0xff]
    %v1602 = vld [vmem:[#allocation2 + $0x2a90] sm:$0xff]
    %v1603 = vld [vmem:[#allocation2 + $0x2a98] sm:$0xff]
    %v1604 = vld [vmem:[#allocation2 + $0x2aa0] sm:$0xff]
    %v1605 = vld [vmem:[#allocation2 + $0x2aa8] sm:$0xff]
    %v1606 = vld [vmem:[#allocation2 + $0x2ab0] sm:$0xff]
    %v1607 = vld [vmem:[#allocation2 + $0x2ab8] sm:$0xff]
    %v1608 = vld [vmem:[#allocation2 + $0x2ac0] sm:$0xff]
    %v1609 = vld [vmem:[#allocation2 + $0x2ac8] sm:$0xff]
    %v1610 = vld [vmem:[#allocation2 + $0x2ad0] sm:$0xff]
    %v1611 = vld [vmem:[#allocation2 + $0x2ad8] sm:$0xff]
    %v1612 = vld [vmem:[#allocation2 + $0x2ae0] sm:$0xff]
    %v1613 = vld [vmem:[#allocation2 + $0x2ae8] sm:$0xff]
    %v1614 = vld [vmem:[#allocation2 + $0x2af0] sm:$0xff]
    %v1615 = vld [vmem:[#allocation2 + $0x2af8] sm:$0xff]
    %v1616 = vld [vmem:[#allocation2 + $0x2b00] sm:$0xff]
    %v1617 = vld [vmem:[#allocation2 + $0x2b08] sm:$0xff]
    %v1618 = vld [vmem:[#allocation2 + $0x2b10] sm:$0xff]
    %v1619 = vld [vmem:[#allocation2 + $0x2b18] sm:$0xff]
    %v1620 = vld [vmem:[#allocation2 + $0x2b20] sm:$0xff]
    %v1621 = vld [vmem:[#allocation2 + $0x2b28] sm:$0xff]
    %v1622 = vld [vmem:[#allocation2 + $0x2b30] sm:$0xff]
    %v1623 = vld [vmem:[#allocation2 + $0x2b38] sm:$0xff]
    %v1624 = vld [vmem:[#allocation2 + $0x2b40] sm:$0xff]
    %v1625 = vld [vmem:[#allocation2 + $0x2b48] sm:$0xff]
    %v1626 = vld [vmem:[#allocation2 + $0x2b50] sm:$0xff]
    %v1627 = vld [vmem:[#allocation2 + $0x2b58] sm:$0xff]
    %v1628 = vld [vmem:[#allocation2 + $0x2b60] sm:$0xff]
    %v1629 = vld [vmem:[#allocation2 + $0x2b68] sm:$0xff]
    %v1630 = vld [vmem:[#allocation2 + $0x2b70] sm:$0xff]
    %v1631 = vld [vmem:[#allocation2 + $0x2b78] sm:$0xff]
    %v1632 = vld [vmem:[#allocation2 + $0x2b80] sm:$0xff]
    %v1633 = vld [vmem:[#allocation2 + $0x2b88] sm:$0xff]
    %v1634 = vld [vmem:[#allocation2 + $0x2b90] sm:$0xff]
    %v1635 = vld [vmem:[#allocation2 + $0x2b98] sm:$0xff]
    %v1636 = vld [vmem:[#allocation2 + $0x2ba0] sm:$0xff]
    %v1637 = vld [vmem:[#allocation2 + $0x2ba8] sm:$0xff]
    %v1638 = vld [vmem:[#allocation2 + $0x2bb0] sm:$0xff]
    %v1639 = vld [vmem:[#allocation2 + $0x2bb8] sm:$0xff]
    %v1640 = vld [vmem:[#allocation2 + $0x2bc0] sm:$0xff]
    %v1641 = vld [vmem:[#allocation2 + $0x2bc8] sm:$0xff]
    %v1642 = vld [vmem:[#allocation2 + $0x2bd0] sm:$0xff]
    %v1643 = vld [vmem:[#allocation2 + $0x2bd8] sm:$0xff]
    %v1644 = vld [vmem:[#allocation2 + $0x2be0] sm:$0xff]
    %v1645 = vld [vmem:[#allocation2 + $0x2be8] sm:$0xff]
    %v1646 = vld [vmem:[#allocation2 + $0x2bf0] sm:$0xff]
    %v1647 = vld [vmem:[#allocation2 + $0x2bf8] sm:$0xff]
    %v1648 = vld [vmem:[#allocation2 + $0x2c00] sm:$0xff]
    %v1649 = vld [vmem:[#allocation2 + $0x2c08] sm:$0xff]
    %v1650 = vld [vmem:[#allocation2 + $0x2c10] sm:$0xff]
    %v1651 = vld [vmem:[#allocation2 + $0x2c18] sm:$0xff]
    %v1652 = vld [vmem:[#allocation2 + $0x2c20] sm:$0xff]
    %v1653 = vld [vmem:[#allocation2 + $0x2c28] sm:$0xff]
    %v1654 = vld [vmem:[#allocation2 + $0x2c30] sm:$0xff]
    %v1655 = vld [vmem:[#allocation2 + $0x2c38] sm:$0xff]
    %v1656 = vld [vmem:[#allocation2 + $0x2c40] sm:$0xff]
    %v1657 = vld [vmem:[#allocation2 + $0x2c48] sm:$0xff]
    %v1658 = vld [vmem:[#allocation2 + $0x2c50] sm:$0xff]
    %v1659 = vld [vmem:[#allocation2 + $0x2c58] sm:$0xff]
    %v1660 = vld [vmem:[#allocation2 + $0x2c60] sm:$0xff]
    %v1661 = vld [vmem:[#allocation2 + $0x2c68] sm:$0xff]
    %v1662 = vld [vmem:[#allocation2 + $0x2c70] sm:$0xff]
    %v1663 = vld [vmem:[#allocation2 + $0x2c78] sm:$0xff]
    %v1664 = vld [vmem:[#allocation2 + $0x2c80] sm:$0xff]
    %v1665 = vld [vmem:[#allocation2 + $0x2c88] sm:$0xff]
    %v1666 = vld [vmem:[#allocation2 + $0x2c90] sm:$0xff]
    %v1667 = vld [vmem:[#allocation2 + $0x2c98] sm:$0xff]
    %v1668 = vld [vmem:[#allocation2 + $0x2ca0] sm:$0xff]
    %v1669 = vld [vmem:[#allocation2 + $0x2ca8] sm:$0xff]
    %v1670 = vld [vmem:[#allocation2 + $0x2cb0] sm:$0xff]
    %v1671 = vld [vmem:[#allocation2 + $0x2cb8] sm:$0xff]
    %v1672 = vld [vmem:[#allocation2 + $0x2cc0] sm:$0xff]
    %v1673 = vld [vmem:[#allocation2 + $0x2cc8] sm:$0xff]
    %v1674 = vld [vmem:[#allocation2 + $0x2cd0] sm:$0xff]
    %v1675 = vld [vmem:[#allocation2 + $0x2cd8] sm:$0xff]
    %v1676 = vld [vmem:[#allocation2 + $0x2ce0] sm:$0xff]
    %v1677 = vld [vmem:[#allocation2 + $0x2ce8] sm:$0xff]
    %v1678 = vld [vmem:[#allocation2 + $0x2cf0] sm:$0xff]
    %v1679 = vld [vmem:[#allocation2 + $0x2cf8] sm:$0xff]
    %v1680 = vld [vmem:[#allocation2 + $0x2d00] sm:$0xff]
    %v1681 = vld [vmem:[#allocation2 + $0x2d08] sm:$0xff]
    %v1682 = vld [vmem:[#allocation2 + $0x2d10] sm:$0xff]
    %v1683 = vld [vmem:[#allocation2 + $0x2d18] sm:$0xff]
    %v1684 = vld [vmem:[#allocation2 + $0x2d20] sm:$0xff]
    %v1685 = vld [vmem:[#allocation2 + $0x2d28] sm:$0xff]
    %v1686 = vld [vmem:[#allocation2 + $0x2d30] sm:$0xff]
    %v1687 = vld [vmem:[#allocation2 + $0x2d38] sm:$0xff]
    %v1688 = vld [vmem:[#allocation2 + $0x2d40] sm:$0xff]
    %v1689 = vld [vmem:[#allocation2 + $0x2d48] sm:$0xff]
    %v1690 = vld [vmem:[#allocation2 + $0x2d50] sm:$0xff]
    %v1691 = vld [vmem:[#allocation2 + $0x2d58] sm:$0xff]
    %v1692 = vld [vmem:[#allocation2 + $0x2d60] sm:$0xff]
    %v1693 = vld [vmem:[#allocation2 + $0x2d68] sm:$0xff]
    %v1694 = vld [vmem:[#allocation2 + $0x2d70] sm:$0xff]
    %v1695 = vld [vmem:[#allocation2 + $0x2d78] sm:$0xff]
    %v1696 = vld [vmem:[#allocation2 + $0x2d80] sm:$0xff]
    %v1697 = vld [vmem:[#allocation2 + $0x2d88] sm:$0xff]
    %v1698 = vld [vmem:[#allocation2 + $0x2d90] sm:$0xff]
    %v1699 = vld [vmem:[#allocation2 + $0x2d98] sm:$0xff]
    %v1700 = vld [vmem:[#allocation2 + $0x2da0] sm:$0xff]
    %v1701 = vld [vmem:[#allocation2 + $0x2da8] sm:$0xff]
    %v1702 = vld [vmem:[#allocation2 + $0x2db0] sm:$0xff]
    %v1703 = vld [vmem:[#allocation2 + $0x2db8] sm:$0xff]
    %v1704 = vld [vmem:[#allocation2 + $0x2dc0] sm:$0xff]
    %v1705 = vld [vmem:[#allocation2 + $0x2dc8] sm:$0xff]
    %v1706 = vld [vmem:[#allocation2 + $0x2dd0] sm:$0xff]
    %v1707 = vld [vmem:[#allocation2 + $0x2dd8] sm:$0xff]
    %v1708 = vld [vmem:[#allocation2 + $0x2de0] sm:$0xff]
    %v1709 = vld [vmem:[#allocation2 + $0x2de8] sm:$0xff]
    %v1710 = vld [vmem:[#allocation2 + $0x2df0] sm:$0xff]
    %v1711 = vld [vmem:[#allocation2 + $0x2df8] sm:$0xff]
    %v1712 = vld [vmem:[#allocation2 + $0x2e00] sm:$0xff]
    %v1713 = vld [vmem:[#allocation2 + $0x2e08] sm:$0xff]
    %v1714 = vld [vmem:[#allocation2 + $0x2e10] sm:$0xff]
    %v1715 = vld [vmem:[#allocation2 + $0x2e18] sm:$0xff]
    %v1716 = vld [vmem:[#allocation2 + $0x2e20] sm:$0xff]
    %v1717 = vld [vmem:[#allocation2 + $0x2e28] sm:$0xff]
    %v1718 = vld [vmem:[#allocation2 + $0x2e30] sm:$0xff]
    %v1719 = vld [vmem:[#allocation2 + $0x2e38] sm:$0xff]
    %v1720 = vld [vmem:[#allocation2 + $0x2e40] sm:$0xff]
    %v1721 = vld [vmem:[#allocation2 + $0x2e48] sm:$0xff]
    %v1722 = vld [vmem:[#allocation2 + $0x2e50] sm:$0xff]
    %v1723 = vld [vmem:[#allocation2 + $0x2e58] sm:$0xff]
    %v1724 = vld [vmem:[#allocation2 + $0x2e60] sm:$0xff]
    %v1725 = vld [vmem:[#allocation2 + $0x2e68] sm:$0xff]
    %v1726 = vld [vmem:[#allocation2 + $0x2e70] sm:$0xff]
    %v1727 = vld [vmem:[#allocation2 + $0x2e78] sm:$0xff]
    %v1728 = vld [vmem:[#allocation2 + $0x2e80] sm:$0xff]
    %v1729 = vld [vmem:[#allocation2 + $0x2e88] sm:$0xff]
    %v1730 = vld [vmem:[#allocation2 + $0x2e90] sm:$0xff]
    %v1731 = vld [vmem:[#allocation2 + $0x2e98] sm:$0xff]
    %v1732 = vld [vmem:[#allocation2 + $0x2ea0] sm:$0xff]
    %v1733 = vld [vmem:[#allocation2 + $0x2ea8] sm:$0xff]
    %v1734 = vld [vmem:[#allocation2 + $0x2eb0] sm:$0xff]
    %v1735 = vld [vmem:[#allocation2 + $0x2eb8] sm:$0xff]
    %v1736 = vld [vmem:[#allocation2 + $0x2ec0] sm:$0xff]
    %v1737 = vld [vmem:[#allocation2 + $0x2ec8] sm:$0xff]
    %v1738 = vld [vmem:[#allocation2 + $0x2ed0] sm:$0xff]
    %v1739 = vld [vmem:[#allocation2 + $0x2ed8] sm:$0xff]
    %v1740 = vld [vmem:[#allocation2 + $0x2ee0] sm:$0xff]
    %v1741 = vld [vmem:[#allocation2 + $0x2ee8] sm:$0xff]
    %v1742 = vld [vmem:[#allocation2 + $0x2ef0] sm:$0xff]
    %v1743 = vld [vmem:[#allocation2 + $0x2ef8] sm:$0xff]
    %v1744 = vld [vmem:[#allocation2 + $0x2f00] sm:$0xff]
    %v1745 = vld [vmem:[#allocation2 + $0x2f08] sm:$0xff]
    %v1746 = vld [vmem:[#allocation2 + $0x2f10] sm:$0xff]
    %v1747 = vld [vmem:[#allocation2 + $0x2f18] sm:$0xff]
    %v1748 = vld [vmem:[#allocation2 + $0x2f20] sm:$0xff]
    %v1749 = vld [vmem:[#allocation2 + $0x2f28] sm:$0xff]
    %v1750 = vld [vmem:[#allocation2 + $0x2f30] sm:$0xff]
    %v1751 = vld [vmem:[#allocation2 + $0x2f38] sm:$0xff]
    %v1752 = vld [vmem:[#allocation2 + $0x2f40] sm:$0xff]
    %v1753 = vld [vmem:[#allocation2 + $0x2f48] sm:$0xff]
    %v1754 = vld [vmem:[#allocation2 + $0x2f50] sm:$0xff]
    %v1755 = vld [vmem:[#allocation2 + $0x2f58] sm:$0xff]
    %v1756 = vld [vmem:[#allocation2 + $0x2f60] sm:$0xff]
    %v1757 = vld [vmem:[#allocation2 + $0x2f68] sm:$0xff]
    %v1758 = vld [vmem:[#allocation2 + $0x2f70] sm:$0xff]
    %v1759 = vld [vmem:[#allocation2 + $0x2f78] sm:$0xff]
    %v1760 = vld [vmem:[#allocation2 + $0x2f80] sm:$0xff]
    %v1761 = vld [vmem:[#allocation2 + $0x2f88] sm:$0xff]
    %v1762 = vld [vmem:[#allocation2 + $0x2f90] sm:$0xff]
    %v1763 = vld [vmem:[#allocation2 + $0x2f98] sm:$0xff]
    %v1764 = vld [vmem:[#allocation2 + $0x2fa0] sm:$0xff]
    %v1765 = vld [vmem:[#allocation2 + $0x2fa8] sm:$0xff]
    %v1766 = vld [vmem:[#allocation2 + $0x2fb0] sm:$0xff]
    %v1767 = vld [vmem:[#allocation2 + $0x2fb8] sm:$0xff]
    %v1768 = vld [vmem:[#allocation2 + $0x2fc0] sm:$0xff]
    %v1769 = vld [vmem:[#allocation2 + $0x2fc8] sm:$0xff]
    %v1770 = vld [vmem:[#allocation2 + $0x2fd0] sm:$0xff]
    %v1771 = vld [vmem:[#allocation2 + $0x2fd8] sm:$0xff]
    %v1772 = vld [vmem:[#allocation2 + $0x2fe0] sm:$0xff]
    %v1773 = vld [vmem:[#allocation2 + $0x2fe8] sm:$0xff]
    %v1774 = vld [vmem:[#allocation2 + $0x2ff0] sm:$0xff]
    %v1775 = vld [vmem:[#allocation2 + $0x2ff8] sm:$0xff]
    %v1776 = vld [vmem:[#allocation2 + $0x3000] sm:$0xff]
    %v1777 = vld [vmem:[#allocation2 + $0x3008] sm:$0xff]
    %v1778 = vld [vmem:[#allocation2 + $0x3010] sm:$0xff]
    %v1779 = vld [vmem:[#allocation2 + $0x3018] sm:$0xff]
    %v1780 = vld [vmem:[#allocation2 + $0x3020] sm:$0xff]
    %v1781 = vld [vmem:[#allocation2 + $0x3028] sm:$0xff]
    %v1782 = vld [vmem:[#allocation2 + $0x3030] sm:$0xff]
    %v1783 = vld [vmem:[#allocation2 + $0x3038] sm:$0xff]
    %v1784 = vld [vmem:[#allocation2 + $0x3040] sm:$0xff]
    %v1785 = vld [vmem:[#allocation2 + $0x3048] sm:$0xff]
    %v1786 = vld [vmem:[#allocation2 + $0x3050] sm:$0xff]
    %v1787 = vld [vmem:[#allocation2 + $0x3058] sm:$0xff]
    %v1788 = vld [vmem:[#allocation2 + $0x3060] sm:$0xff]
    %v1789 = vld [vmem:[#allocation2 + $0x3068] sm:$0xff]
    %v1790 = vld [vmem:[#allocation2 + $0x3070] sm:$0xff]
    %v1791 = vld [vmem:[#allocation2 + $0x3078] sm:$0xff]
    %v1792 = vld [vmem:[#allocation2 + $0x3080] sm:$0xff]
    %v1793 = vld [vmem:[#allocation2 + $0x3088] sm:$0xff]
    %v1794 = vld [vmem:[#allocation2 + $0x3090] sm:$0xff]
    %v1795 = vld [vmem:[#allocation2 + $0x3098] sm:$0xff]
    %v1796 = vld [vmem:[#allocation2 + $0x30a0] sm:$0xff]
    %v1797 = vld [vmem:[#allocation2 + $0x30a8] sm:$0xff]
    %v1798 = vld [vmem:[#allocation2 + $0x30b0] sm:$0xff]
    %v1799 = vld [vmem:[#allocation2 + $0x30b8] sm:$0xff]
    %v1800 = vld [vmem:[#allocation2 + $0x30c0] sm:$0xff]
    %v1801 = vld [vmem:[#allocation2 + $0x30c8] sm:$0xff]
    %v1802 = vld [vmem:[#allocation2 + $0x30d0] sm:$0xff]
    %v1803 = vld [vmem:[#allocation2 + $0x30d8] sm:$0xff]
    %v1804 = vld [vmem:[#allocation2 + $0x30e0] sm:$0xff]
    %v1805 = vld [vmem:[#allocation2 + $0x30e8] sm:$0xff]
    %v1806 = vld [vmem:[#allocation2 + $0x30f0] sm:$0xff]
    %v1807 = vld [vmem:[#allocation2 + $0x30f8] sm:$0xff]
    %v1808 = vld [vmem:[#allocation2 + $0x3100] sm:$0xff]
    %v1809 = vld [vmem:[#allocation2 + $0x3108] sm:$0xff]
    %v1810 = vld [vmem:[#allocation2 + $0x3110] sm:$0xff]
    %v1811 = vld [vmem:[#allocation2 + $0x3118] sm:$0xff]
    %v1812 = vld [vmem:[#allocation2 + $0x3120] sm:$0xff]
    %v1813 = vld [vmem:[#allocation2 + $0x3128] sm:$0xff]
    %v1814 = vld [vmem:[#allocation2 + $0x3130] sm:$0xff]
    %v1815 = vld [vmem:[#allocation2 + $0x3138] sm:$0xff]
    %v1816 = vld [vmem:[#allocation2 + $0x3140] sm:$0xff]
    %v1817 = vld [vmem:[#allocation2 + $0x3148] sm:$0xff]
    %v1818 = vld [vmem:[#allocation2 + $0x3150] sm:$0xff]
    %v1819 = vld [vmem:[#allocation2 + $0x3158] sm:$0xff]
    %v1820 = vld [vmem:[#allocation2 + $0x3160] sm:$0xff]
    %v1821 = vld [vmem:[#allocation2 + $0x3168] sm:$0xff]
    %v1822 = vld [vmem:[#allocation2 + $0x3170] sm:$0xff]
    %v1823 = vld [vmem:[#allocation2 + $0x3178] sm:$0xff]
    %v1824 = vld [vmem:[#allocation2 + $0x3180] sm:$0xff]
    %v1825 = vld [vmem:[#allocation2 + $0x3188] sm:$0xff]
    %v1826 = vld [vmem:[#allocation2 + $0x3190] sm:$0xff]
    %v1827 = vld [vmem:[#allocation2 + $0x3198] sm:$0xff]
    %v1828 = vld [vmem:[#allocation2 + $0x31a0] sm:$0xff]
    %v1829 = vld [vmem:[#allocation2 + $0x31a8] sm:$0xff]
    %v1830 = vld [vmem:[#allocation2 + $0x31b0] sm:$0xff]
    %v1831 = vld [vmem:[#allocation2 + $0x31b8] sm:$0xff]
    %v1832 = vld [vmem:[#allocation2 + $0x31c0] sm:$0xff]
    %v1833 = vld [vmem:[#allocation2 + $0x31c8] sm:$0xff]
    %v1834 = vld [vmem:[#allocation2 + $0x31d0] sm:$0xff]
    %v1835 = vld [vmem:[#allocation2 + $0x31d8] sm:$0xff]
    %v1836 = vld [vmem:[#allocation2 + $0x31e0] sm:$0xff]
    %v1837 = vld [vmem:[#allocation2 + $0x31e8] sm:$0xff]
    %v1838 = vld [vmem:[#allocation2 + $0x31f0] sm:$0xff]
    %v1839 = vld [vmem:[#allocation2 + $0x31f8] sm:$0xff]
    %v1840 = vld [vmem:[#allocation2 + $0x3200] sm:$0xff]
    %v1841 = vld [vmem:[#allocation2 + $0x3208] sm:$0xff]
    %v1842 = vld [vmem:[#allocation2 + $0x3210] sm:$0xff]
    %v1843 = vld [vmem:[#allocation2 + $0x3218] sm:$0xff]
    %v1844 = vld [vmem:[#allocation2 + $0x3220] sm:$0xff]
    %v1845 = vld [vmem:[#allocation2 + $0x3228] sm:$0xff]
    %v1846 = vld [vmem:[#allocation2 + $0x3230] sm:$0xff]
    %v1847 = vld [vmem:[#allocation2 + $0x3238] sm:$0xff]
    %v1848 = vld [vmem:[#allocation2 + $0x3240] sm:$0xff]
    %v1849 = vld [vmem:[#allocation2 + $0x3248] sm:$0xff]
    %v1850 = vld [vmem:[#allocation2 + $0x3250] sm:$0xff]
    %v1851 = vld [vmem:[#allocation2 + $0x3258] sm:$0xff]
    %v1852 = vld [vmem:[#allocation2 + $0x3260] sm:$0xff]
    %v1853 = vld [vmem:[#allocation2 + $0x3268] sm:$0xff]
    %v1854 = vld [vmem:[#allocation2 + $0x3270] sm:$0xff]
    %v1855 = vld [vmem:[#allocation2 + $0x3278] sm:$0xff]
    %v1856 = vld [vmem:[#allocation2 + $0x3280] sm:$0xff]
    %v1857 = vld [vmem:[#allocation2 + $0x3288] sm:$0xff]
    %v1858 = vld [vmem:[#allocation2 + $0x3290] sm:$0xff]
    %v1859 = vld [vmem:[#allocation2 + $0x3298] sm:$0xff]
    %v1860 = vld [vmem:[#allocation2 + $0x32a0] sm:$0xff]
    %v1861 = vld [vmem:[#allocation2 + $0x32a8] sm:$0xff]
    %v1862 = vld [vmem:[#allocation2 + $0x32b0] sm:$0xff]
    %v1863 = vld [vmem:[#allocation2 + $0x32b8] sm:$0xff]
    %v1864 = vld [vmem:[#allocation2 + $0x32c0] sm:$0xff]
    %v1865 = vld [vmem:[#allocation2 + $0x32c8] sm:$0xff]
    %v1866 = vld [vmem:[#allocation2 + $0x32d0] sm:$0xff]
    %v1867 = vld [vmem:[#allocation2 + $0x32d8] sm:$0xff]
    %v1868 = vld [vmem:[#allocation2 + $0x32e0] sm:$0xff]
    %v1869 = vld [vmem:[#allocation2 + $0x32e8] sm:$0xff]
    %v1870 = vld [vmem:[#allocation2 + $0x32f0] sm:$0xff]
    %v1871 = vld [vmem:[#allocation2 + $0x32f8] sm:$0xff]
    %v1872 = vld [vmem:[#allocation2 + $0x3300] sm:$0xff]
    %v1873 = vld [vmem:[#allocation2 + $0x3308] sm:$0xff]
    %v1874 = vld [vmem:[#allocation2 + $0x3310] sm:$0xff]
    %v1875 = vld [vmem:[#allocation2 + $0x3318] sm:$0xff]
    %v1876 = vld [vmem:[#allocation2 + $0x3320] sm:$0xff]
    %v1877 = vld [vmem:[#allocation2 + $0x3328] sm:$0xff]
    %v1878 = vld [vmem:[#allocation2 + $0x3330] sm:$0xff]
    %v1879 = vld [vmem:[#allocation2 + $0x3338] sm:$0xff]
    %v1880 = vld [vmem:[#allocation2 + $0x3340] sm:$0xff]
    %v1881 = vld [vmem:[#allocation2 + $0x3348] sm:$0xff]
    %v1882 = vld [vmem:[#allocation2 + $0x3350] sm:$0xff]
    %v1883 = vld [vmem:[#allocation2 + $0x3358] sm:$0xff]
    %v1884 = vld [vmem:[#allocation2 + $0x3360] sm:$0xff]
    %v1885 = vld [vmem:[#allocation2 + $0x3368] sm:$0xff]
    %v1886 = vld [vmem:[#allocation2 + $0x3370] sm:$0xff]
    %v1887 = vld [vmem:[#allocation2 + $0x3378] sm:$0xff]
    %v1888 = vld [vmem:[#allocation2 + $0x3380] sm:$0xff]
    %v1889 = vld [vmem:[#allocation2 + $0x3388] sm:$0xff]
    %v1890 = vld [vmem:[#allocation2 + $0x3390] sm:$0xff]
    %v1891 = vld [vmem:[#allocation2 + $0x3398] sm:$0xff]
    %v1892 = vld [vmem:[#allocation2 + $0x33a0] sm:$0xff]
    %v1893 = vld [vmem:[#allocation2 + $0x33a8] sm:$0xff]
    %v1894 = vld [vmem:[#allocation2 + $0x33b0] sm:$0xff]
    %v1895 = vld [vmem:[#allocation2 + $0x33b8] sm:$0xff]
    %v1896 = vld [vmem:[#allocation2 + $0x33c0] sm:$0xff]
    %v1897 = vld [vmem:[#allocation2 + $0x33c8] sm:$0xff]
    %v1898 = vld [vmem:[#allocation2 + $0x33d0] sm:$0xff]
    %v1899 = vld [vmem:[#allocation2 + $0x33d8] sm:$0xff]
    %v1900 = vld [vmem:[#allocation2 + $0x33e0] sm:$0xff]
    %v1901 = vld [vmem:[#allocation2 + $0x33e8] sm:$0xff]
    %v1902 = vld [vmem:[#allocation2 + $0x33f0] sm:$0xff]
    %v1903 = vld [vmem:[#allocation2 + $0x33f8] sm:$0xff]
    %v1904 = vld [vmem:[#allocation2 + $0x3400] sm:$0xff]
    %v1905 = vld [vmem:[#allocation2 + $0x3408] sm:$0xff]
    %v1906 = vld [vmem:[#allocation2 + $0x3410] sm:$0xff]
    %v1907 = vld [vmem:[#allocation2 + $0x3418] sm:$0xff]
    %v1908 = vld [vmem:[#allocation2 + $0x3420] sm:$0xff]
    %v1909 = vld [vmem:[#allocation2 + $0x3428] sm:$0xff]
    %v1910 = vld [vmem:[#allocation2 + $0x3430] sm:$0xff]
    %v1911 = vld [vmem:[#allocation2 + $0x3438] sm:$0xff]
    %v1912 = vld [vmem:[#allocation2 + $0x3440] sm:$0xff]
    %v1913 = vld [vmem:[#allocation2 + $0x3448] sm:$0xff]
    %v1914 = vld [vmem:[#allocation2 + $0x3450] sm:$0xff]
    %v1915 = vld [vmem:[#allocation2 + $0x3458] sm:$0xff]
    %v1916 = vld [vmem:[#allocation2 + $0x3460] sm:$0xff]
    %v1917 = vld [vmem:[#allocation2 + $0x3468] sm:$0xff]
    %v1918 = vld [vmem:[#allocation2 + $0x3470] sm:$0xff]
    %v1919 = vld [vmem:[#allocation2 + $0x3478] sm:$0xff]
    %v1920 = vld [vmem:[#allocation2 + $0x3480] sm:$0xff]
    %v1921 = vld [vmem:[#allocation2 + $0x3488] sm:$0xff]
    %v1922 = vld [vmem:[#allocation2 + $0x3490] sm:$0xff]
    %v1923 = vld [vmem:[#allocation2 + $0x3498] sm:$0xff]
    %v1924 = vld [vmem:[#allocation2 + $0x34a0] sm:$0xff]
    %v1925 = vld [vmem:[#allocation2 + $0x34a8] sm:$0xff]
    %v1926 = vld [vmem:[#allocation2 + $0x34b0] sm:$0xff]
    %v1927 = vld [vmem:[#allocation2 + $0x34b8] sm:$0xff]
    %v1928 = vld [vmem:[#allocation2 + $0x34c0] sm:$0xff]
    %v1929 = vld [vmem:[#allocation2 + $0x34c8] sm:$0xff]
    %v1930 = vld [vmem:[#allocation2 + $0x34d0] sm:$0xff]
    %v1931 = vld [vmem:[#allocation2 + $0x34d8] sm:$0xff]
    %v1932 = vld [vmem:[#allocation2 + $0x34e0] sm:$0xff]
    %v1933 = vld [vmem:[#allocation2 + $0x34e8] sm:$0xff]
    %v1934 = vld [vmem:[#allocation2 + $0x34f0] sm:$0xff]
    %v1935 = vld [vmem:[#allocation2 + $0x34f8] sm:$0xff]
    %v1936 = vld [vmem:[#allocation2 + $0x3500] sm:$0xff]
    %v1937 = vld [vmem:[#allocation2 + $0x3508] sm:$0xff]
    %v1938 = vld [vmem:[#allocation2 + $0x3510] sm:$0xff]
    %v1939 = vld [vmem:[#allocation2 + $0x3518] sm:$0xff]
    %v1940 = vld [vmem:[#allocation2 + $0x3520] sm:$0xff]
    %v1941 = vld [vmem:[#allocation2 + $0x3528] sm:$0xff]
    %v1942 = vld [vmem:[#allocation2 + $0x3530] sm:$0xff]
    %v1943 = vld [vmem:[#allocation2 + $0x3538] sm:$0xff]
    %v1944 = vld [vmem:[#allocation2 + $0x3540] sm:$0xff]
    %v1945 = vld [vmem:[#allocation2 + $0x3548] sm:$0xff]
    %v1946 = vld [vmem:[#allocation2 + $0x3550] sm:$0xff]
    %v1947 = vld [vmem:[#allocation2 + $0x3558] sm:$0xff]
    %v1948 = vld [vmem:[#allocation2 + $0x3560] sm:$0xff]
    %v1949 = vld [vmem:[#allocation2 + $0x3568] sm:$0xff]
    %v1950 = vld [vmem:[#allocation2 + $0x3570] sm:$0xff]
    %v1951 = vld [vmem:[#allocation2 + $0x3578] sm:$0xff]
    %v1952 = vld [vmem:[#allocation2 + $0x3580] sm:$0xff]
    %v1953 = vld [vmem:[#allocation2 + $0x3588] sm:$0xff]
    %v1954 = vld [vmem:[#allocation2 + $0x3590] sm:$0xff]
    %v1955 = vld [vmem:[#allocation2 + $0x3598] sm:$0xff]
    %v1956 = vld [vmem:[#allocation2 + $0x35a0] sm:$0xff]
    %v1957 = vld [vmem:[#allocation2 + $0x35a8] sm:$0xff]
    %v1958 = vld [vmem:[#allocation2 + $0x35b0] sm:$0xff]
    %v1959 = vld [vmem:[#allocation2 + $0x35b8] sm:$0xff]
    %v1960 = vld [vmem:[#allocation2 + $0x35c0] sm:$0xff]
    %v1961 = vld [vmem:[#allocation2 + $0x35c8] sm:$0xff]
    %v1962 = vld [vmem:[#allocation2 + $0x35d0] sm:$0xff]
    %v1963 = vld [vmem:[#allocation2 + $0x35d8] sm:$0xff]
    %v1964 = vld [vmem:[#allocation2 + $0x35e0] sm:$0xff]
    %v1965 = vld [vmem:[#allocation2 + $0x35e8] sm:$0xff]
    %v1966 = vld [vmem:[#allocation2 + $0x35f0] sm:$0xff]
    %v1967 = vld [vmem:[#allocation2 + $0x35f8] sm:$0xff]
    %v1968 = vld [vmem:[#allocation2 + $0x3600] sm:$0xff]
    %v1969 = vld [vmem:[#allocation2 + $0x3608] sm:$0xff]
    %v1970 = vld [vmem:[#allocation2 + $0x3610] sm:$0xff]
    %v1971 = vld [vmem:[#allocation2 + $0x3618] sm:$0xff]
    %v1972 = vld [vmem:[#allocation2 + $0x3620] sm:$0xff]
    %v1973 = vld [vmem:[#allocation2 + $0x3628] sm:$0xff]
    %v1974 = vld [vmem:[#allocation2 + $0x3630] sm:$0xff]
    %v1975 = vld [vmem:[#allocation2 + $0x3638] sm:$0xff]
    %v1976 = vld [vmem:[#allocation2 + $0x3640] sm:$0xff]
    %v1977 = vld [vmem:[#allocation2 + $0x3648] sm:$0xff]
    %v1978 = vld [vmem:[#allocation2 + $0x3650] sm:$0xff]
    %v1979 = vld [vmem:[#allocation2 + $0x3658] sm:$0xff]
    %v1980 = vld [vmem:[#allocation2 + $0x3660] sm:$0xff]
    %v1981 = vld [vmem:[#allocation2 + $0x3668] sm:$0xff]
    %v1982 = vld [vmem:[#allocation2 + $0x3670] sm:$0xff]
    %v1983 = vld [vmem:[#allocation2 + $0x3678] sm:$0xff]
    %v1984 = vld [vmem:[#allocation2 + $0x3680] sm:$0xff]
    %v1985 = vld [vmem:[#allocation2 + $0x3688] sm:$0xff]
    %v1986 = vld [vmem:[#allocation2 + $0x3690] sm:$0xff]
    %v1987 = vld [vmem:[#allocation2 + $0x3698] sm:$0xff]
    %v1988 = vld [vmem:[#allocation2 + $0x36a0] sm:$0xff]
    %v1989 = vld [vmem:[#allocation2 + $0x36a8] sm:$0xff]
    %v1990 = vld [vmem:[#allocation2 + $0x36b0] sm:$0xff]
    %v1991 = vld [vmem:[#allocation2 + $0x36b8] sm:$0xff]
    %v1992 = vld [vmem:[#allocation2 + $0x36c0] sm:$0xff]
    %v1993 = vld [vmem:[#allocation2 + $0x36c8] sm:$0xff]
    %v1994 = vld [vmem:[#allocation2 + $0x36d0] sm:$0xff]
    %v1995 = vld [vmem:[#allocation2 + $0x36d8] sm:$0xff]
    %v1996 = vld [vmem:[#allocation2 + $0x36e0] sm:$0xff]
    %v1997 = vld [vmem:[#allocation2 + $0x36e8] sm:$0xff]
    %v1998 = vld [vmem:[#allocation2 + $0x36f0] sm:$0xff]
    %v1999 = vld [vmem:[#allocation2 + $0x36f8] sm:$0xff]
    %v2000 = vld [vmem:[#allocation2 + $0x3700] sm:$0xff]
    %v2001 = vld [vmem:[#allocation2 + $0x3708] sm:$0xff]
    %v2002 = vld [vmem:[#allocation2 + $0x3710] sm:$0xff]
    %v2003 = vld [vmem:[#allocation2 + $0x3718] sm:$0xff]
    %v2004 = vld [vmem:[#allocation2 + $0x3720] sm:$0xff]
    %v2005 = vld [vmem:[#allocation2 + $0x3728] sm:$0xff]
    %v2006 = vld [vmem:[#allocation2 + $0x3730] sm:$0xff]
    %v2007 = vld [vmem:[#allocation2 + $0x3738] sm:$0xff]
    %v2008 = vld [vmem:[#allocation2 + $0x3740] sm:$0xff]
    %v2009 = vld [vmem:[#allocation2 + $0x3748] sm:$0xff]
    %v2010 = vld [vmem:[#allocation2 + $0x3750] sm:$0xff]
    %v2011 = vld [vmem:[#allocation2 + $0x3758] sm:$0xff]
    %v2012 = vld [vmem:[#allocation2 + $0x3760] sm:$0xff]
    %v2013 = vld [vmem:[#allocation2 + $0x3768] sm:$0xff]
    %v2014 = vld [vmem:[#allocation2 + $0x3770] sm:$0xff]
    %v2015 = vld [vmem:[#allocation2 + $0x3778] sm:$0xff]
    %v2016 = vld [vmem:[#allocation2 + $0x3780] sm:$0xff]
    %v2017 = vld [vmem:[#allocation2 + $0x3788] sm:$0xff]
    %v2018 = vld [vmem:[#allocation2 + $0x3790] sm:$0xff]
    %v2019 = vld [vmem:[#allocation2 + $0x3798] sm:$0xff]
    %v2020 = vld [vmem:[#allocation2 + $0x37a0] sm:$0xff]
    %v2021 = vld [vmem:[#allocation2 + $0x37a8] sm:$0xff]
    %v2022 = vld [vmem:[#allocation2 + $0x37b0] sm:$0xff]
    %v2023 = vld [vmem:[#allocation2 + $0x37b8] sm:$0xff]
    %v2024 = vld [vmem:[#allocation2 + $0x37c0] sm:$0xff]
    %v2025 = vld [vmem:[#allocation2 + $0x37c8] sm:$0xff]
    %v2026 = vld [vmem:[#allocation2 + $0x37d0] sm:$0xff]
    %v2027 = vld [vmem:[#allocation2 + $0x37d8] sm:$0xff]
    %v2028 = vld [vmem:[#allocation2 + $0x37e0] sm:$0xff]
    %v2029 = vld [vmem:[#allocation2 + $0x37e8] sm:$0xff]
    %v2030 = vld [vmem:[#allocation2 + $0x37f0] sm:$0xff]
    %v2031 = vld [vmem:[#allocation2 + $0x37f8] sm:$0xff]
    %v2032 = vld [vmem:[#allocation2 + $0x3800] sm:$0xff]
    %v2033 = vld [vmem:[#allocation2 + $0x3808] sm:$0xff]
    %v2034 = vld [vmem:[#allocation2 + $0x3810] sm:$0xff]
    %v2035 = vld [vmem:[#allocation2 + $0x3818] sm:$0xff]
    %v2036 = vld [vmem:[#allocation2 + $0x3820] sm:$0xff]
    %v2037 = vld [vmem:[#allocation2 + $0x3828] sm:$0xff]
    %v2038 = vld [vmem:[#allocation2 + $0x3830] sm:$0xff]
    %v2039 = vld [vmem:[#allocation2 + $0x3838] sm:$0xff]
    %v2040 = vld [vmem:[#allocation2 + $0x3840] sm:$0xff]
    %v2041 = vld [vmem:[#allocation2 + $0x3848] sm:$0xff]
    %v2042 = vld [vmem:[#allocation2 + $0x3850] sm:$0xff]
    %v2043 = vld [vmem:[#allocation2 + $0x3858] sm:$0xff]
    %v2044 = vld [vmem:[#allocation2 + $0x3860] sm:$0xff]
    %v2045 = vld [vmem:[#allocation2 + $0x3868] sm:$0xff]
    %v2046 = vld [vmem:[#allocation2 + $0x3870] sm:$0xff]
    %v2047 = vld [vmem:[#allocation2 + $0x3878] sm:$0xff]
    %v2048 = vld [vmem:[#allocation2 + $0x3880] sm:$0xff]
    %v2049 = vld [vmem:[#allocation2 + $0x3888] sm:$0xff]
    %v2050 = vld [vmem:[#allocation2 + $0x3890] sm:$0xff]
    %v2051 = vld [vmem:[#allocation2 + $0x3898] sm:$0xff]
    %v2052 = vld [vmem:[#allocation2 + $0x38a0] sm:$0xff]
    %v2053 = vld [vmem:[#allocation2 + $0x38a8] sm:$0xff]
    %v2054 = vld [vmem:[#allocation2 + $0x38b0] sm:$0xff]
    %v2055 = vld [vmem:[#allocation2 + $0x38b8] sm:$0xff]
    %v2056 = vld [vmem:[#allocation2 + $0x38c0] sm:$0xff]
    %v2057 = vld [vmem:[#allocation2 + $0x38c8] sm:$0xff]
    %v2058 = vld [vmem:[#allocation2 + $0x38d0] sm:$0xff]
    %v2059 = vld [vmem:[#allocation2 + $0x38d8] sm:$0xff]
    %v2060 = vld [vmem:[#allocation2 + $0x38e0] sm:$0xff]
    %v2061 = vld [vmem:[#allocation2 + $0x38e8] sm:$0xff]
    %v2062 = vld [vmem:[#allocation2 + $0x38f0] sm:$0xff]
    %v2063 = vld [vmem:[#allocation2 + $0x38f8] sm:$0xff]
    %v2064 = vld [vmem:[#allocation2 + $0x3900] sm:$0xff]
    %v2065 = vld [vmem:[#allocation2 + $0x3908] sm:$0xff]
    %v2066 = vld [vmem:[#allocation2 + $0x3910] sm:$0xff]
    %v2067 = vld [vmem:[#allocation2 + $0x3918] sm:$0xff]
    %v2068 = vld [vmem:[#allocation2 + $0x3920] sm:$0xff]
    %v2069 = vld [vmem:[#allocation2 + $0x3928] sm:$0xff]
    %v2070 = vld [vmem:[#allocation2 + $0x3930] sm:$0xff]
    %v2071 = vld [vmem:[#allocation2 + $0x3938] sm:$0xff]
    %v2072 = vld [vmem:[#allocation2 + $0x3940] sm:$0xff]
    %v2073 = vld [vmem:[#allocation2 + $0x3948] sm:$0xff]
    %v2074 = vld [vmem:[#allocation2 + $0x3950] sm:$0xff]
    %v2075 = vld [vmem:[#allocation2 + $0x3958] sm:$0xff]
    %v2076 = vld [vmem:[#allocation2 + $0x3960] sm:$0xff]
    %v2077 = vld [vmem:[#allocation2 + $0x3968] sm:$0xff]
    %v2078 = vld [vmem:[#allocation2 + $0x3970] sm:$0xff]
    %v2079 = vld [vmem:[#allocation2 + $0x3978] sm:$0xff]
    %v2080 = vld [vmem:[#allocation2 + $0x3980] sm:$0xff]
    %v2081 = vld [vmem:[#allocation2 + $0x3988] sm:$0xff]
    %v2082 = vld [vmem:[#allocation2 + $0x3990] sm:$0xff]
    %v2083 = vld [vmem:[#allocation2 + $0x3998] sm:$0xff]
    %v2084 = vld [vmem:[#allocation2 + $0x39a0] sm:$0xff]
    %v2085 = vld [vmem:[#allocation2 + $0x39a8] sm:$0xff]
    %v2086 = vld [vmem:[#allocation2 + $0x39b0] sm:$0xff]
    %v2087 = vld [vmem:[#allocation2 + $0x39b8] sm:$0xff]
    %v2088 = vld [vmem:[#allocation2 + $0x39c0] sm:$0xff]
    %v2089 = vld [vmem:[#allocation2 + $0x39c8] sm:$0xff]
    %v2090 = vld [vmem:[#allocation2 + $0x39d0] sm:$0xff]
    %v2091 = vld [vmem:[#allocation2 + $0x39d8] sm:$0xff]
    %v2092 = vld [vmem:[#allocation2 + $0x39e0] sm:$0xff]
    %v2093 = vld [vmem:[#allocation2 + $0x39e8] sm:$0xff]
    %v2094 = vld [vmem:[#allocation2 + $0x39f0] sm:$0xff]
    %v2095 = vld [vmem:[#allocation2 + $0x39f8] sm:$0xff]
    %v2096 = vld [vmem:[#allocation2 + $0x3a00] sm:$0xff]
    %v2097 = vld [vmem:[#allocation2 + $0x3a08] sm:$0xff]
    %v2098 = vld [vmem:[#allocation2 + $0x3a10] sm:$0xff]
    %v2099 = vld [vmem:[#allocation2 + $0x3a18] sm:$0xff]
    %v2100 = vld [vmem:[#allocation2 + $0x3a20] sm:$0xff]
    %v2101 = vld [vmem:[#allocation2 + $0x3a28] sm:$0xff]
    %v2102 = vld [vmem:[#allocation2 + $0x3a30] sm:$0xff]
    %v2103 = vld [vmem:[#allocation2 + $0x3a38] sm:$0xff]
    %v2104 = vld [vmem:[#allocation2 + $0x3a40] sm:$0xff]
    %v2105 = vld [vmem:[#allocation2 + $0x3a48] sm:$0xff]
    %v2106 = vld [vmem:[#allocation2 + $0x3a50] sm:$0xff]
    %v2107 = vld [vmem:[#allocation2 + $0x3a58] sm:$0xff]
    %v2108 = vld [vmem:[#allocation2 + $0x3a60] sm:$0xff]
    %v2109 = vld [vmem:[#allocation2 + $0x3a68] sm:$0xff]
    %v2110 = vld [vmem:[#allocation2 + $0x3a70] sm:$0xff]
    %v2111 = vld [vmem:[#allocation2 + $0x3a78] sm:$0xff]
    %v2112 = vld [vmem:[#allocation2 + $0x3a80] sm:$0xff]
    %v2113 = vld [vmem:[#allocation2 + $0x3a88] sm:$0xff]
    %v2114 = vld [vmem:[#allocation2 + $0x3a90] sm:$0xff]
    %v2115 = vld [vmem:[#allocation2 + $0x3a98] sm:$0xff]
    %v2116 = vld [vmem:[#allocation2 + $0x3aa0] sm:$0xff]
    %v2117 = vld [vmem:[#allocation2 + $0x3aa8] sm:$0xff]
    %v2118 = vld [vmem:[#allocation2 + $0x3ab0] sm:$0xff]
    %v2119 = vld [vmem:[#allocation2 + $0x3ab8] sm:$0xff]
    %v2120 = vld [vmem:[#allocation2 + $0x3ac0] sm:$0xff]
    %v2121 = vld [vmem:[#allocation2 + $0x3ac8] sm:$0xff]
    %v2122 = vld [vmem:[#allocation2 + $0x3ad0] sm:$0xff]
    %v2123 = vld [vmem:[#allocation2 + $0x3ad8] sm:$0xff]
    %v2124 = vld [vmem:[#allocation2 + $0x3ae0] sm:$0xff]
    %v2125 = vld [vmem:[#allocation2 + $0x3ae8] sm:$0xff]
    %v2126 = vld [vmem:[#allocation2 + $0x3af0] sm:$0xff]
    %v2127 = vld [vmem:[#allocation2 + $0x3af8] sm:$0xff]
    %v2128 = vld [vmem:[#allocation2 + $0x3b00] sm:$0xff]
    %v2129 = vld [vmem:[#allocation2 + $0x3b08] sm:$0xff]
    %v2130 = vld [vmem:[#allocation2 + $0x3b10] sm:$0xff]
    %v2131 = vld [vmem:[#allocation2 + $0x3b18] sm:$0xff]
    %v2132 = vld [vmem:[#allocation2 + $0x3b20] sm:$0xff]
    %v2133 = vld [vmem:[#allocation2 + $0x3b28] sm:$0xff]
    %v2134 = vld [vmem:[#allocation2 + $0x3b30] sm:$0xff]
    %v2135 = vld [vmem:[#allocation2 + $0x3b38] sm:$0xff]
    %v2136 = vld [vmem:[#allocation2 + $0x3b40] sm:$0xff]
    %v2137 = vld [vmem:[#allocation2 + $0x3b48] sm:$0xff]
    %v2138 = vld [vmem:[#allocation2 + $0x3b50] sm:$0xff]
    %v2139 = vld [vmem:[#allocation2 + $0x3b58] sm:$0xff]
    %v2140 = vld [vmem:[#allocation2 + $0x3b60] sm:$0xff]
    %v2141 = vld [vmem:[#allocation2 + $0x3b68] sm:$0xff]
    %v2142 = vld [vmem:[#allocation2 + $0x3b70] sm:$0xff]
    %v2143 = vld [vmem:[#allocation2 + $0x3b78] sm:$0xff]
    %v2144 = vld [vmem:[#allocation2 + $0x3b80] sm:$0xff]
    %v2145 = vld [vmem:[#allocation2 + $0x3b88] sm:$0xff]
    %v2146 = vld [vmem:[#allocation2 + $0x3b90] sm:$0xff]
    %v2147 = vld [vmem:[#allocation2 + $0x3b98] sm:$0xff]
    %v2148 = vld [vmem:[#allocation2 + $0x3ba0] sm:$0xff]
    %v2149 = vld [vmem:[#allocation2 + $0x3ba8] sm:$0xff]
    %v2150 = vld [vmem:[#allocation2 + $0x3bb0] sm:$0xff]
    %v2151 = vld [vmem:[#allocation2 + $0x3bb8] sm:$0xff]
    %v2152 = vld [vmem:[#allocation2 + $0x3bc0] sm:$0xff]
    %v2153 = vld [vmem:[#allocation2 + $0x3bc8] sm:$0xff]
    %v2154 = vld [vmem:[#allocation2 + $0x3bd0] sm:$0xff]
    %v2155 = vld [vmem:[#allocation2 + $0x3bd8] sm:$0xff]
    %v2156 = vld [vmem:[#allocation2 + $0x3be0] sm:$0xff]
    %v2157 = vld [vmem:[#allocation2 + $0x3be8] sm:$0xff]
    %v2158 = vld [vmem:[#allocation2 + $0x3bf0] sm:$0xff]
    %v2159 = vld [vmem:[#allocation2 + $0x3bf8] sm:$0xff]
    %v2160 = vld [vmem:[#allocation2 + $0x3c00] sm:$0xff]
    %v2161 = vld [vmem:[#allocation2 + $0x3c08] sm:$0xff]
    %v2162 = vld [vmem:[#allocation2 + $0x3c10] sm:$0xff]
    %v2163 = vld [vmem:[#allocation2 + $0x3c18] sm:$0xff]
    %v2164 = vld [vmem:[#allocation2 + $0x3c20] sm:$0xff]
    %v2165 = vld [vmem:[#allocation2 + $0x3c28] sm:$0xff]
    %v2166 = vld [vmem:[#allocation2 + $0x3c30] sm:$0xff]
    %v2167 = vld [vmem:[#allocation2 + $0x3c38] sm:$0xff]
    %v2168 = vld [vmem:[#allocation2 + $0x3c40] sm:$0xff]
    %v2169 = vld [vmem:[#allocation2 + $0x3c48] sm:$0xff]
    %v2170 = vld [vmem:[#allocation2 + $0x3c50] sm:$0xff]
    %v2171 = vld [vmem:[#allocation2 + $0x3c58] sm:$0xff]
    %v2172 = vld [vmem:[#allocation2 + $0x3c60] sm:$0xff]
    %v2173 = vld [vmem:[#allocation2 + $0x3c68] sm:$0xff]
    %v2174 = vld [vmem:[#allocation2 + $0x3c70] sm:$0xff]
    %v2175 = vld [vmem:[#allocation2 + $0x3c78] sm:$0xff]
    %v2176 = vld [vmem:[#allocation2 + $0x3c80] sm:$0xff]
    %v2177 = vld [vmem:[#allocation2 + $0x3c88] sm:$0xff]
    %v2178 = vld [vmem:[#allocation2 + $0x3c90] sm:$0xff]
    %v2179 = vld [vmem:[#allocation2 + $0x3c98] sm:$0xff]
    %v2180 = vld [vmem:[#allocation2 + $0x3ca0] sm:$0xff]
    %v2181 = vld [vmem:[#allocation2 + $0x3ca8] sm:$0xff]
    %v2182 = vld [vmem:[#allocation2 + $0x3cb0] sm:$0xff]
    %v2183 = vld [vmem:[#allocation2 + $0x3cb8] sm:$0xff]
    %v2184 = vld [vmem:[#allocation2 + $0x3cc0] sm:$0xff]
    %v2185 = vld [vmem:[#allocation2 + $0x3cc8] sm:$0xff]
    %v2186 = vld [vmem:[#allocation2 + $0x3cd0] sm:$0xff]
    %v2187 = vld [vmem:[#allocation2 + $0x3cd8] sm:$0xff]
    %v2188 = vld [vmem:[#allocation2 + $0x3ce0] sm:$0xff]
    %v2189 = vld [vmem:[#allocation2 + $0x3ce8] sm:$0xff]
    %v2190 = vld [vmem:[#allocation2 + $0x3cf0] sm:$0xff]
    %v2191 = vld [vmem:[#allocation2 + $0x3cf8] sm:$0xff]
    %v2192 = vld [vmem:[#allocation2 + $0x3d00] sm:$0xff]
    %v2193 = vld [vmem:[#allocation2 + $0x3d08] sm:$0xff]
    %v2194 = vld [vmem:[#allocation2 + $0x3d10] sm:$0xff]
    %v2195 = vld [vmem:[#allocation2 + $0x3d18] sm:$0xff]
    %v2196 = vld [vmem:[#allocation2 + $0x3d20] sm:$0xff]
    %v2197 = vld [vmem:[#allocation2 + $0x3d28] sm:$0xff]
    %v2198 = vld [vmem:[#allocation2 + $0x3d30] sm:$0xff]
    %v2199 = vld [vmem:[#allocation2 + $0x3d38] sm:$0xff]
    %v2200 = vld [vmem:[#allocation2 + $0x3d40] sm:$0xff]
    %v2201 = vld [vmem:[#allocation2 + $0x3d48] sm:$0xff]
    %v2202 = vld [vmem:[#allocation2 + $0x3d50] sm:$0xff]
    %v2203 = vld [vmem:[#allocation2 + $0x3d58] sm:$0xff]
    %v2204 = vld [vmem:[#allocation2 + $0x3d60] sm:$0xff]
    %v2205 = vld [vmem:[#allocation2 + $0x3d68] sm:$0xff]
    %v2206 = vld [vmem:[#allocation2 + $0x3d70] sm:$0xff]
    %v2207 = vld [vmem:[#allocation2 + $0x3d78] sm:$0xff]
    %v2208 = vld [vmem:[#allocation2 + $0x3d80] sm:$0xff]
    %v2209 = vld [vmem:[#allocation2 + $0x3d88] sm:$0xff]
    %v2210 = vld [vmem:[#allocation2 + $0x3d90] sm:$0xff]
    %v2211 = vld [vmem:[#allocation2 + $0x3d98] sm:$0xff]
    %v2212 = vld [vmem:[#allocation2 + $0x3da0] sm:$0xff]
    %v2213 = vld [vmem:[#allocation2 + $0x3da8] sm:$0xff]
    %v2214 = vld [vmem:[#allocation2 + $0x3db0] sm:$0xff]
    %v2215 = vld [vmem:[#allocation2 + $0x3db8] sm:$0xff]
    %v2216 = vld [vmem:[#allocation2 + $0x3dc0] sm:$0xff]
    %v2217 = vld [vmem:[#allocation2 + $0x3dc8] sm:$0xff]
    %v2218 = vld [vmem:[#allocation2 + $0x3dd0] sm:$0xff]
    %v2219 = vld [vmem:[#allocation2 + $0x3dd8] sm:$0xff]
    %v2220 = vld [vmem:[#allocation2 + $0x3de0] sm:$0xff]
    %v2221 = vld [vmem:[#allocation2 + $0x3de8] sm:$0xff]
    %v2222 = vld [vmem:[#allocation2 + $0x3df0] sm:$0xff]
    %v2223 = vld [vmem:[#allocation2 + $0x3df8] sm:$0xff]
    %v2224 = vld [vmem:[#allocation2 + $0x3e00] sm:$0xff]
    %v2225 = vld [vmem:[#allocation2 + $0x3e08] sm:$0xff]
    %v2226 = vld [vmem:[#allocation2 + $0x3e10] sm:$0xff]
    %v2227 = vld [vmem:[#allocation2 + $0x3e18] sm:$0xff]
    %v2228 = vld [vmem:[#allocation2 + $0x3e20] sm:$0xff]
    %v2229 = vld [vmem:[#allocation2 + $0x3e28] sm:$0xff]
    %v2230 = vld [vmem:[#allocation2 + $0x3e30] sm:$0xff]
    %v2231 = vld [vmem:[#allocation2 + $0x3e38] sm:$0xff]
    %v2232 = vld [vmem:[#allocation2 + $0x3e40] sm:$0xff]
    %v2233 = vld [vmem:[#allocation2 + $0x3e48] sm:$0xff]
    %v2234 = vld [vmem:[#allocation2 + $0x3e50] sm:$0xff]
    %v2235 = vld [vmem:[#allocation2 + $0x3e58] sm:$0xff]
    %v2236 = vld [vmem:[#allocation2 + $0x3e60] sm:$0xff]
    %v2237 = vld [vmem:[#allocation2 + $0x3e68] sm:$0xff]
    %v2238 = vld [vmem:[#allocation2 + $0x3e70] sm:$0xff]
    %v2239 = vld [vmem:[#allocation2 + $0x3e78] sm:$0xff]
    %v2240 = vld [vmem:[#allocation2 + $0x3e80] sm:$0xff]
    %v2241 = vld [vmem:[#allocation2 + $0x3e88] sm:$0xff]
    %v2242 = vld [vmem:[#allocation2 + $0x3e90] sm:$0xff]
    %v2243 = vld [vmem:[#allocation2 + $0x3e98] sm:$0xff]
    %v2244 = vld [vmem:[#allocation2 + $0x3ea0] sm:$0xff]
    %v2245 = vld [vmem:[#allocation2 + $0x3ea8] sm:$0xff]
    %v2246 = vld [vmem:[#allocation2 + $0x3eb0] sm:$0xff]
    %v2247 = vld [vmem:[#allocation2 + $0x3eb8] sm:$0xff]
    %v2248 = vld [vmem:[#allocation2 + $0x3ec0] sm:$0xff]
    %v2249 = vld [vmem:[#allocation2 + $0x3ec8] sm:$0xff]
    %v2250 = vld [vmem:[#allocation2 + $0x3ed0] sm:$0xff]
    %v2251 = vld [vmem:[#allocation2 + $0x3ed8] sm:$0xff]
    %v2252 = vld [vmem:[#allocation2 + $0x3ee0] sm:$0xff]
    %v2253 = vld [vmem:[#allocation2 + $0x3ee8] sm:$0xff]
    %v2254 = vld [vmem:[#allocation2 + $0x3ef0] sm:$0xff]
    %v2255 = vld [vmem:[#allocation2 + $0x3ef8] sm:$0xff]
    %v2256 = vld [vmem:[#allocation2 + $0x3f00] sm:$0xff]
    %v2257 = vld [vmem:[#allocation2 + $0x3f08] sm:$0xff]
    %v2258 = vld [vmem:[#allocation2 + $0x3f10] sm:$0xff]
    %v2259 = vld [vmem:[#allocation2 + $0x3f18] sm:$0xff]
    %v2260 = vld [vmem:[#allocation2 + $0x3f20] sm:$0xff]
    %v2261 = vld [vmem:[#allocation2 + $0x3f28] sm:$0xff]
    %v2262 = vld [vmem:[#allocation2 + $0x3f30] sm:$0xff]
    %v2263 = vld [vmem:[#allocation2 + $0x3f38] sm:$0xff]
    %v2264 = vld [vmem:[#allocation2 + $0x3f40] sm:$0xff]
    %v2265 = vld [vmem:[#allocation2 + $0x3f48] sm:$0xff]
    %v2266 = vld [vmem:[#allocation2 + $0x3f50] sm:$0xff]
    %v2267 = vld [vmem:[#allocation2 + $0x3f58] sm:$0xff]
    %v2268 = vld [vmem:[#allocation2 + $0x3f60] sm:$0xff]
    %v2269 = vld [vmem:[#allocation2 + $0x3f68] sm:$0xff]
    %v2270 = vld [vmem:[#allocation2 + $0x3f70] sm:$0xff]
    %v2271 = vld [vmem:[#allocation2 + $0x3f78] sm:$0xff]
    %v2272 = vld [vmem:[#allocation2 + $0x3f80] sm:$0xff]
    %v2273 = vld [vmem:[#allocation2 + $0x3f88] sm:$0xff]
    %v2274 = vld [vmem:[#allocation2 + $0x3f90] sm:$0xff]
    %v2275 = vld [vmem:[#allocation2 + $0x3f98] sm:$0xff]
    %v2276 = vld [vmem:[#allocation2 + $0x3fa0] sm:$0xff]
    %v2277 = vld [vmem:[#allocation2 + $0x3fa8] sm:$0xff]
    %v2278 = vld [vmem:[#allocation2 + $0x3fb0] sm:$0xff]
    %v2279 = vld [vmem:[#allocation2 + $0x3fb8] sm:$0xff]
    %v2280 = vld [vmem:[#allocation2 + $0x3fc0] sm:$0xff]
    %v2281 = vld [vmem:[#allocation2 + $0x3fc8] sm:$0xff]
    %v2282 = vld [vmem:[#allocation2 + $0x3fd0] sm:$0xff]
    %v2283 = vld [vmem:[#allocation2 + $0x3fd8] sm:$0xff]
    %v2284 = vld [vmem:[#allocation2 + $0x3fe0] sm:$0xff]
    %v2285 = vld [vmem:[#allocation2 + $0x3fe8] sm:$0xff]
    %v2286 = vld [vmem:[#allocation2 + $0x3ff0] sm:$0xff]
    %v2287 = vld [vmem:[#allocation2 + $0x3ff8] sm:$0xff]
    %v2288 = vld [vmem:[#allocation2 + $0x4000] sm:$0xff]
    %v2289 = vld [vmem:[#allocation2 + $0x4008] sm:$0xff]
    %v2290 = vld [vmem:[#allocation2 + $0x4010] sm:$0xff]
    %v2291 = vld [vmem:[#allocation2 + $0x4018] sm:$0xff]
    %v2292 = vld [vmem:[#allocation2 + $0x4020] sm:$0xff]
    %v2293 = vld [vmem:[#allocation2 + $0x4028] sm:$0xff]
    %v2294 = vld [vmem:[#allocation2 + $0x4030] sm:$0xff]
    %v2295 = vld [vmem:[#allocation2 + $0x4038] sm:$0xff]
    %v2296 = vld [vmem:[#allocation2 + $0x4040] sm:$0xff]
    %v2297 = vld [vmem:[#allocation2 + $0x4048] sm:$0xff]
    %v2298 = vld [vmem:[#allocation2 + $0x4050] sm:$0xff]
    %v2299 = vld [vmem:[#allocation2 + $0x4058] sm:$0xff]
    %v2300 = vld [vmem:[#allocation2 + $0x4060] sm:$0xff]
    %v2301 = vld [vmem:[#allocation2 + $0x4068] sm:$0xff]
    %v2302 = vld [vmem:[#allocation2 + $0x4070] sm:$0xff]
    %v2303 = vld [vmem:[#allocation2 + $0x4078] sm:$0xff]
    %v2304 = vld [vmem:[#allocation2 + $0x4080] sm:$0xff]
    %v2305 = vld [vmem:[#allocation2 + $0x4088] sm:$0xff]
    %v2306 = vld [vmem:[#allocation2 + $0x4090] sm:$0xff]
    %v2307 = vld [vmem:[#allocation2 + $0x4098] sm:$0xff]
    %v2308 = vld [vmem:[#allocation2 + $0x40a0] sm:$0xff]
    %v2309 = vld [vmem:[#allocation2 + $0x40a8] sm:$0xff]
    %v2310 = vld [vmem:[#allocation2 + $0x40b0] sm:$0xff]
    %v2311 = vld [vmem:[#allocation2 + $0x40b8] sm:$0xff]
    %v2312 = vld [vmem:[#allocation2 + $0x40c0] sm:$0xff]
    %v2313 = vld [vmem:[#allocation2 + $0x40c8] sm:$0xff]
    %v2314 = vld [vmem:[#allocation2 + $0x40d0] sm:$0xff]
    %v2315 = vld [vmem:[#allocation2 + $0x40d8] sm:$0xff]
    %v2316 = vld [vmem:[#allocation2 + $0x40e0] sm:$0xff]
    %v2317 = vld [vmem:[#allocation2 + $0x40e8] sm:$0xff]
    %v2318 = vld [vmem:[#allocation2 + $0x40f0] sm:$0xff]
    %v2319 = vld [vmem:[#allocation2 + $0x40f8] sm:$0xff]
    %v2320 = vld [vmem:[#allocation2 + $0x4100] sm:$0xff]
    %v2321 = vld [vmem:[#allocation2 + $0x4108] sm:$0xff]
    %v2322 = vld [vmem:[#allocation2 + $0x4110] sm:$0xff]
    %v2323 = vld [vmem:[#allocation2 + $0x4118] sm:$0xff]
    %v2324 = vld [vmem:[#allocation2 + $0x4120] sm:$0xff]
    %v2325 = vld [vmem:[#allocation2 + $0x4128] sm:$0xff]
    %v2326 = vld [vmem:[#allocation2 + $0x4130] sm:$0xff]
    %v2327 = vld [vmem:[#allocation2 + $0x4138] sm:$0xff]
    %v2328 = vld [vmem:[#allocation2 + $0x4140] sm:$0xff]
    %v2329 = vld [vmem:[#allocation2 + $0x4148] sm:$0xff]
    %v2330 = vld [vmem:[#allocation2 + $0x4150] sm:$0xff]
    %v2331 = vld [vmem:[#allocation2 + $0x4158] sm:$0xff]
    %v2332 = vld [vmem:[#allocation2 + $0x4160] sm:$0xff]
    %v2333 = vld [vmem:[#allocation2 + $0x4168] sm:$0xff]
    %v2334 = vld [vmem:[#allocation2 + $0x4170] sm:$0xff]
    %v2335 = vld [vmem:[#allocation2 + $0x4178] sm:$0xff]
    %v2336 = vld [vmem:[#allocation2 + $0x4180] sm:$0xff]
    %v2337 = vld [vmem:[#allocation2 + $0x4188] sm:$0xff]
    %v2338 = vld [vmem:[#allocation2 + $0x4190] sm:$0xff]
    %v2339 = vld [vmem:[#allocation2 + $0x4198] sm:$0xff]
    %v2340 = vld [vmem:[#allocation2 + $0x41a0] sm:$0xff]
    %v2341 = vld [vmem:[#allocation2 + $0x41a8] sm:$0xff]
    %v2342 = vld [vmem:[#allocation2 + $0x41b0] sm:$0xff]
    %v2343 = vld [vmem:[#allocation2 + $0x41b8] sm:$0xff]
    %v2344 = vld [vmem:[#allocation2 + $0x41c0] sm:$0xff]
    %v2345 = vld [vmem:[#allocation2 + $0x41c8] sm:$0xff]
    %v2346 = vld [vmem:[#allocation2 + $0x41d0] sm:$0xff]
    %v2347 = vld [vmem:[#allocation2 + $0x41d8] sm:$0xff]
    %v2348 = vld [vmem:[#allocation2 + $0x41e0] sm:$0xff]
    %v2349 = vld [vmem:[#allocation2 + $0x41e8] sm:$0xff]
    %v2350 = vld [vmem:[#allocation2 + $0x41f0] sm:$0xff]
    %v2351 = vld [vmem:[#allocation2 + $0x41f8] sm:$0xff]
    %v2352 = vld [vmem:[#allocation2 + $0x4200] sm:$0xff]
    %v2353 = vld [vmem:[#allocation2 + $0x4208] sm:$0xff]
    %v2354 = vld [vmem:[#allocation2 + $0x4210] sm:$0xff]
    %v2355 = vld [vmem:[#allocation2 + $0x4218] sm:$0xff]
    %v2356 = vld [vmem:[#allocation2 + $0x4220] sm:$0xff]
    %v2357 = vld [vmem:[#allocation2 + $0x4228] sm:$0xff]
    %v2358 = vld [vmem:[#allocation2 + $0x4230] sm:$0xff]
    %v2359 = vld [vmem:[#allocation2 + $0x4238] sm:$0xff]
    %v2360 = vld [vmem:[#allocation2 + $0x4240] sm:$0xff]
    %v2361 = vld [vmem:[#allocation2 + $0x4248] sm:$0xff]
    %v2362 = vld [vmem:[#allocation2 + $0x4250] sm:$0xff]
    %v2363 = vld [vmem:[#allocation2 + $0x4258] sm:$0xff]
    %v2364 = vld [vmem:[#allocation2 + $0x4260] sm:$0xff]
    %v2365 = vld [vmem:[#allocation2 + $0x4268] sm:$0xff]
    %v2366 = vld [vmem:[#allocation2 + $0x4270] sm:$0xff]
    %v2367 = vld [vmem:[#allocation2 + $0x4278] sm:$0xff]
    %v2368 = vld [vmem:[#allocation2 + $0x4280] sm:$0xff]
    %v2369 = vld [vmem:[#allocation2 + $0x4288] sm:$0xff]
    %v2370 = vld [vmem:[#allocation2 + $0x4290] sm:$0xff]
    %v2371 = vld [vmem:[#allocation2 + $0x4298] sm:$0xff]
    %v2372 = vld [vmem:[#allocation2 + $0x42a0] sm:$0xff]
    %v2373 = vld [vmem:[#allocation2 + $0x42a8] sm:$0xff]
    %v2374 = vld [vmem:[#allocation2 + $0x42b0] sm:$0xff]
    %v2375 = vld [vmem:[#allocation2 + $0x42b8] sm:$0xff]
    %v2376 = vld [vmem:[#allocation2 + $0x42c0] sm:$0xff]
    %v2377 = vld [vmem:[#allocation2 + $0x42c8] sm:$0xff]
    %v2378 = vld [vmem:[#allocation2 + $0x42d0] sm:$0xff]
    %v2379 = vld [vmem:[#allocation2 + $0x42d8] sm:$0xff]
    %v2380 = vld [vmem:[#allocation2 + $0x42e0] sm:$0xff]
    %v2381 = vld [vmem:[#allocation2 + $0x42e8] sm:$0xff]
    %v2382 = vld [vmem:[#allocation2 + $0x42f0] sm:$0xff]
    %v2383 = vld [vmem:[#allocation2 + $0x42f8] sm:$0xff]
    %v2384 = vld [vmem:[#allocation2 + $0x4300] sm:$0xff]
    %v2385 = vld [vmem:[#allocation2 + $0x4308] sm:$0xff]
    %v2386 = vld [vmem:[#allocation2 + $0x4310] sm:$0xff]
    %v2387 = vld [vmem:[#allocation2 + $0x4318] sm:$0xff]
    %v2388 = vld [vmem:[#allocation2 + $0x4320] sm:$0xff]
    %v2389 = vld [vmem:[#allocation2 + $0x4328] sm:$0xff]
    %v2390 = vld [vmem:[#allocation2 + $0x4330] sm:$0xff]
    %v2391 = vld [vmem:[#allocation2 + $0x4338] sm:$0xff]
    %v2392 = vld [vmem:[#allocation2 + $0x4340] sm:$0xff]
    %v2393 = vld [vmem:[#allocation2 + $0x4348] sm:$0xff]
    %v2394 = vld [vmem:[#allocation2 + $0x4350] sm:$0xff]
    %v2395 = vld [vmem:[#allocation2 + $0x4358] sm:$0xff]
    %v2396 = vld [vmem:[#allocation2 + $0x4360] sm:$0xff]
    %v2397 = vld [vmem:[#allocation2 + $0x4368] sm:$0xff]
    %v2398 = vld [vmem:[#allocation2 + $0x4370] sm:$0xff]
    %v2399 = vld [vmem:[#allocation2 + $0x4378] sm:$0xff]
    %v2400 = vld [vmem:[#allocation2 + $0x4380] sm:$0xff]
    %v2401 = vld [vmem:[#allocation2 + $0x4388] sm:$0xff]
    %v2402 = vld [vmem:[#allocation2 + $0x4390] sm:$0xff]
    %v2403 = vld [vmem:[#allocation2 + $0x4398] sm:$0xff]
    %v2404 = vld [vmem:[#allocation2 + $0x43a0] sm:$0xff]
    %v2405 = vld [vmem:[#allocation2 + $0x43a8] sm:$0xff]
    %v2406 = vld [vmem:[#allocation2 + $0x43b0] sm:$0xff]
    %v2407 = vld [vmem:[#allocation2 + $0x43b8] sm:$0xff]
    %v2408 = vld [vmem:[#allocation2 + $0x43c0] sm:$0xff]
    %v2409 = vld [vmem:[#allocation2 + $0x43c8] sm:$0xff]
    %v2410 = vld [vmem:[#allocation2 + $0x43d0] sm:$0xff]
    %v2411 = vld [vmem:[#allocation2 + $0x43d8] sm:$0xff]
    %v2412 = vld [vmem:[#allocation2 + $0x43e0] sm:$0xff]
    %v2413 = vld [vmem:[#allocation2 + $0x43e8] sm:$0xff]
    %v2414 = vld [vmem:[#allocation2 + $0x43f0] sm:$0xff]
    %v2415 = vld [vmem:[#allocation2 + $0x43f8] sm:$0xff]
    %v2416 = vld [vmem:[#allocation2 + $0x4400] sm:$0xff]
    %v2417 = vld [vmem:[#allocation2 + $0x4408] sm:$0xff]
    %v2418 = vld [vmem:[#allocation2 + $0x4410] sm:$0xff]
    %v2419 = vld [vmem:[#allocation2 + $0x4418] sm:$0xff]
    %v2420 = vld [vmem:[#allocation2 + $0x4420] sm:$0xff]
    %v2421 = vld [vmem:[#allocation2 + $0x4428] sm:$0xff]
    %v2422 = vld [vmem:[#allocation2 + $0x4430] sm:$0xff]
    %v2423 = vld [vmem:[#allocation2 + $0x4438] sm:$0xff]
    %v2424 = vld [vmem:[#allocation2 + $0x4440] sm:$0xff]
    %v2425 = vld [vmem:[#allocation2 + $0x4448] sm:$0xff]
    %v2426 = vld [vmem:[#allocation2 + $0x4450] sm:$0xff]
    %v2427 = vld [vmem:[#allocation2 + $0x4458] sm:$0xff]
    %v2428 = vld [vmem:[#allocation2 + $0x4460] sm:$0xff]
    %v2429 = vld [vmem:[#allocation2 + $0x4468] sm:$0xff]
    %v2430 = vld [vmem:[#allocation2 + $0x4470] sm:$0xff]
    %v2431 = vld [vmem:[#allocation2 + $0x4478] sm:$0xff]
    %v2432 = vld [vmem:[#allocation2 + $0x4480] sm:$0xff]
    %v2433 = vld [vmem:[#allocation2 + $0x4488] sm:$0xff]
    %v2434 = vld [vmem:[#allocation2 + $0x4490] sm:$0xff]
    %v2435 = vld [vmem:[#allocation2 + $0x4498] sm:$0xff]
    %v2436 = vld [vmem:[#allocation2 + $0x44a0] sm:$0xff]
    %v2437 = vld [vmem:[#allocation2 + $0x44a8] sm:$0xff]
    %v2438 = vld [vmem:[#allocation2 + $0x44b0] sm:$0xff]
    %v2439 = vld [vmem:[#allocation2 + $0x44b8] sm:$0xff]
    %v2440 = vld [vmem:[#allocation2 + $0x44c0] sm:$0xff]
    %v2441 = vld [vmem:[#allocation2 + $0x44c8] sm:$0xff]
    %v2442 = vld [vmem:[#allocation2 + $0x44d0] sm:$0xff]
    %v2443 = vld [vmem:[#allocation2 + $0x44d8] sm:$0xff]
    %v2444 = vld [vmem:[#allocation2 + $0x44e0] sm:$0xff]
    %v2445 = vld [vmem:[#allocation2 + $0x44e8] sm:$0xff]
    %v2446 = vld [vmem:[#allocation2 + $0x44f0] sm:$0xff]
    %v2447 = vld [vmem:[#allocation2 + $0x44f8] sm:$0xff]
    %v2448 = vld [vmem:[#allocation2 + $0x4500] sm:$0xff]
    %v2449 = vld [vmem:[#allocation2 + $0x4508] sm:$0xff]
    %v2450 = vld [vmem:[#allocation2 + $0x4510] sm:$0xff]
    %v2451 = vld [vmem:[#allocation2 + $0x4518] sm:$0xff]
    %v2452 = vld [vmem:[#allocation2 + $0x4520] sm:$0xff]
    %v2453 = vld [vmem:[#allocation2 + $0x4528] sm:$0xff]
    %v2454 = vld [vmem:[#allocation2 + $0x4530] sm:$0xff]
    %v2455 = vld [vmem:[#allocation2 + $0x4538] sm:$0xff]
    %v2456 = vld [vmem:[#allocation2 + $0x4540] sm:$0xff]
    %v2457 = vld [vmem:[#allocation2 + $0x4548] sm:$0xff]
    %v2458 = vld [vmem:[#allocation2 + $0x4550] sm:$0xff]
    %v2459 = vld [vmem:[#allocation2 + $0x4558] sm:$0xff]
    %v2460 = vld [vmem:[#allocation2 + $0x4560] sm:$0xff]
    %v2461 = vld [vmem:[#allocation2 + $0x4568] sm:$0xff]
    %v2462 = vld [vmem:[#allocation2 + $0x4570] sm:$0xff]
    %v2463 = vld [vmem:[#allocation2 + $0x4578] sm:$0xff]
    %v2464 = vld [vmem:[#allocation2 + $0x4580] sm:$0xff]
    %v2465 = vld [vmem:[#allocation2 + $0x4588] sm:$0xff]
    %v2466 = vld [vmem:[#allocation2 + $0x4590] sm:$0xff]
    %v2467 = vld [vmem:[#allocation2 + $0x4598] sm:$0xff]
    %v2468 = vld [vmem:[#allocation2 + $0x45a0] sm:$0xff]
    %v2469 = vld [vmem:[#allocation2 + $0x45a8] sm:$0xff]
    %v2470 = vld [vmem:[#allocation2 + $0x45b0] sm:$0xff]
    %v2471 = vld [vmem:[#allocation2 + $0x45b8] sm:$0xff]
    %v2472 = vld [vmem:[#allocation2 + $0x45c0] sm:$0xff]
    %v2473 = vld [vmem:[#allocation2 + $0x45c8] sm:$0xff]
    %v2474 = vld [vmem:[#allocation2 + $0x45d0] sm:$0xff]
    %v2475 = vld [vmem:[#allocation2 + $0x45d8] sm:$0xff]
    %v2476 = vld [vmem:[#allocation2 + $0x45e0] sm:$0xff]
    %v2477 = vld [vmem:[#allocation2 + $0x45e8] sm:$0xff]
    %v2478 = vld [vmem:[#allocation2 + $0x45f0] sm:$0xff]
    %v2479 = vld [vmem:[#allocation2 + $0x45f8] sm:$0xff]
    %v2480 = vld [vmem:[#allocation2 + $0x4600] sm:$0xff]
    %v2481 = vld [vmem:[#allocation2 + $0x4608] sm:$0xff]
    %v2482 = vld [vmem:[#allocation2 + $0x4610] sm:$0xff]
    %v2483 = vld [vmem:[#allocation2 + $0x4618] sm:$0xff]
    %v2484 = vld [vmem:[#allocation2 + $0x4620] sm:$0xff]
    %v2485 = vld [vmem:[#allocation2 + $0x4628] sm:$0xff]
    %v2486 = vld [vmem:[#allocation2 + $0x4630] sm:$0xff]
    %v2487 = vld [vmem:[#allocation2 + $0x4638] sm:$0xff]
    %v2488 = vld [vmem:[#allocation2 + $0x4640] sm:$0xff]
    %v2489 = vld [vmem:[#allocation2 + $0x4648] sm:$0xff]
    %v2490 = vld [vmem:[#allocation2 + $0x4650] sm:$0xff]
    %v2491 = vld [vmem:[#allocation2 + $0x4658] sm:$0xff]
    %v2492 = vld [vmem:[#allocation2 + $0x4660] sm:$0xff]
    %v2493 = vld [vmem:[#allocation2 + $0x4668] sm:$0xff]
    %v2494 = vld [vmem:[#allocation2 + $0x4670] sm:$0xff]
    %v2495 = vld [vmem:[#allocation2 + $0x4678] sm:$0xff]
    %v2496 = vld [vmem:[#allocation2 + $0x4680] sm:$0xff]
    %v2497 = vld [vmem:[#allocation2 + $0x4688] sm:$0xff]
    %v2498 = vld [vmem:[#allocation2 + $0x4690] sm:$0xff]
    %v2499 = vld [vmem:[#allocation2 + $0x4698] sm:$0xff]
    %v2500 = vld [vmem:[#allocation2 + $0x46a0] sm:$0xff]
    %v2501 = vld [vmem:[#allocation2 + $0x46a8] sm:$0xff]
    %v2502 = vld [vmem:[#allocation2 + $0x46b0] sm:$0xff]
    %v2503 = vld [vmem:[#allocation2 + $0x46b8] sm:$0xff]
    %v2504 = vld [vmem:[#allocation2 + $0x46c0] sm:$0xff]
    %v2505 = vld [vmem:[#allocation2 + $0x46c8] sm:$0xff]
    %v2506 = vld [vmem:[#allocation2 + $0x46d0] sm:$0xff]
    %v2507 = vld [vmem:[#allocation2 + $0x46d8] sm:$0xff]
    %v2508 = vld [vmem:[#allocation2 + $0x46e0] sm:$0xff]
    %v2509 = vld [vmem:[#allocation2 + $0x46e8] sm:$0xff]
    %v2510 = vld [vmem:[#allocation2 + $0x46f0] sm:$0xff]
    %v2511 = vld [vmem:[#allocation2 + $0x46f8] sm:$0xff]
    %v2512 = vld [vmem:[#allocation2 + $0x4700] sm:$0xff]
    %v2513 = vld [vmem:[#allocation2 + $0x4708] sm:$0xff]
    %v2514 = vld [vmem:[#allocation2 + $0x4710] sm:$0xff]
    %v2515 = vld [vmem:[#allocation2 + $0x4718] sm:$0xff]
    %v2516 = vld [vmem:[#allocation2 + $0x4720] sm:$0xff]
    %v2517 = vld [vmem:[#allocation2 + $0x4728] sm:$0xff]
    %v2518 = vld [vmem:[#allocation2 + $0x4730] sm:$0xff]
    %v2519 = vld [vmem:[#allocation2 + $0x4738] sm:$0xff]
    %v2520 = vld [vmem:[#allocation2 + $0x4740] sm:$0xff]
    %v2521 = vld [vmem:[#allocation2 + $0x4748] sm:$0xff]
    %v2522 = vld [vmem:[#allocation2 + $0x4750] sm:$0xff]
    %v2523 = vld [vmem:[#allocation2 + $0x4758] sm:$0xff]
    %v2524 = vld [vmem:[#allocation2 + $0x4760] sm:$0xff]
    %v2525 = vld [vmem:[#allocation2 + $0x4768] sm:$0xff]
    %v2526 = vld [vmem:[#allocation2 + $0x4770] sm:$0xff]
    %v2527 = vld [vmem:[#allocation2 + $0x4778] sm:$0xff]
    %v2528 = vld [vmem:[#allocation2 + $0x4780] sm:$0xff]
    %v2529 = vld [vmem:[#allocation2 + $0x4788] sm:$0xff]
    %v2530 = vld [vmem:[#allocation2 + $0x4790] sm:$0xff]
    %v2531 = vld [vmem:[#allocation2 + $0x4798] sm:$0xff]
    %v2532 = vld [vmem:[#allocation2 + $0x47a0] sm:$0xff]
    %v2533 = vld [vmem:[#allocation2 + $0x47a8] sm:$0xff]
    %v2534 = vld [vmem:[#allocation2 + $0x47b0] sm:$0xff]
    %v2535 = vld [vmem:[#allocation2 + $0x47b8] sm:$0xff]
    %v2536 = vld [vmem:[#allocation2 + $0x47c0] sm:$0xff]
    %v2537 = vld [vmem:[#allocation2 + $0x47c8] sm:$0xff]
    %v2538 = vld [vmem:[#allocation2 + $0x47d0] sm:$0xff]
    %v2539 = vld [vmem:[#allocation2 + $0x47d8] sm:$0xff]
    %v2540 = vld [vmem:[#allocation2 + $0x47e0] sm:$0xff]
    %v2541 = vld [vmem:[#allocation2 + $0x47e8] sm:$0xff]
    %v2542 = vld [vmem:[#allocation2 + $0x47f0] sm:$0xff]
    %v2543 = vld [vmem:[#allocation2 + $0x47f8] sm:$0xff]
    %v2544 = vld [vmem:[#allocation2 + $0x4800] sm:$0xff]
    %v2545 = vld [vmem:[#allocation2 + $0x4808] sm:$0xff]
    %v2546 = vld [vmem:[#allocation2 + $0x4810] sm:$0xff]
    %v2547 = vld [vmem:[#allocation2 + $0x4818] sm:$0xff]
    %v2548 = vld [vmem:[#allocation2 + $0x4820] sm:$0xff]
    %v2549 = vld [vmem:[#allocation2 + $0x4828] sm:$0xff]
    %v2550 = vld [vmem:[#allocation2 + $0x4830] sm:$0xff]
    %v2551 = vld [vmem:[#allocation2 + $0x4838] sm:$0xff]
    %v2552 = vld [vmem:[#allocation2 + $0x4840] sm:$0xff]
    %v2553 = vld [vmem:[#allocation2 + $0x4848] sm:$0xff]
    %v2554 = vld [vmem:[#allocation2 + $0x4850] sm:$0xff]
    %v2555 = vld [vmem:[#allocation2 + $0x4858] sm:$0xff]
    %v2556 = vld [vmem:[#allocation2 + $0x4860] sm:$0xff]
    %v2557 = vld [vmem:[#allocation2 + $0x4868] sm:$0xff]
    %v2558 = vld [vmem:[#allocation2 + $0x4870] sm:$0xff]
    %v2559 = vld [vmem:[#allocation2 + $0x4878] sm:$0xff]
    %v2560 = vld [vmem:[#allocation2 + $0x4880] sm:$0xff]
    %v2561 = vld [vmem:[#allocation2 + $0x4888] sm:$0xff]
    %v2562 = vld [vmem:[#allocation2 + $0x4890] sm:$0xff]
    %v2563 = vld [vmem:[#allocation2 + $0x4898] sm:$0xff]
    %v2564 = vld [vmem:[#allocation2 + $0x48a0] sm:$0xff]
    %v2565 = vld [vmem:[#allocation2 + $0x48a8] sm:$0xff]
    %v2566 = vld [vmem:[#allocation2 + $0x48b0] sm:$0xff]
    %v2567 = vld [vmem:[#allocation2 + $0x48b8] sm:$0xff]
    %v2568 = vld [vmem:[#allocation2 + $0x48c0] sm:$0xff]
    %v2569 = vld [vmem:[#allocation2 + $0x48c8] sm:$0xff]
    %v2570 = vld [vmem:[#allocation2 + $0x48d0] sm:$0xff]
    %v2571 = vld [vmem:[#allocation2 + $0x48d8] sm:$0xff]
    %v2572 = vld [vmem:[#allocation2 + $0x48e0] sm:$0xff]
    %v2573 = vld [vmem:[#allocation2 + $0x48e8] sm:$0xff]
    %v2574 = vld [vmem:[#allocation2 + $0x48f0] sm:$0xff]
    %v2575 = vld [vmem:[#allocation2 + $0x48f8] sm:$0xff]
    %v2576 = vld [vmem:[#allocation2 + $0x4900] sm:$0xff]
    %v2577 = vld [vmem:[#allocation2 + $0x4908] sm:$0xff]
    %v2578 = vld [vmem:[#allocation2 + $0x4910] sm:$0xff]
    %v2579 = vld [vmem:[#allocation2 + $0x4918] sm:$0xff]
    %v2580 = vld [vmem:[#allocation2 + $0x4920] sm:$0xff]
    %v2581 = vld [vmem:[#allocation2 + $0x4928] sm:$0xff]
    %v2582 = vld [vmem:[#allocation2 + $0x4930] sm:$0xff]
    %v2583 = vld [vmem:[#allocation2 + $0x4938] sm:$0xff]
    %v2584 = vld [vmem:[#allocation2 + $0x4940] sm:$0xff]
    %v2585 = vld [vmem:[#allocation2 + $0x4948] sm:$0xff]
    %v2586 = vld [vmem:[#allocation2 + $0x4950] sm:$0xff]
    %v2587 = vld [vmem:[#allocation2 + $0x4958] sm:$0xff]
    %v2588 = vld [vmem:[#allocation2 + $0x4960] sm:$0xff]
    %v2589 = vld [vmem:[#allocation2 + $0x4968] sm:$0xff]
    %v2590 = vld [vmem:[#allocation2 + $0x4970] sm:$0xff]
    %v2591 = vld [vmem:[#allocation2 + $0x4978] sm:$0xff]
    %v2592 = vld [vmem:[#allocation2 + $0x4980] sm:$0xff]
    %v2593 = vld [vmem:[#allocation2 + $0x4988] sm:$0xff]
    %v2594 = vld [vmem:[#allocation2 + $0x4990] sm:$0xff]
    %v2595 = vld [vmem:[#allocation2 + $0x4998] sm:$0xff]
    %v2596 = vld [vmem:[#allocation2 + $0x49a0] sm:$0xff]
    %v2597 = vld [vmem:[#allocation2 + $0x49a8] sm:$0xff]
    %v2598 = vld [vmem:[#allocation2 + $0x49b0] sm:$0xff]
    %v2599 = vld [vmem:[#allocation2 + $0x49b8] sm:$0xff]
    %v2600 = vld [vmem:[#allocation2 + $0x49c0] sm:$0xff]
    %v2601 = vld [vmem:[#allocation2 + $0x49c8] sm:$0xff]
    %v2602 = vld [vmem:[#allocation2 + $0x49d0] sm:$0xff]
    %v2603 = vld [vmem:[#allocation2 + $0x49d8] sm:$0xff]
    %v2604 = vld [vmem:[#allocation2 + $0x49e0] sm:$0xff]
    %v2605 = vld [vmem:[#allocation2 + $0x49e8] sm:$0xff]
    %v2606 = vld [vmem:[#allocation2 + $0x49f0] sm:$0xff]
    %v2607 = vld [vmem:[#allocation2 + $0x49f8] sm:$0xff]
    %v2608 = vld [vmem:[#allocation2 + $0x4a00] sm:$0xff]
    %v2609 = vld [vmem:[#allocation2 + $0x4a08] sm:$0xff]
    %v2610 = vld [vmem:[#allocation2 + $0x4a10] sm:$0xff]
    %v2611 = vld [vmem:[#allocation2 + $0x4a18] sm:$0xff]
    %v2612 = vld [vmem:[#allocation2 + $0x4a20] sm:$0xff]
    %v2613 = vld [vmem:[#allocation2 + $0x4a28] sm:$0xff]
    %v2614 = vld [vmem:[#allocation2 + $0x4a30] sm:$0xff]
    %v2615 = vld [vmem:[#allocation2 + $0x4a38] sm:$0xff]
    %v2616 = vld [vmem:[#allocation2 + $0x4a40] sm:$0xff]
    %v2617 = vld [vmem:[#allocation2 + $0x4a48] sm:$0xff]
    %v2618 = vld [vmem:[#allocation2 + $0x4a50] sm:$0xff]
    %v2619 = vld [vmem:[#allocation2 + $0x4a58] sm:$0xff]
    %v2620 = vld [vmem:[#allocation2 + $0x4a60] sm:$0xff]
    %v2621 = vld [vmem:[#allocation2 + $0x4a68] sm:$0xff]
    %v2622 = vld [vmem:[#allocation2 + $0x4a70] sm:$0xff]
    %v2623 = vld [vmem:[#allocation2 + $0x4a78] sm:$0xff]
    %v2624 = vld [vmem:[#allocation2 + $0x4a80] sm:$0xff]
    %v2625 = vld [vmem:[#allocation2 + $0x4a88] sm:$0xff]
    %v2626 = vld [vmem:[#allocation2 + $0x4a90] sm:$0xff]
    %v2627 = vld [vmem:[#allocation2 + $0x4a98] sm:$0xff]
    %v2628 = vld [vmem:[#allocation2 + $0x4aa0] sm:$0xff]
    %v2629 = vld [vmem:[#allocation2 + $0x4aa8] sm:$0xff]
    %v2630 = vld [vmem:[#allocation2 + $0x4ab0] sm:$0xff]
    %v2631 = vld [vmem:[#allocation2 + $0x4ab8] sm:$0xff]
    %v2632 = vld [vmem:[#allocation2 + $0x4ac0] sm:$0xff]
    %v2633 = vld [vmem:[#allocation2 + $0x4ac8] sm:$0xff]
    %v2634 = vld [vmem:[#allocation2 + $0x4ad0] sm:$0xff]
    %v2635 = vld [vmem:[#allocation2 + $0x4ad8] sm:$0xff]
    %v2636 = vld [vmem:[#allocation2 + $0x4ae0] sm:$0xff]
    %v2637 = vld [vmem:[#allocation2 + $0x4ae8] sm:$0xff]
    %v2638 = vld [vmem:[#allocation2 + $0x4af0] sm:$0xff]
    %v2639 = vld [vmem:[#allocation2 + $0x4af8] sm:$0xff]
    %v2640 = vld [vmem:[#allocation2 + $0x4b00] sm:$0xff]
    %v2641 = vld [vmem:[#allocation2 + $0x4b08] sm:$0xff]
    %v2642 = vld [vmem:[#allocation2 + $0x4b10] sm:$0xff]
    %v2643 = vld [vmem:[#allocation2 + $0x4b18] sm:$0xff]
    %v2644 = vld [vmem:[#allocation2 + $0x4b20] sm:$0xff]
    %v2645 = vld [vmem:[#allocation2 + $0x4b28] sm:$0xff]
    %v2646 = vld [vmem:[#allocation2 + $0x4b30] sm:$0xff]
    %v2647 = vld [vmem:[#allocation2 + $0x4b38] sm:$0xff]
    %v2648 = vld [vmem:[#allocation2 + $0x4b40] sm:$0xff]
    %v2649 = vld [vmem:[#allocation2 + $0x4b48] sm:$0xff]
    %v2650 = vld [vmem:[#allocation2 + $0x4b50] sm:$0xff]
    %v2651 = vld [vmem:[#allocation2 + $0x4b58] sm:$0xff]
    %v2652 = vld [vmem:[#allocation2 + $0x4b60] sm:$0xff]
    %v2653 = vld [vmem:[#allocation2 + $0x4b68] sm:$0xff]
    %v2654 = vld [vmem:[#allocation2 + $0x4b70] sm:$0xff]
    %v2655 = vld [vmem:[#allocation2 + $0x4b78] sm:$0xff]
    %v2656 = vld [vmem:[#allocation2 + $0x4b80] sm:$0xff]
    %v2657 = vld [vmem:[#allocation2 + $0x4b88] sm:$0xff]
    %v2658 = vld [vmem:[#allocation2 + $0x4b90] sm:$0xff]
    %v2659 = vld [vmem:[#allocation2 + $0x4b98] sm:$0xff]
    %v2660 = vld [vmem:[#allocation2 + $0x4ba0] sm:$0xff]
    %v2661 = vld [vmem:[#allocation2 + $0x4ba8] sm:$0xff]
    %v2662 = vld [vmem:[#allocation2 + $0x4bb0] sm:$0xff]
    %v2663 = vld [vmem:[#allocation2 + $0x4bb8] sm:$0xff]
    %v2664 = vld [vmem:[#allocation2 + $0x4bc0] sm:$0xff]
    %v2665 = vld [vmem:[#allocation2 + $0x4bc8] sm:$0xff]
    %v2666 = vld [vmem:[#allocation2 + $0x4bd0] sm:$0xff]
    %v2667 = vld [vmem:[#allocation2 + $0x4bd8] sm:$0xff]
    %v2668 = vld [vmem:[#allocation2 + $0x4be0] sm:$0xff]
    %v2669 = vld [vmem:[#allocation2 + $0x4be8] sm:$0xff]
    %v2670 = vld [vmem:[#allocation2 + $0x4bf0] sm:$0xff]
    %v2671 = vld [vmem:[#allocation2 + $0x4bf8] sm:$0xff]
    %v2672 = vld [vmem:[#allocation2 + $0x4c00] sm:$0xff]
    %v2673 = vld [vmem:[#allocation2 + $0x4c08] sm:$0xff]
    %v2674 = vld [vmem:[#allocation2 + $0x4c10] sm:$0xff]
    %v2675 = vld [vmem:[#allocation2 + $0x4c18] sm:$0xff]
    %v2676 = vld [vmem:[#allocation2 + $0x4c20] sm:$0xff]
    %v2677 = vld [vmem:[#allocation2 + $0x4c28] sm:$0xff]
    %v2678 = vld [vmem:[#allocation2 + $0x4c30] sm:$0xff]
    %v2679 = vld [vmem:[#allocation2 + $0x4c38] sm:$0xff]
    %v2680 = vld [vmem:[#allocation2 + $0x4c40] sm:$0xff]
    %v2681 = vld [vmem:[#allocation2 + $0x4c48] sm:$0xff]
    %v2682 = vld [vmem:[#allocation2 + $0x4c50] sm:$0xff]
    %v2683 = vld [vmem:[#allocation2 + $0x4c58] sm:$0xff]
    %v2684 = vld [vmem:[#allocation2 + $0x4c60] sm:$0xff]
    %v2685 = vld [vmem:[#allocation2 + $0x4c68] sm:$0xff]
    %v2686 = vld [vmem:[#allocation2 + $0x4c70] sm:$0xff]
    %v2687 = vld [vmem:[#allocation2 + $0x4c78] sm:$0xff]
    %v2688 = vld [vmem:[#allocation2 + $0x4c80] sm:$0xff]
    %v2689 = vld [vmem:[#allocation2 + $0x4c88] sm:$0xff]
    %v2690 = vld [vmem:[#allocation2 + $0x4c90] sm:$0xff]
    %v2691 = vld [vmem:[#allocation2 + $0x4c98] sm:$0xff]
    %v2692 = vld [vmem:[#allocation2 + $0x4ca0] sm:$0xff]
    %v2693 = vld [vmem:[#allocation2 + $0x4ca8] sm:$0xff]
    %v2694 = vld [vmem:[#allocation2 + $0x4cb0] sm:$0xff]
    %v2695 = vld [vmem:[#allocation2 + $0x4cb8] sm:$0xff]
    %v2696 = vld [vmem:[#allocation2 + $0x4cc0] sm:$0xff]
    %v2697 = vld [vmem:[#allocation2 + $0x4cc8] sm:$0xff]
    %v2698 = vld [vmem:[#allocation2 + $0x4cd0] sm:$0xff]
    %v2699 = vld [vmem:[#allocation2 + $0x4cd8] sm:$0xff]
    %v2700 = vld [vmem:[#allocation2 + $0x4ce0] sm:$0xff]
    %v2701 = vld [vmem:[#allocation2 + $0x4ce8] sm:$0xff]
    %v2702 = vld [vmem:[#allocation2 + $0x4cf0] sm:$0xff]
    %v2703 = vld [vmem:[#allocation2 + $0x4cf8] sm:$0xff]
    %v2704 = vld [vmem:[#allocation2 + $0x4d00] sm:$0xff]
    %v2705 = vld [vmem:[#allocation2 + $0x4d08] sm:$0xff]
    %v2706 = vld [vmem:[#allocation2 + $0x4d10] sm:$0xff]
    %v2707 = vld [vmem:[#allocation2 + $0x4d18] sm:$0xff]
    %v2708 = vld [vmem:[#allocation2 + $0x4d20] sm:$0xff]
    %v2709 = vld [vmem:[#allocation2 + $0x4d28] sm:$0xff]
    %v2710 = vld [vmem:[#allocation2 + $0x4d30] sm:$0xff]
    %v2711 = vld [vmem:[#allocation2 + $0x4d38] sm:$0xff]
    %v2712 = vld [vmem:[#allocation2 + $0x4d40] sm:$0xff]
    %v2713 = vld [vmem:[#allocation2 + $0x4d48] sm:$0xff]
    %v2714 = vld [vmem:[#allocation2 + $0x4d50] sm:$0xff]
    %v2715 = vld [vmem:[#allocation2 + $0x4d58] sm:$0xff]
    %v2716 = vld [vmem:[#allocation2 + $0x4d60] sm:$0xff]
    %v2717 = vld [vmem:[#allocation2 + $0x4d68] sm:$0xff]
    %v2718 = vld [vmem:[#allocation2 + $0x4d70] sm:$0xff]
    %v2719 = vld [vmem:[#allocation2 + $0x4d78] sm:$0xff]
    %v2720 = vld [vmem:[#allocation2 + $0x4d80] sm:$0xff]
    %v2721 = vld [vmem:[#allocation2 + $0x4d88] sm:$0xff]
    %v2722 = vld [vmem:[#allocation2 + $0x4d90] sm:$0xff]
    %v2723 = vld [vmem:[#allocation2 + $0x4d98] sm:$0xff]
    %v2724 = vld [vmem:[#allocation2 + $0x4da0] sm:$0xff]
    %v2725 = vld [vmem:[#allocation2 + $0x4da8] sm:$0xff]
    %v2726 = vld [vmem:[#allocation2 + $0x4db0] sm:$0xff]
    %v2727 = vld [vmem:[#allocation2 + $0x4db8] sm:$0xff]
    %v2728 = vld [vmem:[#allocation2 + $0x4dc0] sm:$0xff]
    %v2729 = vld [vmem:[#allocation2 + $0x4dc8] sm:$0xff]
    %v2730 = vld [vmem:[#allocation2 + $0x4dd0] sm:$0xff]
    %v2731 = vld [vmem:[#allocation2 + $0x4dd8] sm:$0xff]
    %v2732 = vld [vmem:[#allocation2 + $0x4de0] sm:$0xff]
    %v2733 = vld [vmem:[#allocation2 + $0x4de8] sm:$0xff]
    %v2734 = vld [vmem:[#allocation2 + $0x4df0] sm:$0xff]
    %v2735 = vld [vmem:[#allocation2 + $0x4df8] sm:$0xff]
    %v2736 = vld [vmem:[#allocation2 + $0x4e00] sm:$0xff]
    %v2737 = vld [vmem:[#allocation2 + $0x4e08] sm:$0xff]
    %v2738 = vld [vmem:[#allocation2 + $0x4e10] sm:$0xff]
    %v2739 = vld [vmem:[#allocation2 + $0x4e18] sm:$0xff]
    %v2740 = vld [vmem:[#allocation2 + $0x4e20] sm:$0xff]
    %v2741 = vld [vmem:[#allocation2 + $0x4e28] sm:$0xff]
    %v2742 = vld [vmem:[#allocation2 + $0x4e30] sm:$0xff]
    %v2743 = vld [vmem:[#allocation2 + $0x4e38] sm:$0xff]
    %v2744 = vld [vmem:[#allocation2 + $0x4e40] sm:$0xff]
    %v2745 = vld [vmem:[#allocation2 + $0x4e48] sm:$0xff]
    %v2746 = vld [vmem:[#allocation2 + $0x4e50] sm:$0xff]
    %v2747 = vld [vmem:[#allocation2 + $0x4e58] sm:$0xff]
    %v2748 = vld [vmem:[#allocation2 + $0x4e60] sm:$0xff]
    %v2749 = vld [vmem:[#allocation2 + $0x4e68] sm:$0xff]
    %v2750 = vld [vmem:[#allocation2 + $0x4e70] sm:$0xff]
    %v2751 = vld [vmem:[#allocation2 + $0x4e78] sm:$0xff]
    %v2752 = vld [vmem:[#allocation2 + $0x4e80] sm:$0xff]
    %v2753 = vld [vmem:[#allocation2 + $0x4e88] sm:$0xff]
    %v2754 = vld [vmem:[#allocation2 + $0x4e90] sm:$0xff]
    %v2755 = vld [vmem:[#allocation2 + $0x4e98] sm:$0xff]
    %v2756 = vld [vmem:[#allocation2 + $0x4ea0] sm:$0xff]
    %v2757 = vld [vmem:[#allocation2 + $0x4ea8] sm:$0xff]
    %v2758 = vld [vmem:[#allocation2 + $0x4eb0] sm:$0xff]
    %v2759 = vld [vmem:[#allocation2 + $0x4eb8] sm:$0xff]
    %v2760 = vld [vmem:[#allocation2 + $0x4ec0] sm:$0xff]
    %v2761 = vld [vmem:[#allocation2 + $0x4ec8] sm:$0xff]
    %v2762 = vld [vmem:[#allocation2 + $0x4ed0] sm:$0xff]
    %v2763 = vld [vmem:[#allocation2 + $0x4ed8] sm:$0xff]
    %v2764 = vld [vmem:[#allocation2 + $0x4ee0] sm:$0xff]
    %v2765 = vld [vmem:[#allocation2 + $0x4ee8] sm:$0xff]
    %v2766 = vld [vmem:[#allocation2 + $0x4ef0] sm:$0xff]
    %v2767 = vld [vmem:[#allocation2 + $0x4ef8] sm:$0xff]
    %v2768 = vld [vmem:[#allocation2 + $0x4f00] sm:$0xff]
    %v2769 = vld [vmem:[#allocation2 + $0x4f08] sm:$0xff]
    %v2770 = vld [vmem:[#allocation2 + $0x4f10] sm:$0xff]
    %v2771 = vld [vmem:[#allocation2 + $0x4f18] sm:$0xff]
    %v2772 = vld [vmem:[#allocation2 + $0x4f20] sm:$0xff]
    %v2773 = vld [vmem:[#allocation2 + $0x4f28] sm:$0xff]
    %v2774 = vld [vmem:[#allocation2 + $0x4f30] sm:$0xff]
    %v2775 = vld [vmem:[#allocation2 + $0x4f38] sm:$0xff]
    %v2776 = vld [vmem:[#allocation2 + $0x4f40] sm:$0xff]
    %v2777 = vld [vmem:[#allocation2 + $0x4f48] sm:$0xff]
    %v2778 = vld [vmem:[#allocation2 + $0x4f50] sm:$0xff]
    %v2779 = vld [vmem:[#allocation2 + $0x4f58] sm:$0xff]
    %v2780 = vld [vmem:[#allocation2 + $0x4f60] sm:$0xff]
    %v2781 = vld [vmem:[#allocation2 + $0x4f68] sm:$0xff]
    %v2782 = vld [vmem:[#allocation2 + $0x4f70] sm:$0xff]
    %v2783 = vld [vmem:[#allocation2 + $0x4f78] sm:$0xff]
    %v2784 = vld [vmem:[#allocation2 + $0x4f80] sm:$0xff]
    %v2785 = vld [vmem:[#allocation2 + $0x4f88] sm:$0xff]
    %v2786 = vld [vmem:[#allocation2 + $0x4f90] sm:$0xff]
    %v2787 = vld [vmem:[#allocation2 + $0x4f98] sm:$0xff]
    %v2788 = vld [vmem:[#allocation2 + $0x4fa0] sm:$0xff]
    %v2789 = vld [vmem:[#allocation2 + $0x4fa8] sm:$0xff]
    %v2790 = vld [vmem:[#allocation2 + $0x4fb0] sm:$0xff]
    %v2791 = vld [vmem:[#allocation2 + $0x4fb8] sm:$0xff]
    %v2792 = vld [vmem:[#allocation2 + $0x4fc0] sm:$0xff]
    %v2793 = vld [vmem:[#allocation2 + $0x4fc8] sm:$0xff]
    %v2794 = vld [vmem:[#allocation2 + $0x4fd0] sm:$0xff]
    %v2795 = vld [vmem:[#allocation2 + $0x4fd8] sm:$0xff]
    %v2796 = vld [vmem:[#allocation2 + $0x4fe0] sm:$0xff]
    %v2797 = vld [vmem:[#allocation2 + $0x4fe8] sm:$0xff]
    %v2798 = vld [vmem:[#allocation2 + $0x4ff0] sm:$0xff]
    %v2799 = vld [vmem:[#allocation2 + $0x4ff8] sm:$0xff]
    %v2800 = vld [vmem:[#allocation2 + $0x5000] sm:$0xff]
    %v2801 = vld [vmem:[#allocation2 + $0x5008] sm:$0xff]
    %v2802 = vld [vmem:[#allocation2 + $0x5010] sm:$0xff]
    %v2803 = vld [vmem:[#allocation2 + $0x5018] sm:$0xff]
    %v2804 = vld [vmem:[#allocation2 + $0x5020] sm:$0xff]
    %v2805 = vld [vmem:[#allocation2 + $0x5028] sm:$0xff]
    %v2806 = vld [vmem:[#allocation2 + $0x5030] sm:$0xff]
    %v2807 = vld [vmem:[#allocation2 + $0x5038] sm:$0xff]
    %v2808 = vld [vmem:[#allocation2 + $0x5040] sm:$0xff]
    %v2809 = vld [vmem:[#allocation2 + $0x5048] sm:$0xff]
    %v2810 = vld [vmem:[#allocation2 + $0x5050] sm:$0xff]
    %v2811 = vld [vmem:[#allocation2 + $0x5058] sm:$0xff]
    %v2812 = vld [vmem:[#allocation2 + $0x5060] sm:$0xff]
    %v2813 = vld [vmem:[#allocation2 + $0x5068] sm:$0xff]
    %v2814 = vld [vmem:[#allocation2 + $0x5070] sm:$0xff]
    %v2815 = vld [vmem:[#allocation2 + $0x5078] sm:$0xff]
    %v2816 = vld [vmem:[#allocation2 + $0x5080] sm:$0xff]
    %v2817 = vld [vmem:[#allocation2 + $0x5088] sm:$0xff]
    %v2818 = vld [vmem:[#allocation2 + $0x5090] sm:$0xff]
    %v2819 = vld [vmem:[#allocation2 + $0x5098] sm:$0xff]
    %v2820 = vld [vmem:[#allocation2 + $0x50a0] sm:$0xff]
    %v2821 = vld [vmem:[#allocation2 + $0x50a8] sm:$0xff]
    %v2822 = vld [vmem:[#allocation2 + $0x50b0] sm:$0xff]
    %v2823 = vld [vmem:[#allocation2 + $0x50b8] sm:$0xff]
    %v2824 = vld [vmem:[#allocation2 + $0x50c0] sm:$0xff]
    %v2825 = vld [vmem:[#allocation2 + $0x50c8] sm:$0xff]
    %v2826 = vld [vmem:[#allocation2 + $0x50d0] sm:$0xff]
    %v2827 = vld [vmem:[#allocation2 + $0x50d8] sm:$0xff]
    %v2828 = vld [vmem:[#allocation2 + $0x50e0] sm:$0xff]
    %v2829 = vld [vmem:[#allocation2 + $0x50e8] sm:$0xff]
    %v2830 = vld [vmem:[#allocation2 + $0x50f0] sm:$0xff]
    %v2831 = vld [vmem:[#allocation2 + $0x50f8] sm:$0xff]
    %v2832 = vld [vmem:[#allocation2 + $0x5100] sm:$0xff]
    %v2833 = vld [vmem:[#allocation2 + $0x5108] sm:$0xff]
    %v2834 = vld [vmem:[#allocation2 + $0x5110] sm:$0xff]
    %v2835 = vld [vmem:[#allocation2 + $0x5118] sm:$0xff]
    %v2836 = vld [vmem:[#allocation2 + $0x5120] sm:$0xff]
    %v2837 = vld [vmem:[#allocation2 + $0x5128] sm:$0xff]
    %v2838 = vld [vmem:[#allocation2 + $0x5130] sm:$0xff]
    %v2839 = vld [vmem:[#allocation2 + $0x5138] sm:$0xff]
    %v2840 = vld [vmem:[#allocation2 + $0x5140] sm:$0xff]
    %v2841 = vld [vmem:[#allocation2 + $0x5148] sm:$0xff]
    %v2842 = vld [vmem:[#allocation2 + $0x5150] sm:$0xff]
    %v2843 = vld [vmem:[#allocation2 + $0x5158] sm:$0xff]
    %v2844 = vld [vmem:[#allocation2 + $0x5160] sm:$0xff]
    %v2845 = vld [vmem:[#allocation2 + $0x5168] sm:$0xff]
    %v2846 = vld [vmem:[#allocation2 + $0x5170] sm:$0xff]
    %v2847 = vld [vmem:[#allocation2 + $0x5178] sm:$0xff]
    %v2848 = vld [vmem:[#allocation2 + $0x5180] sm:$0xff]
    %v2849 = vld [vmem:[#allocation2 + $0x5188] sm:$0xff]
    %v2850 = vld [vmem:[#allocation2 + $0x5190] sm:$0xff]
    %v2851 = vld [vmem:[#allocation2 + $0x5198] sm:$0xff]
    %v2852 = vld [vmem:[#allocation2 + $0x51a0] sm:$0xff]
    %v2853 = vld [vmem:[#allocation2 + $0x51a8] sm:$0xff]
    %v2854 = vld [vmem:[#allocation2 + $0x51b0] sm:$0xff]
    %v2855 = vld [vmem:[#allocation2 + $0x51b8] sm:$0xff]
    %v2856 = vld [vmem:[#allocation2 + $0x51c0] sm:$0xff]
    %v2857 = vld [vmem:[#allocation2 + $0x51c8] sm:$0xff]
    %v2858 = vld [vmem:[#allocation2 + $0x51d0] sm:$0xff]
    %v2859 = vld [vmem:[#allocation2 + $0x51d8] sm:$0xff]
    %v2860 = vld [vmem:[#allocation2 + $0x51e0] sm:$0xff]
    %v2861 = vld [vmem:[#allocation2 + $0x51e8] sm:$0xff]
    %v2862 = vld [vmem:[#allocation2 + $0x51f0] sm:$0xff]
    %v2863 = vld [vmem:[#allocation2 + $0x51f8] sm:$0xff]
    %v2864 = vld [vmem:[#allocation2 + $0x5200] sm:$0xff]
    %v2865 = vld [vmem:[#allocation2 + $0x5208] sm:$0xff]
    %v2866 = vld [vmem:[#allocation2 + $0x5210] sm:$0xff]
    %v2867 = vld [vmem:[#allocation2 + $0x5218] sm:$0xff]
    %v2868 = vld [vmem:[#allocation2 + $0x5220] sm:$0xff]
    %v2869 = vld [vmem:[#allocation2 + $0x5228] sm:$0xff]
    %v2870 = vld [vmem:[#allocation2 + $0x5230] sm:$0xff]
    %v2871 = vld [vmem:[#allocation2 + $0x5238] sm:$0xff]
    %v2872 = vld [vmem:[#allocation2 + $0x5240] sm:$0xff]
    %v2873 = vld [vmem:[#allocation2 + $0x5248] sm:$0xff]
    %v2874 = vld [vmem:[#allocation2 + $0x5250] sm:$0xff]
    %v2875 = vld [vmem:[#allocation2 + $0x5258] sm:$0xff]
    %v2876 = vld [vmem:[#allocation2 + $0x5260] sm:$0xff]
    %v2877 = vld [vmem:[#allocation2 + $0x5268] sm:$0xff]
    %v2878 = vld [vmem:[#allocation2 + $0x5270] sm:$0xff]
    %v2879 = vld [vmem:[#allocation2 + $0x5278] sm:$0xff]
    %v2880 = vld [vmem:[#allocation2 + $0x5280] sm:$0xff]
    %v2881 = vld [vmem:[#allocation2 + $0x5288] sm:$0xff]
    %v2882 = vld [vmem:[#allocation2 + $0x5290] sm:$0xff]
    %v2883 = vld [vmem:[#allocation2 + $0x5298] sm:$0xff]
    %v2884 = vld [vmem:[#allocation2 + $0x52a0] sm:$0xff]
    %v2885 = vld [vmem:[#allocation2 + $0x52a8] sm:$0xff]
    %v2886 = vld [vmem:[#allocation2 + $0x52b0] sm:$0xff]
    %v2887 = vld [vmem:[#allocation2 + $0x52b8] sm:$0xff]
    %v2888 = vld [vmem:[#allocation2 + $0x52c0] sm:$0xff]
    %v2889 = vld [vmem:[#allocation2 + $0x52c8] sm:$0xff]
    %v2890 = vld [vmem:[#allocation2 + $0x52d0] sm:$0xff]
    %v2891 = vld [vmem:[#allocation2 + $0x52d8] sm:$0xff]
    %v2892 = vld [vmem:[#allocation2 + $0x52e0] sm:$0xff]
    %v2893 = vld [vmem:[#allocation2 + $0x52e8] sm:$0xff]
    %v2894 = vld [vmem:[#allocation2 + $0x52f0] sm:$0xff]
    %v2895 = vld [vmem:[#allocation2 + $0x52f8] sm:$0xff]
    %v2896 = vld [vmem:[#allocation2 + $0x5300] sm:$0xff]
    %v2897 = vld [vmem:[#allocation2 + $0x5308] sm:$0xff]
    %v2898 = vld [vmem:[#allocation2 + $0x5310] sm:$0xff]
    %v2899 = vld [vmem:[#allocation2 + $0x5318] sm:$0xff]
    %v2900 = vld [vmem:[#allocation2 + $0x5320] sm:$0xff]
    %v2901 = vld [vmem:[#allocation2 + $0x5328] sm:$0xff]
    %v2902 = vld [vmem:[#allocation2 + $0x5330] sm:$0xff]
    %v2903 = vld [vmem:[#allocation2 + $0x5338] sm:$0xff]
    %v2904 = vld [vmem:[#allocation2 + $0x5340] sm:$0xff]
    %v2905 = vld [vmem:[#allocation2 + $0x5348] sm:$0xff]
    %v2906 = vld [vmem:[#allocation2 + $0x5350] sm:$0xff]
    %v2907 = vld [vmem:[#allocation2 + $0x5358] sm:$0xff]
    %v2908 = vld [vmem:[#allocation2 + $0x5360] sm:$0xff]
    %v2909 = vld [vmem:[#allocation2 + $0x5368] sm:$0xff]
    %v2910 = vld [vmem:[#allocation2 + $0x5370] sm:$0xff]
    %v2911 = vld [vmem:[#allocation2 + $0x5378] sm:$0xff]
    %v2912 = vld [vmem:[#allocation2 + $0x5380] sm:$0xff]
    %v2913 = vld [vmem:[#allocation2 + $0x5388] sm:$0xff]
    %v2914 = vld [vmem:[#allocation2 + $0x5390] sm:$0xff]
    %v2915 = vld [vmem:[#allocation2 + $0x5398] sm:$0xff]
    %v2916 = vld [vmem:[#allocation2 + $0x53a0] sm:$0xff]
    %v2917 = vld [vmem:[#allocation2 + $0x53a8] sm:$0xff]
    %v2918 = vld [vmem:[#allocation2 + $0x53b0] sm:$0xff]
    %v2919 = vld [vmem:[#allocation2 + $0x53b8] sm:$0xff]
    %v2920 = vld [vmem:[#allocation2 + $0x53c0] sm:$0xff]
    %v2921 = vld [vmem:[#allocation2 + $0x53c8] sm:$0xff]
    %v2922 = vld [vmem:[#allocation2 + $0x53d0] sm:$0xff]
    %v2923 = vld [vmem:[#allocation2 + $0x53d8] sm:$0xff]
    %v2924 = vld [vmem:[#allocation2 + $0x53e0] sm:$0xff]
    %v2925 = vld [vmem:[#allocation2 + $0x53e8] sm:$0xff]
    %v2926 = vld [vmem:[#allocation2 + $0x53f0] sm:$0xff]
    %v2927 = vld [vmem:[#allocation2 + $0x53f8] sm:$0xff]
    %v2928 = vld [vmem:[#allocation2 + $0x5400] sm:$0xff]
    %v2929 = vld [vmem:[#allocation2 + $0x5408] sm:$0xff]
    %v2930 = vld [vmem:[#allocation2 + $0x5410] sm:$0xff]
    %v2931 = vld [vmem:[#allocation2 + $0x5418] sm:$0xff]
    %v2932 = vld [vmem:[#allocation2 + $0x5420] sm:$0xff]
    %v2933 = vld [vmem:[#allocation2 + $0x5428] sm:$0xff]
    %v2934 = vld [vmem:[#allocation2 + $0x5430] sm:$0xff]
    %v2935 = vld [vmem:[#allocation2 + $0x5438] sm:$0xff]
    %v2936 = vld [vmem:[#allocation2 + $0x5440] sm:$0xff]
    %v2937 = vld [vmem:[#allocation2 + $0x5448] sm:$0xff]
    %v2938 = vld [vmem:[#allocation2 + $0x5450] sm:$0xff]
    %v2939 = vld [vmem:[#allocation2 + $0x5458] sm:$0xff]
    %v2940 = vld [vmem:[#allocation2 + $0x5460] sm:$0xff]
    %v2941 = vld [vmem:[#allocation2 + $0x5468] sm:$0xff]
    %v2942 = vld [vmem:[#allocation2 + $0x5470] sm:$0xff]
    %v2943 = vld [vmem:[#allocation2 + $0x5478] sm:$0xff]
    %v2944 = vld [vmem:[#allocation2 + $0x5480] sm:$0xff]
    %v2945 = vld [vmem:[#allocation2 + $0x5488] sm:$0xff]
    %v2946 = vld [vmem:[#allocation2 + $0x5490] sm:$0xff]
    %v2947 = vld [vmem:[#allocation2 + $0x5498] sm:$0xff]
    %v2948 = vld [vmem:[#allocation2 + $0x54a0] sm:$0xff]
    %v2949 = vld [vmem:[#allocation2 + $0x54a8] sm:$0xff]
    %v2950 = vld [vmem:[#allocation2 + $0x54b0] sm:$0xff]
    %v2951 = vld [vmem:[#allocation2 + $0x54b8] sm:$0xff]
    %v2952 = vld [vmem:[#allocation2 + $0x54c0] sm:$0xff]
    %v2953 = vld [vmem:[#allocation2 + $0x54c8] sm:$0xff]
    %v2954 = vld [vmem:[#allocation2 + $0x54d0] sm:$0xff]
    %v2955 = vld [vmem:[#allocation2 + $0x54d8] sm:$0xff]
    %v2956 = vld [vmem:[#allocation2 + $0x54e0] sm:$0xff]
    %v2957 = vld [vmem:[#allocation2 + $0x54e8] sm:$0xff]
    %v2958 = vld [vmem:[#allocation2 + $0x54f0] sm:$0xff]
    %v2959 = vld [vmem:[#allocation2 + $0x54f8] sm:$0xff]
    %v2960 = vld [vmem:[#allocation2 + $0x5500] sm:$0xff]
    %v2961 = vld [vmem:[#allocation2 + $0x5508] sm:$0xff]
    %v2962 = vld [vmem:[#allocation2 + $0x5510] sm:$0xff]
    %v2963 = vld [vmem:[#allocation2 + $0x5518] sm:$0xff]
    %v2964 = vld [vmem:[#allocation2 + $0x5520] sm:$0xff]
    %v2965 = vld [vmem:[#allocation2 + $0x5528] sm:$0xff]
    %v2966 = vld [vmem:[#allocation2 + $0x5530] sm:$0xff]
    %v2967 = vld [vmem:[#allocation2 + $0x5538] sm:$0xff]
    %v2968 = vld [vmem:[#allocation2 + $0x5540] sm:$0xff]
    %v2969 = vld [vmem:[#allocation2 + $0x5548] sm:$0xff]
    %v2970 = vld [vmem:[#allocation2 + $0x5550] sm:$0xff]
    %v2971 = vld [vmem:[#allocation2 + $0x5558] sm:$0xff]
    %v2972 = vld [vmem:[#allocation2 + $0x5560] sm:$0xff]
    %v2973 = vld [vmem:[#allocation2 + $0x5568] sm:$0xff]
    %v2974 = vld [vmem:[#allocation2 + $0x5570] sm:$0xff]
    %v2975 = vld [vmem:[#allocation2 + $0x5578] sm:$0xff]
    %v2976 = vld [vmem:[#allocation2 + $0x5580] sm:$0xff]
    %v2977 = vld [vmem:[#allocation2 + $0x5588] sm:$0xff]
    %v2978 = vld [vmem:[#allocation2 + $0x5590] sm:$0xff]
    %v2979 = vld [vmem:[#allocation2 + $0x5598] sm:$0xff]
    %v2980 = vld [vmem:[#allocation2 + $0x55a0] sm:$0xff]
    %v2981 = vld [vmem:[#allocation2 + $0x55a8] sm:$0xff]
    %v2982 = vld [vmem:[#allocation2 + $0x55b0] sm:$0xff]
    %v2983 = vld [vmem:[#allocation2 + $0x55b8] sm:$0xff]
    %v2984 = vld [vmem:[#allocation2 + $0x55c0] sm:$0xff]
    %v2985 = vld [vmem:[#allocation2 + $0x55c8] sm:$0xff]
    %v2986 = vld [vmem:[#allocation2 + $0x55d0] sm:$0xff]
    %v2987 = vld [vmem:[#allocation2 + $0x55d8] sm:$0xff]
    %v2988 = vld [vmem:[#allocation2 + $0x55e0] sm:$0xff]
    %v2989 = vld [vmem:[#allocation2 + $0x55e8] sm:$0xff]
    %v2990 = vld [vmem:[#allocation2 + $0x55f0] sm:$0xff]
    %v2991 = vld [vmem:[#allocation2 + $0x55f8] sm:$0xff]
    %v2992 = vld [vmem:[#allocation2 + $0x5600] sm:$0xff]
    %v2993 = vld [vmem:[#allocation2 + $0x5608] sm:$0xff]
    %v2994 = vld [vmem:[#allocation2 + $0x5610] sm:$0xff]
    %v2995 = vld [vmem:[#allocation2 + $0x5618] sm:$0xff]
    %v2996 = vld [vmem:[#allocation2 + $0x5620] sm:$0xff]
    %v2997 = vld [vmem:[#allocation2 + $0x5628] sm:$0xff]
    %v2998 = vld [vmem:[#allocation2 + $0x5630] sm:$0xff]
    %v2999 = vld [vmem:[#allocation2 + $0x5638] sm:$0xff]
    %v3000 = vld [vmem:[#allocation2 + $0x5640] sm:$0xff]
    %v3001 = vld [vmem:[#allocation2 + $0x5648] sm:$0xff]
    %v3002 = vld [vmem:[#allocation2 + $0x5650] sm:$0xff]
    %v3003 = vld [vmem:[#allocation2 + $0x5658] sm:$0xff]
    %v3004 = vld [vmem:[#allocation2 + $0x5660] sm:$0xff]
    %v3005 = vld [vmem:[#allocation2 + $0x5668] sm:$0xff]
    %v3006 = vld [vmem:[#allocation2 + $0x5670] sm:$0xff]
    %v3007 = vld [vmem:[#allocation2 + $0x5678] sm:$0xff]
    %v3008 = vld [vmem:[#allocation2 + $0x5680] sm:$0xff]
    %v3009 = vld [vmem:[#allocation2 + $0x5688] sm:$0xff]
    %v3010 = vld [vmem:[#allocation2 + $0x5690] sm:$0xff]
    %v3011 = vld [vmem:[#allocation2 + $0x5698] sm:$0xff]
    %v3012 = vld [vmem:[#allocation2 + $0x56a0] sm:$0xff]
    %v3013 = vld [vmem:[#allocation2 + $0x56a8] sm:$0xff]
    %v3014 = vld [vmem:[#allocation2 + $0x56b0] sm:$0xff]
    %v3015 = vld [vmem:[#allocation2 + $0x56b8] sm:$0xff]
    %v3016 = vld [vmem:[#allocation2 + $0x56c0] sm:$0xff]
    %v3017 = vld [vmem:[#allocation2 + $0x56c8] sm:$0xff]
    %v3018 = vld [vmem:[#allocation2 + $0x56d0] sm:$0xff]
    %v3019 = vld [vmem:[#allocation2 + $0x56d8] sm:$0xff]
    %v3020 = vld [vmem:[#allocation2 + $0x56e0] sm:$0xff]
    %v3021 = vld [vmem:[#allocation2 + $0x56e8] sm:$0xff]
    %v3022 = vld [vmem:[#allocation2 + $0x56f0] sm:$0xff]
    %v3023 = vld [vmem:[#allocation2 + $0x56f8] sm:$0xff]
    %v3024 = vld [vmem:[#allocation2 + $0x5700] sm:$0xff]
    %v3025 = vld [vmem:[#allocation2 + $0x5708] sm:$0xff]
    %v3026 = vld [vmem:[#allocation2 + $0x5710] sm:$0xff]
    %v3027 = vld [vmem:[#allocation2 + $0x5718] sm:$0xff]
    %v3028 = vld [vmem:[#allocation2 + $0x5720] sm:$0xff]
    %v3029 = vld [vmem:[#allocation2 + $0x5728] sm:$0xff]
    %v3030 = vld [vmem:[#allocation2 + $0x5730] sm:$0xff]
    %v3031 = vld [vmem:[#allocation2 + $0x5738] sm:$0xff]
    %v3032 = vld [vmem:[#allocation2 + $0x5740] sm:$0xff]
    %v3033 = vld [vmem:[#allocation2 + $0x5748] sm:$0xff]
    %v3034 = vld [vmem:[#allocation2 + $0x5750] sm:$0xff]
    %v3035 = vld [vmem:[#allocation2 + $0x5758] sm:$0xff]
    %v3036 = vld [vmem:[#allocation2 + $0x5760] sm:$0xff]
    %v3037 = vld [vmem:[#allocation2 + $0x5768] sm:$0xff]
    %v3038 = vld [vmem:[#allocation2 + $0x5770] sm:$0xff]
    %v3039 = vld [vmem:[#allocation2 + $0x5778] sm:$0xff]
    %v3040 = vld [vmem:[#allocation2 + $0x5780] sm:$0xff]
    %v3041 = vld [vmem:[#allocation2 + $0x5788] sm:$0xff]
    %v3042 = vld [vmem:[#allocation2 + $0x5790] sm:$0xff]
    %v3043 = vld [vmem:[#allocation2 + $0x5798] sm:$0xff]
    %v3044 = vld [vmem:[#allocation2 + $0x57a0] sm:$0xff]
    %v3045 = vld [vmem:[#allocation2 + $0x57a8] sm:$0xff]
    %v3046 = vld [vmem:[#allocation2 + $0x57b0] sm:$0xff]
    %v3047 = vld [vmem:[#allocation2 + $0x57b8] sm:$0xff]
    %v3048 = vld [vmem:[#allocation2 + $0x57c0] sm:$0xff]
    %v3049 = vld [vmem:[#allocation2 + $0x57c8] sm:$0xff]
    %v3050 = vld [vmem:[#allocation2 + $0x57d0] sm:$0xff]
    %v3051 = vld [vmem:[#allocation2 + $0x57d8] sm:$0xff]
    %v3052 = vld [vmem:[#allocation2 + $0x57e0] sm:$0xff]
    %v3053 = vld [vmem:[#allocation2 + $0x57e8] sm:$0xff]
    %v3054 = vld [vmem:[#allocation2 + $0x57f0] sm:$0xff]
    %v3055 = vld [vmem:[#allocation2 + $0x57f8] sm:$0xff]
    %v3056 = vld [vmem:[#allocation2 + $0x5800] sm:$0xff]
    %v3057 = vld [vmem:[#allocation2 + $0x5808] sm:$0xff]
    %v3058 = vld [vmem:[#allocation2 + $0x5810] sm:$0xff]
    %v3059 = vld [vmem:[#allocation2 + $0x5818] sm:$0xff]
    %v3060 = vld [vmem:[#allocation2 + $0x5820] sm:$0xff]
    %v3061 = vld [vmem:[#allocation2 + $0x5828] sm:$0xff]
    %v3062 = vld [vmem:[#allocation2 + $0x5830] sm:$0xff]
    %v3063 = vld [vmem:[#allocation2 + $0x5838] sm:$0xff]
    %v3064 = vld [vmem:[#allocation2 + $0x5840] sm:$0xff]
    %v3065 = vld [vmem:[#allocation2 + $0x5848] sm:$0xff]
    %v3066 = vld [vmem:[#allocation2 + $0x5850] sm:$0xff]
    %v3067 = vld [vmem:[#allocation2 + $0x5858] sm:$0xff]
    %v3068 = vld [vmem:[#allocation2 + $0x5860] sm:$0xff]
    %v3069 = vld [vmem:[#allocation2 + $0x5868] sm:$0xff]
    %v3070 = vld [vmem:[#allocation2 + $0x5870] sm:$0xff]
    %v3071 = vld [vmem:[#allocation2 + $0x5878] sm:$0xff]
    %v3072 = vld [vmem:[#allocation2 + $0x5880] sm:$0xff]
    %v3073 = vld [vmem:[#allocation2 + $0x5888] sm:$0xff]
    %v3074 = vld [vmem:[#allocation2 + $0x5890] sm:$0xff]
    %v3075 = vld [vmem:[#allocation2 + $0x5898] sm:$0xff]
    %v3076 = vld [vmem:[#allocation2 + $0x58a0] sm:$0xff]
    %v3077 = vld [vmem:[#allocation2 + $0x58a8] sm:$0xff]
    %v3078 = vld [vmem:[#allocation2 + $0x58b0] sm:$0xff]
    %v3079 = vld [vmem:[#allocation2 + $0x58b8] sm:$0xff]
    %v3080 = vld [vmem:[#allocation2 + $0x58c0] sm:$0xff]
    %v3081 = vld [vmem:[#allocation2 + $0x58c8] sm:$0xff]
    %v3082 = vld [vmem:[#allocation2 + $0x58d0] sm:$0xff]
    %v3083 = vld [vmem:[#allocation2 + $0x58d8] sm:$0xff]
    %v3084 = vld [vmem:[#allocation2 + $0x58e0] sm:$0xff]
    %v3085 = vld [vmem:[#allocation2 + $0x58e8] sm:$0xff]
    %v3086 = vld [vmem:[#allocation2 + $0x58f0] sm:$0xff]
    %v3087 = vld [vmem:[#allocation2 + $0x58f8] sm:$0xff]
    %v3088 = vld [vmem:[#allocation2 + $0x5900] sm:$0xff]
    %v3089 = vld [vmem:[#allocation2 + $0x5908] sm:$0xff]
    %v3090 = vld [vmem:[#allocation2 + $0x5910] sm:$0xff]
    %v3091 = vld [vmem:[#allocation2 + $0x5918] sm:$0xff]
    %v3092 = vld [vmem:[#allocation2 + $0x5920] sm:$0xff]
    %v3093 = vld [vmem:[#allocation2 + $0x5928] sm:$0xff]
    %v3094 = vld [vmem:[#allocation2 + $0x5930] sm:$0xff]
    %v3095 = vld [vmem:[#allocation2 + $0x5938] sm:$0xff]
    %v3096 = vld [vmem:[#allocation2 + $0x5940] sm:$0xff]
    %v3097 = vld [vmem:[#allocation2 + $0x5948] sm:$0xff]
    %v3098 = vld [vmem:[#allocation2 + $0x5950] sm:$0xff]
    %v3099 = vld [vmem:[#allocation2 + $0x5958] sm:$0xff]
    %v3100 = vld [vmem:[#allocation2 + $0x5960] sm:$0xff]
    %v3101 = vld [vmem:[#allocation2 + $0x5968] sm:$0xff]
    %v3102 = vld [vmem:[#allocation2 + $0x5970] sm:$0xff]
    %v3103 = vld [vmem:[#allocation2 + $0x5978] sm:$0xff]
    %v3104 = vld [vmem:[#allocation2 + $0x5980] sm:$0xff]
    %v3105 = vld [vmem:[#allocation2 + $0x5988] sm:$0xff]
    %v3106 = vld [vmem:[#allocation2 + $0x5990] sm:$0xff]
    %v3107 = vld [vmem:[#allocation2 + $0x5998] sm:$0xff]
    %v3108 = vld [vmem:[#allocation2 + $0x59a0] sm:$0xff]
    %v3109 = vld [vmem:[#allocation2 + $0x59a8] sm:$0xff]
    %v3110 = vld [vmem:[#allocation2 + $0x59b0] sm:$0xff]
    %v3111 = vld [vmem:[#allocation2 + $0x59b8] sm:$0xff]
    %v3112 = vld [vmem:[#allocation2 + $0x59c0] sm:$0xff]
    %v3113 = vld [vmem:[#allocation2 + $0x59c8] sm:$0xff]
    %v3114 = vld [vmem:[#allocation2 + $0x59d0] sm:$0xff]
    %v3115 = vld [vmem:[#allocation2 + $0x59d8] sm:$0xff]
    %v3116 = vld [vmem:[#allocation2 + $0x59e0] sm:$0xff]
    %v3117 = vld [vmem:[#allocation2 + $0x59e8] sm:$0xff]
    %v3118 = vld [vmem:[#allocation2 + $0x59f0] sm:$0xff]
    %v3119 = vld [vmem:[#allocation2 + $0x59f8] sm:$0xff]
    %v3120 = vld [vmem:[#allocation2 + $0x5a00] sm:$0xff]
    %v3121 = vld [vmem:[#allocation2 + $0x5a08] sm:$0xff]
    %v3122 = vld [vmem:[#allocation2 + $0x5a10] sm:$0xff]
    %v3123 = vld [vmem:[#allocation2 + $0x5a18] sm:$0xff]
    %v3124 = vld [vmem:[#allocation2 + $0x5a20] sm:$0xff]
    %v3125 = vld [vmem:[#allocation2 + $0x5a28] sm:$0xff]
    %v3126 = vld [vmem:[#allocation2 + $0x5a30] sm:$0xff]
    %v3127 = vld [vmem:[#allocation2 + $0x5a38] sm:$0xff]
    %v3128 = vld [vmem:[#allocation2 + $0x5a40] sm:$0xff]
    %v3129 = vld [vmem:[#allocation2 + $0x5a48] sm:$0xff]
    %v3130 = vld [vmem:[#allocation2 + $0x5a50] sm:$0xff]
    %v3131 = vld [vmem:[#allocation2 + $0x5a58] sm:$0xff]
    %v3132 = vld [vmem:[#allocation2 + $0x5a60] sm:$0xff]
    %v3133 = vld [vmem:[#allocation2 + $0x5a68] sm:$0xff]
    %v3134 = vld [vmem:[#allocation2 + $0x5a70] sm:$0xff]
    %v3135 = vld [vmem:[#allocation2 + $0x5a78] sm:$0xff]
    %v3136 = vld [vmem:[#allocation2 + $0x5a80] sm:$0xff]
    %v3137 = vld [vmem:[#allocation2 + $0x5a88] sm:$0xff]
    %v3138 = vld [vmem:[#allocation2 + $0x5a90] sm:$0xff]
    %v3139 = vld [vmem:[#allocation2 + $0x5a98] sm:$0xff]
    %v3140 = vld [vmem:[#allocation2 + $0x5aa0] sm:$0xff]
    %v3141 = vld [vmem:[#allocation2 + $0x5aa8] sm:$0xff]
    %v3142 = vld [vmem:[#allocation2 + $0x5ab0] sm:$0xff]
    %v3143 = vld [vmem:[#allocation2 + $0x5ab8] sm:$0xff]
    %v3144 = vld [vmem:[#allocation2 + $0x5ac0] sm:$0xff]
    %v3145 = vld [vmem:[#allocation2 + $0x5ac8] sm:$0xff]
    %v3146 = vld [vmem:[#allocation2 + $0x5ad0] sm:$0xff]
    %v3147 = vld [vmem:[#allocation2 + $0x5ad8] sm:$0xff]
    %v3148 = vld [vmem:[#allocation2 + $0x5ae0] sm:$0xff]
    %v3149 = vld [vmem:[#allocation2 + $0x5ae8] sm:$0xff]
    %v3150 = vld [vmem:[#allocation2 + $0x5af0] sm:$0xff]
    %v3151 = vld [vmem:[#allocation2 + $0x5af8] sm:$0xff]
    %v3152 = vld [vmem:[#allocation2 + $0x5b00] sm:$0xff]
    %v3153 = vld [vmem:[#allocation2 + $0x5b08] sm:$0xff]
    %v3154 = vld [vmem:[#allocation2 + $0x5b10] sm:$0xff]
    %v3155 = vld [vmem:[#allocation2 + $0x5b18] sm:$0xff]
    %v3156 = vld [vmem:[#allocation2 + $0x5b20] sm:$0xff]
    %v3157 = vld [vmem:[#allocation2 + $0x5b28] sm:$0xff]
    %v3158 = vld [vmem:[#allocation2 + $0x5b30] sm:$0xff]
    %v3159 = vld [vmem:[#allocation2 + $0x5b38] sm:$0xff]
    %v3160 = vld [vmem:[#allocation2 + $0x5b40] sm:$0xff]
    %v3161 = vld [vmem:[#allocation2 + $0x5b48] sm:$0xff]
    %v3162 = vld [vmem:[#allocation2 + $0x5b50] sm:$0xff]
    %v3163 = vld [vmem:[#allocation2 + $0x5b58] sm:$0xff]
    %v3164 = vld [vmem:[#allocation2 + $0x5b60] sm:$0xff]
    %v3165 = vld [vmem:[#allocation2 + $0x5b68] sm:$0xff]
    %v3166 = vld [vmem:[#allocation2 + $0x5b70] sm:$0xff]
    %v3167 = vld [vmem:[#allocation2 + $0x5b78] sm:$0xff]
    %v3168 = vld [vmem:[#allocation2 + $0x5b80] sm:$0xff]
    %v3169 = vld [vmem:[#allocation2 + $0x5b88] sm:$0xff]
    %v3170 = vld [vmem:[#allocation2 + $0x5b90] sm:$0xff]
    %v3171 = vld [vmem:[#allocation2 + $0x5b98] sm:$0xff]
    %v3172 = vld [vmem:[#allocation2 + $0x5ba0] sm:$0xff]
    %v3173 = vld [vmem:[#allocation2 + $0x5ba8] sm:$0xff]
    %v3174 = vld [vmem:[#allocation2 + $0x5bb0] sm:$0xff]
    %v3175 = vld [vmem:[#allocation2 + $0x5bb8] sm:$0xff]
    %v3176 = vld [vmem:[#allocation2 + $0x5bc0] sm:$0xff]
    %v3177 = vld [vmem:[#allocation2 + $0x5bc8] sm:$0xff]
    %v3178 = vld [vmem:[#allocation2 + $0x5bd0] sm:$0xff]
    %v3179 = vld [vmem:[#allocation2 + $0x5bd8] sm:$0xff]
    %v3180 = vld [vmem:[#allocation2 + $0x5be0] sm:$0xff]
    %v3181 = vld [vmem:[#allocation2 + $0x5be8] sm:$0xff]
    %v3182 = vld [vmem:[#allocation2 + $0x5bf0] sm:$0xff]
    %v3183 = vld [vmem:[#allocation2 + $0x5bf8] sm:$0xff]
    %v3184 = vld [vmem:[#allocation2 + $0x5c00] sm:$0xff]
    %v3185 = vld [vmem:[#allocation2 + $0x5c08] sm:$0xff]
    %v3186 = vld [vmem:[#allocation2 + $0x5c10] sm:$0xff]
    %v3187 = vld [vmem:[#allocation2 + $0x5c18] sm:$0xff]
    %v3188 = vld [vmem:[#allocation2 + $0x5c20] sm:$0xff]
    %v3189 = vld [vmem:[#allocation2 + $0x5c28] sm:$0xff]
    %v3190 = vld [vmem:[#allocation2 + $0x5c30] sm:$0xff]
    %v3191 = vld [vmem:[#allocation2 + $0x5c38] sm:$0xff]
    %v3192 = vld [vmem:[#allocation2 + $0x5c40] sm:$0xff]
    %v3193 = vld [vmem:[#allocation2 + $0x5c48] sm:$0xff]
    %v3194 = vld [vmem:[#allocation2 + $0x5c50] sm:$0xff]
    %v3195 = vld [vmem:[#allocation2 + $0x5c58] sm:$0xff]
    %v3196 = vld [vmem:[#allocation2 + $0x5c60] sm:$0xff]
    %v3197 = vld [vmem:[#allocation2 + $0x5c68] sm:$0xff]
    %v3198 = vld [vmem:[#allocation2 + $0x5c70] sm:$0xff]
    %v3199 = vld [vmem:[#allocation2 + $0x5c78] sm:$0xff]
    %v3200 = vld [vmem:[#allocation2 + $0x5c80] sm:$0xff]
    %v3201 = vld [vmem:[#allocation2 + $0x5c88] sm:$0xff]
    %v3202 = vld [vmem:[#allocation2 + $0x5c90] sm:$0xff]
    %v3203 = vld [vmem:[#allocation2 + $0x5c98] sm:$0xff]
    %v3204 = vld [vmem:[#allocation2 + $0x5ca0] sm:$0xff]
    %v3205 = vld [vmem:[#allocation2 + $0x5ca8] sm:$0xff]
    %v3206 = vld [vmem:[#allocation2 + $0x5cb0] sm:$0xff]
    %v3207 = vld [vmem:[#allocation2 + $0x5cb8] sm:$0xff]
    %v3208 = vld [vmem:[#allocation2 + $0x5cc0] sm:$0xff]
    %v3209 = vld [vmem:[#allocation2 + $0x5cc8] sm:$0xff]
    %v3210 = vld [vmem:[#allocation2 + $0x5cd0] sm:$0xff]
    %v3211 = vld [vmem:[#allocation2 + $0x5cd8] sm:$0xff]
    %v3212 = vld [vmem:[#allocation2 + $0x5ce0] sm:$0xff]
    %v3213 = vld [vmem:[#allocation2 + $0x5ce8] sm:$0xff]
    %v3214 = vld [vmem:[#allocation2 + $0x5cf0] sm:$0xff]
    %v3215 = vld [vmem:[#allocation2 + $0x5cf8] sm:$0xff]
    %v3216 = vld [vmem:[#allocation2 + $0x5d00] sm:$0xff]
    %v3217 = vld [vmem:[#allocation2 + $0x5d08] sm:$0xff]
    %v3218 = vld [vmem:[#allocation2 + $0x5d10] sm:$0xff]
    %v3219 = vld [vmem:[#allocation2 + $0x5d18] sm:$0xff]
    %v3220 = vld [vmem:[#allocation2 + $0x5d20] sm:$0xff]
    %v3221 = vld [vmem:[#allocation2 + $0x5d28] sm:$0xff]
    %v3222 = vld [vmem:[#allocation2 + $0x5d30] sm:$0xff]
    %v3223 = vld [vmem:[#allocation2 + $0x5d38] sm:$0xff]
    %v3224 = vld [vmem:[#allocation2 + $0x5d40] sm:$0xff]
    %v3225 = vld [vmem:[#allocation2 + $0x5d48] sm:$0xff]
    %v3226 = vld [vmem:[#allocation2 + $0x5d50] sm:$0xff]
    %v3227 = vld [vmem:[#allocation2 + $0x5d58] sm:$0xff]
    %v3228 = vld [vmem:[#allocation2 + $0x5d60] sm:$0xff]
    %v3229 = vld [vmem:[#allocation2 + $0x5d68] sm:$0xff]
    %v3230 = vld [vmem:[#allocation2 + $0x5d70] sm:$0xff]
    %v3231 = vld [vmem:[#allocation2 + $0x5d78] sm:$0xff]
    %v3232 = vld [vmem:[#allocation2 + $0x5d80] sm:$0xff]
    %v3233 = vld [vmem:[#allocation2 + $0x5d88] sm:$0xff]
    %v3234 = vld [vmem:[#allocation2 + $0x5d90] sm:$0xff]
    %v3235 = vld [vmem:[#allocation2 + $0x5d98] sm:$0xff]
    %v3236 = vld [vmem:[#allocation2 + $0x5da0] sm:$0xff]
    %v3237 = vld [vmem:[#allocation2 + $0x5da8] sm:$0xff]
    %v3238 = vld [vmem:[#allocation2 + $0x5db0] sm:$0xff]
    %v3239 = vld [vmem:[#allocation2 + $0x5db8] sm:$0xff]
    %v3240 = vld [vmem:[#allocation2 + $0x5dc0] sm:$0xff]
    %v3241 = vld [vmem:[#allocation2 + $0x5dc8] sm:$0xff]
    %v3242 = vld [vmem:[#allocation2 + $0x5dd0] sm:$0xff]
    %v3243 = vld [vmem:[#allocation2 + $0x5dd8] sm:$0xff]
    %v3244 = vld [vmem:[#allocation2 + $0x5de0] sm:$0xff]
    %v3245 = vld [vmem:[#allocation2 + $0x5de8] sm:$0xff]
    %v3246 = vld [vmem:[#allocation2 + $0x5df0] sm:$0xff]
    %v3247 = vld [vmem:[#allocation2 + $0x5df8] sm:$0xff]
    %v3248 = vld [vmem:[#allocation2 + $0x5e00] sm:$0xff]
    %v3249 = vld [vmem:[#allocation2 + $0x5e08] sm:$0xff]
    %v3250 = vld [vmem:[#allocation2 + $0x5e10] sm:$0xff]
    %v3251 = vld [vmem:[#allocation2 + $0x5e18] sm:$0xff]
    %v3252 = vld [vmem:[#allocation2 + $0x5e20] sm:$0xff]
    %v3253 = vld [vmem:[#allocation2 + $0x5e28] sm:$0xff]
    %v3254 = vld [vmem:[#allocation2 + $0x5e30] sm:$0xff]
    %v3255 = vld [vmem:[#allocation2 + $0x5e38] sm:$0xff]
    %v3256 = vld [vmem:[#allocation2 + $0x5e40] sm:$0xff]
    %v3257 = vld [vmem:[#allocation2 + $0x5e48] sm:$0xff]
    %v3258 = vld [vmem:[#allocation2 + $0x5e50] sm:$0xff]
    %v3259 = vld [vmem:[#allocation2 + $0x5e58] sm:$0xff]
    %v3260 = vld [vmem:[#allocation2 + $0x5e60] sm:$0xff]
    %v3261 = vld [vmem:[#allocation2 + $0x5e68] sm:$0xff]
    %v3262 = vld [vmem:[#allocation2 + $0x5e70] sm:$0xff]
    %v3263 = vld [vmem:[#allocation2 + $0x5e78] sm:$0xff]
    %v3264 = vld [vmem:[#allocation2 + $0x5e80] sm:$0xff]
    %v3265 = vld [vmem:[#allocation2 + $0x5e88] sm:$0xff]
    %v3266 = vld [vmem:[#allocation2 + $0x5e90] sm:$0xff]
    %v3267 = vld [vmem:[#allocation2 + $0x5e98] sm:$0xff]
    %v3268 = vld [vmem:[#allocation2 + $0x5ea0] sm:$0xff]
    %v3269 = vld [vmem:[#allocation2 + $0x5ea8] sm:$0xff]
    %v3270 = vld [vmem:[#allocation2 + $0x5eb0] sm:$0xff]
    %v3271 = vld [vmem:[#allocation2 + $0x5eb8] sm:$0xff]
    %v3272 = vld [vmem:[#allocation2 + $0x5ec0] sm:$0xff]
    %v3273 = vld [vmem:[#allocation2 + $0x5ec8] sm:$0xff]
    %v3274 = vld [vmem:[#allocation2 + $0x5ed0] sm:$0xff]
    %v3275 = vld [vmem:[#allocation2 + $0x5ed8] sm:$0xff]
    %v3276 = vld [vmem:[#allocation2 + $0x5ee0] sm:$0xff]
    %v3277 = vld [vmem:[#allocation2 + $0x5ee8] sm:$0xff]
    %v3278 = vld [vmem:[#allocation2 + $0x5ef0] sm:$0xff]
    %v3279 = vld [vmem:[#allocation2 + $0x5ef8] sm:$0xff]
    %v3280 = vld [vmem:[#allocation2 + $0x5f00] sm:$0xff]
    %v3281 = vld [vmem:[#allocation2 + $0x5f08] sm:$0xff]
    %v3282 = vld [vmem:[#allocation2 + $0x5f10] sm:$0xff]
    %v3283 = vld [vmem:[#allocation2 + $0x5f18] sm:$0xff]
    %v3284 = vld [vmem:[#allocation2 + $0x5f20] sm:$0xff]
    %v3285 = vld [vmem:[#allocation2 + $0x5f28] sm:$0xff]
    %v3286 = vld [vmem:[#allocation2 + $0x5f30] sm:$0xff]
    %v3287 = vld [vmem:[#allocation2 + $0x5f38] sm:$0xff]
    %v3288 = vld [vmem:[#allocation2 + $0x5f40] sm:$0xff]
    %v3289 = vld [vmem:[#allocation2 + $0x5f48] sm:$0xff]
    %v3290 = vld [vmem:[#allocation2 + $0x5f50] sm:$0xff]
    %v3291 = vld [vmem:[#allocation2 + $0x5f58] sm:$0xff]
    %v3292 = vld [vmem:[#allocation2 + $0x5f60] sm:$0xff]
    %v3293 = vld [vmem:[#allocation2 + $0x5f68] sm:$0xff]
    %v3294 = vld [vmem:[#allocation2 + $0x5f70] sm:$0xff]
    %v3295 = vld [vmem:[#allocation2 + $0x5f78] sm:$0xff]
    %v3296 = vld [vmem:[#allocation2 + $0x5f80] sm:$0xff]
    %v3297 = vld [vmem:[#allocation2 + $0x5f88] sm:$0xff]
    %v3298 = vld [vmem:[#allocation2 + $0x5f90] sm:$0xff]
    %v3299 = vld [vmem:[#allocation2 + $0x5f98] sm:$0xff]
    %v3300 = vld [vmem:[#allocation2 + $0x5fa0] sm:$0xff]
    %v3301 = vld [vmem:[#allocation2 + $0x5fa8] sm:$0xff]
    %v3302 = vld [vmem:[#allocation2 + $0x5fb0] sm:$0xff]
    %v3303 = vld [vmem:[#allocation2 + $0x5fb8] sm:$0xff]
    %v3304 = vld [vmem:[#allocation2 + $0x5fc0] sm:$0xff]
    %v3305 = vld [vmem:[#allocation2 + $0x5fc8] sm:$0xff]
    %v3306 = vld [vmem:[#allocation2 + $0x5fd0] sm:$0xff]
    %v3307 = vld [vmem:[#allocation2 + $0x5fd8] sm:$0xff]
    %v3308 = vld [vmem:[#allocation2 + $0x5fe0] sm:$0xff]
    %v3309 = vld [vmem:[#allocation2 + $0x5fe8] sm:$0xff]
    %v3310 = vld [vmem:[#allocation2 + $0x5ff0] sm:$0xff]
    %v3311 = vld [vmem:[#allocation2 + $0x5ff8] sm:$0xff]
    %v3312 = vld [vmem:[#allocation2 + $0x6000] sm:$0xff]
    %v3313 = vld [vmem:[#allocation2 + $0x6008] sm:$0xff]
    %v3314 = vld [vmem:[#allocation2 + $0x6010] sm:$0xff]
    %v3315 = vld [vmem:[#allocation2 + $0x6018] sm:$0xff]
    %v3316 = vld [vmem:[#allocation2 + $0x6020] sm:$0xff]
    %v3317 = vld [vmem:[#allocation2 + $0x6028] sm:$0xff]
    %v3318 = vld [vmem:[#allocation2 + $0x6030] sm:$0xff]
    %v3319 = vld [vmem:[#allocation2 + $0x6038] sm:$0xff]
    %v3320 = vld [vmem:[#allocation2 + $0x6040] sm:$0xff]
    %v3321 = vld [vmem:[#allocation2 + $0x6048] sm:$0xff]
    %v3322 = vld [vmem:[#allocation2 + $0x6050] sm:$0xff]
    %v3323 = vld [vmem:[#allocation2 + $0x6058] sm:$0xff]
    %v3324 = vld [vmem:[#allocation2 + $0x6060] sm:$0xff]
    %v3325 = vld [vmem:[#allocation2 + $0x6068] sm:$0xff]
    %v3326 = vld [vmem:[#allocation2 + $0x6070] sm:$0xff]
    %v3327 = vld [vmem:[#allocation2 + $0x6078] sm:$0xff]
    %v3328 = vld [vmem:[#allocation2 + $0x6080] sm:$0xff]
    %v3329 = vld [vmem:[#allocation2 + $0x6088] sm:$0xff]
    %v3330 = vld [vmem:[#allocation2 + $0x6090] sm:$0xff]
    %v3331 = vld [vmem:[#allocation2 + $0x6098] sm:$0xff]
    %v3332 = vld [vmem:[#allocation2 + $0x60a0] sm:$0xff]
    %v3333 = vld [vmem:[#allocation2 + $0x60a8] sm:$0xff]
    %v3334 = vld [vmem:[#allocation2 + $0x60b0] sm:$0xff]
    %v3335 = vld [vmem:[#allocation2 + $0x60b8] sm:$0xff]
    %v3336 = vld [vmem:[#allocation2 + $0x60c0] sm:$0xff]
    %v3337 = vld [vmem:[#allocation2 + $0x60c8] sm:$0xff]
    %v3338 = vld [vmem:[#allocation2 + $0x60d0] sm:$0xff]
    %v3339 = vld [vmem:[#allocation2 + $0x60d8] sm:$0xff]
    %v3340 = vld [vmem:[#allocation2 + $0x60e0] sm:$0xff]
    %v3341 = vld [vmem:[#allocation2 + $0x60e8] sm:$0xff]
    %v3342 = vld [vmem:[#allocation2 + $0x60f0] sm:$0xff]
    %v3343 = vld [vmem:[#allocation2 + $0x60f8] sm:$0xff]
    %v3344 = vld [vmem:[#allocation2 + $0x6100] sm:$0xff]
    %v3345 = vld [vmem:[#allocation2 + $0x6108] sm:$0xff]
    %v3346 = vld [vmem:[#allocation2 + $0x6110] sm:$0xff]
    %v3347 = vld [vmem:[#allocation2 + $0x6118] sm:$0xff]
    %v3348 = vld [vmem:[#allocation2 + $0x6120] sm:$0xff]
    %v3349 = vld [vmem:[#allocation2 + $0x6128] sm:$0xff]
    %v3350 = vld [vmem:[#allocation2 + $0x6130] sm:$0xff]
    %v3351 = vld [vmem:[#allocation2 + $0x6138] sm:$0xff]
    %v3352 = vld [vmem:[#allocation2 + $0x6140] sm:$0xff]
    %v3353 = vld [vmem:[#allocation2 + $0x6148] sm:$0xff]
    %v3354 = vld [vmem:[#allocation2 + $0x6150] sm:$0xff]
    %v3355 = vld [vmem:[#allocation2 + $0x6158] sm:$0xff]
    %v3356 = vld [vmem:[#allocation2 + $0x6160] sm:$0xff]
    %v3357 = vld [vmem:[#allocation2 + $0x6168] sm:$0xff]
    %v3358 = vld [vmem:[#allocation2 + $0x6170] sm:$0xff]
    %v3359 = vld [vmem:[#allocation2 + $0x6178] sm:$0xff]
    %v3360 = vld [vmem:[#allocation2 + $0x6180] sm:$0xff]
    %v3361 = vld [vmem:[#allocation2 + $0x6188] sm:$0xff]
    %v3362 = vld [vmem:[#allocation2 + $0x6190] sm:$0xff]
    %v3363 = vld [vmem:[#allocation2 + $0x6198] sm:$0xff]
    %v3364 = vld [vmem:[#allocation2 + $0x61a0] sm:$0xff]
    %v3365 = vld [vmem:[#allocation2 + $0x61a8] sm:$0xff]
    %v3366 = vld [vmem:[#allocation2 + $0x61b0] sm:$0xff]
    %v3367 = vld [vmem:[#allocation2 + $0x61b8] sm:$0xff]
    %v3368 = vld [vmem:[#allocation2 + $0x61c0] sm:$0xff]
    %v3369 = vld [vmem:[#allocation2 + $0x61c8] sm:$0xff]
    %v3370 = vld [vmem:[#allocation2 + $0x61d0] sm:$0xff]
    %v3371 = vld [vmem:[#allocation2 + $0x61d8] sm:$0xff]
    %v3372 = vld [vmem:[#allocation2 + $0x61e0] sm:$0xff]
    %v3373 = vld [vmem:[#allocation2 + $0x61e8] sm:$0xff]
    %v3374 = vld [vmem:[#allocation2 + $0x61f0] sm:$0xff]
    %v3375 = vld [vmem:[#allocation2 + $0x61f8] sm:$0xff]
    %v3376 = vld [vmem:[#allocation4] sm:$0x1]
    %v3378 = vperm.slane %v3376, 0
    %3380 = vmatpush.msra.mxu0 %v255
    %3381 = vmatpush.msra.mxu0 %v254
    %3382 = vmatpush.msra.mxu0 %v253
    %3383 = vmatpush.msra.mxu0 %v252
    %3384 = vmatpush.msra.mxu0 %v251
    %3385 = vmatpush.msra.mxu0 %v250
    %3386 = vmatpush.msra.mxu0 %v249
    %3387 = vmatpush.msra.mxu0 %v248
    %3388 = vmatpush.msra.mxu0 %v247
    %3389 = vmatpush.msra.mxu0 %v246
    %3390 = vmatpush.msra.mxu0 %v245
    %3391 = vmatpush.msra.mxu0 %v244
    %3392 = vmatpush.msra.mxu0 %v243
    %3393 = vmatpush.msra.mxu0 %v242
    %3394 = vmatpush.msra.mxu0 %v241
    %3395 = vmatpush.msra.mxu0 %v240
    %3396 = vmatmul.f32.gmra.mxu0 %v44
    %v3397 = vpop.f32.mrf.mxu0
    %v3398 = vadd.f32 %v3378, %v3397
    %3399 = vdwg.mxu0
    %3400 = vmatpush.msra.mxu0 %v271
    %3401 = vmatpush.msra.mxu0 %v270
    %3402 = vmatpush.msra.mxu0 %v269
    %3403 = vmatpush.msra.mxu0 %v268
    %3404 = vmatpush.msra.mxu0 %v267
    %3405 = vmatpush.msra.mxu0 %v266
    %3406 = vmatpush.msra.mxu0 %v265
    %3407 = vmatpush.msra.mxu0 %v264
    %3408 = vmatpush.msra.mxu0 %v263
    %3409 = vmatpush.msra.mxu0 %v262
    %3410 = vmatpush.msra.mxu0 %v261
    %3411 = vmatpush.msra.mxu0 %v260
    %3412 = vmatpush.msra.mxu0 %v259
    %3413 = vmatpush.msra.mxu0 %v258
    %3414 = vmatpush.msra.mxu0 %v257
    %3415 = vmatpush.msra.mxu0 %v256
    %3416 = vmatmul.f32.gmra.mxu0 %v45
    %v3417 = vpop.f32.mrf.mxu0
    %v3418 = vadd.f32 %v3398, %v3417
    %3419 = vdwg.mxu0
    %3420 = vmatpush.msra.mxu0 %v287
    %3421 = vmatpush.msra.mxu0 %v286
    %3422 = vmatpush.msra.mxu0 %v285
    %3423 = vmatpush.msra.mxu0 %v284
    %3424 = vmatpush.msra.mxu0 %v283
    %3425 = vmatpush.msra.mxu0 %v282
    %3426 = vmatpush.msra.mxu0 %v281
    %3427 = vmatpush.msra.mxu0 %v280
    %3428 = vmatpush.msra.mxu0 %v279
    %3429 = vmatpush.msra.mxu0 %v278
    %3430 = vmatpush.msra.mxu0 %v277
    %3431 = vmatpush.msra.mxu0 %v276
    %3432 = vmatpush.msra.mxu0 %v275
    %3433 = vmatpush.msra.mxu0 %v274
    %3434 = vmatpush.msra.mxu0 %v273
    %3435 = vmatpush.msra.mxu0 %v272
    %3436 = vmatmul.f32.gmra.mxu0 %v46
    %v3437 = vpop.f32.mrf.mxu0
    %v3438 = vadd.f32 %v3418, %v3437
    %3439 = vdwg.mxu0
    %3440 = vmatpush.msra.mxu0 %v303
    %3441 = vmatpush.msra.mxu0 %v302
    %3442 = vmatpush.msra.mxu0 %v301
    %3443 = vmatpush.msra.mxu0 %v300
    %3444 = vmatpush.msra.mxu0 %v299
    %3445 = vmatpush.msra.mxu0 %v298
    %3446 = vmatpush.msra.mxu0 %v297
    %3447 = vmatpush.msra.mxu0 %v296
    %3448 = vmatpush.msra.mxu0 %v295
    %3449 = vmatpush.msra.mxu0 %v294
    %3450 = vmatpush.msra.mxu0 %v293
    %3451 = vmatpush.msra.mxu0 %v292
    %3452 = vmatpush.msra.mxu0 %v291
    %3453 = vmatpush.msra.mxu0 %v290
    %3454 = vmatpush.msra.mxu0 %v289
    %3455 = vmatpush.msra.mxu0 %v288
    %3456 = vmatmul.f32.gmra.mxu0 %v47
    %v3457 = vpop.f32.mrf.mxu0
    %v3458 = vadd.f32 %v3438, %v3457
    %3459 = vdwg.mxu0
    %3460 = vmatpush.msra.mxu0 %v319
    %3461 = vmatpush.msra.mxu0 %v318
    %3462 = vmatpush.msra.mxu0 %v317
    %3463 = vmatpush.msra.mxu0 %v316
    %3464 = vmatpush.msra.mxu0 %v315
    %3465 = vmatpush.msra.mxu0 %v314
    %3466 = vmatpush.msra.mxu0 %v313
    %3467 = vmatpush.msra.mxu0 %v312
    %3468 = vmatpush.msra.mxu0 %v311
    %3469 = vmatpush.msra.mxu0 %v310
    %3470 = vmatpush.msra.mxu0 %v309
    %3471 = vmatpush.msra.mxu0 %v308
    %3472 = vmatpush.msra.mxu0 %v307
    %3473 = vmatpush.msra.mxu0 %v306
    %3474 = vmatpush.msra.mxu0 %v305
    %3475 = vmatpush.msra.mxu0 %v304
    %3476 = vmatmul.f32.gmra.mxu0 %v48
    %v3477 = vpop.f32.mrf.mxu0
    %v3478 = vadd.f32 %v3458, %v3477
    %3479 = vdwg.mxu0
    %3480 = vmatpush.msra.mxu0 %v335
    %3481 = vmatpush.msra.mxu0 %v334
    %3482 = vmatpush.msra.mxu0 %v333
    %3483 = vmatpush.msra.mxu0 %v332
    %3484 = vmatpush.msra.mxu0 %v331
    %3485 = vmatpush.msra.mxu0 %v330
    %3486 = vmatpush.msra.mxu0 %v329
    %3487 = vmatpush.msra.mxu0 %v328
    %3488 = vmatpush.msra.mxu0 %v327
    %3489 = vmatpush.msra.mxu0 %v326
    %3490 = vmatpush.msra.mxu0 %v325
    %3491 = vmatpush.msra.mxu0 %v324
    %3492 = vmatpush.msra.mxu0 %v323
    %3493 = vmatpush.msra.mxu0 %v322
    %3494 = vmatpush.msra.mxu0 %v321
    %3495 = vmatpush.msra.mxu0 %v320
    %3496 = vmatmul.f32.gmra.mxu0 %v49
    %v3497 = vpop.f32.mrf.mxu0
    %v3498 = vadd.f32 %v3478, %v3497
    %3499 = vdwg.mxu0
    %3500 = vmatpush.msra.mxu0 %v351
    %3501 = vmatpush.msra.mxu0 %v350
    %3502 = vmatpush.msra.mxu0 %v349
    %3503 = vmatpush.msra.mxu0 %v348
    %3504 = vmatpush.msra.mxu0 %v347
    %3505 = vmatpush.msra.mxu0 %v346
    %3506 = vmatpush.msra.mxu0 %v345
    %3507 = vmatpush.msra.mxu0 %v344
    %3508 = vmatpush.msra.mxu0 %v343
    %3509 = vmatpush.msra.mxu0 %v342
    %3510 = vmatpush.msra.mxu0 %v341
    %3511 = vmatpush.msra.mxu0 %v340
    %3512 = vmatpush.msra.mxu0 %v339
    %3513 = vmatpush.msra.mxu0 %v338
    %3514 = vmatpush.msra.mxu0 %v337
    %3515 = vmatpush.msra.mxu0 %v336
    %3516 = vmatmul.f32.gmra.mxu0 %v50
    %v3517 = vpop.f32.mrf.mxu0
    %v3518 = vadd.f32 %v3498, %v3517
    %3519 = vdwg.mxu0
    %3520 = vmatpush.msra.mxu0 %v367
    %3521 = vmatpush.msra.mxu0 %v366
    %3522 = vmatpush.msra.mxu0 %v365
    %3523 = vmatpush.msra.mxu0 %v364
    %3524 = vmatpush.msra.mxu0 %v363
    %3525 = vmatpush.msra.mxu0 %v362
    %3526 = vmatpush.msra.mxu0 %v361
    %3527 = vmatpush.msra.mxu0 %v360
    %3528 = vmatpush.msra.mxu0 %v359
    %3529 = vmatpush.msra.mxu0 %v358
    %3530 = vmatpush.msra.mxu0 %v357
    %3531 = vmatpush.msra.mxu0 %v356
    %3532 = vmatpush.msra.mxu0 %v355
    %3533 = vmatpush.msra.mxu0 %v354
    %3534 = vmatpush.msra.mxu0 %v353
    %3535 = vmatpush.msra.mxu0 %v352
    %3536 = vmatmul.f32.gmra.mxu0 %v51
    %v3537 = vpop.f32.mrf.mxu0
    %v3538 = vadd.f32 %v3518, %v3537
    %3539 = vdwg.mxu0
    %3540 = vmatpush.msra.mxu0 %v383
    %3541 = vmatpush.msra.mxu0 %v382
    %3542 = vmatpush.msra.mxu0 %v381
    %3543 = vmatpush.msra.mxu0 %v380
    %3544 = vmatpush.msra.mxu0 %v379
    %3545 = vmatpush.msra.mxu0 %v378
    %3546 = vmatpush.msra.mxu0 %v377
    %3547 = vmatpush.msra.mxu0 %v376
    %3548 = vmatpush.msra.mxu0 %v375
    %3549 = vmatpush.msra.mxu0 %v374
    %3550 = vmatpush.msra.mxu0 %v373
    %3551 = vmatpush.msra.mxu0 %v372
    %3552 = vmatpush.msra.mxu0 %v371
    %3553 = vmatpush.msra.mxu0 %v370
    %3554 = vmatpush.msra.mxu0 %v369
    %3555 = vmatpush.msra.mxu0 %v368
    %3556 = vmatmul.f32.gmra.mxu0 %v52
    %v3557 = vpop.f32.mrf.mxu0
    %v3558 = vadd.f32 %v3538, %v3557
    %3559 = vdwg.mxu0
    %3560 = vmatpush.msra.mxu0 %v399
    %3561 = vmatpush.msra.mxu0 %v398
    %3562 = vmatpush.msra.mxu0 %v397
    %3563 = vmatpush.msra.mxu0 %v396
    %3564 = vmatpush.msra.mxu0 %v395
    %3565 = vmatpush.msra.mxu0 %v394
    %3566 = vmatpush.msra.mxu0 %v393
    %3567 = vmatpush.msra.mxu0 %v392
    %3568 = vmatpush.msra.mxu0 %v391
    %3569 = vmatpush.msra.mxu0 %v390
    %3570 = vmatpush.msra.mxu0 %v389
    %3571 = vmatpush.msra.mxu0 %v388
    %3572 = vmatpush.msra.mxu0 %v387
    %3573 = vmatpush.msra.mxu0 %v386
    %3574 = vmatpush.msra.mxu0 %v385
    %3575 = vmatpush.msra.mxu0 %v384
    %3576 = vmatmul.f32.gmra.mxu0 %v53
    %v3577 = vpop.f32.mrf.mxu0
    %v3578 = vadd.f32 %v3558, %v3577
    %3579 = vdwg.mxu0
    %3580 = vmatpush.msra.mxu0 %v415
    %3581 = vmatpush.msra.mxu0 %v414
    %3582 = vmatpush.msra.mxu0 %v413
    %3583 = vmatpush.msra.mxu0 %v412
    %3584 = vmatpush.msra.mxu0 %v411
    %3585 = vmatpush.msra.mxu0 %v410
    %3586 = vmatpush.msra.mxu0 %v409
    %3587 = vmatpush.msra.mxu0 %v408
    %3588 = vmatpush.msra.mxu0 %v407
    %3589 = vmatpush.msra.mxu0 %v406
    %3590 = vmatpush.msra.mxu0 %v405
    %3591 = vmatpush.msra.mxu0 %v404
    %3592 = vmatpush.msra.mxu0 %v403
    %3593 = vmatpush.msra.mxu0 %v402
    %3594 = vmatpush.msra.mxu0 %v401
    %3595 = vmatpush.msra.mxu0 %v400
    %3596 = vmatmul.f32.gmra.mxu0 %v54
    %v3597 = vpop.f32.mrf.mxu0
    %v3598 = vadd.f32 %v3578, %v3597
    %3599 = vdwg.mxu0
    %3600 = vmatpush.msra.mxu0 %v431
    %3601 = vmatpush.msra.mxu0 %v430
    %3602 = vmatpush.msra.mxu0 %v429
    %3603 = vmatpush.msra.mxu0 %v428
    %3604 = vmatpush.msra.mxu0 %v427
    %3605 = vmatpush.msra.mxu0 %v426
    %3606 = vmatpush.msra.mxu0 %v425
    %3607 = vmatpush.msra.mxu0 %v424
    %3608 = vmatpush.msra.mxu0 %v423
    %3609 = vmatpush.msra.mxu0 %v422
    %3610 = vmatpush.msra.mxu0 %v421
    %3611 = vmatpush.msra.mxu0 %v420
    %3612 = vmatpush.msra.mxu0 %v419
    %3613 = vmatpush.msra.mxu0 %v418
    %3614 = vmatpush.msra.mxu0 %v417
    %3615 = vmatpush.msra.mxu0 %v416
    %3616 = vmatmul.f32.gmra.mxu0 %v55
    %v3617 = vpop.f32.mrf.mxu0
    %v3618 = vadd.f32 %v3598, %v3617
    %3619 = vdwg.mxu0
    %3620 = vmatpush.msra.mxu0 %v447
    %3621 = vmatpush.msra.mxu0 %v446
    %3622 = vmatpush.msra.mxu0 %v445
    %3623 = vmatpush.msra.mxu0 %v444
    %3624 = vmatpush.msra.mxu0 %v443
    %3625 = vmatpush.msra.mxu0 %v442
    %3626 = vmatpush.msra.mxu0 %v441
    %3627 = vmatpush.msra.mxu0 %v440
    %3628 = vmatpush.msra.mxu0 %v439
    %3629 = vmatpush.msra.mxu0 %v438
    %3630 = vmatpush.msra.mxu0 %v437
    %3631 = vmatpush.msra.mxu0 %v436
    %3632 = vmatpush.msra.mxu0 %v435
    %3633 = vmatpush.msra.mxu0 %v434
    %3634 = vmatpush.msra.mxu0 %v433
    %3635 = vmatpush.msra.mxu0 %v432
    %3636 = vmatmul.f32.gmra.mxu0 %v56
    %v3637 = vpop.f32.mrf.mxu0
    %v3638 = vadd.f32 %v3618, %v3637
    %3639 = vdwg.mxu0
    %3640 = vmatpush.msra.mxu0 %v463
    %3641 = vmatpush.msra.mxu0 %v462
    %3642 = vmatpush.msra.mxu0 %v461
    %3643 = vmatpush.msra.mxu0 %v460
    %3644 = vmatpush.msra.mxu0 %v459
    %3645 = vmatpush.msra.mxu0 %v458
    %3646 = vmatpush.msra.mxu0 %v457
    %3647 = vmatpush.msra.mxu0 %v456
    %3648 = vmatpush.msra.mxu0 %v455
    %3649 = vmatpush.msra.mxu0 %v454
    %3650 = vmatpush.msra.mxu0 %v453
    %3651 = vmatpush.msra.mxu0 %v452
    %3652 = vmatpush.msra.mxu0 %v451
    %3653 = vmatpush.msra.mxu0 %v450
    %3654 = vmatpush.msra.mxu0 %v449
    %3655 = vmatpush.msra.mxu0 %v448
    %3656 = vmatmul.f32.gmra.mxu0 %v57
    %v3657 = vpop.f32.mrf.mxu0
    %v3658 = vadd.f32 %v3638, %v3657
    %3659 = vdwg.mxu0
    %3660 = vmatpush.msra.mxu0 %v479
    %3661 = vmatpush.msra.mxu0 %v478
    %3662 = vmatpush.msra.mxu0 %v477
    %3663 = vmatpush.msra.mxu0 %v476
    %3664 = vmatpush.msra.mxu0 %v475
    %3665 = vmatpush.msra.mxu0 %v474
    %3666 = vmatpush.msra.mxu0 %v473
    %3667 = vmatpush.msra.mxu0 %v472
    %3668 = vmatpush.msra.mxu0 %v471
    %3669 = vmatpush.msra.mxu0 %v470
    %3670 = vmatpush.msra.mxu0 %v469
    %3671 = vmatpush.msra.mxu0 %v468
    %3672 = vmatpush.msra.mxu0 %v467
    %3673 = vmatpush.msra.mxu0 %v466
    %3674 = vmatpush.msra.mxu0 %v465
    %3675 = vmatpush.msra.mxu0 %v464
    %3676 = vmatmul.f32.gmra.mxu0 %v58
    %v3677 = vpop.f32.mrf.mxu0
    %v3678 = vadd.f32 %v3658, %v3677
    %3679 = vdwg.mxu0
    %3680 = vmatpush.msra.mxu0 %v495
    %3681 = vmatpush.msra.mxu0 %v494
    %3682 = vmatpush.msra.mxu0 %v493
    %3683 = vmatpush.msra.mxu0 %v492
    %3684 = vmatpush.msra.mxu0 %v491
    %3685 = vmatpush.msra.mxu0 %v490
    %3686 = vmatpush.msra.mxu0 %v489
    %3687 = vmatpush.msra.mxu0 %v488
    %3688 = vmatpush.msra.mxu0 %v487
    %3689 = vmatpush.msra.mxu0 %v486
    %3690 = vmatpush.msra.mxu0 %v485
    %3691 = vmatpush.msra.mxu0 %v484
    %3692 = vmatpush.msra.mxu0 %v483
    %3693 = vmatpush.msra.mxu0 %v482
    %3694 = vmatpush.msra.mxu0 %v481
    %3695 = vmatpush.msra.mxu0 %v480
    %3696 = vmatmul.f32.gmra.mxu0 %v59
    %v3697 = vpop.f32.mrf.mxu0
    %v3698 = vadd.f32 %v3678, %v3697
    %3699 = vdwg.mxu0
    %3700 = vmatpush.msra.mxu0 %v511
    %3701 = vmatpush.msra.mxu0 %v510
    %3702 = vmatpush.msra.mxu0 %v509
    %3703 = vmatpush.msra.mxu0 %v508
    %3704 = vmatpush.msra.mxu0 %v507
    %3705 = vmatpush.msra.mxu0 %v506
    %3706 = vmatpush.msra.mxu0 %v505
    %3707 = vmatpush.msra.mxu0 %v504
    %3708 = vmatpush.msra.mxu0 %v503
    %3709 = vmatpush.msra.mxu0 %v502
    %3710 = vmatpush.msra.mxu0 %v501
    %3711 = vmatpush.msra.mxu0 %v500
    %3712 = vmatpush.msra.mxu0 %v499
    %3713 = vmatpush.msra.mxu0 %v498
    %3714 = vmatpush.msra.mxu0 %v497
    %3715 = vmatpush.msra.mxu0 %v496
    %3716 = vmatmul.f32.gmra.mxu0 %v60
    %v3717 = vpop.f32.mrf.mxu0
    %v3718 = vadd.f32 %v3698, %v3717
    %3719 = vdwg.mxu0
    %3720 = vmatpush.msra.mxu0 %v527
    %3721 = vmatpush.msra.mxu0 %v526
    %3722 = vmatpush.msra.mxu0 %v525
    %3723 = vmatpush.msra.mxu0 %v524
    %3724 = vmatpush.msra.mxu0 %v523
    %3725 = vmatpush.msra.mxu0 %v522
    %3726 = vmatpush.msra.mxu0 %v521
    %3727 = vmatpush.msra.mxu0 %v520
    %3728 = vmatpush.msra.mxu0 %v519
    %3729 = vmatpush.msra.mxu0 %v518
    %3730 = vmatpush.msra.mxu0 %v517
    %3731 = vmatpush.msra.mxu0 %v516
    %3732 = vmatpush.msra.mxu0 %v515
    %3733 = vmatpush.msra.mxu0 %v514
    %3734 = vmatpush.msra.mxu0 %v513
    %3735 = vmatpush.msra.mxu0 %v512
    %3736 = vmatmul.f32.gmra.mxu0 %v61
    %v3737 = vpop.f32.mrf.mxu0
    %v3738 = vadd.f32 %v3718, %v3737
    %3739 = vdwg.mxu0
    %3740 = vmatpush.msra.mxu0 %v543
    %3741 = vmatpush.msra.mxu0 %v542
    %3742 = vmatpush.msra.mxu0 %v541
    %3743 = vmatpush.msra.mxu0 %v540
    %3744 = vmatpush.msra.mxu0 %v539
    %3745 = vmatpush.msra.mxu0 %v538
    %3746 = vmatpush.msra.mxu0 %v537
    %3747 = vmatpush.msra.mxu0 %v536
    %3748 = vmatpush.msra.mxu0 %v535
    %3749 = vmatpush.msra.mxu0 %v534
    %3750 = vmatpush.msra.mxu0 %v533
    %3751 = vmatpush.msra.mxu0 %v532
    %3752 = vmatpush.msra.mxu0 %v531
    %3753 = vmatpush.msra.mxu0 %v530
    %3754 = vmatpush.msra.mxu0 %v529
    %3755 = vmatpush.msra.mxu0 %v528
    %3756 = vmatmul.f32.gmra.mxu0 %v62
    %v3757 = vpop.f32.mrf.mxu0
    %v3758 = vadd.f32 %v3738, %v3757
    %3759 = vdwg.mxu0
    %3760 = vmatpush.msra.mxu0 %v559
    %3761 = vmatpush.msra.mxu0 %v558
    %3762 = vmatpush.msra.mxu0 %v557
    %3763 = vmatpush.msra.mxu0 %v556
    %3764 = vmatpush.msra.mxu0 %v555
    %3765 = vmatpush.msra.mxu0 %v554
    %3766 = vmatpush.msra.mxu0 %v553
    %3767 = vmatpush.msra.mxu0 %v552
    %3768 = vmatpush.msra.mxu0 %v551
    %3769 = vmatpush.msra.mxu0 %v550
    %3770 = vmatpush.msra.mxu0 %v549
    %3771 = vmatpush.msra.mxu0 %v548
    %3772 = vmatpush.msra.mxu0 %v547
    %3773 = vmatpush.msra.mxu0 %v546
    %3774 = vmatpush.msra.mxu0 %v545
    %3775 = vmatpush.msra.mxu0 %v544
    %3776 = vmatmul.f32.gmra.mxu0 %v63
    %v3777 = vpop.f32.mrf.mxu0
    %v3778 = vadd.f32 %v3758, %v3777
    %3779 = vdwg.mxu0
    %3780 = vmatpush.msra.mxu0 %v575
    %3781 = vmatpush.msra.mxu0 %v574
    %3782 = vmatpush.msra.mxu0 %v573
    %3783 = vmatpush.msra.mxu0 %v572
    %3784 = vmatpush.msra.mxu0 %v571
    %3785 = vmatpush.msra.mxu0 %v570
    %3786 = vmatpush.msra.mxu0 %v569
    %3787 = vmatpush.msra.mxu0 %v568
    %3788 = vmatpush.msra.mxu0 %v567
    %3789 = vmatpush.msra.mxu0 %v566
    %3790 = vmatpush.msra.mxu0 %v565
    %3791 = vmatpush.msra.mxu0 %v564
    %3792 = vmatpush.msra.mxu0 %v563
    %3793 = vmatpush.msra.mxu0 %v562
    %3794 = vmatpush.msra.mxu0 %v561
    %3795 = vmatpush.msra.mxu0 %v560
    %3796 = vmatmul.f32.gmra.mxu0 %v64
    %v3797 = vpop.f32.mrf.mxu0
    %v3798 = vadd.f32 %v3778, %v3797
    %3799 = vdwg.mxu0
    %3800 = vmatpush.msra.mxu0 %v591
    %3801 = vmatpush.msra.mxu0 %v590
    %3802 = vmatpush.msra.mxu0 %v589
    %3803 = vmatpush.msra.mxu0 %v588
    %3804 = vmatpush.msra.mxu0 %v587
    %3805 = vmatpush.msra.mxu0 %v586
    %3806 = vmatpush.msra.mxu0 %v585
    %3807 = vmatpush.msra.mxu0 %v584
    %3808 = vmatpush.msra.mxu0 %v583
    %3809 = vmatpush.msra.mxu0 %v582
    %3810 = vmatpush.msra.mxu0 %v581
    %3811 = vmatpush.msra.mxu0 %v580
    %3812 = vmatpush.msra.mxu0 %v579
    %3813 = vmatpush.msra.mxu0 %v578
    %3814 = vmatpush.msra.mxu0 %v577
    %3815 = vmatpush.msra.mxu0 %v576
    %3816 = vmatmul.f32.gmra.mxu0 %v65
    %v3817 = vpop.f32.mrf.mxu0
    %v3818 = vadd.f32 %v3798, %v3817
    %3819 = vdwg.mxu0
    %3820 = vmatpush.msra.mxu0 %v607
    %3821 = vmatpush.msra.mxu0 %v606
    %3822 = vmatpush.msra.mxu0 %v605
    %3823 = vmatpush.msra.mxu0 %v604
    %3824 = vmatpush.msra.mxu0 %v603
    %3825 = vmatpush.msra.mxu0 %v602
    %3826 = vmatpush.msra.mxu0 %v601
    %3827 = vmatpush.msra.mxu0 %v600
    %3828 = vmatpush.msra.mxu0 %v599
    %3829 = vmatpush.msra.mxu0 %v598
    %3830 = vmatpush.msra.mxu0 %v597
    %3831 = vmatpush.msra.mxu0 %v596
    %3832 = vmatpush.msra.mxu0 %v595
    %3833 = vmatpush.msra.mxu0 %v594
    %3834 = vmatpush.msra.mxu0 %v593
    %3835 = vmatpush.msra.mxu0 %v592
    %3836 = vmatmul.f32.gmra.mxu0 %v66
    %v3837 = vpop.f32.mrf.mxu0
    %v3838 = vadd.f32 %v3818, %v3837
    %3839 = vdwg.mxu0
    %3840 = vmatpush.msra.mxu0 %v623
    %3841 = vmatpush.msra.mxu0 %v622
    %3842 = vmatpush.msra.mxu0 %v621
    %3843 = vmatpush.msra.mxu0 %v620
    %3844 = vmatpush.msra.mxu0 %v619
    %3845 = vmatpush.msra.mxu0 %v618
    %3846 = vmatpush.msra.mxu0 %v617
    %3847 = vmatpush.msra.mxu0 %v616
    %3848 = vmatpush.msra.mxu0 %v615
    %3849 = vmatpush.msra.mxu0 %v614
    %3850 = vmatpush.msra.mxu0 %v613
    %3851 = vmatpush.msra.mxu0 %v612
    %3852 = vmatpush.msra.mxu0 %v611
    %3853 = vmatpush.msra.mxu0 %v610
    %3854 = vmatpush.msra.mxu0 %v609
    %3855 = vmatpush.msra.mxu0 %v608
    %3856 = vmatmul.f32.gmra.mxu0 %v67
    %v3857 = vpop.f32.mrf.mxu0
    %v3858 = vadd.f32 %v3838, %v3857
    %3859 = vdwg.mxu0
    %3860 = vmatpush.msra.mxu0 %v639
    %3861 = vmatpush.msra.mxu0 %v638
    %3862 = vmatpush.msra.mxu0 %v637
    %3863 = vmatpush.msra.mxu0 %v636
    %3864 = vmatpush.msra.mxu0 %v635
    %3865 = vmatpush.msra.mxu0 %v634
    %3866 = vmatpush.msra.mxu0 %v633
    %3867 = vmatpush.msra.mxu0 %v632
    %3868 = vmatpush.msra.mxu0 %v631
    %3869 = vmatpush.msra.mxu0 %v630
    %3870 = vmatpush.msra.mxu0 %v629
    %3871 = vmatpush.msra.mxu0 %v628
    %3872 = vmatpush.msra.mxu0 %v627
    %3873 = vmatpush.msra.mxu0 %v626
    %3874 = vmatpush.msra.mxu0 %v625
    %3875 = vmatpush.msra.mxu0 %v624
    %3876 = vmatmul.f32.gmra.mxu0 %v68
    %v3877 = vpop.f32.mrf.mxu0
    %v3878 = vadd.f32 %v3858, %v3877
    %3879 = vdwg.mxu0
    %3880 = vmatpush.msra.mxu0 %v655
    %3881 = vmatpush.msra.mxu0 %v654
    %3882 = vmatpush.msra.mxu0 %v653
    %3883 = vmatpush.msra.mxu0 %v652
    %3884 = vmatpush.msra.mxu0 %v651
    %3885 = vmatpush.msra.mxu0 %v650
    %3886 = vmatpush.msra.mxu0 %v649
    %3887 = vmatpush.msra.mxu0 %v648
    %3888 = vmatpush.msra.mxu0 %v647
    %3889 = vmatpush.msra.mxu0 %v646
    %3890 = vmatpush.msra.mxu0 %v645
    %3891 = vmatpush.msra.mxu0 %v644
    %3892 = vmatpush.msra.mxu0 %v643
    %3893 = vmatpush.msra.mxu0 %v642
    %3894 = vmatpush.msra.mxu0 %v641
    %3895 = vmatpush.msra.mxu0 %v640
    %3896 = vmatmul.f32.gmra.mxu0 %v69
    %v3897 = vpop.f32.mrf.mxu0
    %v3898 = vadd.f32 %v3878, %v3897
    %3899 = vdwg.mxu0
    %3900 = vmatpush.msra.mxu0 %v671
    %3901 = vmatpush.msra.mxu0 %v670
    %3902 = vmatpush.msra.mxu0 %v669
    %3903 = vmatpush.msra.mxu0 %v668
    %3904 = vmatpush.msra.mxu0 %v667
    %3905 = vmatpush.msra.mxu0 %v666
    %3906 = vmatpush.msra.mxu0 %v665
    %3907 = vmatpush.msra.mxu0 %v664
    %3908 = vmatpush.msra.mxu0 %v663
    %3909 = vmatpush.msra.mxu0 %v662
    %3910 = vmatpush.msra.mxu0 %v661
    %3911 = vmatpush.msra.mxu0 %v660
    %3912 = vmatpush.msra.mxu0 %v659
    %3913 = vmatpush.msra.mxu0 %v658
    %3914 = vmatpush.msra.mxu0 %v657
    %3915 = vmatpush.msra.mxu0 %v656
    %3916 = vmatmul.f32.gmra.mxu0 %v70
    %v3917 = vpop.f32.mrf.mxu0
    %v3918 = vadd.f32 %v3898, %v3917
    %3919 = vdwg.mxu0
    %3920 = vmatpush.msra.mxu0 %v687
    %3921 = vmatpush.msra.mxu0 %v686
    %3922 = vmatpush.msra.mxu0 %v685
    %3923 = vmatpush.msra.mxu0 %v684
    %3924 = vmatpush.msra.mxu0 %v683
    %3925 = vmatpush.msra.mxu0 %v682
    %3926 = vmatpush.msra.mxu0 %v681
    %3927 = vmatpush.msra.mxu0 %v680
    %3928 = vmatpush.msra.mxu0 %v679
    %3929 = vmatpush.msra.mxu0 %v678
    %3930 = vmatpush.msra.mxu0 %v677
    %3931 = vmatpush.msra.mxu0 %v676
    %3932 = vmatpush.msra.mxu0 %v675
    %3933 = vmatpush.msra.mxu0 %v674
    %3934 = vmatpush.msra.mxu0 %v673
    %3935 = vmatpush.msra.mxu0 %v672
    %3936 = vmatmul.f32.gmra.mxu0 %v71
    %v3937 = vpop.f32.mrf.mxu0
    %v3938 = vadd.f32 %v3918, %v3937
    %3939 = vdwg.mxu0
    %3940 = vmatpush.msra.mxu0 %v703
    %3941 = vmatpush.msra.mxu0 %v702
    %3942 = vmatpush.msra.mxu0 %v701
    %3943 = vmatpush.msra.mxu0 %v700
    %3944 = vmatpush.msra.mxu0 %v699
    %3945 = vmatpush.msra.mxu0 %v698
    %3946 = vmatpush.msra.mxu0 %v697
    %3947 = vmatpush.msra.mxu0 %v696
    %3948 = vmatpush.msra.mxu0 %v695
    %3949 = vmatpush.msra.mxu0 %v694
    %3950 = vmatpush.msra.mxu0 %v693
    %3951 = vmatpush.msra.mxu0 %v692
    %3952 = vmatpush.msra.mxu0 %v691
    %3953 = vmatpush.msra.mxu0 %v690
    %3954 = vmatpush.msra.mxu0 %v689
    %3955 = vmatpush.msra.mxu0 %v688
    %3956 = vmatmul.f32.gmra.mxu0 %v72
    %v3957 = vpop.f32.mrf.mxu0
    %v3958 = vadd.f32 %v3938, %v3957
    %3959 = vdwg.mxu0
    %3960 = vmatpush.msra.mxu0 %v719
    %3961 = vmatpush.msra.mxu0 %v718
    %3962 = vmatpush.msra.mxu0 %v717
    %3963 = vmatpush.msra.mxu0 %v716
    %3964 = vmatpush.msra.mxu0 %v715
    %3965 = vmatpush.msra.mxu0 %v714
    %3966 = vmatpush.msra.mxu0 %v713
    %3967 = vmatpush.msra.mxu0 %v712
    %3968 = vmatpush.msra.mxu0 %v711
    %3969 = vmatpush.msra.mxu0 %v710
    %3970 = vmatpush.msra.mxu0 %v709
    %3971 = vmatpush.msra.mxu0 %v708
    %3972 = vmatpush.msra.mxu0 %v707
    %3973 = vmatpush.msra.mxu0 %v706
    %3974 = vmatpush.msra.mxu0 %v705
    %3975 = vmatpush.msra.mxu0 %v704
    %3976 = vmatmul.f32.gmra.mxu0 %v73
    %v3977 = vpop.f32.mrf.mxu0
    %v3978 = vadd.f32 %v3958, %v3977
    %3979 = vdwg.mxu0
    %3980 = vmatpush.msra.mxu0 %v735
    %3981 = vmatpush.msra.mxu0 %v734
    %3982 = vmatpush.msra.mxu0 %v733
    %3983 = vmatpush.msra.mxu0 %v732
    %3984 = vmatpush.msra.mxu0 %v731
    %3985 = vmatpush.msra.mxu0 %v730
    %3986 = vmatpush.msra.mxu0 %v729
    %3987 = vmatpush.msra.mxu0 %v728
    %3988 = vmatpush.msra.mxu0 %v727
    %3989 = vmatpush.msra.mxu0 %v726
    %3990 = vmatpush.msra.mxu0 %v725
    %3991 = vmatpush.msra.mxu0 %v724
    %3992 = vmatpush.msra.mxu0 %v723
    %3993 = vmatpush.msra.mxu0 %v722
    %3994 = vmatpush.msra.mxu0 %v721
    %3995 = vmatpush.msra.mxu0 %v720
    %3996 = vmatmul.f32.gmra.mxu0 %v74
    %v3997 = vpop.f32.mrf.mxu0
    %v3998 = vadd.f32 %v3978, %v3997
    %3999 = vdwg.mxu0
    %4000 = vmatpush.msra.mxu0 %v751
    %4001 = vmatpush.msra.mxu0 %v750
    %4002 = vmatpush.msra.mxu0 %v749
    %4003 = vmatpush.msra.mxu0 %v748
    %4004 = vmatpush.msra.mxu0 %v747
    %4005 = vmatpush.msra.mxu0 %v746
    %4006 = vmatpush.msra.mxu0 %v745
    %4007 = vmatpush.msra.mxu0 %v744
    %4008 = vmatpush.msra.mxu0 %v743
    %4009 = vmatpush.msra.mxu0 %v742
    %4010 = vmatpush.msra.mxu0 %v741
    %4011 = vmatpush.msra.mxu0 %v740
    %4012 = vmatpush.msra.mxu0 %v739
    %4013 = vmatpush.msra.mxu0 %v738
    %4014 = vmatpush.msra.mxu0 %v737
    %4015 = vmatpush.msra.mxu0 %v736
    %4016 = vmatmul.f32.gmra.mxu0 %v75
    %v4017 = vpop.f32.mrf.mxu0
    %v4018 = vadd.f32 %v3998, %v4017
    %4019 = vdwg.mxu0
    %4020 = vmatpush.msra.mxu0 %v767
    %4021 = vmatpush.msra.mxu0 %v766
    %4022 = vmatpush.msra.mxu0 %v765
    %4023 = vmatpush.msra.mxu0 %v764
    %4024 = vmatpush.msra.mxu0 %v763
    %4025 = vmatpush.msra.mxu0 %v762
    %4026 = vmatpush.msra.mxu0 %v761
    %4027 = vmatpush.msra.mxu0 %v760
    %4028 = vmatpush.msra.mxu0 %v759
    %4029 = vmatpush.msra.mxu0 %v758
    %4030 = vmatpush.msra.mxu0 %v757
    %4031 = vmatpush.msra.mxu0 %v756
    %4032 = vmatpush.msra.mxu0 %v755
    %4033 = vmatpush.msra.mxu0 %v754
    %4034 = vmatpush.msra.mxu0 %v753
    %4035 = vmatpush.msra.mxu0 %v752
    %4036 = vmatmul.f32.gmra.mxu0 %v76
    %v4037 = vpop.f32.mrf.mxu0
    %v4038 = vadd.f32 %v4018, %v4037
    %4039 = vdwg.mxu0
    %4040 = vmatpush.msra.mxu0 %v783
    %4041 = vmatpush.msra.mxu0 %v782
    %4042 = vmatpush.msra.mxu0 %v781
    %4043 = vmatpush.msra.mxu0 %v780
    %4044 = vmatpush.msra.mxu0 %v779
    %4045 = vmatpush.msra.mxu0 %v778
    %4046 = vmatpush.msra.mxu0 %v777
    %4047 = vmatpush.msra.mxu0 %v776
    %4048 = vmatpush.msra.mxu0 %v775
    %4049 = vmatpush.msra.mxu0 %v774
    %4050 = vmatpush.msra.mxu0 %v773
    %4051 = vmatpush.msra.mxu0 %v772
    %4052 = vmatpush.msra.mxu0 %v771
    %4053 = vmatpush.msra.mxu0 %v770
    %4054 = vmatpush.msra.mxu0 %v769
    %4055 = vmatpush.msra.mxu0 %v768
    %4056 = vmatmul.f32.gmra.mxu0 %v77
    %v4057 = vpop.f32.mrf.mxu0
    %v4058 = vadd.f32 %v4038, %v4057
    %4059 = vdwg.mxu0
    %4060 = vmatpush.msra.mxu0 %v799
    %4061 = vmatpush.msra.mxu0 %v798
    %4062 = vmatpush.msra.mxu0 %v797
    %4063 = vmatpush.msra.mxu0 %v796
    %4064 = vmatpush.msra.mxu0 %v795
    %4065 = vmatpush.msra.mxu0 %v794
    %4066 = vmatpush.msra.mxu0 %v793
    %4067 = vmatpush.msra.mxu0 %v792
    %4068 = vmatpush.msra.mxu0 %v791
    %4069 = vmatpush.msra.mxu0 %v790
    %4070 = vmatpush.msra.mxu0 %v789
    %4071 = vmatpush.msra.mxu0 %v788
    %4072 = vmatpush.msra.mxu0 %v787
    %4073 = vmatpush.msra.mxu0 %v786
    %4074 = vmatpush.msra.mxu0 %v785
    %4075 = vmatpush.msra.mxu0 %v784
    %4076 = vmatmul.f32.gmra.mxu0 %v78
    %v4077 = vpop.f32.mrf.mxu0
    %v4078 = vadd.f32 %v4058, %v4077
    %4079 = vdwg.mxu0
    %4080 = vmatpush.msra.mxu0 %v815
    %4081 = vmatpush.msra.mxu0 %v814
    %4082 = vmatpush.msra.mxu0 %v813
    %4083 = vmatpush.msra.mxu0 %v812
    %4084 = vmatpush.msra.mxu0 %v811
    %4085 = vmatpush.msra.mxu0 %v810
    %4086 = vmatpush.msra.mxu0 %v809
    %4087 = vmatpush.msra.mxu0 %v808
    %4088 = vmatpush.msra.mxu0 %v807
    %4089 = vmatpush.msra.mxu0 %v806
    %4090 = vmatpush.msra.mxu0 %v805
    %4091 = vmatpush.msra.mxu0 %v804
    %4092 = vmatpush.msra.mxu0 %v803
    %4093 = vmatpush.msra.mxu0 %v802
    %4094 = vmatpush.msra.mxu0 %v801
    %4095 = vmatpush.msra.mxu0 %v800
    %4096 = vmatmul.f32.gmra.mxu0 %v79
    %v4097 = vpop.f32.mrf.mxu0
    %v4098 = vadd.f32 %v4078, %v4097
    %4099 = vdwg.mxu0
    %4100 = vmatpush.msra.mxu0 %v831
    %4101 = vmatpush.msra.mxu0 %v830
    %4102 = vmatpush.msra.mxu0 %v829
    %4103 = vmatpush.msra.mxu0 %v828
    %4104 = vmatpush.msra.mxu0 %v827
    %4105 = vmatpush.msra.mxu0 %v826
    %4106 = vmatpush.msra.mxu0 %v825
    %4107 = vmatpush.msra.mxu0 %v824
    %4108 = vmatpush.msra.mxu0 %v823
    %4109 = vmatpush.msra.mxu0 %v822
    %4110 = vmatpush.msra.mxu0 %v821
    %4111 = vmatpush.msra.mxu0 %v820
    %4112 = vmatpush.msra.mxu0 %v819
    %4113 = vmatpush.msra.mxu0 %v818
    %4114 = vmatpush.msra.mxu0 %v817
    %4115 = vmatpush.msra.mxu0 %v816
    %4116 = vmatmul.f32.gmra.mxu0 %v80
    %v4117 = vpop.f32.mrf.mxu0
    %v4118 = vadd.f32 %v4098, %v4117
    %4119 = vdwg.mxu0
    %4120 = vmatpush.msra.mxu0 %v847
    %4121 = vmatpush.msra.mxu0 %v846
    %4122 = vmatpush.msra.mxu0 %v845
    %4123 = vmatpush.msra.mxu0 %v844
    %4124 = vmatpush.msra.mxu0 %v843
    %4125 = vmatpush.msra.mxu0 %v842
    %4126 = vmatpush.msra.mxu0 %v841
    %4127 = vmatpush.msra.mxu0 %v840
    %4128 = vmatpush.msra.mxu0 %v839
    %4129 = vmatpush.msra.mxu0 %v838
    %4130 = vmatpush.msra.mxu0 %v837
    %4131 = vmatpush.msra.mxu0 %v836
    %4132 = vmatpush.msra.mxu0 %v835
    %4133 = vmatpush.msra.mxu0 %v834
    %4134 = vmatpush.msra.mxu0 %v833
    %4135 = vmatpush.msra.mxu0 %v832
    %4136 = vmatmul.f32.gmra.mxu0 %v81
    %v4137 = vpop.f32.mrf.mxu0
    %v4138 = vadd.f32 %v4118, %v4137
    %4139 = vdwg.mxu0
    %4140 = vmatpush.msra.mxu0 %v863
    %4141 = vmatpush.msra.mxu0 %v862
    %4142 = vmatpush.msra.mxu0 %v861
    %4143 = vmatpush.msra.mxu0 %v860
    %4144 = vmatpush.msra.mxu0 %v859
    %4145 = vmatpush.msra.mxu0 %v858
    %4146 = vmatpush.msra.mxu0 %v857
    %4147 = vmatpush.msra.mxu0 %v856
    %4148 = vmatpush.msra.mxu0 %v855
    %4149 = vmatpush.msra.mxu0 %v854
    %4150 = vmatpush.msra.mxu0 %v853
    %4151 = vmatpush.msra.mxu0 %v852
    %4152 = vmatpush.msra.mxu0 %v851
    %4153 = vmatpush.msra.mxu0 %v850
    %4154 = vmatpush.msra.mxu0 %v849
    %4155 = vmatpush.msra.mxu0 %v848
    %4156 = vmatmul.f32.gmra.mxu0 %v82
    %v4157 = vpop.f32.mrf.mxu0
    %v4158 = vadd.f32 %v4138, %v4157
    %4159 = vdwg.mxu0
    %4160 = vmatpush.msra.mxu0 %v879
    %4161 = vmatpush.msra.mxu0 %v878
    %4162 = vmatpush.msra.mxu0 %v877
    %4163 = vmatpush.msra.mxu0 %v876
    %4164 = vmatpush.msra.mxu0 %v875
    %4165 = vmatpush.msra.mxu0 %v874
    %4166 = vmatpush.msra.mxu0 %v873
    %4167 = vmatpush.msra.mxu0 %v872
    %4168 = vmatpush.msra.mxu0 %v871
    %4169 = vmatpush.msra.mxu0 %v870
    %4170 = vmatpush.msra.mxu0 %v869
    %4171 = vmatpush.msra.mxu0 %v868
    %4172 = vmatpush.msra.mxu0 %v867
    %4173 = vmatpush.msra.mxu0 %v866
    %4174 = vmatpush.msra.mxu0 %v865
    %4175 = vmatpush.msra.mxu0 %v864
    %4176 = vmatmul.f32.gmra.mxu0 %v83
    %v4177 = vpop.f32.mrf.mxu0
    %v4178 = vadd.f32 %v4158, %v4177
    %4179 = vdwg.mxu0
    %4180 = vmatpush.msra.mxu0 %v895
    %4181 = vmatpush.msra.mxu0 %v894
    %4182 = vmatpush.msra.mxu0 %v893
    %4183 = vmatpush.msra.mxu0 %v892
    %4184 = vmatpush.msra.mxu0 %v891
    %4185 = vmatpush.msra.mxu0 %v890
    %4186 = vmatpush.msra.mxu0 %v889
    %4187 = vmatpush.msra.mxu0 %v888
    %4188 = vmatpush.msra.mxu0 %v887
    %4189 = vmatpush.msra.mxu0 %v886
    %4190 = vmatpush.msra.mxu0 %v885
    %4191 = vmatpush.msra.mxu0 %v884
    %4192 = vmatpush.msra.mxu0 %v883
    %4193 = vmatpush.msra.mxu0 %v882
    %4194 = vmatpush.msra.mxu0 %v881
    %4195 = vmatpush.msra.mxu0 %v880
    %4196 = vmatmul.f32.gmra.mxu0 %v84
    %v4197 = vpop.f32.mrf.mxu0
    %v4198 = vadd.f32 %v4178, %v4197
    %4199 = vdwg.mxu0
    %4200 = vmatpush.msra.mxu0 %v911
    %4201 = vmatpush.msra.mxu0 %v910
    %4202 = vmatpush.msra.mxu0 %v909
    %4203 = vmatpush.msra.mxu0 %v908
    %4204 = vmatpush.msra.mxu0 %v907
    %4205 = vmatpush.msra.mxu0 %v906
    %4206 = vmatpush.msra.mxu0 %v905
    %4207 = vmatpush.msra.mxu0 %v904
    %4208 = vmatpush.msra.mxu0 %v903
    %4209 = vmatpush.msra.mxu0 %v902
    %4210 = vmatpush.msra.mxu0 %v901
    %4211 = vmatpush.msra.mxu0 %v900
    %4212 = vmatpush.msra.mxu0 %v899
    %4213 = vmatpush.msra.mxu0 %v898
    %4214 = vmatpush.msra.mxu0 %v897
    %4215 = vmatpush.msra.mxu0 %v896
    %4216 = vmatmul.f32.gmra.mxu0 %v85
    %v4217 = vpop.f32.mrf.mxu0
    %v4218 = vadd.f32 %v4198, %v4217
    %4219 = vdwg.mxu0
    %4220 = vmatpush.msra.mxu0 %v927
    %4221 = vmatpush.msra.mxu0 %v926
    %4222 = vmatpush.msra.mxu0 %v925
    %4223 = vmatpush.msra.mxu0 %v924
    %4224 = vmatpush.msra.mxu0 %v923
    %4225 = vmatpush.msra.mxu0 %v922
    %4226 = vmatpush.msra.mxu0 %v921
    %4227 = vmatpush.msra.mxu0 %v920
    %4228 = vmatpush.msra.mxu0 %v919
    %4229 = vmatpush.msra.mxu0 %v918
    %4230 = vmatpush.msra.mxu0 %v917
    %4231 = vmatpush.msra.mxu0 %v916
    %4232 = vmatpush.msra.mxu0 %v915
    %4233 = vmatpush.msra.mxu0 %v914
    %4234 = vmatpush.msra.mxu0 %v913
    %4235 = vmatpush.msra.mxu0 %v912
    %4236 = vmatmul.f32.gmra.mxu0 %v86
    %v4237 = vpop.f32.mrf.mxu0
    %v4238 = vadd.f32 %v4218, %v4237
    %4239 = vdwg.mxu0
    %4240 = vmatpush.msra.mxu0 %v943
    %4241 = vmatpush.msra.mxu0 %v942
    %4242 = vmatpush.msra.mxu0 %v941
    %4243 = vmatpush.msra.mxu0 %v940
    %4244 = vmatpush.msra.mxu0 %v939
    %4245 = vmatpush.msra.mxu0 %v938
    %4246 = vmatpush.msra.mxu0 %v937
    %4247 = vmatpush.msra.mxu0 %v936
    %4248 = vmatpush.msra.mxu0 %v935
    %4249 = vmatpush.msra.mxu0 %v934
    %4250 = vmatpush.msra.mxu0 %v933
    %4251 = vmatpush.msra.mxu0 %v932
    %4252 = vmatpush.msra.mxu0 %v931
    %4253 = vmatpush.msra.mxu0 %v930
    %4254 = vmatpush.msra.mxu0 %v929
    %4255 = vmatpush.msra.mxu0 %v928
    %4256 = vmatmul.f32.gmra.mxu0 %v87
    %v4257 = vpop.f32.mrf.mxu0
    %v4258 = vadd.f32 %v4238, %v4257
    %4259 = vdwg.mxu0
    %4260 = vmatpush.msra.mxu0 %v959
    %4261 = vmatpush.msra.mxu0 %v958
    %4262 = vmatpush.msra.mxu0 %v957
    %4263 = vmatpush.msra.mxu0 %v956
    %4264 = vmatpush.msra.mxu0 %v955
    %4265 = vmatpush.msra.mxu0 %v954
    %4266 = vmatpush.msra.mxu0 %v953
    %4267 = vmatpush.msra.mxu0 %v952
    %4268 = vmatpush.msra.mxu0 %v951
    %4269 = vmatpush.msra.mxu0 %v950
    %4270 = vmatpush.msra.mxu0 %v949
    %4271 = vmatpush.msra.mxu0 %v948
    %4272 = vmatpush.msra.mxu0 %v947
    %4273 = vmatpush.msra.mxu0 %v946
    %4274 = vmatpush.msra.mxu0 %v945
    %4275 = vmatpush.msra.mxu0 %v944
    %4276 = vmatmul.f32.gmra.mxu0 %v88
    %v4277 = vpop.f32.mrf.mxu0
    %v4278 = vadd.f32 %v4258, %v4277
    %4279 = vdwg.mxu0
    %4280 = vmatpush.msra.mxu0 %v975
    %4281 = vmatpush.msra.mxu0 %v974
    %4282 = vmatpush.msra.mxu0 %v973
    %4283 = vmatpush.msra.mxu0 %v972
    %4284 = vmatpush.msra.mxu0 %v971
    %4285 = vmatpush.msra.mxu0 %v970
    %4286 = vmatpush.msra.mxu0 %v969
    %4287 = vmatpush.msra.mxu0 %v968
    %4288 = vmatpush.msra.mxu0 %v967
    %4289 = vmatpush.msra.mxu0 %v966
    %4290 = vmatpush.msra.mxu0 %v965
    %4291 = vmatpush.msra.mxu0 %v964
    %4292 = vmatpush.msra.mxu0 %v963
    %4293 = vmatpush.msra.mxu0 %v962
    %4294 = vmatpush.msra.mxu0 %v961
    %4295 = vmatpush.msra.mxu0 %v960
    %4296 = vmatmul.f32.gmra.mxu0 %v89
    %v4297 = vpop.f32.mrf.mxu0
    %v4298 = vadd.f32 %v4278, %v4297
    %4299 = vdwg.mxu0
    %4300 = vmatpush.msra.mxu0 %v991
    %4301 = vmatpush.msra.mxu0 %v990
    %4302 = vmatpush.msra.mxu0 %v989
    %4303 = vmatpush.msra.mxu0 %v988
    %4304 = vmatpush.msra.mxu0 %v987
    %4305 = vmatpush.msra.mxu0 %v986
    %4306 = vmatpush.msra.mxu0 %v985
    %4307 = vmatpush.msra.mxu0 %v984
    %4308 = vmatpush.msra.mxu0 %v983
    %4309 = vmatpush.msra.mxu0 %v982
    %4310 = vmatpush.msra.mxu0 %v981
    %4311 = vmatpush.msra.mxu0 %v980
    %4312 = vmatpush.msra.mxu0 %v979
    %4313 = vmatpush.msra.mxu0 %v978
    %4314 = vmatpush.msra.mxu0 %v977
    %4315 = vmatpush.msra.mxu0 %v976
    %4316 = vmatmul.f32.gmra.mxu0 %v90
    %v4317 = vpop.f32.mrf.mxu0
    %v4318 = vadd.f32 %v4298, %v4317
    %4319 = vdwg.mxu0
    %4320 = vmatpush.msra.mxu0 %v1007
    %4321 = vmatpush.msra.mxu0 %v1006
    %4322 = vmatpush.msra.mxu0 %v1005
    %4323 = vmatpush.msra.mxu0 %v1004
    %4324 = vmatpush.msra.mxu0 %v1003
    %4325 = vmatpush.msra.mxu0 %v1002
    %4326 = vmatpush.msra.mxu0 %v1001
    %4327 = vmatpush.msra.mxu0 %v1000
    %4328 = vmatpush.msra.mxu0 %v999
    %4329 = vmatpush.msra.mxu0 %v998
    %4330 = vmatpush.msra.mxu0 %v997
    %4331 = vmatpush.msra.mxu0 %v996
    %4332 = vmatpush.msra.mxu0 %v995
    %4333 = vmatpush.msra.mxu0 %v994
    %4334 = vmatpush.msra.mxu0 %v993
    %4335 = vmatpush.msra.mxu0 %v992
    %4336 = vmatmul.f32.gmra.mxu0 %v91
    %v4337 = vpop.f32.mrf.mxu0
    %v4338 = vadd.f32 %v4318, %v4337
    %4339 = vdwg.mxu0
    %4340 = vmatpush.msra.mxu0 %v1023
    %4341 = vmatpush.msra.mxu0 %v1022
    %4342 = vmatpush.msra.mxu0 %v1021
    %4343 = vmatpush.msra.mxu0 %v1020
    %4344 = vmatpush.msra.mxu0 %v1019
    %4345 = vmatpush.msra.mxu0 %v1018
    %4346 = vmatpush.msra.mxu0 %v1017
    %4347 = vmatpush.msra.mxu0 %v1016
    %4348 = vmatpush.msra.mxu0 %v1015
    %4349 = vmatpush.msra.mxu0 %v1014
    %4350 = vmatpush.msra.mxu0 %v1013
    %4351 = vmatpush.msra.mxu0 %v1012
    %4352 = vmatpush.msra.mxu0 %v1011
    %4353 = vmatpush.msra.mxu0 %v1010
    %4354 = vmatpush.msra.mxu0 %v1009
    %4355 = vmatpush.msra.mxu0 %v1008
    %4356 = vmatmul.f32.gmra.mxu0 %v92
    %v4357 = vpop.f32.mrf.mxu0
    %v4358 = vadd.f32 %v4338, %v4357
    %4359 = vdwg.mxu0
    %4360 = vmatpush.msra.mxu0 %v1039
    %4361 = vmatpush.msra.mxu0 %v1038
    %4362 = vmatpush.msra.mxu0 %v1037
    %4363 = vmatpush.msra.mxu0 %v1036
    %4364 = vmatpush.msra.mxu0 %v1035
    %4365 = vmatpush.msra.mxu0 %v1034
    %4366 = vmatpush.msra.mxu0 %v1033
    %4367 = vmatpush.msra.mxu0 %v1032
    %4368 = vmatpush.msra.mxu0 %v1031
    %4369 = vmatpush.msra.mxu0 %v1030
    %4370 = vmatpush.msra.mxu0 %v1029
    %4371 = vmatpush.msra.mxu0 %v1028
    %4372 = vmatpush.msra.mxu0 %v1027
    %4373 = vmatpush.msra.mxu0 %v1026
    %4374 = vmatpush.msra.mxu0 %v1025
    %4375 = vmatpush.msra.mxu0 %v1024
    %4376 = vmatmul.f32.gmra.mxu0 %v93
    %v4377 = vpop.f32.mrf.mxu0
    %v4378 = vadd.f32 %v4358, %v4377
    %4379 = vdwg.mxu0
    %4380 = vmatpush.msra.mxu0 %v1055
    %4381 = vmatpush.msra.mxu0 %v1054
    %4382 = vmatpush.msra.mxu0 %v1053
    %4383 = vmatpush.msra.mxu0 %v1052
    %4384 = vmatpush.msra.mxu0 %v1051
    %4385 = vmatpush.msra.mxu0 %v1050
    %4386 = vmatpush.msra.mxu0 %v1049
    %4387 = vmatpush.msra.mxu0 %v1048
    %4388 = vmatpush.msra.mxu0 %v1047
    %4389 = vmatpush.msra.mxu0 %v1046
    %4390 = vmatpush.msra.mxu0 %v1045
    %4391 = vmatpush.msra.mxu0 %v1044
    %4392 = vmatpush.msra.mxu0 %v1043
    %4393 = vmatpush.msra.mxu0 %v1042
    %4394 = vmatpush.msra.mxu0 %v1041
    %4395 = vmatpush.msra.mxu0 %v1040
    %4396 = vmatmul.f32.gmra.mxu0 %v94
    %v4397 = vpop.f32.mrf.mxu0
    %v4398 = vadd.f32 %v4378, %v4397
    %4399 = vdwg.mxu0
    %4400 = vmatpush.msra.mxu0 %v1071
    %4401 = vmatpush.msra.mxu0 %v1070
    %4402 = vmatpush.msra.mxu0 %v1069
    %4403 = vmatpush.msra.mxu0 %v1068
    %4404 = vmatpush.msra.mxu0 %v1067
    %4405 = vmatpush.msra.mxu0 %v1066
    %4406 = vmatpush.msra.mxu0 %v1065
    %4407 = vmatpush.msra.mxu0 %v1064
    %4408 = vmatpush.msra.mxu0 %v1063
    %4409 = vmatpush.msra.mxu0 %v1062
    %4410 = vmatpush.msra.mxu0 %v1061
    %4411 = vmatpush.msra.mxu0 %v1060
    %4412 = vmatpush.msra.mxu0 %v1059
    %4413 = vmatpush.msra.mxu0 %v1058
    %4414 = vmatpush.msra.mxu0 %v1057
    %4415 = vmatpush.msra.mxu0 %v1056
    %4416 = vmatmul.f32.gmra.mxu0 %v95
    %v4417 = vpop.f32.mrf.mxu0
    %v4418 = vadd.f32 %v4398, %v4417
    %4419 = vdwg.mxu0
    %4420 = vmatpush.msra.mxu0 %v1087
    %4421 = vmatpush.msra.mxu0 %v1086
    %4422 = vmatpush.msra.mxu0 %v1085
    %4423 = vmatpush.msra.mxu0 %v1084
    %4424 = vmatpush.msra.mxu0 %v1083
    %4425 = vmatpush.msra.mxu0 %v1082
    %4426 = vmatpush.msra.mxu0 %v1081
    %4427 = vmatpush.msra.mxu0 %v1080
    %4428 = vmatpush.msra.mxu0 %v1079
    %4429 = vmatpush.msra.mxu0 %v1078
    %4430 = vmatpush.msra.mxu0 %v1077
    %4431 = vmatpush.msra.mxu0 %v1076
    %4432 = vmatpush.msra.mxu0 %v1075
    %4433 = vmatpush.msra.mxu0 %v1074
    %4434 = vmatpush.msra.mxu0 %v1073
    %4435 = vmatpush.msra.mxu0 %v1072
    %4436 = vmatmul.f32.gmra.mxu0 %v96
    %v4437 = vpop.f32.mrf.mxu0
    %v4438 = vadd.f32 %v4418, %v4437
    %4439 = vdwg.mxu0
    %4440 = vmatpush.msra.mxu0 %v1103
    %4441 = vmatpush.msra.mxu0 %v1102
    %4442 = vmatpush.msra.mxu0 %v1101
    %4443 = vmatpush.msra.mxu0 %v1100
    %4444 = vmatpush.msra.mxu0 %v1099
    %4445 = vmatpush.msra.mxu0 %v1098
    %4446 = vmatpush.msra.mxu0 %v1097
    %4447 = vmatpush.msra.mxu0 %v1096
    %4448 = vmatpush.msra.mxu0 %v1095
    %4449 = vmatpush.msra.mxu0 %v1094
    %4450 = vmatpush.msra.mxu0 %v1093
    %4451 = vmatpush.msra.mxu0 %v1092
    %4452 = vmatpush.msra.mxu0 %v1091
    %4453 = vmatpush.msra.mxu0 %v1090
    %4454 = vmatpush.msra.mxu0 %v1089
    %4455 = vmatpush.msra.mxu0 %v1088
    %4456 = vmatmul.f32.gmra.mxu0 %v97
    %v4457 = vpop.f32.mrf.mxu0
    %v4458 = vadd.f32 %v4438, %v4457
    %4459 = vdwg.mxu0
    %4460 = vmatpush.msra.mxu0 %v1119
    %4461 = vmatpush.msra.mxu0 %v1118
    %4462 = vmatpush.msra.mxu0 %v1117
    %4463 = vmatpush.msra.mxu0 %v1116
    %4464 = vmatpush.msra.mxu0 %v1115
    %4465 = vmatpush.msra.mxu0 %v1114
    %4466 = vmatpush.msra.mxu0 %v1113
    %4467 = vmatpush.msra.mxu0 %v1112
    %4468 = vmatpush.msra.mxu0 %v1111
    %4469 = vmatpush.msra.mxu0 %v1110
    %4470 = vmatpush.msra.mxu0 %v1109
    %4471 = vmatpush.msra.mxu0 %v1108
    %4472 = vmatpush.msra.mxu0 %v1107
    %4473 = vmatpush.msra.mxu0 %v1106
    %4474 = vmatpush.msra.mxu0 %v1105
    %4475 = vmatpush.msra.mxu0 %v1104
    %4476 = vmatmul.f32.gmra.mxu0 %v98
    %v4477 = vpop.f32.mrf.mxu0
    %v4478 = vadd.f32 %v4458, %v4477
    %4479 = vdwg.mxu0
    %4480 = vmatpush.msra.mxu0 %v1135
    %4481 = vmatpush.msra.mxu0 %v1134
    %4482 = vmatpush.msra.mxu0 %v1133
    %4483 = vmatpush.msra.mxu0 %v1132
    %4484 = vmatpush.msra.mxu0 %v1131
    %4485 = vmatpush.msra.mxu0 %v1130
    %4486 = vmatpush.msra.mxu0 %v1129
    %4487 = vmatpush.msra.mxu0 %v1128
    %4488 = vmatpush.msra.mxu0 %v1127
    %4489 = vmatpush.msra.mxu0 %v1126
    %4490 = vmatpush.msra.mxu0 %v1125
    %4491 = vmatpush.msra.mxu0 %v1124
    %4492 = vmatpush.msra.mxu0 %v1123
    %4493 = vmatpush.msra.mxu0 %v1122
    %4494 = vmatpush.msra.mxu0 %v1121
    %4495 = vmatpush.msra.mxu0 %v1120
    %4496 = vmatmul.f32.gmra.mxu0 %v99
    %v4497 = vpop.f32.mrf.mxu0
    %v4498 = vadd.f32 %v4478, %v4497
    %4499 = vdwg.mxu0
    %4500 = vmatpush.msra.mxu0 %v1151
    %4501 = vmatpush.msra.mxu0 %v1150
    %4502 = vmatpush.msra.mxu0 %v1149
    %4503 = vmatpush.msra.mxu0 %v1148
    %4504 = vmatpush.msra.mxu0 %v1147
    %4505 = vmatpush.msra.mxu0 %v1146
    %4506 = vmatpush.msra.mxu0 %v1145
    %4507 = vmatpush.msra.mxu0 %v1144
    %4508 = vmatpush.msra.mxu0 %v1143
    %4509 = vmatpush.msra.mxu0 %v1142
    %4510 = vmatpush.msra.mxu0 %v1141
    %4511 = vmatpush.msra.mxu0 %v1140
    %4512 = vmatpush.msra.mxu0 %v1139
    %4513 = vmatpush.msra.mxu0 %v1138
    %4514 = vmatpush.msra.mxu0 %v1137
    %4515 = vmatpush.msra.mxu0 %v1136
    %4516 = vmatmul.f32.gmra.mxu0 %v100
    %v4517 = vpop.f32.mrf.mxu0
    %v4518 = vadd.f32 %v4498, %v4517
    %4519 = vdwg.mxu0
    %4520 = vmatpush.msra.mxu0 %v1167
    %4521 = vmatpush.msra.mxu0 %v1166
    %4522 = vmatpush.msra.mxu0 %v1165
    %4523 = vmatpush.msra.mxu0 %v1164
    %4524 = vmatpush.msra.mxu0 %v1163
    %4525 = vmatpush.msra.mxu0 %v1162
    %4526 = vmatpush.msra.mxu0 %v1161
    %4527 = vmatpush.msra.mxu0 %v1160
    %4528 = vmatpush.msra.mxu0 %v1159
    %4529 = vmatpush.msra.mxu0 %v1158
    %4530 = vmatpush.msra.mxu0 %v1157
    %4531 = vmatpush.msra.mxu0 %v1156
    %4532 = vmatpush.msra.mxu0 %v1155
    %4533 = vmatpush.msra.mxu0 %v1154
    %4534 = vmatpush.msra.mxu0 %v1153
    %4535 = vmatpush.msra.mxu0 %v1152
    %4536 = vmatmul.f32.gmra.mxu0 %v101
    %v4537 = vpop.f32.mrf.mxu0
    %v4538 = vadd.f32 %v4518, %v4537
    %4539 = vdwg.mxu0
    %4540 = vmatpush.msra.mxu0 %v1183
    %4541 = vmatpush.msra.mxu0 %v1182
    %4542 = vmatpush.msra.mxu0 %v1181
    %4543 = vmatpush.msra.mxu0 %v1180
    %4544 = vmatpush.msra.mxu0 %v1179
    %4545 = vmatpush.msra.mxu0 %v1178
    %4546 = vmatpush.msra.mxu0 %v1177
    %4547 = vmatpush.msra.mxu0 %v1176
    %4548 = vmatpush.msra.mxu0 %v1175
    %4549 = vmatpush.msra.mxu0 %v1174
    %4550 = vmatpush.msra.mxu0 %v1173
    %4551 = vmatpush.msra.mxu0 %v1172
    %4552 = vmatpush.msra.mxu0 %v1171
    %4553 = vmatpush.msra.mxu0 %v1170
    %4554 = vmatpush.msra.mxu0 %v1169
    %4555 = vmatpush.msra.mxu0 %v1168
    %4556 = vmatmul.f32.gmra.mxu0 %v102
    %v4557 = vpop.f32.mrf.mxu0
    %v4558 = vadd.f32 %v4538, %v4557
    %4559 = vdwg.mxu0
    %4560 = vmatpush.msra.mxu0 %v1199
    %4561 = vmatpush.msra.mxu0 %v1198
    %4562 = vmatpush.msra.mxu0 %v1197
    %4563 = vmatpush.msra.mxu0 %v1196
    %4564 = vmatpush.msra.mxu0 %v1195
    %4565 = vmatpush.msra.mxu0 %v1194
    %4566 = vmatpush.msra.mxu0 %v1193
    %4567 = vmatpush.msra.mxu0 %v1192
    %4568 = vmatpush.msra.mxu0 %v1191
    %4569 = vmatpush.msra.mxu0 %v1190
    %4570 = vmatpush.msra.mxu0 %v1189
    %4571 = vmatpush.msra.mxu0 %v1188
    %4572 = vmatpush.msra.mxu0 %v1187
    %4573 = vmatpush.msra.mxu0 %v1186
    %4574 = vmatpush.msra.mxu0 %v1185
    %4575 = vmatpush.msra.mxu0 %v1184
    %4576 = vmatmul.f32.gmra.mxu0 %v103
    %v4577 = vpop.f32.mrf.mxu0
    %v4578 = vadd.f32 %v4558, %v4577
    %4579 = vdwg.mxu0
    %4580 = vmatpush.msra.mxu0 %v1215
    %4581 = vmatpush.msra.mxu0 %v1214
    %4582 = vmatpush.msra.mxu0 %v1213
    %4583 = vmatpush.msra.mxu0 %v1212
    %4584 = vmatpush.msra.mxu0 %v1211
    %4585 = vmatpush.msra.mxu0 %v1210
    %4586 = vmatpush.msra.mxu0 %v1209
    %4587 = vmatpush.msra.mxu0 %v1208
    %4588 = vmatpush.msra.mxu0 %v1207
    %4589 = vmatpush.msra.mxu0 %v1206
    %4590 = vmatpush.msra.mxu0 %v1205
    %4591 = vmatpush.msra.mxu0 %v1204
    %4592 = vmatpush.msra.mxu0 %v1203
    %4593 = vmatpush.msra.mxu0 %v1202
    %4594 = vmatpush.msra.mxu0 %v1201
    %4595 = vmatpush.msra.mxu0 %v1200
    %4596 = vmatmul.f32.gmra.mxu0 %v104
    %v4597 = vpop.f32.mrf.mxu0
    %v4598 = vadd.f32 %v4578, %v4597
    %4599 = vdwg.mxu0
    %4600 = vmatpush.msra.mxu0 %v1231
    %4601 = vmatpush.msra.mxu0 %v1230
    %4602 = vmatpush.msra.mxu0 %v1229
    %4603 = vmatpush.msra.mxu0 %v1228
    %4604 = vmatpush.msra.mxu0 %v1227
    %4605 = vmatpush.msra.mxu0 %v1226
    %4606 = vmatpush.msra.mxu0 %v1225
    %4607 = vmatpush.msra.mxu0 %v1224
    %4608 = vmatpush.msra.mxu0 %v1223
    %4609 = vmatpush.msra.mxu0 %v1222
    %4610 = vmatpush.msra.mxu0 %v1221
    %4611 = vmatpush.msra.mxu0 %v1220
    %4612 = vmatpush.msra.mxu0 %v1219
    %4613 = vmatpush.msra.mxu0 %v1218
    %4614 = vmatpush.msra.mxu0 %v1217
    %4615 = vmatpush.msra.mxu0 %v1216
    %4616 = vmatmul.f32.gmra.mxu0 %v105
    %v4617 = vpop.f32.mrf.mxu0
    %v4618 = vadd.f32 %v4598, %v4617
    %4619 = vdwg.mxu0
    %4620 = vmatpush.msra.mxu0 %v1247
    %4621 = vmatpush.msra.mxu0 %v1246
    %4622 = vmatpush.msra.mxu0 %v1245
    %4623 = vmatpush.msra.mxu0 %v1244
    %4624 = vmatpush.msra.mxu0 %v1243
    %4625 = vmatpush.msra.mxu0 %v1242
    %4626 = vmatpush.msra.mxu0 %v1241
    %4627 = vmatpush.msra.mxu0 %v1240
    %4628 = vmatpush.msra.mxu0 %v1239
    %4629 = vmatpush.msra.mxu0 %v1238
    %4630 = vmatpush.msra.mxu0 %v1237
    %4631 = vmatpush.msra.mxu0 %v1236
    %4632 = vmatpush.msra.mxu0 %v1235
    %4633 = vmatpush.msra.mxu0 %v1234
    %4634 = vmatpush.msra.mxu0 %v1233
    %4635 = vmatpush.msra.mxu0 %v1232
    %4636 = vmatmul.f32.gmra.mxu0 %v106
    %v4637 = vpop.f32.mrf.mxu0
    %v4638 = vadd.f32 %v4618, %v4637
    %4639 = vdwg.mxu0
    %4640 = vmatpush.msra.mxu0 %v1263
    %4641 = vmatpush.msra.mxu0 %v1262
    %4642 = vmatpush.msra.mxu0 %v1261
    %4643 = vmatpush.msra.mxu0 %v1260
    %4644 = vmatpush.msra.mxu0 %v1259
    %4645 = vmatpush.msra.mxu0 %v1258
    %4646 = vmatpush.msra.mxu0 %v1257
    %4647 = vmatpush.msra.mxu0 %v1256
    %4648 = vmatpush.msra.mxu0 %v1255
    %4649 = vmatpush.msra.mxu0 %v1254
    %4650 = vmatpush.msra.mxu0 %v1253
    %4651 = vmatpush.msra.mxu0 %v1252
    %4652 = vmatpush.msra.mxu0 %v1251
    %4653 = vmatpush.msra.mxu0 %v1250
    %4654 = vmatpush.msra.mxu0 %v1249
    %4655 = vmatpush.msra.mxu0 %v1248
    %4656 = vmatmul.f32.gmra.mxu0 %v107
    %v4657 = vpop.f32.mrf.mxu0
    %v4658 = vadd.f32 %v4638, %v4657
    %4659 = vdwg.mxu0
    %4660 = vmatpush.msra.mxu0 %v1279
    %4661 = vmatpush.msra.mxu0 %v1278
    %4662 = vmatpush.msra.mxu0 %v1277
    %4663 = vmatpush.msra.mxu0 %v1276
    %4664 = vmatpush.msra.mxu0 %v1275
    %4665 = vmatpush.msra.mxu0 %v1274
    %4666 = vmatpush.msra.mxu0 %v1273
    %4667 = vmatpush.msra.mxu0 %v1272
    %4668 = vmatpush.msra.mxu0 %v1271
    %4669 = vmatpush.msra.mxu0 %v1270
    %4670 = vmatpush.msra.mxu0 %v1269
    %4671 = vmatpush.msra.mxu0 %v1268
    %4672 = vmatpush.msra.mxu0 %v1267
    %4673 = vmatpush.msra.mxu0 %v1266
    %4674 = vmatpush.msra.mxu0 %v1265
    %4675 = vmatpush.msra.mxu0 %v1264
    %4676 = vmatmul.f32.gmra.mxu0 %v108
    %v4677 = vpop.f32.mrf.mxu0
    %v4678 = vadd.f32 %v4658, %v4677
    %4679 = vdwg.mxu0
    %4680 = vmatpush.msra.mxu0 %v1295
    %4681 = vmatpush.msra.mxu0 %v1294
    %4682 = vmatpush.msra.mxu0 %v1293
    %4683 = vmatpush.msra.mxu0 %v1292
    %4684 = vmatpush.msra.mxu0 %v1291
    %4685 = vmatpush.msra.mxu0 %v1290
    %4686 = vmatpush.msra.mxu0 %v1289
    %4687 = vmatpush.msra.mxu0 %v1288
    %4688 = vmatpush.msra.mxu0 %v1287
    %4689 = vmatpush.msra.mxu0 %v1286
    %4690 = vmatpush.msra.mxu0 %v1285
    %4691 = vmatpush.msra.mxu0 %v1284
    %4692 = vmatpush.msra.mxu0 %v1283
    %4693 = vmatpush.msra.mxu0 %v1282
    %4694 = vmatpush.msra.mxu0 %v1281
    %4695 = vmatpush.msra.mxu0 %v1280
    %4696 = vmatmul.f32.gmra.mxu0 %v109
    %v4697 = vpop.f32.mrf.mxu0
    %v4698 = vadd.f32 %v4678, %v4697
    %4699 = vdwg.mxu0
    %4700 = vmatpush.msra.mxu0 %v1311
    %4701 = vmatpush.msra.mxu0 %v1310
    %4702 = vmatpush.msra.mxu0 %v1309
    %4703 = vmatpush.msra.mxu0 %v1308
    %4704 = vmatpush.msra.mxu0 %v1307
    %4705 = vmatpush.msra.mxu0 %v1306
    %4706 = vmatpush.msra.mxu0 %v1305
    %4707 = vmatpush.msra.mxu0 %v1304
    %4708 = vmatpush.msra.mxu0 %v1303
    %4709 = vmatpush.msra.mxu0 %v1302
    %4710 = vmatpush.msra.mxu0 %v1301
    %4711 = vmatpush.msra.mxu0 %v1300
    %4712 = vmatpush.msra.mxu0 %v1299
    %4713 = vmatpush.msra.mxu0 %v1298
    %4714 = vmatpush.msra.mxu0 %v1297
    %4715 = vmatpush.msra.mxu0 %v1296
    %4716 = vmatmul.f32.gmra.mxu0 %v110
    %v4717 = vpop.f32.mrf.mxu0
    %v4718 = vadd.f32 %v4698, %v4717
    %4719 = vdwg.mxu0
    %4720 = vmatpush.msra.mxu0 %v1327
    %4721 = vmatpush.msra.mxu0 %v1326
    %4722 = vmatpush.msra.mxu0 %v1325
    %4723 = vmatpush.msra.mxu0 %v1324
    %4724 = vmatpush.msra.mxu0 %v1323
    %4725 = vmatpush.msra.mxu0 %v1322
    %4726 = vmatpush.msra.mxu0 %v1321
    %4727 = vmatpush.msra.mxu0 %v1320
    %4728 = vmatpush.msra.mxu0 %v1319
    %4729 = vmatpush.msra.mxu0 %v1318
    %4730 = vmatpush.msra.mxu0 %v1317
    %4731 = vmatpush.msra.mxu0 %v1316
    %4732 = vmatpush.msra.mxu0 %v1315
    %4733 = vmatpush.msra.mxu0 %v1314
    %4734 = vmatpush.msra.mxu0 %v1313
    %4735 = vmatpush.msra.mxu0 %v1312
    %4736 = vmatmul.f32.gmra.mxu0 %v111
    %v4737 = vpop.f32.mrf.mxu0
    %v4738 = vadd.f32 %v4718, %v4737
    %4739 = vdwg.mxu0
    %4740 = vmatpush.msra.mxu0 %v1343
    %4741 = vmatpush.msra.mxu0 %v1342
    %4742 = vmatpush.msra.mxu0 %v1341
    %4743 = vmatpush.msra.mxu0 %v1340
    %4744 = vmatpush.msra.mxu0 %v1339
    %4745 = vmatpush.msra.mxu0 %v1338
    %4746 = vmatpush.msra.mxu0 %v1337
    %4747 = vmatpush.msra.mxu0 %v1336
    %4748 = vmatpush.msra.mxu0 %v1335
    %4749 = vmatpush.msra.mxu0 %v1334
    %4750 = vmatpush.msra.mxu0 %v1333
    %4751 = vmatpush.msra.mxu0 %v1332
    %4752 = vmatpush.msra.mxu0 %v1331
    %4753 = vmatpush.msra.mxu0 %v1330
    %4754 = vmatpush.msra.mxu0 %v1329
    %4755 = vmatpush.msra.mxu0 %v1328
    %4756 = vmatmul.f32.gmra.mxu0 %v112
    %v4757 = vpop.f32.mrf.mxu0
    %v4758 = vadd.f32 %v4738, %v4757
    %4759 = vdwg.mxu0
    %4760 = vmatpush.msra.mxu0 %v1359
    %4761 = vmatpush.msra.mxu0 %v1358
    %4762 = vmatpush.msra.mxu0 %v1357
    %4763 = vmatpush.msra.mxu0 %v1356
    %4764 = vmatpush.msra.mxu0 %v1355
    %4765 = vmatpush.msra.mxu0 %v1354
    %4766 = vmatpush.msra.mxu0 %v1353
    %4767 = vmatpush.msra.mxu0 %v1352
    %4768 = vmatpush.msra.mxu0 %v1351
    %4769 = vmatpush.msra.mxu0 %v1350
    %4770 = vmatpush.msra.mxu0 %v1349
    %4771 = vmatpush.msra.mxu0 %v1348
    %4772 = vmatpush.msra.mxu0 %v1347
    %4773 = vmatpush.msra.mxu0 %v1346
    %4774 = vmatpush.msra.mxu0 %v1345
    %4775 = vmatpush.msra.mxu0 %v1344
    %4776 = vmatmul.f32.gmra.mxu0 %v113
    %v4777 = vpop.f32.mrf.mxu0
    %v4778 = vadd.f32 %v4758, %v4777
    %4779 = vdwg.mxu0
    %4780 = vmatpush.msra.mxu0 %v1375
    %4781 = vmatpush.msra.mxu0 %v1374
    %4782 = vmatpush.msra.mxu0 %v1373
    %4783 = vmatpush.msra.mxu0 %v1372
    %4784 = vmatpush.msra.mxu0 %v1371
    %4785 = vmatpush.msra.mxu0 %v1370
    %4786 = vmatpush.msra.mxu0 %v1369
    %4787 = vmatpush.msra.mxu0 %v1368
    %4788 = vmatpush.msra.mxu0 %v1367
    %4789 = vmatpush.msra.mxu0 %v1366
    %4790 = vmatpush.msra.mxu0 %v1365
    %4791 = vmatpush.msra.mxu0 %v1364
    %4792 = vmatpush.msra.mxu0 %v1363
    %4793 = vmatpush.msra.mxu0 %v1362
    %4794 = vmatpush.msra.mxu0 %v1361
    %4795 = vmatpush.msra.mxu0 %v1360
    %4796 = vmatmul.f32.gmra.mxu0 %v114
    %v4797 = vpop.f32.mrf.mxu0
    %v4798 = vadd.f32 %v4778, %v4797
    %4799 = vdwg.mxu0
    %4800 = vmatpush.msra.mxu0 %v1391
    %4801 = vmatpush.msra.mxu0 %v1390
    %4802 = vmatpush.msra.mxu0 %v1389
    %4803 = vmatpush.msra.mxu0 %v1388
    %4804 = vmatpush.msra.mxu0 %v1387
    %4805 = vmatpush.msra.mxu0 %v1386
    %4806 = vmatpush.msra.mxu0 %v1385
    %4807 = vmatpush.msra.mxu0 %v1384
    %4808 = vmatpush.msra.mxu0 %v1383
    %4809 = vmatpush.msra.mxu0 %v1382
    %4810 = vmatpush.msra.mxu0 %v1381
    %4811 = vmatpush.msra.mxu0 %v1380
    %4812 = vmatpush.msra.mxu0 %v1379
    %4813 = vmatpush.msra.mxu0 %v1378
    %4814 = vmatpush.msra.mxu0 %v1377
    %4815 = vmatpush.msra.mxu0 %v1376
    %4816 = vmatmul.f32.gmra.mxu0 %v115
    %v4817 = vpop.f32.mrf.mxu0
    %v4818 = vadd.f32 %v4798, %v4817
    %4819 = vdwg.mxu0
    %4820 = vmatpush.msra.mxu0 %v1407
    %4821 = vmatpush.msra.mxu0 %v1406
    %4822 = vmatpush.msra.mxu0 %v1405
    %4823 = vmatpush.msra.mxu0 %v1404
    %4824 = vmatpush.msra.mxu0 %v1403
    %4825 = vmatpush.msra.mxu0 %v1402
    %4826 = vmatpush.msra.mxu0 %v1401
    %4827 = vmatpush.msra.mxu0 %v1400
    %4828 = vmatpush.msra.mxu0 %v1399
    %4829 = vmatpush.msra.mxu0 %v1398
    %4830 = vmatpush.msra.mxu0 %v1397
    %4831 = vmatpush.msra.mxu0 %v1396
    %4832 = vmatpush.msra.mxu0 %v1395
    %4833 = vmatpush.msra.mxu0 %v1394
    %4834 = vmatpush.msra.mxu0 %v1393
    %4835 = vmatpush.msra.mxu0 %v1392
    %4836 = vmatmul.f32.gmra.mxu0 %v116
    %v4837 = vpop.f32.mrf.mxu0
    %v4838 = vadd.f32 %v4818, %v4837
    %4839 = vdwg.mxu0
    %4840 = vmatpush.msra.mxu0 %v1423
    %4841 = vmatpush.msra.mxu0 %v1422
    %4842 = vmatpush.msra.mxu0 %v1421
    %4843 = vmatpush.msra.mxu0 %v1420
    %4844 = vmatpush.msra.mxu0 %v1419
    %4845 = vmatpush.msra.mxu0 %v1418
    %4846 = vmatpush.msra.mxu0 %v1417
    %4847 = vmatpush.msra.mxu0 %v1416
    %4848 = vmatpush.msra.mxu0 %v1415
    %4849 = vmatpush.msra.mxu0 %v1414
    %4850 = vmatpush.msra.mxu0 %v1413
    %4851 = vmatpush.msra.mxu0 %v1412
    %4852 = vmatpush.msra.mxu0 %v1411
    %4853 = vmatpush.msra.mxu0 %v1410
    %4854 = vmatpush.msra.mxu0 %v1409
    %4855 = vmatpush.msra.mxu0 %v1408
    %4856 = vmatmul.f32.gmra.mxu0 %v117
    %v4857 = vpop.f32.mrf.mxu0
    %v4858 = vadd.f32 %v4838, %v4857
    %4859 = vdwg.mxu0
    %4860 = vmatpush.msra.mxu0 %v1439
    %4861 = vmatpush.msra.mxu0 %v1438
    %4862 = vmatpush.msra.mxu0 %v1437
    %4863 = vmatpush.msra.mxu0 %v1436
    %4864 = vmatpush.msra.mxu0 %v1435
    %4865 = vmatpush.msra.mxu0 %v1434
    %4866 = vmatpush.msra.mxu0 %v1433
    %4867 = vmatpush.msra.mxu0 %v1432
    %4868 = vmatpush.msra.mxu0 %v1431
    %4869 = vmatpush.msra.mxu0 %v1430
    %4870 = vmatpush.msra.mxu0 %v1429
    %4871 = vmatpush.msra.mxu0 %v1428
    %4872 = vmatpush.msra.mxu0 %v1427
    %4873 = vmatpush.msra.mxu0 %v1426
    %4874 = vmatpush.msra.mxu0 %v1425
    %4875 = vmatpush.msra.mxu0 %v1424
    %4876 = vmatmul.f32.gmra.mxu0 %v118
    %v4877 = vpop.f32.mrf.mxu0
    %v4878 = vadd.f32 %v4858, %v4877
    %4879 = vdwg.mxu0
    %4880 = vmatpush.msra.mxu0 %v1455
    %4881 = vmatpush.msra.mxu0 %v1454
    %4882 = vmatpush.msra.mxu0 %v1453
    %4883 = vmatpush.msra.mxu0 %v1452
    %4884 = vmatpush.msra.mxu0 %v1451
    %4885 = vmatpush.msra.mxu0 %v1450
    %4886 = vmatpush.msra.mxu0 %v1449
    %4887 = vmatpush.msra.mxu0 %v1448
    %4888 = vmatpush.msra.mxu0 %v1447
    %4889 = vmatpush.msra.mxu0 %v1446
    %4890 = vmatpush.msra.mxu0 %v1445
    %4891 = vmatpush.msra.mxu0 %v1444
    %4892 = vmatpush.msra.mxu0 %v1443
    %4893 = vmatpush.msra.mxu0 %v1442
    %4894 = vmatpush.msra.mxu0 %v1441
    %4895 = vmatpush.msra.mxu0 %v1440
    %4896 = vmatmul.f32.gmra.mxu0 %v119
    %v4897 = vpop.f32.mrf.mxu0
    %v4898 = vadd.f32 %v4878, %v4897
    %4899 = vdwg.mxu0
    %4900 = vmatpush.msra.mxu0 %v1471
    %4901 = vmatpush.msra.mxu0 %v1470
    %4902 = vmatpush.msra.mxu0 %v1469
    %4903 = vmatpush.msra.mxu0 %v1468
    %4904 = vmatpush.msra.mxu0 %v1467
    %4905 = vmatpush.msra.mxu0 %v1466
    %4906 = vmatpush.msra.mxu0 %v1465
    %4907 = vmatpush.msra.mxu0 %v1464
    %4908 = vmatpush.msra.mxu0 %v1463
    %4909 = vmatpush.msra.mxu0 %v1462
    %4910 = vmatpush.msra.mxu0 %v1461
    %4911 = vmatpush.msra.mxu0 %v1460
    %4912 = vmatpush.msra.mxu0 %v1459
    %4913 = vmatpush.msra.mxu0 %v1458
    %4914 = vmatpush.msra.mxu0 %v1457
    %4915 = vmatpush.msra.mxu0 %v1456
    %4916 = vmatmul.f32.gmra.mxu0 %v120
    %v4917 = vpop.f32.mrf.mxu0
    %v4918 = vadd.f32 %v4898, %v4917
    %4919 = vdwg.mxu0
    %4920 = vmatpush.msra.mxu0 %v1487
    %4921 = vmatpush.msra.mxu0 %v1486
    %4922 = vmatpush.msra.mxu0 %v1485
    %4923 = vmatpush.msra.mxu0 %v1484
    %4924 = vmatpush.msra.mxu0 %v1483
    %4925 = vmatpush.msra.mxu0 %v1482
    %4926 = vmatpush.msra.mxu0 %v1481
    %4927 = vmatpush.msra.mxu0 %v1480
    %4928 = vmatpush.msra.mxu0 %v1479
    %4929 = vmatpush.msra.mxu0 %v1478
    %4930 = vmatpush.msra.mxu0 %v1477
    %4931 = vmatpush.msra.mxu0 %v1476
    %4932 = vmatpush.msra.mxu0 %v1475
    %4933 = vmatpush.msra.mxu0 %v1474
    %4934 = vmatpush.msra.mxu0 %v1473
    %4935 = vmatpush.msra.mxu0 %v1472
    %4936 = vmatmul.f32.gmra.mxu0 %v121
    %v4937 = vpop.f32.mrf.mxu0
    %v4938 = vadd.f32 %v4918, %v4937
    %4939 = vdwg.mxu0
    %4940 = vmatpush.msra.mxu0 %v1503
    %4941 = vmatpush.msra.mxu0 %v1502
    %4942 = vmatpush.msra.mxu0 %v1501
    %4943 = vmatpush.msra.mxu0 %v1500
    %4944 = vmatpush.msra.mxu0 %v1499
    %4945 = vmatpush.msra.mxu0 %v1498
    %4946 = vmatpush.msra.mxu0 %v1497
    %4947 = vmatpush.msra.mxu0 %v1496
    %4948 = vmatpush.msra.mxu0 %v1495
    %4949 = vmatpush.msra.mxu0 %v1494
    %4950 = vmatpush.msra.mxu0 %v1493
    %4951 = vmatpush.msra.mxu0 %v1492
    %4952 = vmatpush.msra.mxu0 %v1491
    %4953 = vmatpush.msra.mxu0 %v1490
    %4954 = vmatpush.msra.mxu0 %v1489
    %4955 = vmatpush.msra.mxu0 %v1488
    %4956 = vmatmul.f32.gmra.mxu0 %v122
    %v4957 = vpop.f32.mrf.mxu0
    %v4958 = vadd.f32 %v4938, %v4957
    %4959 = vdwg.mxu0
    %4960 = vmatpush.msra.mxu0 %v1519
    %4961 = vmatpush.msra.mxu0 %v1518
    %4962 = vmatpush.msra.mxu0 %v1517
    %4963 = vmatpush.msra.mxu0 %v1516
    %4964 = vmatpush.msra.mxu0 %v1515
    %4965 = vmatpush.msra.mxu0 %v1514
    %4966 = vmatpush.msra.mxu0 %v1513
    %4967 = vmatpush.msra.mxu0 %v1512
    %4968 = vmatpush.msra.mxu0 %v1511
    %4969 = vmatpush.msra.mxu0 %v1510
    %4970 = vmatpush.msra.mxu0 %v1509
    %4971 = vmatpush.msra.mxu0 %v1508
    %4972 = vmatpush.msra.mxu0 %v1507
    %4973 = vmatpush.msra.mxu0 %v1506
    %4974 = vmatpush.msra.mxu0 %v1505
    %4975 = vmatpush.msra.mxu0 %v1504
    %4976 = vmatmul.f32.gmra.mxu0 %v123
    %v4977 = vpop.f32.mrf.mxu0
    %v4978 = vadd.f32 %v4958, %v4977
    %4979 = vdwg.mxu0
    %4980 = vmatpush.msra.mxu0 %v1535
    %4981 = vmatpush.msra.mxu0 %v1534
    %4982 = vmatpush.msra.mxu0 %v1533
    %4983 = vmatpush.msra.mxu0 %v1532
    %4984 = vmatpush.msra.mxu0 %v1531
    %4985 = vmatpush.msra.mxu0 %v1530
    %4986 = vmatpush.msra.mxu0 %v1529
    %4987 = vmatpush.msra.mxu0 %v1528
    %4988 = vmatpush.msra.mxu0 %v1527
    %4989 = vmatpush.msra.mxu0 %v1526
    %4990 = vmatpush.msra.mxu0 %v1525
    %4991 = vmatpush.msra.mxu0 %v1524
    %4992 = vmatpush.msra.mxu0 %v1523
    %4993 = vmatpush.msra.mxu0 %v1522
    %4994 = vmatpush.msra.mxu0 %v1521
    %4995 = vmatpush.msra.mxu0 %v1520
    %4996 = vmatmul.f32.gmra.mxu0 %v124
    %v4997 = vpop.f32.mrf.mxu0
    %v4998 = vadd.f32 %v4978, %v4997
    %4999 = vdwg.mxu0
    %5000 = vmatpush.msra.mxu0 %v1551
    %5001 = vmatpush.msra.mxu0 %v1550
    %5002 = vmatpush.msra.mxu0 %v1549
    %5003 = vmatpush.msra.mxu0 %v1548
    %5004 = vmatpush.msra.mxu0 %v1547
    %5005 = vmatpush.msra.mxu0 %v1546
    %5006 = vmatpush.msra.mxu0 %v1545
    %5007 = vmatpush.msra.mxu0 %v1544
    %5008 = vmatpush.msra.mxu0 %v1543
    %5009 = vmatpush.msra.mxu0 %v1542
    %5010 = vmatpush.msra.mxu0 %v1541
    %5011 = vmatpush.msra.mxu0 %v1540
    %5012 = vmatpush.msra.mxu0 %v1539
    %5013 = vmatpush.msra.mxu0 %v1538
    %5014 = vmatpush.msra.mxu0 %v1537
    %5015 = vmatpush.msra.mxu0 %v1536
    %5016 = vmatmul.f32.gmra.mxu0 %v125
    %v5017 = vpop.f32.mrf.mxu0
    %v5018 = vadd.f32 %v4998, %v5017
    %5019 = vdwg.mxu0
    %5020 = vmatpush.msra.mxu0 %v1567
    %5021 = vmatpush.msra.mxu0 %v1566
    %5022 = vmatpush.msra.mxu0 %v1565
    %5023 = vmatpush.msra.mxu0 %v1564
    %5024 = vmatpush.msra.mxu0 %v1563
    %5025 = vmatpush.msra.mxu0 %v1562
    %5026 = vmatpush.msra.mxu0 %v1561
    %5027 = vmatpush.msra.mxu0 %v1560
    %5028 = vmatpush.msra.mxu0 %v1559
    %5029 = vmatpush.msra.mxu0 %v1558
    %5030 = vmatpush.msra.mxu0 %v1557
    %5031 = vmatpush.msra.mxu0 %v1556
    %5032 = vmatpush.msra.mxu0 %v1555
    %5033 = vmatpush.msra.mxu0 %v1554
    %5034 = vmatpush.msra.mxu0 %v1553
    %5035 = vmatpush.msra.mxu0 %v1552
    %5036 = vmatmul.f32.gmra.mxu0 %v126
    %v5037 = vpop.f32.mrf.mxu0
    %v5038 = vadd.f32 %v5018, %v5037
    %5039 = vdwg.mxu0
    %5040 = vmatpush.msra.mxu0 %v1583
    %5041 = vmatpush.msra.mxu0 %v1582
    %5042 = vmatpush.msra.mxu0 %v1581
    %5043 = vmatpush.msra.mxu0 %v1580
    %5044 = vmatpush.msra.mxu0 %v1579
    %5045 = vmatpush.msra.mxu0 %v1578
    %5046 = vmatpush.msra.mxu0 %v1577
    %5047 = vmatpush.msra.mxu0 %v1576
    %5048 = vmatpush.msra.mxu0 %v1575
    %5049 = vmatpush.msra.mxu0 %v1574
    %5050 = vmatpush.msra.mxu0 %v1573
    %5051 = vmatpush.msra.mxu0 %v1572
    %5052 = vmatpush.msra.mxu0 %v1571
    %5053 = vmatpush.msra.mxu0 %v1570
    %5054 = vmatpush.msra.mxu0 %v1569
    %5055 = vmatpush.msra.mxu0 %v1568
    %5056 = vmatmul.f32.gmra.mxu0 %v127
    %v5057 = vpop.f32.mrf.mxu0
    %v5058 = vadd.f32 %v5038, %v5057
    %5059 = vdwg.mxu0
    %5060 = vmatpush.msra.mxu0 %v1599
    %5061 = vmatpush.msra.mxu0 %v1598
    %5062 = vmatpush.msra.mxu0 %v1597
    %5063 = vmatpush.msra.mxu0 %v1596
    %5064 = vmatpush.msra.mxu0 %v1595
    %5065 = vmatpush.msra.mxu0 %v1594
    %5066 = vmatpush.msra.mxu0 %v1593
    %5067 = vmatpush.msra.mxu0 %v1592
    %5068 = vmatpush.msra.mxu0 %v1591
    %5069 = vmatpush.msra.mxu0 %v1590
    %5070 = vmatpush.msra.mxu0 %v1589
    %5071 = vmatpush.msra.mxu0 %v1588
    %5072 = vmatpush.msra.mxu0 %v1587
    %5073 = vmatpush.msra.mxu0 %v1586
    %5074 = vmatpush.msra.mxu0 %v1585
    %5075 = vmatpush.msra.mxu0 %v1584
    %5076 = vmatmul.f32.gmra.mxu0 %v128
    %v5077 = vpop.f32.mrf.mxu0
    %v5078 = vadd.f32 %v5058, %v5077
    %5079 = vdwg.mxu0
    %5080 = vmatpush.msra.mxu0 %v1615
    %5081 = vmatpush.msra.mxu0 %v1614
    %5082 = vmatpush.msra.mxu0 %v1613
    %5083 = vmatpush.msra.mxu0 %v1612
    %5084 = vmatpush.msra.mxu0 %v1611
    %5085 = vmatpush.msra.mxu0 %v1610
    %5086 = vmatpush.msra.mxu0 %v1609
    %5087 = vmatpush.msra.mxu0 %v1608
    %5088 = vmatpush.msra.mxu0 %v1607
    %5089 = vmatpush.msra.mxu0 %v1606
    %5090 = vmatpush.msra.mxu0 %v1605
    %5091 = vmatpush.msra.mxu0 %v1604
    %5092 = vmatpush.msra.mxu0 %v1603
    %5093 = vmatpush.msra.mxu0 %v1602
    %5094 = vmatpush.msra.mxu0 %v1601
    %5095 = vmatpush.msra.mxu0 %v1600
    %5096 = vmatmul.f32.gmra.mxu0 %v129
    %v5097 = vpop.f32.mrf.mxu0
    %v5098 = vadd.f32 %v5078, %v5097
    %5099 = vdwg.mxu0
    %5100 = vmatpush.msra.mxu0 %v1631
    %5101 = vmatpush.msra.mxu0 %v1630
    %5102 = vmatpush.msra.mxu0 %v1629
    %5103 = vmatpush.msra.mxu0 %v1628
    %5104 = vmatpush.msra.mxu0 %v1627
    %5105 = vmatpush.msra.mxu0 %v1626
    %5106 = vmatpush.msra.mxu0 %v1625
    %5107 = vmatpush.msra.mxu0 %v1624
    %5108 = vmatpush.msra.mxu0 %v1623
    %5109 = vmatpush.msra.mxu0 %v1622
    %5110 = vmatpush.msra.mxu0 %v1621
    %5111 = vmatpush.msra.mxu0 %v1620
    %5112 = vmatpush.msra.mxu0 %v1619
    %5113 = vmatpush.msra.mxu0 %v1618
    %5114 = vmatpush.msra.mxu0 %v1617
    %5115 = vmatpush.msra.mxu0 %v1616
    %5116 = vmatmul.f32.gmra.mxu0 %v130
    %v5117 = vpop.f32.mrf.mxu0
    %v5118 = vadd.f32 %v5098, %v5117
    %5119 = vdwg.mxu0
    %5120 = vmatpush.msra.mxu0 %v1647
    %5121 = vmatpush.msra.mxu0 %v1646
    %5122 = vmatpush.msra.mxu0 %v1645
    %5123 = vmatpush.msra.mxu0 %v1644
    %5124 = vmatpush.msra.mxu0 %v1643
    %5125 = vmatpush.msra.mxu0 %v1642
    %5126 = vmatpush.msra.mxu0 %v1641
    %5127 = vmatpush.msra.mxu0 %v1640
    %5128 = vmatpush.msra.mxu0 %v1639
    %5129 = vmatpush.msra.mxu0 %v1638
    %5130 = vmatpush.msra.mxu0 %v1637
    %5131 = vmatpush.msra.mxu0 %v1636
    %5132 = vmatpush.msra.mxu0 %v1635
    %5133 = vmatpush.msra.mxu0 %v1634
    %5134 = vmatpush.msra.mxu0 %v1633
    %5135 = vmatpush.msra.mxu0 %v1632
    %5136 = vmatmul.f32.gmra.mxu0 %v131
    %v5137 = vpop.f32.mrf.mxu0
    %v5138 = vadd.f32 %v5118, %v5137
    %5139 = vdwg.mxu0
    %5140 = vmatpush.msra.mxu0 %v1663
    %5141 = vmatpush.msra.mxu0 %v1662
    %5142 = vmatpush.msra.mxu0 %v1661
    %5143 = vmatpush.msra.mxu0 %v1660
    %5144 = vmatpush.msra.mxu0 %v1659
    %5145 = vmatpush.msra.mxu0 %v1658
    %5146 = vmatpush.msra.mxu0 %v1657
    %5147 = vmatpush.msra.mxu0 %v1656
    %5148 = vmatpush.msra.mxu0 %v1655
    %5149 = vmatpush.msra.mxu0 %v1654
    %5150 = vmatpush.msra.mxu0 %v1653
    %5151 = vmatpush.msra.mxu0 %v1652
    %5152 = vmatpush.msra.mxu0 %v1651
    %5153 = vmatpush.msra.mxu0 %v1650
    %5154 = vmatpush.msra.mxu0 %v1649
    %5155 = vmatpush.msra.mxu0 %v1648
    %5156 = vmatmul.f32.gmra.mxu0 %v132
    %v5157 = vpop.f32.mrf.mxu0
    %v5158 = vadd.f32 %v5138, %v5157
    %5159 = vdwg.mxu0
    %5160 = vmatpush.msra.mxu0 %v1679
    %5161 = vmatpush.msra.mxu0 %v1678
    %5162 = vmatpush.msra.mxu0 %v1677
    %5163 = vmatpush.msra.mxu0 %v1676
    %5164 = vmatpush.msra.mxu0 %v1675
    %5165 = vmatpush.msra.mxu0 %v1674
    %5166 = vmatpush.msra.mxu0 %v1673
    %5167 = vmatpush.msra.mxu0 %v1672
    %5168 = vmatpush.msra.mxu0 %v1671
    %5169 = vmatpush.msra.mxu0 %v1670
    %5170 = vmatpush.msra.mxu0 %v1669
    %5171 = vmatpush.msra.mxu0 %v1668
    %5172 = vmatpush.msra.mxu0 %v1667
    %5173 = vmatpush.msra.mxu0 %v1666
    %5174 = vmatpush.msra.mxu0 %v1665
    %5175 = vmatpush.msra.mxu0 %v1664
    %5176 = vmatmul.f32.gmra.mxu0 %v133
    %v5177 = vpop.f32.mrf.mxu0
    %v5178 = vadd.f32 %v5158, %v5177
    %5179 = vdwg.mxu0
    %5180 = vmatpush.msra.mxu0 %v1695
    %5181 = vmatpush.msra.mxu0 %v1694
    %5182 = vmatpush.msra.mxu0 %v1693
    %5183 = vmatpush.msra.mxu0 %v1692
    %5184 = vmatpush.msra.mxu0 %v1691
    %5185 = vmatpush.msra.mxu0 %v1690
    %5186 = vmatpush.msra.mxu0 %v1689
    %5187 = vmatpush.msra.mxu0 %v1688
    %5188 = vmatpush.msra.mxu0 %v1687
    %5189 = vmatpush.msra.mxu0 %v1686
    %5190 = vmatpush.msra.mxu0 %v1685
    %5191 = vmatpush.msra.mxu0 %v1684
    %5192 = vmatpush.msra.mxu0 %v1683
    %5193 = vmatpush.msra.mxu0 %v1682
    %5194 = vmatpush.msra.mxu0 %v1681
    %5195 = vmatpush.msra.mxu0 %v1680
    %5196 = vmatmul.f32.gmra.mxu0 %v134
    %v5197 = vpop.f32.mrf.mxu0
    %v5198 = vadd.f32 %v5178, %v5197
    %5199 = vdwg.mxu0
    %5200 = vmatpush.msra.mxu0 %v1711
    %5201 = vmatpush.msra.mxu0 %v1710
    %5202 = vmatpush.msra.mxu0 %v1709
    %5203 = vmatpush.msra.mxu0 %v1708
    %5204 = vmatpush.msra.mxu0 %v1707
    %5205 = vmatpush.msra.mxu0 %v1706
    %5206 = vmatpush.msra.mxu0 %v1705
    %5207 = vmatpush.msra.mxu0 %v1704
    %5208 = vmatpush.msra.mxu0 %v1703
    %5209 = vmatpush.msra.mxu0 %v1702
    %5210 = vmatpush.msra.mxu0 %v1701
    %5211 = vmatpush.msra.mxu0 %v1700
    %5212 = vmatpush.msra.mxu0 %v1699
    %5213 = vmatpush.msra.mxu0 %v1698
    %5214 = vmatpush.msra.mxu0 %v1697
    %5215 = vmatpush.msra.mxu0 %v1696
    %5216 = vmatmul.f32.gmra.mxu0 %v135
    %v5217 = vpop.f32.mrf.mxu0
    %v5218 = vadd.f32 %v5198, %v5217
    %5219 = vdwg.mxu0
    %5220 = vmatpush.msra.mxu0 %v1727
    %5221 = vmatpush.msra.mxu0 %v1726
    %5222 = vmatpush.msra.mxu0 %v1725
    %5223 = vmatpush.msra.mxu0 %v1724
    %5224 = vmatpush.msra.mxu0 %v1723
    %5225 = vmatpush.msra.mxu0 %v1722
    %5226 = vmatpush.msra.mxu0 %v1721
    %5227 = vmatpush.msra.mxu0 %v1720
    %5228 = vmatpush.msra.mxu0 %v1719
    %5229 = vmatpush.msra.mxu0 %v1718
    %5230 = vmatpush.msra.mxu0 %v1717
    %5231 = vmatpush.msra.mxu0 %v1716
    %5232 = vmatpush.msra.mxu0 %v1715
    %5233 = vmatpush.msra.mxu0 %v1714
    %5234 = vmatpush.msra.mxu0 %v1713
    %5235 = vmatpush.msra.mxu0 %v1712
    %5236 = vmatmul.f32.gmra.mxu0 %v136
    %v5237 = vpop.f32.mrf.mxu0
    %v5238 = vadd.f32 %v5218, %v5237
    %5239 = vdwg.mxu0
    %5240 = vmatpush.msra.mxu0 %v1743
    %5241 = vmatpush.msra.mxu0 %v1742
    %5242 = vmatpush.msra.mxu0 %v1741
    %5243 = vmatpush.msra.mxu0 %v1740
    %5244 = vmatpush.msra.mxu0 %v1739
    %5245 = vmatpush.msra.mxu0 %v1738
    %5246 = vmatpush.msra.mxu0 %v1737
    %5247 = vmatpush.msra.mxu0 %v1736
    %5248 = vmatpush.msra.mxu0 %v1735
    %5249 = vmatpush.msra.mxu0 %v1734
    %5250 = vmatpush.msra.mxu0 %v1733
    %5251 = vmatpush.msra.mxu0 %v1732
    %5252 = vmatpush.msra.mxu0 %v1731
    %5253 = vmatpush.msra.mxu0 %v1730
    %5254 = vmatpush.msra.mxu0 %v1729
    %5255 = vmatpush.msra.mxu0 %v1728
    %5256 = vmatmul.f32.gmra.mxu0 %v137
    %v5257 = vpop.f32.mrf.mxu0
    %v5258 = vadd.f32 %v5238, %v5257
    %5259 = vdwg.mxu0
    %5260 = vmatpush.msra.mxu0 %v1759
    %5261 = vmatpush.msra.mxu0 %v1758
    %5262 = vmatpush.msra.mxu0 %v1757
    %5263 = vmatpush.msra.mxu0 %v1756
    %5264 = vmatpush.msra.mxu0 %v1755
    %5265 = vmatpush.msra.mxu0 %v1754
    %5266 = vmatpush.msra.mxu0 %v1753
    %5267 = vmatpush.msra.mxu0 %v1752
    %5268 = vmatpush.msra.mxu0 %v1751
    %5269 = vmatpush.msra.mxu0 %v1750
    %5270 = vmatpush.msra.mxu0 %v1749
    %5271 = vmatpush.msra.mxu0 %v1748
    %5272 = vmatpush.msra.mxu0 %v1747
    %5273 = vmatpush.msra.mxu0 %v1746
    %5274 = vmatpush.msra.mxu0 %v1745
    %5275 = vmatpush.msra.mxu0 %v1744
    %5276 = vmatmul.f32.gmra.mxu0 %v138
    %v5277 = vpop.f32.mrf.mxu0
    %v5278 = vadd.f32 %v5258, %v5277
    %5279 = vdwg.mxu0
    %5280 = vmatpush.msra.mxu0 %v1775
    %5281 = vmatpush.msra.mxu0 %v1774
    %5282 = vmatpush.msra.mxu0 %v1773
    %5283 = vmatpush.msra.mxu0 %v1772
    %5284 = vmatpush.msra.mxu0 %v1771
    %5285 = vmatpush.msra.mxu0 %v1770
    %5286 = vmatpush.msra.mxu0 %v1769
    %5287 = vmatpush.msra.mxu0 %v1768
    %5288 = vmatpush.msra.mxu0 %v1767
    %5289 = vmatpush.msra.mxu0 %v1766
    %5290 = vmatpush.msra.mxu0 %v1765
    %5291 = vmatpush.msra.mxu0 %v1764
    %5292 = vmatpush.msra.mxu0 %v1763
    %5293 = vmatpush.msra.mxu0 %v1762
    %5294 = vmatpush.msra.mxu0 %v1761
    %5295 = vmatpush.msra.mxu0 %v1760
    %5296 = vmatmul.f32.gmra.mxu0 %v139
    %v5297 = vpop.f32.mrf.mxu0
    %v5298 = vadd.f32 %v5278, %v5297
    %5299 = vdwg.mxu0
    %5300 = vmatpush.msra.mxu0 %v1791
    %5301 = vmatpush.msra.mxu0 %v1790
    %5302 = vmatpush.msra.mxu0 %v1789
    %5303 = vmatpush.msra.mxu0 %v1788
    %5304 = vmatpush.msra.mxu0 %v1787
    %5305 = vmatpush.msra.mxu0 %v1786
    %5306 = vmatpush.msra.mxu0 %v1785
    %5307 = vmatpush.msra.mxu0 %v1784
    %5308 = vmatpush.msra.mxu0 %v1783
    %5309 = vmatpush.msra.mxu0 %v1782
    %5310 = vmatpush.msra.mxu0 %v1781
    %5311 = vmatpush.msra.mxu0 %v1780
    %5312 = vmatpush.msra.mxu0 %v1779
    %5313 = vmatpush.msra.mxu0 %v1778
    %5314 = vmatpush.msra.mxu0 %v1777
    %5315 = vmatpush.msra.mxu0 %v1776
    %5316 = vmatmul.f32.gmra.mxu0 %v140
    %v5317 = vpop.f32.mrf.mxu0
    %v5318 = vadd.f32 %v5298, %v5317
    %5319 = vdwg.mxu0
    %5320 = vmatpush.msra.mxu0 %v1807
    %5321 = vmatpush.msra.mxu0 %v1806
    %5322 = vmatpush.msra.mxu0 %v1805
    %5323 = vmatpush.msra.mxu0 %v1804
    %5324 = vmatpush.msra.mxu0 %v1803
    %5325 = vmatpush.msra.mxu0 %v1802
    %5326 = vmatpush.msra.mxu0 %v1801
    %5327 = vmatpush.msra.mxu0 %v1800
    %5328 = vmatpush.msra.mxu0 %v1799
    %5329 = vmatpush.msra.mxu0 %v1798
    %5330 = vmatpush.msra.mxu0 %v1797
    %5331 = vmatpush.msra.mxu0 %v1796
    %5332 = vmatpush.msra.mxu0 %v1795
    %5333 = vmatpush.msra.mxu0 %v1794
    %5334 = vmatpush.msra.mxu0 %v1793
    %5335 = vmatpush.msra.mxu0 %v1792
    %5336 = vmatmul.f32.gmra.mxu0 %v141
    %v5337 = vpop.f32.mrf.mxu0
    %v5338 = vadd.f32 %v5318, %v5337
    %5339 = vdwg.mxu0
    %5340 = vmatpush.msra.mxu0 %v1823
    %5341 = vmatpush.msra.mxu0 %v1822
    %5342 = vmatpush.msra.mxu0 %v1821
    %5343 = vmatpush.msra.mxu0 %v1820
    %5344 = vmatpush.msra.mxu0 %v1819
    %5345 = vmatpush.msra.mxu0 %v1818
    %5346 = vmatpush.msra.mxu0 %v1817
    %5347 = vmatpush.msra.mxu0 %v1816
    %5348 = vmatpush.msra.mxu0 %v1815
    %5349 = vmatpush.msra.mxu0 %v1814
    %5350 = vmatpush.msra.mxu0 %v1813
    %5351 = vmatpush.msra.mxu0 %v1812
    %5352 = vmatpush.msra.mxu0 %v1811
    %5353 = vmatpush.msra.mxu0 %v1810
    %5354 = vmatpush.msra.mxu0 %v1809
    %5355 = vmatpush.msra.mxu0 %v1808
    %5356 = vmatmul.f32.gmra.mxu0 %v142
    %v5357 = vpop.f32.mrf.mxu0
    %v5358 = vadd.f32 %v5338, %v5357
    %5359 = vdwg.mxu0
    %5360 = vmatpush.msra.mxu0 %v1839
    %5361 = vmatpush.msra.mxu0 %v1838
    %5362 = vmatpush.msra.mxu0 %v1837
    %5363 = vmatpush.msra.mxu0 %v1836
    %5364 = vmatpush.msra.mxu0 %v1835
    %5365 = vmatpush.msra.mxu0 %v1834
    %5366 = vmatpush.msra.mxu0 %v1833
    %5367 = vmatpush.msra.mxu0 %v1832
    %5368 = vmatpush.msra.mxu0 %v1831
    %5369 = vmatpush.msra.mxu0 %v1830
    %5370 = vmatpush.msra.mxu0 %v1829
    %5371 = vmatpush.msra.mxu0 %v1828
    %5372 = vmatpush.msra.mxu0 %v1827
    %5373 = vmatpush.msra.mxu0 %v1826
    %5374 = vmatpush.msra.mxu0 %v1825
    %5375 = vmatpush.msra.mxu0 %v1824
    %5376 = vmatmul.f32.gmra.mxu0 %v143
    %v5377 = vpop.f32.mrf.mxu0
    %v5378 = vadd.f32 %v5358, %v5377
    %5379 = vdwg.mxu0
    %5380 = vmatpush.msra.mxu0 %v1855
    %5381 = vmatpush.msra.mxu0 %v1854
    %5382 = vmatpush.msra.mxu0 %v1853
    %5383 = vmatpush.msra.mxu0 %v1852
    %5384 = vmatpush.msra.mxu0 %v1851
    %5385 = vmatpush.msra.mxu0 %v1850
    %5386 = vmatpush.msra.mxu0 %v1849
    %5387 = vmatpush.msra.mxu0 %v1848
    %5388 = vmatpush.msra.mxu0 %v1847
    %5389 = vmatpush.msra.mxu0 %v1846
    %5390 = vmatpush.msra.mxu0 %v1845
    %5391 = vmatpush.msra.mxu0 %v1844
    %5392 = vmatpush.msra.mxu0 %v1843
    %5393 = vmatpush.msra.mxu0 %v1842
    %5394 = vmatpush.msra.mxu0 %v1841
    %5395 = vmatpush.msra.mxu0 %v1840
    %5396 = vmatmul.f32.gmra.mxu0 %v144
    %v5397 = vpop.f32.mrf.mxu0
    %v5398 = vadd.f32 %v5378, %v5397
    %5399 = vdwg.mxu0
    %5400 = vmatpush.msra.mxu0 %v1871
    %5401 = vmatpush.msra.mxu0 %v1870
    %5402 = vmatpush.msra.mxu0 %v1869
    %5403 = vmatpush.msra.mxu0 %v1868
    %5404 = vmatpush.msra.mxu0 %v1867
    %5405 = vmatpush.msra.mxu0 %v1866
    %5406 = vmatpush.msra.mxu0 %v1865
    %5407 = vmatpush.msra.mxu0 %v1864
    %5408 = vmatpush.msra.mxu0 %v1863
    %5409 = vmatpush.msra.mxu0 %v1862
    %5410 = vmatpush.msra.mxu0 %v1861
    %5411 = vmatpush.msra.mxu0 %v1860
    %5412 = vmatpush.msra.mxu0 %v1859
    %5413 = vmatpush.msra.mxu0 %v1858
    %5414 = vmatpush.msra.mxu0 %v1857
    %5415 = vmatpush.msra.mxu0 %v1856
    %5416 = vmatmul.f32.gmra.mxu0 %v145
    %v5417 = vpop.f32.mrf.mxu0
    %v5418 = vadd.f32 %v5398, %v5417
    %5419 = vdwg.mxu0
    %5420 = vmatpush.msra.mxu0 %v1887
    %5421 = vmatpush.msra.mxu0 %v1886
    %5422 = vmatpush.msra.mxu0 %v1885
    %5423 = vmatpush.msra.mxu0 %v1884
    %5424 = vmatpush.msra.mxu0 %v1883
    %5425 = vmatpush.msra.mxu0 %v1882
    %5426 = vmatpush.msra.mxu0 %v1881
    %5427 = vmatpush.msra.mxu0 %v1880
    %5428 = vmatpush.msra.mxu0 %v1879
    %5429 = vmatpush.msra.mxu0 %v1878
    %5430 = vmatpush.msra.mxu0 %v1877
    %5431 = vmatpush.msra.mxu0 %v1876
    %5432 = vmatpush.msra.mxu0 %v1875
    %5433 = vmatpush.msra.mxu0 %v1874
    %5434 = vmatpush.msra.mxu0 %v1873
    %5435 = vmatpush.msra.mxu0 %v1872
    %5436 = vmatmul.f32.gmra.mxu0 %v146
    %v5437 = vpop.f32.mrf.mxu0
    %v5438 = vadd.f32 %v5418, %v5437
    %5439 = vdwg.mxu0
    %5440 = vmatpush.msra.mxu0 %v1903
    %5441 = vmatpush.msra.mxu0 %v1902
    %5442 = vmatpush.msra.mxu0 %v1901
    %5443 = vmatpush.msra.mxu0 %v1900
    %5444 = vmatpush.msra.mxu0 %v1899
    %5445 = vmatpush.msra.mxu0 %v1898
    %5446 = vmatpush.msra.mxu0 %v1897
    %5447 = vmatpush.msra.mxu0 %v1896
    %5448 = vmatpush.msra.mxu0 %v1895
    %5449 = vmatpush.msra.mxu0 %v1894
    %5450 = vmatpush.msra.mxu0 %v1893
    %5451 = vmatpush.msra.mxu0 %v1892
    %5452 = vmatpush.msra.mxu0 %v1891
    %5453 = vmatpush.msra.mxu0 %v1890
    %5454 = vmatpush.msra.mxu0 %v1889
    %5455 = vmatpush.msra.mxu0 %v1888
    %5456 = vmatmul.f32.gmra.mxu0 %v147
    %v5457 = vpop.f32.mrf.mxu0
    %v5458 = vadd.f32 %v5438, %v5457
    %5459 = vdwg.mxu0
    %5460 = vmatpush.msra.mxu0 %v1919
    %5461 = vmatpush.msra.mxu0 %v1918
    %5462 = vmatpush.msra.mxu0 %v1917
    %5463 = vmatpush.msra.mxu0 %v1916
    %5464 = vmatpush.msra.mxu0 %v1915
    %5465 = vmatpush.msra.mxu0 %v1914
    %5466 = vmatpush.msra.mxu0 %v1913
    %5467 = vmatpush.msra.mxu0 %v1912
    %5468 = vmatpush.msra.mxu0 %v1911
    %5469 = vmatpush.msra.mxu0 %v1910
    %5470 = vmatpush.msra.mxu0 %v1909
    %5471 = vmatpush.msra.mxu0 %v1908
    %5472 = vmatpush.msra.mxu0 %v1907
    %5473 = vmatpush.msra.mxu0 %v1906
    %5474 = vmatpush.msra.mxu0 %v1905
    %5475 = vmatpush.msra.mxu0 %v1904
    %5476 = vmatmul.f32.gmra.mxu0 %v148
    %v5477 = vpop.f32.mrf.mxu0
    %v5478 = vadd.f32 %v5458, %v5477
    %5479 = vdwg.mxu0
    %5480 = vmatpush.msra.mxu0 %v1935
    %5481 = vmatpush.msra.mxu0 %v1934
    %5482 = vmatpush.msra.mxu0 %v1933
    %5483 = vmatpush.msra.mxu0 %v1932
    %5484 = vmatpush.msra.mxu0 %v1931
    %5485 = vmatpush.msra.mxu0 %v1930
    %5486 = vmatpush.msra.mxu0 %v1929
    %5487 = vmatpush.msra.mxu0 %v1928
    %5488 = vmatpush.msra.mxu0 %v1927
    %5489 = vmatpush.msra.mxu0 %v1926
    %5490 = vmatpush.msra.mxu0 %v1925
    %5491 = vmatpush.msra.mxu0 %v1924
    %5492 = vmatpush.msra.mxu0 %v1923
    %5493 = vmatpush.msra.mxu0 %v1922
    %5494 = vmatpush.msra.mxu0 %v1921
    %5495 = vmatpush.msra.mxu0 %v1920
    %5496 = vmatmul.f32.gmra.mxu0 %v149
    %v5497 = vpop.f32.mrf.mxu0
    %v5498 = vadd.f32 %v5478, %v5497
    %5499 = vdwg.mxu0
    %5500 = vmatpush.msra.mxu0 %v1951
    %5501 = vmatpush.msra.mxu0 %v1950
    %5502 = vmatpush.msra.mxu0 %v1949
    %5503 = vmatpush.msra.mxu0 %v1948
    %5504 = vmatpush.msra.mxu0 %v1947
    %5505 = vmatpush.msra.mxu0 %v1946
    %5506 = vmatpush.msra.mxu0 %v1945
    %5507 = vmatpush.msra.mxu0 %v1944
    %5508 = vmatpush.msra.mxu0 %v1943
    %5509 = vmatpush.msra.mxu0 %v1942
    %5510 = vmatpush.msra.mxu0 %v1941
    %5511 = vmatpush.msra.mxu0 %v1940
    %5512 = vmatpush.msra.mxu0 %v1939
    %5513 = vmatpush.msra.mxu0 %v1938
    %5514 = vmatpush.msra.mxu0 %v1937
    %5515 = vmatpush.msra.mxu0 %v1936
    %5516 = vmatmul.f32.gmra.mxu0 %v150
    %v5517 = vpop.f32.mrf.mxu0
    %v5518 = vadd.f32 %v5498, %v5517
    %5519 = vdwg.mxu0
    %5520 = vmatpush.msra.mxu0 %v1967
    %5521 = vmatpush.msra.mxu0 %v1966
    %5522 = vmatpush.msra.mxu0 %v1965
    %5523 = vmatpush.msra.mxu0 %v1964
    %5524 = vmatpush.msra.mxu0 %v1963
    %5525 = vmatpush.msra.mxu0 %v1962
    %5526 = vmatpush.msra.mxu0 %v1961
    %5527 = vmatpush.msra.mxu0 %v1960
    %5528 = vmatpush.msra.mxu0 %v1959
    %5529 = vmatpush.msra.mxu0 %v1958
    %5530 = vmatpush.msra.mxu0 %v1957
    %5531 = vmatpush.msra.mxu0 %v1956
    %5532 = vmatpush.msra.mxu0 %v1955
    %5533 = vmatpush.msra.mxu0 %v1954
    %5534 = vmatpush.msra.mxu0 %v1953
    %5535 = vmatpush.msra.mxu0 %v1952
    %5536 = vmatmul.f32.gmra.mxu0 %v151
    %v5537 = vpop.f32.mrf.mxu0
    %v5538 = vadd.f32 %v5518, %v5537
    %5539 = vdwg.mxu0
    %5540 = vmatpush.msra.mxu0 %v1983
    %5541 = vmatpush.msra.mxu0 %v1982
    %5542 = vmatpush.msra.mxu0 %v1981
    %5543 = vmatpush.msra.mxu0 %v1980
    %5544 = vmatpush.msra.mxu0 %v1979
    %5545 = vmatpush.msra.mxu0 %v1978
    %5546 = vmatpush.msra.mxu0 %v1977
    %5547 = vmatpush.msra.mxu0 %v1976
    %5548 = vmatpush.msra.mxu0 %v1975
    %5549 = vmatpush.msra.mxu0 %v1974
    %5550 = vmatpush.msra.mxu0 %v1973
    %5551 = vmatpush.msra.mxu0 %v1972
    %5552 = vmatpush.msra.mxu0 %v1971
    %5553 = vmatpush.msra.mxu0 %v1970
    %5554 = vmatpush.msra.mxu0 %v1969
    %5555 = vmatpush.msra.mxu0 %v1968
    %5556 = vmatmul.f32.gmra.mxu0 %v152
    %v5557 = vpop.f32.mrf.mxu0
    %v5558 = vadd.f32 %v5538, %v5557
    %5559 = vdwg.mxu0
    %5560 = vmatpush.msra.mxu0 %v1999
    %5561 = vmatpush.msra.mxu0 %v1998
    %5562 = vmatpush.msra.mxu0 %v1997
    %5563 = vmatpush.msra.mxu0 %v1996
    %5564 = vmatpush.msra.mxu0 %v1995
    %5565 = vmatpush.msra.mxu0 %v1994
    %5566 = vmatpush.msra.mxu0 %v1993
    %5567 = vmatpush.msra.mxu0 %v1992
    %5568 = vmatpush.msra.mxu0 %v1991
    %5569 = vmatpush.msra.mxu0 %v1990
    %5570 = vmatpush.msra.mxu0 %v1989
    %5571 = vmatpush.msra.mxu0 %v1988
    %5572 = vmatpush.msra.mxu0 %v1987
    %5573 = vmatpush.msra.mxu0 %v1986
    %5574 = vmatpush.msra.mxu0 %v1985
    %5575 = vmatpush.msra.mxu0 %v1984
    %5576 = vmatmul.f32.gmra.mxu0 %v153
    %v5577 = vpop.f32.mrf.mxu0
    %v5578 = vadd.f32 %v5558, %v5577
    %5579 = vdwg.mxu0
    %5580 = vmatpush.msra.mxu0 %v2015
    %5581 = vmatpush.msra.mxu0 %v2014
    %5582 = vmatpush.msra.mxu0 %v2013
    %5583 = vmatpush.msra.mxu0 %v2012
    %5584 = vmatpush.msra.mxu0 %v2011
    %5585 = vmatpush.msra.mxu0 %v2010
    %5586 = vmatpush.msra.mxu0 %v2009
    %5587 = vmatpush.msra.mxu0 %v2008
    %5588 = vmatpush.msra.mxu0 %v2007
    %5589 = vmatpush.msra.mxu0 %v2006
    %5590 = vmatpush.msra.mxu0 %v2005
    %5591 = vmatpush.msra.mxu0 %v2004
    %5592 = vmatpush.msra.mxu0 %v2003
    %5593 = vmatpush.msra.mxu0 %v2002
    %5594 = vmatpush.msra.mxu0 %v2001
    %5595 = vmatpush.msra.mxu0 %v2000
    %5596 = vmatmul.f32.gmra.mxu0 %v154
    %v5597 = vpop.f32.mrf.mxu0
    %v5598 = vadd.f32 %v5578, %v5597
    %5599 = vdwg.mxu0
    %5600 = vmatpush.msra.mxu0 %v2031
    %5601 = vmatpush.msra.mxu0 %v2030
    %5602 = vmatpush.msra.mxu0 %v2029
    %5603 = vmatpush.msra.mxu0 %v2028
    %5604 = vmatpush.msra.mxu0 %v2027
    %5605 = vmatpush.msra.mxu0 %v2026
    %5606 = vmatpush.msra.mxu0 %v2025
    %5607 = vmatpush.msra.mxu0 %v2024
    %5608 = vmatpush.msra.mxu0 %v2023
    %5609 = vmatpush.msra.mxu0 %v2022
    %5610 = vmatpush.msra.mxu0 %v2021
    %5611 = vmatpush.msra.mxu0 %v2020
    %5612 = vmatpush.msra.mxu0 %v2019
    %5613 = vmatpush.msra.mxu0 %v2018
    %5614 = vmatpush.msra.mxu0 %v2017
    %5615 = vmatpush.msra.mxu0 %v2016
    %5616 = vmatmul.f32.gmra.mxu0 %v155
    %v5617 = vpop.f32.mrf.mxu0
    %v5618 = vadd.f32 %v5598, %v5617
    %5619 = vdwg.mxu0
    %5620 = vmatpush.msra.mxu0 %v2047
    %5621 = vmatpush.msra.mxu0 %v2046
    %5622 = vmatpush.msra.mxu0 %v2045
    %5623 = vmatpush.msra.mxu0 %v2044
    %5624 = vmatpush.msra.mxu0 %v2043
    %5625 = vmatpush.msra.mxu0 %v2042
    %5626 = vmatpush.msra.mxu0 %v2041
    %5627 = vmatpush.msra.mxu0 %v2040
    %5628 = vmatpush.msra.mxu0 %v2039
    %5629 = vmatpush.msra.mxu0 %v2038
    %5630 = vmatpush.msra.mxu0 %v2037
    %5631 = vmatpush.msra.mxu0 %v2036
    %5632 = vmatpush.msra.mxu0 %v2035
    %5633 = vmatpush.msra.mxu0 %v2034
    %5634 = vmatpush.msra.mxu0 %v2033
    %5635 = vmatpush.msra.mxu0 %v2032
    %5636 = vmatmul.f32.gmra.mxu0 %v156
    %v5637 = vpop.f32.mrf.mxu0
    %v5638 = vadd.f32 %v5618, %v5637
    %5639 = vdwg.mxu0
    %5640 = vmatpush.msra.mxu0 %v2063
    %5641 = vmatpush.msra.mxu0 %v2062
    %5642 = vmatpush.msra.mxu0 %v2061
    %5643 = vmatpush.msra.mxu0 %v2060
    %5644 = vmatpush.msra.mxu0 %v2059
    %5645 = vmatpush.msra.mxu0 %v2058
    %5646 = vmatpush.msra.mxu0 %v2057
    %5647 = vmatpush.msra.mxu0 %v2056
    %5648 = vmatpush.msra.mxu0 %v2055
    %5649 = vmatpush.msra.mxu0 %v2054
    %5650 = vmatpush.msra.mxu0 %v2053
    %5651 = vmatpush.msra.mxu0 %v2052
    %5652 = vmatpush.msra.mxu0 %v2051
    %5653 = vmatpush.msra.mxu0 %v2050
    %5654 = vmatpush.msra.mxu0 %v2049
    %5655 = vmatpush.msra.mxu0 %v2048
    %5656 = vmatmul.f32.gmra.mxu0 %v157
    %v5657 = vpop.f32.mrf.mxu0
    %v5658 = vadd.f32 %v5638, %v5657
    %5659 = vdwg.mxu0
    %5660 = vmatpush.msra.mxu0 %v2079
    %5661 = vmatpush.msra.mxu0 %v2078
    %5662 = vmatpush.msra.mxu0 %v2077
    %5663 = vmatpush.msra.mxu0 %v2076
    %5664 = vmatpush.msra.mxu0 %v2075
    %5665 = vmatpush.msra.mxu0 %v2074
    %5666 = vmatpush.msra.mxu0 %v2073
    %5667 = vmatpush.msra.mxu0 %v2072
    %5668 = vmatpush.msra.mxu0 %v2071
    %5669 = vmatpush.msra.mxu0 %v2070
    %5670 = vmatpush.msra.mxu0 %v2069
    %5671 = vmatpush.msra.mxu0 %v2068
    %5672 = vmatpush.msra.mxu0 %v2067
    %5673 = vmatpush.msra.mxu0 %v2066
    %5674 = vmatpush.msra.mxu0 %v2065
    %5675 = vmatpush.msra.mxu0 %v2064
    %5676 = vmatmul.f32.gmra.mxu0 %v158
    %v5677 = vpop.f32.mrf.mxu0
    %v5678 = vadd.f32 %v5658, %v5677
    %5679 = vdwg.mxu0
    %5680 = vmatpush.msra.mxu0 %v2095
    %5681 = vmatpush.msra.mxu0 %v2094
    %5682 = vmatpush.msra.mxu0 %v2093
    %5683 = vmatpush.msra.mxu0 %v2092
    %5684 = vmatpush.msra.mxu0 %v2091
    %5685 = vmatpush.msra.mxu0 %v2090
    %5686 = vmatpush.msra.mxu0 %v2089
    %5687 = vmatpush.msra.mxu0 %v2088
    %5688 = vmatpush.msra.mxu0 %v2087
    %5689 = vmatpush.msra.mxu0 %v2086
    %5690 = vmatpush.msra.mxu0 %v2085
    %5691 = vmatpush.msra.mxu0 %v2084
    %5692 = vmatpush.msra.mxu0 %v2083
    %5693 = vmatpush.msra.mxu0 %v2082
    %5694 = vmatpush.msra.mxu0 %v2081
    %5695 = vmatpush.msra.mxu0 %v2080
    %5696 = vmatmul.f32.gmra.mxu0 %v159
    %v5697 = vpop.f32.mrf.mxu0
    %v5698 = vadd.f32 %v5678, %v5697
    %5699 = vdwg.mxu0
    %5700 = vmatpush.msra.mxu0 %v2111
    %5701 = vmatpush.msra.mxu0 %v2110
    %5702 = vmatpush.msra.mxu0 %v2109
    %5703 = vmatpush.msra.mxu0 %v2108
    %5704 = vmatpush.msra.mxu0 %v2107
    %5705 = vmatpush.msra.mxu0 %v2106
    %5706 = vmatpush.msra.mxu0 %v2105
    %5707 = vmatpush.msra.mxu0 %v2104
    %5708 = vmatpush.msra.mxu0 %v2103
    %5709 = vmatpush.msra.mxu0 %v2102
    %5710 = vmatpush.msra.mxu0 %v2101
    %5711 = vmatpush.msra.mxu0 %v2100
    %5712 = vmatpush.msra.mxu0 %v2099
    %5713 = vmatpush.msra.mxu0 %v2098
    %5714 = vmatpush.msra.mxu0 %v2097
    %5715 = vmatpush.msra.mxu0 %v2096
    %5716 = vmatmul.f32.gmra.mxu0 %v160
    %v5717 = vpop.f32.mrf.mxu0
    %v5718 = vadd.f32 %v5698, %v5717
    %5719 = vdwg.mxu0
    %5720 = vmatpush.msra.mxu0 %v2127
    %5721 = vmatpush.msra.mxu0 %v2126
    %5722 = vmatpush.msra.mxu0 %v2125
    %5723 = vmatpush.msra.mxu0 %v2124
    %5724 = vmatpush.msra.mxu0 %v2123
    %5725 = vmatpush.msra.mxu0 %v2122
    %5726 = vmatpush.msra.mxu0 %v2121
    %5727 = vmatpush.msra.mxu0 %v2120
    %5728 = vmatpush.msra.mxu0 %v2119
    %5729 = vmatpush.msra.mxu0 %v2118
    %5730 = vmatpush.msra.mxu0 %v2117
    %5731 = vmatpush.msra.mxu0 %v2116
    %5732 = vmatpush.msra.mxu0 %v2115
    %5733 = vmatpush.msra.mxu0 %v2114
    %5734 = vmatpush.msra.mxu0 %v2113
    %5735 = vmatpush.msra.mxu0 %v2112
    %5736 = vmatmul.f32.gmra.mxu0 %v161
    %v5737 = vpop.f32.mrf.mxu0
    %v5738 = vadd.f32 %v5718, %v5737
    %5739 = vdwg.mxu0
    %5740 = vmatpush.msra.mxu0 %v2143
    %5741 = vmatpush.msra.mxu0 %v2142
    %5742 = vmatpush.msra.mxu0 %v2141
    %5743 = vmatpush.msra.mxu0 %v2140
    %5744 = vmatpush.msra.mxu0 %v2139
    %5745 = vmatpush.msra.mxu0 %v2138
    %5746 = vmatpush.msra.mxu0 %v2137
    %5747 = vmatpush.msra.mxu0 %v2136
    %5748 = vmatpush.msra.mxu0 %v2135
    %5749 = vmatpush.msra.mxu0 %v2134
    %5750 = vmatpush.msra.mxu0 %v2133
    %5751 = vmatpush.msra.mxu0 %v2132
    %5752 = vmatpush.msra.mxu0 %v2131
    %5753 = vmatpush.msra.mxu0 %v2130
    %5754 = vmatpush.msra.mxu0 %v2129
    %5755 = vmatpush.msra.mxu0 %v2128
    %5756 = vmatmul.f32.gmra.mxu0 %v162
    %v5757 = vpop.f32.mrf.mxu0
    %v5758 = vadd.f32 %v5738, %v5757
    %5759 = vdwg.mxu0
    %5760 = vmatpush.msra.mxu0 %v2159
    %5761 = vmatpush.msra.mxu0 %v2158
    %5762 = vmatpush.msra.mxu0 %v2157
    %5763 = vmatpush.msra.mxu0 %v2156
    %5764 = vmatpush.msra.mxu0 %v2155
    %5765 = vmatpush.msra.mxu0 %v2154
    %5766 = vmatpush.msra.mxu0 %v2153
    %5767 = vmatpush.msra.mxu0 %v2152
    %5768 = vmatpush.msra.mxu0 %v2151
    %5769 = vmatpush.msra.mxu0 %v2150
    %5770 = vmatpush.msra.mxu0 %v2149
    %5771 = vmatpush.msra.mxu0 %v2148
    %5772 = vmatpush.msra.mxu0 %v2147
    %5773 = vmatpush.msra.mxu0 %v2146
    %5774 = vmatpush.msra.mxu0 %v2145
    %5775 = vmatpush.msra.mxu0 %v2144
    %5776 = vmatmul.f32.gmra.mxu0 %v163
    %v5777 = vpop.f32.mrf.mxu0
    %v5778 = vadd.f32 %v5758, %v5777
    %5779 = vdwg.mxu0
    %5780 = vmatpush.msra.mxu0 %v2175
    %5781 = vmatpush.msra.mxu0 %v2174
    %5782 = vmatpush.msra.mxu0 %v2173
    %5783 = vmatpush.msra.mxu0 %v2172
    %5784 = vmatpush.msra.mxu0 %v2171
    %5785 = vmatpush.msra.mxu0 %v2170
    %5786 = vmatpush.msra.mxu0 %v2169
    %5787 = vmatpush.msra.mxu0 %v2168
    %5788 = vmatpush.msra.mxu0 %v2167
    %5789 = vmatpush.msra.mxu0 %v2166
    %5790 = vmatpush.msra.mxu0 %v2165
    %5791 = vmatpush.msra.mxu0 %v2164
    %5792 = vmatpush.msra.mxu0 %v2163
    %5793 = vmatpush.msra.mxu0 %v2162
    %5794 = vmatpush.msra.mxu0 %v2161
    %5795 = vmatpush.msra.mxu0 %v2160
    %5796 = vmatmul.f32.gmra.mxu0 %v164
    %v5797 = vpop.f32.mrf.mxu0
    %v5798 = vadd.f32 %v5778, %v5797
    %5799 = vdwg.mxu0
    %5800 = vmatpush.msra.mxu0 %v2191
    %5801 = vmatpush.msra.mxu0 %v2190
    %5802 = vmatpush.msra.mxu0 %v2189
    %5803 = vmatpush.msra.mxu0 %v2188
    %5804 = vmatpush.msra.mxu0 %v2187
    %5805 = vmatpush.msra.mxu0 %v2186
    %5806 = vmatpush.msra.mxu0 %v2185
    %5807 = vmatpush.msra.mxu0 %v2184
    %5808 = vmatpush.msra.mxu0 %v2183
    %5809 = vmatpush.msra.mxu0 %v2182
    %5810 = vmatpush.msra.mxu0 %v2181
    %5811 = vmatpush.msra.mxu0 %v2180
    %5812 = vmatpush.msra.mxu0 %v2179
    %5813 = vmatpush.msra.mxu0 %v2178
    %5814 = vmatpush.msra.mxu0 %v2177
    %5815 = vmatpush.msra.mxu0 %v2176
    %5816 = vmatmul.f32.gmra.mxu0 %v165
    %v5817 = vpop.f32.mrf.mxu0
    %v5818 = vadd.f32 %v5798, %v5817
    %5819 = vdwg.mxu0
    %5820 = vmatpush.msra.mxu0 %v2207
    %5821 = vmatpush.msra.mxu0 %v2206
    %5822 = vmatpush.msra.mxu0 %v2205
    %5823 = vmatpush.msra.mxu0 %v2204
    %5824 = vmatpush.msra.mxu0 %v2203
    %5825 = vmatpush.msra.mxu0 %v2202
    %5826 = vmatpush.msra.mxu0 %v2201
    %5827 = vmatpush.msra.mxu0 %v2200
    %5828 = vmatpush.msra.mxu0 %v2199
    %5829 = vmatpush.msra.mxu0 %v2198
    %5830 = vmatpush.msra.mxu0 %v2197
    %5831 = vmatpush.msra.mxu0 %v2196
    %5832 = vmatpush.msra.mxu0 %v2195
    %5833 = vmatpush.msra.mxu0 %v2194
    %5834 = vmatpush.msra.mxu0 %v2193
    %5835 = vmatpush.msra.mxu0 %v2192
    %5836 = vmatmul.f32.gmra.mxu0 %v166
    %v5837 = vpop.f32.mrf.mxu0
    %v5838 = vadd.f32 %v5818, %v5837
    %5839 = vdwg.mxu0
    %5840 = vmatpush.msra.mxu0 %v2223
    %5841 = vmatpush.msra.mxu0 %v2222
    %5842 = vmatpush.msra.mxu0 %v2221
    %5843 = vmatpush.msra.mxu0 %v2220
    %5844 = vmatpush.msra.mxu0 %v2219
    %5845 = vmatpush.msra.mxu0 %v2218
    %5846 = vmatpush.msra.mxu0 %v2217
    %5847 = vmatpush.msra.mxu0 %v2216
    %5848 = vmatpush.msra.mxu0 %v2215
    %5849 = vmatpush.msra.mxu0 %v2214
    %5850 = vmatpush.msra.mxu0 %v2213
    %5851 = vmatpush.msra.mxu0 %v2212
    %5852 = vmatpush.msra.mxu0 %v2211
    %5853 = vmatpush.msra.mxu0 %v2210
    %5854 = vmatpush.msra.mxu0 %v2209
    %5855 = vmatpush.msra.mxu0 %v2208
    %5856 = vmatmul.f32.gmra.mxu0 %v167
    %v5857 = vpop.f32.mrf.mxu0
    %v5858 = vadd.f32 %v5838, %v5857
    %5859 = vdwg.mxu0
    %5860 = vmatpush.msra.mxu0 %v2239
    %5861 = vmatpush.msra.mxu0 %v2238
    %5862 = vmatpush.msra.mxu0 %v2237
    %5863 = vmatpush.msra.mxu0 %v2236
    %5864 = vmatpush.msra.mxu0 %v2235
    %5865 = vmatpush.msra.mxu0 %v2234
    %5866 = vmatpush.msra.mxu0 %v2233
    %5867 = vmatpush.msra.mxu0 %v2232
    %5868 = vmatpush.msra.mxu0 %v2231
    %5869 = vmatpush.msra.mxu0 %v2230
    %5870 = vmatpush.msra.mxu0 %v2229
    %5871 = vmatpush.msra.mxu0 %v2228
    %5872 = vmatpush.msra.mxu0 %v2227
    %5873 = vmatpush.msra.mxu0 %v2226
    %5874 = vmatpush.msra.mxu0 %v2225
    %5875 = vmatpush.msra.mxu0 %v2224
    %5876 = vmatmul.f32.gmra.mxu0 %v168
    %v5877 = vpop.f32.mrf.mxu0
    %v5878 = vadd.f32 %v5858, %v5877
    %5879 = vdwg.mxu0
    %5880 = vmatpush.msra.mxu0 %v2255
    %5881 = vmatpush.msra.mxu0 %v2254
    %5882 = vmatpush.msra.mxu0 %v2253
    %5883 = vmatpush.msra.mxu0 %v2252
    %5884 = vmatpush.msra.mxu0 %v2251
    %5885 = vmatpush.msra.mxu0 %v2250
    %5886 = vmatpush.msra.mxu0 %v2249
    %5887 = vmatpush.msra.mxu0 %v2248
    %5888 = vmatpush.msra.mxu0 %v2247
    %5889 = vmatpush.msra.mxu0 %v2246
    %5890 = vmatpush.msra.mxu0 %v2245
    %5891 = vmatpush.msra.mxu0 %v2244
    %5892 = vmatpush.msra.mxu0 %v2243
    %5893 = vmatpush.msra.mxu0 %v2242
    %5894 = vmatpush.msra.mxu0 %v2241
    %5895 = vmatpush.msra.mxu0 %v2240
    %5896 = vmatmul.f32.gmra.mxu0 %v169
    %v5897 = vpop.f32.mrf.mxu0
    %v5898 = vadd.f32 %v5878, %v5897
    %5899 = vdwg.mxu0
    %5900 = vmatpush.msra.mxu0 %v2271
    %5901 = vmatpush.msra.mxu0 %v2270
    %5902 = vmatpush.msra.mxu0 %v2269
    %5903 = vmatpush.msra.mxu0 %v2268
    %5904 = vmatpush.msra.mxu0 %v2267
    %5905 = vmatpush.msra.mxu0 %v2266
    %5906 = vmatpush.msra.mxu0 %v2265
    %5907 = vmatpush.msra.mxu0 %v2264
    %5908 = vmatpush.msra.mxu0 %v2263
    %5909 = vmatpush.msra.mxu0 %v2262
    %5910 = vmatpush.msra.mxu0 %v2261
    %5911 = vmatpush.msra.mxu0 %v2260
    %5912 = vmatpush.msra.mxu0 %v2259
    %5913 = vmatpush.msra.mxu0 %v2258
    %5914 = vmatpush.msra.mxu0 %v2257
    %5915 = vmatpush.msra.mxu0 %v2256
    %5916 = vmatmul.f32.gmra.mxu0 %v170
    %v5917 = vpop.f32.mrf.mxu0
    %v5918 = vadd.f32 %v5898, %v5917
    %5919 = vdwg.mxu0
    %5920 = vmatpush.msra.mxu0 %v2287
    %5921 = vmatpush.msra.mxu0 %v2286
    %5922 = vmatpush.msra.mxu0 %v2285
    %5923 = vmatpush.msra.mxu0 %v2284
    %5924 = vmatpush.msra.mxu0 %v2283
    %5925 = vmatpush.msra.mxu0 %v2282
    %5926 = vmatpush.msra.mxu0 %v2281
    %5927 = vmatpush.msra.mxu0 %v2280
    %5928 = vmatpush.msra.mxu0 %v2279
    %5929 = vmatpush.msra.mxu0 %v2278
    %5930 = vmatpush.msra.mxu0 %v2277
    %5931 = vmatpush.msra.mxu0 %v2276
    %5932 = vmatpush.msra.mxu0 %v2275
    %5933 = vmatpush.msra.mxu0 %v2274
    %5934 = vmatpush.msra.mxu0 %v2273
    %5935 = vmatpush.msra.mxu0 %v2272
    %5936 = vmatmul.f32.gmra.mxu0 %v171
    %v5937 = vpop.f32.mrf.mxu0
    %v5938 = vadd.f32 %v5918, %v5937
    %5939 = vdwg.mxu0
    %5940 = vmatpush.msra.mxu0 %v2303
    %5941 = vmatpush.msra.mxu0 %v2302
    %5942 = vmatpush.msra.mxu0 %v2301
    %5943 = vmatpush.msra.mxu0 %v2300
    %5944 = vmatpush.msra.mxu0 %v2299
    %5945 = vmatpush.msra.mxu0 %v2298
    %5946 = vmatpush.msra.mxu0 %v2297
    %5947 = vmatpush.msra.mxu0 %v2296
    %5948 = vmatpush.msra.mxu0 %v2295
    %5949 = vmatpush.msra.mxu0 %v2294
    %5950 = vmatpush.msra.mxu0 %v2293
    %5951 = vmatpush.msra.mxu0 %v2292
    %5952 = vmatpush.msra.mxu0 %v2291
    %5953 = vmatpush.msra.mxu0 %v2290
    %5954 = vmatpush.msra.mxu0 %v2289
    %5955 = vmatpush.msra.mxu0 %v2288
    %5956 = vmatmul.f32.gmra.mxu0 %v172
    %v5957 = vpop.f32.mrf.mxu0
    %v5958 = vadd.f32 %v5938, %v5957
    %5959 = vdwg.mxu0
    %5960 = vmatpush.msra.mxu0 %v2319
    %5961 = vmatpush.msra.mxu0 %v2318
    %5962 = vmatpush.msra.mxu0 %v2317
    %5963 = vmatpush.msra.mxu0 %v2316
    %5964 = vmatpush.msra.mxu0 %v2315
    %5965 = vmatpush.msra.mxu0 %v2314
    %5966 = vmatpush.msra.mxu0 %v2313
    %5967 = vmatpush.msra.mxu0 %v2312
    %5968 = vmatpush.msra.mxu0 %v2311
    %5969 = vmatpush.msra.mxu0 %v2310
    %5970 = vmatpush.msra.mxu0 %v2309
    %5971 = vmatpush.msra.mxu0 %v2308
    %5972 = vmatpush.msra.mxu0 %v2307
    %5973 = vmatpush.msra.mxu0 %v2306
    %5974 = vmatpush.msra.mxu0 %v2305
    %5975 = vmatpush.msra.mxu0 %v2304
    %5976 = vmatmul.f32.gmra.mxu0 %v173
    %v5977 = vpop.f32.mrf.mxu0
    %v5978 = vadd.f32 %v5958, %v5977
    %5979 = vdwg.mxu0
    %5980 = vmatpush.msra.mxu0 %v2335
    %5981 = vmatpush.msra.mxu0 %v2334
    %5982 = vmatpush.msra.mxu0 %v2333
    %5983 = vmatpush.msra.mxu0 %v2332
    %5984 = vmatpush.msra.mxu0 %v2331
    %5985 = vmatpush.msra.mxu0 %v2330
    %5986 = vmatpush.msra.mxu0 %v2329
    %5987 = vmatpush.msra.mxu0 %v2328
    %5988 = vmatpush.msra.mxu0 %v2327
    %5989 = vmatpush.msra.mxu0 %v2326
    %5990 = vmatpush.msra.mxu0 %v2325
    %5991 = vmatpush.msra.mxu0 %v2324
    %5992 = vmatpush.msra.mxu0 %v2323
    %5993 = vmatpush.msra.mxu0 %v2322
    %5994 = vmatpush.msra.mxu0 %v2321
    %5995 = vmatpush.msra.mxu0 %v2320
    %5996 = vmatmul.f32.gmra.mxu0 %v174
    %v5997 = vpop.f32.mrf.mxu0
    %v5998 = vadd.f32 %v5978, %v5997
    %5999 = vdwg.mxu0
    %6000 = vmatpush.msra.mxu0 %v2351
    %6001 = vmatpush.msra.mxu0 %v2350
    %6002 = vmatpush.msra.mxu0 %v2349
    %6003 = vmatpush.msra.mxu0 %v2348
    %6004 = vmatpush.msra.mxu0 %v2347
    %6005 = vmatpush.msra.mxu0 %v2346
    %6006 = vmatpush.msra.mxu0 %v2345
    %6007 = vmatpush.msra.mxu0 %v2344
    %6008 = vmatpush.msra.mxu0 %v2343
    %6009 = vmatpush.msra.mxu0 %v2342
    %6010 = vmatpush.msra.mxu0 %v2341
    %6011 = vmatpush.msra.mxu0 %v2340
    %6012 = vmatpush.msra.mxu0 %v2339
    %6013 = vmatpush.msra.mxu0 %v2338
    %6014 = vmatpush.msra.mxu0 %v2337
    %6015 = vmatpush.msra.mxu0 %v2336
    %6016 = vmatmul.f32.gmra.mxu0 %v175
    %v6017 = vpop.f32.mrf.mxu0
    %v6018 = vadd.f32 %v5998, %v6017
    %6019 = vdwg.mxu0
    %6020 = vmatpush.msra.mxu0 %v2367
    %6021 = vmatpush.msra.mxu0 %v2366
    %6022 = vmatpush.msra.mxu0 %v2365
    %6023 = vmatpush.msra.mxu0 %v2364
    %6024 = vmatpush.msra.mxu0 %v2363
    %6025 = vmatpush.msra.mxu0 %v2362
    %6026 = vmatpush.msra.mxu0 %v2361
    %6027 = vmatpush.msra.mxu0 %v2360
    %6028 = vmatpush.msra.mxu0 %v2359
    %6029 = vmatpush.msra.mxu0 %v2358
    %6030 = vmatpush.msra.mxu0 %v2357
    %6031 = vmatpush.msra.mxu0 %v2356
    %6032 = vmatpush.msra.mxu0 %v2355
    %6033 = vmatpush.msra.mxu0 %v2354
    %6034 = vmatpush.msra.mxu0 %v2353
    %6035 = vmatpush.msra.mxu0 %v2352
    %6036 = vmatmul.f32.gmra.mxu0 %v176
    %v6037 = vpop.f32.mrf.mxu0
    %v6038 = vadd.f32 %v6018, %v6037
    %6039 = vdwg.mxu0
    %6040 = vmatpush.msra.mxu0 %v2383
    %6041 = vmatpush.msra.mxu0 %v2382
    %6042 = vmatpush.msra.mxu0 %v2381
    %6043 = vmatpush.msra.mxu0 %v2380
    %6044 = vmatpush.msra.mxu0 %v2379
    %6045 = vmatpush.msra.mxu0 %v2378
    %6046 = vmatpush.msra.mxu0 %v2377
    %6047 = vmatpush.msra.mxu0 %v2376
    %6048 = vmatpush.msra.mxu0 %v2375
    %6049 = vmatpush.msra.mxu0 %v2374
    %6050 = vmatpush.msra.mxu0 %v2373
    %6051 = vmatpush.msra.mxu0 %v2372
    %6052 = vmatpush.msra.mxu0 %v2371
    %6053 = vmatpush.msra.mxu0 %v2370
    %6054 = vmatpush.msra.mxu0 %v2369
    %6055 = vmatpush.msra.mxu0 %v2368
    %6056 = vmatmul.f32.gmra.mxu0 %v177
    %v6057 = vpop.f32.mrf.mxu0
    %v6058 = vadd.f32 %v6038, %v6057
    %6059 = vdwg.mxu0
    %6060 = vmatpush.msra.mxu0 %v2399
    %6061 = vmatpush.msra.mxu0 %v2398
    %6062 = vmatpush.msra.mxu0 %v2397
    %6063 = vmatpush.msra.mxu0 %v2396
    %6064 = vmatpush.msra.mxu0 %v2395
    %6065 = vmatpush.msra.mxu0 %v2394
    %6066 = vmatpush.msra.mxu0 %v2393
    %6067 = vmatpush.msra.mxu0 %v2392
    %6068 = vmatpush.msra.mxu0 %v2391
    %6069 = vmatpush.msra.mxu0 %v2390
    %6070 = vmatpush.msra.mxu0 %v2389
    %6071 = vmatpush.msra.mxu0 %v2388
    %6072 = vmatpush.msra.mxu0 %v2387
    %6073 = vmatpush.msra.mxu0 %v2386
    %6074 = vmatpush.msra.mxu0 %v2385
    %6075 = vmatpush.msra.mxu0 %v2384
    %6076 = vmatmul.f32.gmra.mxu0 %v178
    %v6077 = vpop.f32.mrf.mxu0
    %v6078 = vadd.f32 %v6058, %v6077
    %6079 = vdwg.mxu0
    %6080 = vmatpush.msra.mxu0 %v2415
    %6081 = vmatpush.msra.mxu0 %v2414
    %6082 = vmatpush.msra.mxu0 %v2413
    %6083 = vmatpush.msra.mxu0 %v2412
    %6084 = vmatpush.msra.mxu0 %v2411
    %6085 = vmatpush.msra.mxu0 %v2410
    %6086 = vmatpush.msra.mxu0 %v2409
    %6087 = vmatpush.msra.mxu0 %v2408
    %6088 = vmatpush.msra.mxu0 %v2407
    %6089 = vmatpush.msra.mxu0 %v2406
    %6090 = vmatpush.msra.mxu0 %v2405
    %6091 = vmatpush.msra.mxu0 %v2404
    %6092 = vmatpush.msra.mxu0 %v2403
    %6093 = vmatpush.msra.mxu0 %v2402
    %6094 = vmatpush.msra.mxu0 %v2401
    %6095 = vmatpush.msra.mxu0 %v2400
    %6096 = vmatmul.f32.gmra.mxu0 %v179
    %v6097 = vpop.f32.mrf.mxu0
    %v6098 = vadd.f32 %v6078, %v6097
    %6099 = vdwg.mxu0
    %6100 = vmatpush.msra.mxu0 %v2431
    %6101 = vmatpush.msra.mxu0 %v2430
    %6102 = vmatpush.msra.mxu0 %v2429
    %6103 = vmatpush.msra.mxu0 %v2428
    %6104 = vmatpush.msra.mxu0 %v2427
    %6105 = vmatpush.msra.mxu0 %v2426
    %6106 = vmatpush.msra.mxu0 %v2425
    %6107 = vmatpush.msra.mxu0 %v2424
    %6108 = vmatpush.msra.mxu0 %v2423
    %6109 = vmatpush.msra.mxu0 %v2422
    %6110 = vmatpush.msra.mxu0 %v2421
    %6111 = vmatpush.msra.mxu0 %v2420
    %6112 = vmatpush.msra.mxu0 %v2419
    %6113 = vmatpush.msra.mxu0 %v2418
    %6114 = vmatpush.msra.mxu0 %v2417
    %6115 = vmatpush.msra.mxu0 %v2416
    %6116 = vmatmul.f32.gmra.mxu0 %v180
    %v6117 = vpop.f32.mrf.mxu0
    %v6118 = vadd.f32 %v6098, %v6117
    %6119 = vdwg.mxu0
    %6120 = vmatpush.msra.mxu0 %v2447
    %6121 = vmatpush.msra.mxu0 %v2446
    %6122 = vmatpush.msra.mxu0 %v2445
    %6123 = vmatpush.msra.mxu0 %v2444
    %6124 = vmatpush.msra.mxu0 %v2443
    %6125 = vmatpush.msra.mxu0 %v2442
    %6126 = vmatpush.msra.mxu0 %v2441
    %6127 = vmatpush.msra.mxu0 %v2440
    %6128 = vmatpush.msra.mxu0 %v2439
    %6129 = vmatpush.msra.mxu0 %v2438
    %6130 = vmatpush.msra.mxu0 %v2437
    %6131 = vmatpush.msra.mxu0 %v2436
    %6132 = vmatpush.msra.mxu0 %v2435
    %6133 = vmatpush.msra.mxu0 %v2434
    %6134 = vmatpush.msra.mxu0 %v2433
    %6135 = vmatpush.msra.mxu0 %v2432
    %6136 = vmatmul.f32.gmra.mxu0 %v181
    %v6137 = vpop.f32.mrf.mxu0
    %v6138 = vadd.f32 %v6118, %v6137
    %6139 = vdwg.mxu0
    %6140 = vmatpush.msra.mxu0 %v2463
    %6141 = vmatpush.msra.mxu0 %v2462
    %6142 = vmatpush.msra.mxu0 %v2461
    %6143 = vmatpush.msra.mxu0 %v2460
    %6144 = vmatpush.msra.mxu0 %v2459
    %6145 = vmatpush.msra.mxu0 %v2458
    %6146 = vmatpush.msra.mxu0 %v2457
    %6147 = vmatpush.msra.mxu0 %v2456
    %6148 = vmatpush.msra.mxu0 %v2455
    %6149 = vmatpush.msra.mxu0 %v2454
    %6150 = vmatpush.msra.mxu0 %v2453
    %6151 = vmatpush.msra.mxu0 %v2452
    %6152 = vmatpush.msra.mxu0 %v2451
    %6153 = vmatpush.msra.mxu0 %v2450
    %6154 = vmatpush.msra.mxu0 %v2449
    %6155 = vmatpush.msra.mxu0 %v2448
    %6156 = vmatmul.f32.gmra.mxu0 %v182
    %v6157 = vpop.f32.mrf.mxu0
    %v6158 = vadd.f32 %v6138, %v6157
    %6159 = vdwg.mxu0
    %6160 = vmatpush.msra.mxu0 %v2479
    %6161 = vmatpush.msra.mxu0 %v2478
    %6162 = vmatpush.msra.mxu0 %v2477
    %6163 = vmatpush.msra.mxu0 %v2476
    %6164 = vmatpush.msra.mxu0 %v2475
    %6165 = vmatpush.msra.mxu0 %v2474
    %6166 = vmatpush.msra.mxu0 %v2473
    %6167 = vmatpush.msra.mxu0 %v2472
    %6168 = vmatpush.msra.mxu0 %v2471
    %6169 = vmatpush.msra.mxu0 %v2470
    %6170 = vmatpush.msra.mxu0 %v2469
    %6171 = vmatpush.msra.mxu0 %v2468
    %6172 = vmatpush.msra.mxu0 %v2467
    %6173 = vmatpush.msra.mxu0 %v2466
    %6174 = vmatpush.msra.mxu0 %v2465
    %6175 = vmatpush.msra.mxu0 %v2464
    %6176 = vmatmul.f32.gmra.mxu0 %v183
    %v6177 = vpop.f32.mrf.mxu0
    %v6178 = vadd.f32 %v6158, %v6177
    %6179 = vdwg.mxu0
    %6180 = vmatpush.msra.mxu0 %v2495
    %6181 = vmatpush.msra.mxu0 %v2494
    %6182 = vmatpush.msra.mxu0 %v2493
    %6183 = vmatpush.msra.mxu0 %v2492
    %6184 = vmatpush.msra.mxu0 %v2491
    %6185 = vmatpush.msra.mxu0 %v2490
    %6186 = vmatpush.msra.mxu0 %v2489
    %6187 = vmatpush.msra.mxu0 %v2488
    %6188 = vmatpush.msra.mxu0 %v2487
    %6189 = vmatpush.msra.mxu0 %v2486
    %6190 = vmatpush.msra.mxu0 %v2485
    %6191 = vmatpush.msra.mxu0 %v2484
    %6192 = vmatpush.msra.mxu0 %v2483
    %6193 = vmatpush.msra.mxu0 %v2482
    %6194 = vmatpush.msra.mxu0 %v2481
    %6195 = vmatpush.msra.mxu0 %v2480
    %6196 = vmatmul.f32.gmra.mxu0 %v184
    %v6197 = vpop.f32.mrf.mxu0
    %v6198 = vadd.f32 %v6178, %v6197
    %6199 = vdwg.mxu0
    %6200 = vmatpush.msra.mxu0 %v2511
    %6201 = vmatpush.msra.mxu0 %v2510
    %6202 = vmatpush.msra.mxu0 %v2509
    %6203 = vmatpush.msra.mxu0 %v2508
    %6204 = vmatpush.msra.mxu0 %v2507
    %6205 = vmatpush.msra.mxu0 %v2506
    %6206 = vmatpush.msra.mxu0 %v2505
    %6207 = vmatpush.msra.mxu0 %v2504
    %6208 = vmatpush.msra.mxu0 %v2503
    %6209 = vmatpush.msra.mxu0 %v2502
    %6210 = vmatpush.msra.mxu0 %v2501
    %6211 = vmatpush.msra.mxu0 %v2500
    %6212 = vmatpush.msra.mxu0 %v2499
    %6213 = vmatpush.msra.mxu0 %v2498
    %6214 = vmatpush.msra.mxu0 %v2497
    %6215 = vmatpush.msra.mxu0 %v2496
    %6216 = vmatmul.f32.gmra.mxu0 %v185
    %v6217 = vpop.f32.mrf.mxu0
    %v6218 = vadd.f32 %v6198, %v6217
    %6219 = vdwg.mxu0
    %6220 = vmatpush.msra.mxu0 %v2527
    %6221 = vmatpush.msra.mxu0 %v2526
    %6222 = vmatpush.msra.mxu0 %v2525
    %6223 = vmatpush.msra.mxu0 %v2524
    %6224 = vmatpush.msra.mxu0 %v2523
    %6225 = vmatpush.msra.mxu0 %v2522
    %6226 = vmatpush.msra.mxu0 %v2521
    %6227 = vmatpush.msra.mxu0 %v2520
    %6228 = vmatpush.msra.mxu0 %v2519
    %6229 = vmatpush.msra.mxu0 %v2518
    %6230 = vmatpush.msra.mxu0 %v2517
    %6231 = vmatpush.msra.mxu0 %v2516
    %6232 = vmatpush.msra.mxu0 %v2515
    %6233 = vmatpush.msra.mxu0 %v2514
    %6234 = vmatpush.msra.mxu0 %v2513
    %6235 = vmatpush.msra.mxu0 %v2512
    %6236 = vmatmul.f32.gmra.mxu0 %v186
    %v6237 = vpop.f32.mrf.mxu0
    %v6238 = vadd.f32 %v6218, %v6237
    %6239 = vdwg.mxu0
    %6240 = vmatpush.msra.mxu0 %v2543
    %6241 = vmatpush.msra.mxu0 %v2542
    %6242 = vmatpush.msra.mxu0 %v2541
    %6243 = vmatpush.msra.mxu0 %v2540
    %6244 = vmatpush.msra.mxu0 %v2539
    %6245 = vmatpush.msra.mxu0 %v2538
    %6246 = vmatpush.msra.mxu0 %v2537
    %6247 = vmatpush.msra.mxu0 %v2536
    %6248 = vmatpush.msra.mxu0 %v2535
    %6249 = vmatpush.msra.mxu0 %v2534
    %6250 = vmatpush.msra.mxu0 %v2533
    %6251 = vmatpush.msra.mxu0 %v2532
    %6252 = vmatpush.msra.mxu0 %v2531
    %6253 = vmatpush.msra.mxu0 %v2530
    %6254 = vmatpush.msra.mxu0 %v2529
    %6255 = vmatpush.msra.mxu0 %v2528
    %6256 = vmatmul.f32.gmra.mxu0 %v187
    %v6257 = vpop.f32.mrf.mxu0
    %v6258 = vadd.f32 %v6238, %v6257
    %6259 = vdwg.mxu0
    %6260 = vmatpush.msra.mxu0 %v2559
    %6261 = vmatpush.msra.mxu0 %v2558
    %6262 = vmatpush.msra.mxu0 %v2557
    %6263 = vmatpush.msra.mxu0 %v2556
    %6264 = vmatpush.msra.mxu0 %v2555
    %6265 = vmatpush.msra.mxu0 %v2554
    %6266 = vmatpush.msra.mxu0 %v2553
    %6267 = vmatpush.msra.mxu0 %v2552
    %6268 = vmatpush.msra.mxu0 %v2551
    %6269 = vmatpush.msra.mxu0 %v2550
    %6270 = vmatpush.msra.mxu0 %v2549
    %6271 = vmatpush.msra.mxu0 %v2548
    %6272 = vmatpush.msra.mxu0 %v2547
    %6273 = vmatpush.msra.mxu0 %v2546
    %6274 = vmatpush.msra.mxu0 %v2545
    %6275 = vmatpush.msra.mxu0 %v2544
    %6276 = vmatmul.f32.gmra.mxu0 %v188
    %v6277 = vpop.f32.mrf.mxu0
    %v6278 = vadd.f32 %v6258, %v6277
    %6279 = vdwg.mxu0
    %6280 = vmatpush.msra.mxu0 %v2575
    %6281 = vmatpush.msra.mxu0 %v2574
    %6282 = vmatpush.msra.mxu0 %v2573
    %6283 = vmatpush.msra.mxu0 %v2572
    %6284 = vmatpush.msra.mxu0 %v2571
    %6285 = vmatpush.msra.mxu0 %v2570
    %6286 = vmatpush.msra.mxu0 %v2569
    %6287 = vmatpush.msra.mxu0 %v2568
    %6288 = vmatpush.msra.mxu0 %v2567
    %6289 = vmatpush.msra.mxu0 %v2566
    %6290 = vmatpush.msra.mxu0 %v2565
    %6291 = vmatpush.msra.mxu0 %v2564
    %6292 = vmatpush.msra.mxu0 %v2563
    %6293 = vmatpush.msra.mxu0 %v2562
    %6294 = vmatpush.msra.mxu0 %v2561
    %6295 = vmatpush.msra.mxu0 %v2560
    %6296 = vmatmul.f32.gmra.mxu0 %v189
    %v6297 = vpop.f32.mrf.mxu0
    %v6298 = vadd.f32 %v6278, %v6297
    %6299 = vdwg.mxu0
    %6300 = vmatpush.msra.mxu0 %v2591
    %6301 = vmatpush.msra.mxu0 %v2590
    %6302 = vmatpush.msra.mxu0 %v2589
    %6303 = vmatpush.msra.mxu0 %v2588
    %6304 = vmatpush.msra.mxu0 %v2587
    %6305 = vmatpush.msra.mxu0 %v2586
    %6306 = vmatpush.msra.mxu0 %v2585
    %6307 = vmatpush.msra.mxu0 %v2584
    %6308 = vmatpush.msra.mxu0 %v2583
    %6309 = vmatpush.msra.mxu0 %v2582
    %6310 = vmatpush.msra.mxu0 %v2581
    %6311 = vmatpush.msra.mxu0 %v2580
    %6312 = vmatpush.msra.mxu0 %v2579
    %6313 = vmatpush.msra.mxu0 %v2578
    %6314 = vmatpush.msra.mxu0 %v2577
    %6315 = vmatpush.msra.mxu0 %v2576
    %6316 = vmatmul.f32.gmra.mxu0 %v190
    %v6317 = vpop.f32.mrf.mxu0
    %v6318 = vadd.f32 %v6298, %v6317
    %6319 = vdwg.mxu0
    %6320 = vmatpush.msra.mxu0 %v2607
    %6321 = vmatpush.msra.mxu0 %v2606
    %6322 = vmatpush.msra.mxu0 %v2605
    %6323 = vmatpush.msra.mxu0 %v2604
    %6324 = vmatpush.msra.mxu0 %v2603
    %6325 = vmatpush.msra.mxu0 %v2602
    %6326 = vmatpush.msra.mxu0 %v2601
    %6327 = vmatpush.msra.mxu0 %v2600
    %6328 = vmatpush.msra.mxu0 %v2599
    %6329 = vmatpush.msra.mxu0 %v2598
    %6330 = vmatpush.msra.mxu0 %v2597
    %6331 = vmatpush.msra.mxu0 %v2596
    %6332 = vmatpush.msra.mxu0 %v2595
    %6333 = vmatpush.msra.mxu0 %v2594
    %6334 = vmatpush.msra.mxu0 %v2593
    %6335 = vmatpush.msra.mxu0 %v2592
    %6336 = vmatmul.f32.gmra.mxu0 %v191
    %v6337 = vpop.f32.mrf.mxu0
    %v6338 = vadd.f32 %v6318, %v6337
    %6339 = vdwg.mxu0
    %6340 = vmatpush.msra.mxu0 %v2623
    %6341 = vmatpush.msra.mxu0 %v2622
    %6342 = vmatpush.msra.mxu0 %v2621
    %6343 = vmatpush.msra.mxu0 %v2620
    %6344 = vmatpush.msra.mxu0 %v2619
    %6345 = vmatpush.msra.mxu0 %v2618
    %6346 = vmatpush.msra.mxu0 %v2617
    %6347 = vmatpush.msra.mxu0 %v2616
    %6348 = vmatpush.msra.mxu0 %v2615
    %6349 = vmatpush.msra.mxu0 %v2614
    %6350 = vmatpush.msra.mxu0 %v2613
    %6351 = vmatpush.msra.mxu0 %v2612
    %6352 = vmatpush.msra.mxu0 %v2611
    %6353 = vmatpush.msra.mxu0 %v2610
    %6354 = vmatpush.msra.mxu0 %v2609
    %6355 = vmatpush.msra.mxu0 %v2608
    %6356 = vmatmul.f32.gmra.mxu0 %v192
    %v6357 = vpop.f32.mrf.mxu0
    %v6358 = vadd.f32 %v6338, %v6357
    %6359 = vdwg.mxu0
    %6360 = vmatpush.msra.mxu0 %v2639
    %6361 = vmatpush.msra.mxu0 %v2638
    %6362 = vmatpush.msra.mxu0 %v2637
    %6363 = vmatpush.msra.mxu0 %v2636
    %6364 = vmatpush.msra.mxu0 %v2635
    %6365 = vmatpush.msra.mxu0 %v2634
    %6366 = vmatpush.msra.mxu0 %v2633
    %6367 = vmatpush.msra.mxu0 %v2632
    %6368 = vmatpush.msra.mxu0 %v2631
    %6369 = vmatpush.msra.mxu0 %v2630
    %6370 = vmatpush.msra.mxu0 %v2629
    %6371 = vmatpush.msra.mxu0 %v2628
    %6372 = vmatpush.msra.mxu0 %v2627
    %6373 = vmatpush.msra.mxu0 %v2626
    %6374 = vmatpush.msra.mxu0 %v2625
    %6375 = vmatpush.msra.mxu0 %v2624
    %6376 = vmatmul.f32.gmra.mxu0 %v193
    %v6377 = vpop.f32.mrf.mxu0
    %v6378 = vadd.f32 %v6358, %v6377
    %6379 = vdwg.mxu0
    %6380 = vmatpush.msra.mxu0 %v2655
    %6381 = vmatpush.msra.mxu0 %v2654
    %6382 = vmatpush.msra.mxu0 %v2653
    %6383 = vmatpush.msra.mxu0 %v2652
    %6384 = vmatpush.msra.mxu0 %v2651
    %6385 = vmatpush.msra.mxu0 %v2650
    %6386 = vmatpush.msra.mxu0 %v2649
    %6387 = vmatpush.msra.mxu0 %v2648
    %6388 = vmatpush.msra.mxu0 %v2647
    %6389 = vmatpush.msra.mxu0 %v2646
    %6390 = vmatpush.msra.mxu0 %v2645
    %6391 = vmatpush.msra.mxu0 %v2644
    %6392 = vmatpush.msra.mxu0 %v2643
    %6393 = vmatpush.msra.mxu0 %v2642
    %6394 = vmatpush.msra.mxu0 %v2641
    %6395 = vmatpush.msra.mxu0 %v2640
    %6396 = vmatmul.f32.gmra.mxu0 %v194
    %v6397 = vpop.f32.mrf.mxu0
    %v6398 = vadd.f32 %v6378, %v6397
    %6399 = vdwg.mxu0
    %6400 = vmatpush.msra.mxu0 %v2671
    %6401 = vmatpush.msra.mxu0 %v2670
    %6402 = vmatpush.msra.mxu0 %v2669
    %6403 = vmatpush.msra.mxu0 %v2668
    %6404 = vmatpush.msra.mxu0 %v2667
    %6405 = vmatpush.msra.mxu0 %v2666
    %6406 = vmatpush.msra.mxu0 %v2665
    %6407 = vmatpush.msra.mxu0 %v2664
    %6408 = vmatpush.msra.mxu0 %v2663
    %6409 = vmatpush.msra.mxu0 %v2662
    %6410 = vmatpush.msra.mxu0 %v2661
    %6411 = vmatpush.msra.mxu0 %v2660
    %6412 = vmatpush.msra.mxu0 %v2659
    %6413 = vmatpush.msra.mxu0 %v2658
    %6414 = vmatpush.msra.mxu0 %v2657
    %6415 = vmatpush.msra.mxu0 %v2656
    %6416 = vmatmul.f32.gmra.mxu0 %v195
    %v6417 = vpop.f32.mrf.mxu0
    %v6418 = vadd.f32 %v6398, %v6417
    %6419 = vdwg.mxu0
    %6420 = vmatpush.msra.mxu0 %v2687
    %6421 = vmatpush.msra.mxu0 %v2686
    %6422 = vmatpush.msra.mxu0 %v2685
    %6423 = vmatpush.msra.mxu0 %v2684
    %6424 = vmatpush.msra.mxu0 %v2683
    %6425 = vmatpush.msra.mxu0 %v2682
    %6426 = vmatpush.msra.mxu0 %v2681
    %6427 = vmatpush.msra.mxu0 %v2680
    %6428 = vmatpush.msra.mxu0 %v2679
    %6429 = vmatpush.msra.mxu0 %v2678
    %6430 = vmatpush.msra.mxu0 %v2677
    %6431 = vmatpush.msra.mxu0 %v2676
    %6432 = vmatpush.msra.mxu0 %v2675
    %6433 = vmatpush.msra.mxu0 %v2674
    %6434 = vmatpush.msra.mxu0 %v2673
    %6435 = vmatpush.msra.mxu0 %v2672
    %6436 = vmatmul.f32.gmra.mxu0 %v196
    %v6437 = vpop.f32.mrf.mxu0
    %v6438 = vadd.f32 %v6418, %v6437
    %6439 = vdwg.mxu0
    %6440 = vmatpush.msra.mxu0 %v2703
    %6441 = vmatpush.msra.mxu0 %v2702
    %6442 = vmatpush.msra.mxu0 %v2701
    %6443 = vmatpush.msra.mxu0 %v2700
    %6444 = vmatpush.msra.mxu0 %v2699
    %6445 = vmatpush.msra.mxu0 %v2698
    %6446 = vmatpush.msra.mxu0 %v2697
    %6447 = vmatpush.msra.mxu0 %v2696
    %6448 = vmatpush.msra.mxu0 %v2695
    %6449 = vmatpush.msra.mxu0 %v2694
    %6450 = vmatpush.msra.mxu0 %v2693
    %6451 = vmatpush.msra.mxu0 %v2692
    %6452 = vmatpush.msra.mxu0 %v2691
    %6453 = vmatpush.msra.mxu0 %v2690
    %6454 = vmatpush.msra.mxu0 %v2689
    %6455 = vmatpush.msra.mxu0 %v2688
    %6456 = vmatmul.f32.gmra.mxu0 %v197
    %v6457 = vpop.f32.mrf.mxu0
    %v6458 = vadd.f32 %v6438, %v6457
    %6459 = vdwg.mxu0
    %6460 = vmatpush.msra.mxu0 %v2719
    %6461 = vmatpush.msra.mxu0 %v2718
    %6462 = vmatpush.msra.mxu0 %v2717
    %6463 = vmatpush.msra.mxu0 %v2716
    %6464 = vmatpush.msra.mxu0 %v2715
    %6465 = vmatpush.msra.mxu0 %v2714
    %6466 = vmatpush.msra.mxu0 %v2713
    %6467 = vmatpush.msra.mxu0 %v2712
    %6468 = vmatpush.msra.mxu0 %v2711
    %6469 = vmatpush.msra.mxu0 %v2710
    %6470 = vmatpush.msra.mxu0 %v2709
    %6471 = vmatpush.msra.mxu0 %v2708
    %6472 = vmatpush.msra.mxu0 %v2707
    %6473 = vmatpush.msra.mxu0 %v2706
    %6474 = vmatpush.msra.mxu0 %v2705
    %6475 = vmatpush.msra.mxu0 %v2704
    %6476 = vmatmul.f32.gmra.mxu0 %v198
    %v6477 = vpop.f32.mrf.mxu0
    %v6478 = vadd.f32 %v6458, %v6477
    %6479 = vdwg.mxu0
    %6480 = vmatpush.msra.mxu0 %v2735
    %6481 = vmatpush.msra.mxu0 %v2734
    %6482 = vmatpush.msra.mxu0 %v2733
    %6483 = vmatpush.msra.mxu0 %v2732
    %6484 = vmatpush.msra.mxu0 %v2731
    %6485 = vmatpush.msra.mxu0 %v2730
    %6486 = vmatpush.msra.mxu0 %v2729
    %6487 = vmatpush.msra.mxu0 %v2728
    %6488 = vmatpush.msra.mxu0 %v2727
    %6489 = vmatpush.msra.mxu0 %v2726
    %6490 = vmatpush.msra.mxu0 %v2725
    %6491 = vmatpush.msra.mxu0 %v2724
    %6492 = vmatpush.msra.mxu0 %v2723
    %6493 = vmatpush.msra.mxu0 %v2722
    %6494 = vmatpush.msra.mxu0 %v2721
    %6495 = vmatpush.msra.mxu0 %v2720
    %6496 = vmatmul.f32.gmra.mxu0 %v199
    %v6497 = vpop.f32.mrf.mxu0
    %v6498 = vadd.f32 %v6478, %v6497
    %6499 = vdwg.mxu0
    %6500 = vmatpush.msra.mxu0 %v2751
    %6501 = vmatpush.msra.mxu0 %v2750
    %6502 = vmatpush.msra.mxu0 %v2749
    %6503 = vmatpush.msra.mxu0 %v2748
    %6504 = vmatpush.msra.mxu0 %v2747
    %6505 = vmatpush.msra.mxu0 %v2746
    %6506 = vmatpush.msra.mxu0 %v2745
    %6507 = vmatpush.msra.mxu0 %v2744
    %6508 = vmatpush.msra.mxu0 %v2743
    %6509 = vmatpush.msra.mxu0 %v2742
    %6510 = vmatpush.msra.mxu0 %v2741
    %6511 = vmatpush.msra.mxu0 %v2740
    %6512 = vmatpush.msra.mxu0 %v2739
    %6513 = vmatpush.msra.mxu0 %v2738
    %6514 = vmatpush.msra.mxu0 %v2737
    %6515 = vmatpush.msra.mxu0 %v2736
    %6516 = vmatmul.f32.gmra.mxu0 %v200
    %v6517 = vpop.f32.mrf.mxu0
    %v6518 = vadd.f32 %v6498, %v6517
    %6519 = vdwg.mxu0
    %6520 = vmatpush.msra.mxu0 %v2767
    %6521 = vmatpush.msra.mxu0 %v2766
    %6522 = vmatpush.msra.mxu0 %v2765
    %6523 = vmatpush.msra.mxu0 %v2764
    %6524 = vmatpush.msra.mxu0 %v2763
    %6525 = vmatpush.msra.mxu0 %v2762
    %6526 = vmatpush.msra.mxu0 %v2761
    %6527 = vmatpush.msra.mxu0 %v2760
    %6528 = vmatpush.msra.mxu0 %v2759
    %6529 = vmatpush.msra.mxu0 %v2758
    %6530 = vmatpush.msra.mxu0 %v2757
    %6531 = vmatpush.msra.mxu0 %v2756
    %6532 = vmatpush.msra.mxu0 %v2755
    %6533 = vmatpush.msra.mxu0 %v2754
    %6534 = vmatpush.msra.mxu0 %v2753
    %6535 = vmatpush.msra.mxu0 %v2752
    %6536 = vmatmul.f32.gmra.mxu0 %v201
    %v6537 = vpop.f32.mrf.mxu0
    %v6538 = vadd.f32 %v6518, %v6537
    %6539 = vdwg.mxu0
    %6540 = vmatpush.msra.mxu0 %v2783
    %6541 = vmatpush.msra.mxu0 %v2782
    %6542 = vmatpush.msra.mxu0 %v2781
    %6543 = vmatpush.msra.mxu0 %v2780
    %6544 = vmatpush.msra.mxu0 %v2779
    %6545 = vmatpush.msra.mxu0 %v2778
    %6546 = vmatpush.msra.mxu0 %v2777
    %6547 = vmatpush.msra.mxu0 %v2776
    %6548 = vmatpush.msra.mxu0 %v2775
    %6549 = vmatpush.msra.mxu0 %v2774
    %6550 = vmatpush.msra.mxu0 %v2773
    %6551 = vmatpush.msra.mxu0 %v2772
    %6552 = vmatpush.msra.mxu0 %v2771
    %6553 = vmatpush.msra.mxu0 %v2770
    %6554 = vmatpush.msra.mxu0 %v2769
    %6555 = vmatpush.msra.mxu0 %v2768
    %6556 = vmatmul.f32.gmra.mxu0 %v202
    %v6557 = vpop.f32.mrf.mxu0
    %v6558 = vadd.f32 %v6538, %v6557
    %6559 = vdwg.mxu0
    %6560 = vmatpush.msra.mxu0 %v2799
    %6561 = vmatpush.msra.mxu0 %v2798
    %6562 = vmatpush.msra.mxu0 %v2797
    %6563 = vmatpush.msra.mxu0 %v2796
    %6564 = vmatpush.msra.mxu0 %v2795
    %6565 = vmatpush.msra.mxu0 %v2794
    %6566 = vmatpush.msra.mxu0 %v2793
    %6567 = vmatpush.msra.mxu0 %v2792
    %6568 = vmatpush.msra.mxu0 %v2791
    %6569 = vmatpush.msra.mxu0 %v2790
    %6570 = vmatpush.msra.mxu0 %v2789
    %6571 = vmatpush.msra.mxu0 %v2788
    %6572 = vmatpush.msra.mxu0 %v2787
    %6573 = vmatpush.msra.mxu0 %v2786
    %6574 = vmatpush.msra.mxu0 %v2785
    %6575 = vmatpush.msra.mxu0 %v2784
    %6576 = vmatmul.f32.gmra.mxu0 %v203
    %v6577 = vpop.f32.mrf.mxu0
    %v6578 = vadd.f32 %v6558, %v6577
    %6579 = vdwg.mxu0
    %6580 = vmatpush.msra.mxu0 %v2815
    %6581 = vmatpush.msra.mxu0 %v2814
    %6582 = vmatpush.msra.mxu0 %v2813
    %6583 = vmatpush.msra.mxu0 %v2812
    %6584 = vmatpush.msra.mxu0 %v2811
    %6585 = vmatpush.msra.mxu0 %v2810
    %6586 = vmatpush.msra.mxu0 %v2809
    %6587 = vmatpush.msra.mxu0 %v2808
    %6588 = vmatpush.msra.mxu0 %v2807
    %6589 = vmatpush.msra.mxu0 %v2806
    %6590 = vmatpush.msra.mxu0 %v2805
    %6591 = vmatpush.msra.mxu0 %v2804
    %6592 = vmatpush.msra.mxu0 %v2803
    %6593 = vmatpush.msra.mxu0 %v2802
    %6594 = vmatpush.msra.mxu0 %v2801
    %6595 = vmatpush.msra.mxu0 %v2800
    %6596 = vmatmul.f32.gmra.mxu0 %v204
    %v6597 = vpop.f32.mrf.mxu0
    %v6598 = vadd.f32 %v6578, %v6597
    %6599 = vdwg.mxu0
    %6600 = vmatpush.msra.mxu0 %v2831
    %6601 = vmatpush.msra.mxu0 %v2830
    %6602 = vmatpush.msra.mxu0 %v2829
    %6603 = vmatpush.msra.mxu0 %v2828
    %6604 = vmatpush.msra.mxu0 %v2827
    %6605 = vmatpush.msra.mxu0 %v2826
    %6606 = vmatpush.msra.mxu0 %v2825
    %6607 = vmatpush.msra.mxu0 %v2824
    %6608 = vmatpush.msra.mxu0 %v2823
    %6609 = vmatpush.msra.mxu0 %v2822
    %6610 = vmatpush.msra.mxu0 %v2821
    %6611 = vmatpush.msra.mxu0 %v2820
    %6612 = vmatpush.msra.mxu0 %v2819
    %6613 = vmatpush.msra.mxu0 %v2818
    %6614 = vmatpush.msra.mxu0 %v2817
    %6615 = vmatpush.msra.mxu0 %v2816
    %6616 = vmatmul.f32.gmra.mxu0 %v205
    %v6617 = vpop.f32.mrf.mxu0
    %v6618 = vadd.f32 %v6598, %v6617
    %6619 = vdwg.mxu0
    %6620 = vmatpush.msra.mxu0 %v2847
    %6621 = vmatpush.msra.mxu0 %v2846
    %6622 = vmatpush.msra.mxu0 %v2845
    %6623 = vmatpush.msra.mxu0 %v2844
    %6624 = vmatpush.msra.mxu0 %v2843
    %6625 = vmatpush.msra.mxu0 %v2842
    %6626 = vmatpush.msra.mxu0 %v2841
    %6627 = vmatpush.msra.mxu0 %v2840
    %6628 = vmatpush.msra.mxu0 %v2839
    %6629 = vmatpush.msra.mxu0 %v2838
    %6630 = vmatpush.msra.mxu0 %v2837
    %6631 = vmatpush.msra.mxu0 %v2836
    %6632 = vmatpush.msra.mxu0 %v2835
    %6633 = vmatpush.msra.mxu0 %v2834
    %6634 = vmatpush.msra.mxu0 %v2833
    %6635 = vmatpush.msra.mxu0 %v2832
    %6636 = vmatmul.f32.gmra.mxu0 %v206
    %v6637 = vpop.f32.mrf.mxu0
    %v6638 = vadd.f32 %v6618, %v6637
    %6639 = vdwg.mxu0
    %6640 = vmatpush.msra.mxu0 %v2863
    %6641 = vmatpush.msra.mxu0 %v2862
    %6642 = vmatpush.msra.mxu0 %v2861
    %6643 = vmatpush.msra.mxu0 %v2860
    %6644 = vmatpush.msra.mxu0 %v2859
    %6645 = vmatpush.msra.mxu0 %v2858
    %6646 = vmatpush.msra.mxu0 %v2857
    %6647 = vmatpush.msra.mxu0 %v2856
    %6648 = vmatpush.msra.mxu0 %v2855
    %6649 = vmatpush.msra.mxu0 %v2854
    %6650 = vmatpush.msra.mxu0 %v2853
    %6651 = vmatpush.msra.mxu0 %v2852
    %6652 = vmatpush.msra.mxu0 %v2851
    %6653 = vmatpush.msra.mxu0 %v2850
    %6654 = vmatpush.msra.mxu0 %v2849
    %6655 = vmatpush.msra.mxu0 %v2848
    %6656 = vmatmul.f32.gmra.mxu0 %v207
    %v6657 = vpop.f32.mrf.mxu0
    %v6658 = vadd.f32 %v6638, %v6657
    %6659 = vdwg.mxu0
    %6660 = vmatpush.msra.mxu0 %v2879
    %6661 = vmatpush.msra.mxu0 %v2878
    %6662 = vmatpush.msra.mxu0 %v2877
    %6663 = vmatpush.msra.mxu0 %v2876
    %6664 = vmatpush.msra.mxu0 %v2875
    %6665 = vmatpush.msra.mxu0 %v2874
    %6666 = vmatpush.msra.mxu0 %v2873
    %6667 = vmatpush.msra.mxu0 %v2872
    %6668 = vmatpush.msra.mxu0 %v2871
    %6669 = vmatpush.msra.mxu0 %v2870
    %6670 = vmatpush.msra.mxu0 %v2869
    %6671 = vmatpush.msra.mxu0 %v2868
    %6672 = vmatpush.msra.mxu0 %v2867
    %6673 = vmatpush.msra.mxu0 %v2866
    %6674 = vmatpush.msra.mxu0 %v2865
    %6675 = vmatpush.msra.mxu0 %v2864
    %6676 = vmatmul.f32.gmra.mxu0 %v208
    %v6677 = vpop.f32.mrf.mxu0
    %v6678 = vadd.f32 %v6658, %v6677
    %6679 = vdwg.mxu0
    %6680 = vmatpush.msra.mxu0 %v2895
    %6681 = vmatpush.msra.mxu0 %v2894
    %6682 = vmatpush.msra.mxu0 %v2893
    %6683 = vmatpush.msra.mxu0 %v2892
    %6684 = vmatpush.msra.mxu0 %v2891
    %6685 = vmatpush.msra.mxu0 %v2890
    %6686 = vmatpush.msra.mxu0 %v2889
    %6687 = vmatpush.msra.mxu0 %v2888
    %6688 = vmatpush.msra.mxu0 %v2887
    %6689 = vmatpush.msra.mxu0 %v2886
    %6690 = vmatpush.msra.mxu0 %v2885
    %6691 = vmatpush.msra.mxu0 %v2884
    %6692 = vmatpush.msra.mxu0 %v2883
    %6693 = vmatpush.msra.mxu0 %v2882
    %6694 = vmatpush.msra.mxu0 %v2881
    %6695 = vmatpush.msra.mxu0 %v2880
    %6696 = vmatmul.f32.gmra.mxu0 %v209
    %v6697 = vpop.f32.mrf.mxu0
    %v6698 = vadd.f32 %v6678, %v6697
    %6699 = vdwg.mxu0
    %6700 = vmatpush.msra.mxu0 %v2911
    %6701 = vmatpush.msra.mxu0 %v2910
    %6702 = vmatpush.msra.mxu0 %v2909
    %6703 = vmatpush.msra.mxu0 %v2908
    %6704 = vmatpush.msra.mxu0 %v2907
    %6705 = vmatpush.msra.mxu0 %v2906
    %6706 = vmatpush.msra.mxu0 %v2905
    %6707 = vmatpush.msra.mxu0 %v2904
    %6708 = vmatpush.msra.mxu0 %v2903
    %6709 = vmatpush.msra.mxu0 %v2902
    %6710 = vmatpush.msra.mxu0 %v2901
    %6711 = vmatpush.msra.mxu0 %v2900
    %6712 = vmatpush.msra.mxu0 %v2899
    %6713 = vmatpush.msra.mxu0 %v2898
    %6714 = vmatpush.msra.mxu0 %v2897
    %6715 = vmatpush.msra.mxu0 %v2896
    %6716 = vmatmul.f32.gmra.mxu0 %v210
    %v6717 = vpop.f32.mrf.mxu0
    %v6718 = vadd.f32 %v6698, %v6717
    %6719 = vdwg.mxu0
    %6720 = vmatpush.msra.mxu0 %v2927
    %6721 = vmatpush.msra.mxu0 %v2926
    %6722 = vmatpush.msra.mxu0 %v2925
    %6723 = vmatpush.msra.mxu0 %v2924
    %6724 = vmatpush.msra.mxu0 %v2923
    %6725 = vmatpush.msra.mxu0 %v2922
    %6726 = vmatpush.msra.mxu0 %v2921
    %6727 = vmatpush.msra.mxu0 %v2920
    %6728 = vmatpush.msra.mxu0 %v2919
    %6729 = vmatpush.msra.mxu0 %v2918
    %6730 = vmatpush.msra.mxu0 %v2917
    %6731 = vmatpush.msra.mxu0 %v2916
    %6732 = vmatpush.msra.mxu0 %v2915
    %6733 = vmatpush.msra.mxu0 %v2914
    %6734 = vmatpush.msra.mxu0 %v2913
    %6735 = vmatpush.msra.mxu0 %v2912
    %6736 = vmatmul.f32.gmra.mxu0 %v211
    %v6737 = vpop.f32.mrf.mxu0
    %v6738 = vadd.f32 %v6718, %v6737
    %6739 = vdwg.mxu0
    %6740 = vmatpush.msra.mxu0 %v2943
    %6741 = vmatpush.msra.mxu0 %v2942
    %6742 = vmatpush.msra.mxu0 %v2941
    %6743 = vmatpush.msra.mxu0 %v2940
    %6744 = vmatpush.msra.mxu0 %v2939
    %6745 = vmatpush.msra.mxu0 %v2938
    %6746 = vmatpush.msra.mxu0 %v2937
    %6747 = vmatpush.msra.mxu0 %v2936
    %6748 = vmatpush.msra.mxu0 %v2935
    %6749 = vmatpush.msra.mxu0 %v2934
    %6750 = vmatpush.msra.mxu0 %v2933
    %6751 = vmatpush.msra.mxu0 %v2932
    %6752 = vmatpush.msra.mxu0 %v2931
    %6753 = vmatpush.msra.mxu0 %v2930
    %6754 = vmatpush.msra.mxu0 %v2929
    %6755 = vmatpush.msra.mxu0 %v2928
    %6756 = vmatmul.f32.gmra.mxu0 %v212
    %v6757 = vpop.f32.mrf.mxu0
    %v6758 = vadd.f32 %v6738, %v6757
    %6759 = vdwg.mxu0
    %6760 = vmatpush.msra.mxu0 %v2959
    %6761 = vmatpush.msra.mxu0 %v2958
    %6762 = vmatpush.msra.mxu0 %v2957
    %6763 = vmatpush.msra.mxu0 %v2956
    %6764 = vmatpush.msra.mxu0 %v2955
    %6765 = vmatpush.msra.mxu0 %v2954
    %6766 = vmatpush.msra.mxu0 %v2953
    %6767 = vmatpush.msra.mxu0 %v2952
    %6768 = vmatpush.msra.mxu0 %v2951
    %6769 = vmatpush.msra.mxu0 %v2950
    %6770 = vmatpush.msra.mxu0 %v2949
    %6771 = vmatpush.msra.mxu0 %v2948
    %6772 = vmatpush.msra.mxu0 %v2947
    %6773 = vmatpush.msra.mxu0 %v2946
    %6774 = vmatpush.msra.mxu0 %v2945
    %6775 = vmatpush.msra.mxu0 %v2944
    %6776 = vmatmul.f32.gmra.mxu0 %v213
    %v6777 = vpop.f32.mrf.mxu0
    %v6778 = vadd.f32 %v6758, %v6777
    %6779 = vdwg.mxu0
    %6780 = vmatpush.msra.mxu0 %v2975
    %6781 = vmatpush.msra.mxu0 %v2974
    %6782 = vmatpush.msra.mxu0 %v2973
    %6783 = vmatpush.msra.mxu0 %v2972
    %6784 = vmatpush.msra.mxu0 %v2971
    %6785 = vmatpush.msra.mxu0 %v2970
    %6786 = vmatpush.msra.mxu0 %v2969
    %6787 = vmatpush.msra.mxu0 %v2968
    %6788 = vmatpush.msra.mxu0 %v2967
    %6789 = vmatpush.msra.mxu0 %v2966
    %6790 = vmatpush.msra.mxu0 %v2965
    %6791 = vmatpush.msra.mxu0 %v2964
    %6792 = vmatpush.msra.mxu0 %v2963
    %6793 = vmatpush.msra.mxu0 %v2962
    %6794 = vmatpush.msra.mxu0 %v2961
    %6795 = vmatpush.msra.mxu0 %v2960
    %6796 = vmatmul.f32.gmra.mxu0 %v214
    %v6797 = vpop.f32.mrf.mxu0
    %v6798 = vadd.f32 %v6778, %v6797
    %6799 = vdwg.mxu0
    %6800 = vmatpush.msra.mxu0 %v2991
    %6801 = vmatpush.msra.mxu0 %v2990
    %6802 = vmatpush.msra.mxu0 %v2989
    %6803 = vmatpush.msra.mxu0 %v2988
    %6804 = vmatpush.msra.mxu0 %v2987
    %6805 = vmatpush.msra.mxu0 %v2986
    %6806 = vmatpush.msra.mxu0 %v2985
    %6807 = vmatpush.msra.mxu0 %v2984
    %6808 = vmatpush.msra.mxu0 %v2983
    %6809 = vmatpush.msra.mxu0 %v2982
    %6810 = vmatpush.msra.mxu0 %v2981
    %6811 = vmatpush.msra.mxu0 %v2980
    %6812 = vmatpush.msra.mxu0 %v2979
    %6813 = vmatpush.msra.mxu0 %v2978
    %6814 = vmatpush.msra.mxu0 %v2977
    %6815 = vmatpush.msra.mxu0 %v2976
    %6816 = vmatmul.f32.gmra.mxu0 %v215
    %v6817 = vpop.f32.mrf.mxu0
    %v6818 = vadd.f32 %v6798, %v6817
    %6819 = vdwg.mxu0
    %6820 = vmatpush.msra.mxu0 %v3007
    %6821 = vmatpush.msra.mxu0 %v3006
    %6822 = vmatpush.msra.mxu0 %v3005
    %6823 = vmatpush.msra.mxu0 %v3004
    %6824 = vmatpush.msra.mxu0 %v3003
    %6825 = vmatpush.msra.mxu0 %v3002
    %6826 = vmatpush.msra.mxu0 %v3001
    %6827 = vmatpush.msra.mxu0 %v3000
    %6828 = vmatpush.msra.mxu0 %v2999
    %6829 = vmatpush.msra.mxu0 %v2998
    %6830 = vmatpush.msra.mxu0 %v2997
    %6831 = vmatpush.msra.mxu0 %v2996
    %6832 = vmatpush.msra.mxu0 %v2995
    %6833 = vmatpush.msra.mxu0 %v2994
    %6834 = vmatpush.msra.mxu0 %v2993
    %6835 = vmatpush.msra.mxu0 %v2992
    %6836 = vmatmul.f32.gmra.mxu0 %v216
    %v6837 = vpop.f32.mrf.mxu0
    %v6838 = vadd.f32 %v6818, %v6837
    %6839 = vdwg.mxu0
    %6840 = vmatpush.msra.mxu0 %v3023
    %6841 = vmatpush.msra.mxu0 %v3022
    %6842 = vmatpush.msra.mxu0 %v3021
    %6843 = vmatpush.msra.mxu0 %v3020
    %6844 = vmatpush.msra.mxu0 %v3019
    %6845 = vmatpush.msra.mxu0 %v3018
    %6846 = vmatpush.msra.mxu0 %v3017
    %6847 = vmatpush.msra.mxu0 %v3016
    %6848 = vmatpush.msra.mxu0 %v3015
    %6849 = vmatpush.msra.mxu0 %v3014
    %6850 = vmatpush.msra.mxu0 %v3013
    %6851 = vmatpush.msra.mxu0 %v3012
    %6852 = vmatpush.msra.mxu0 %v3011
    %6853 = vmatpush.msra.mxu0 %v3010
    %6854 = vmatpush.msra.mxu0 %v3009
    %6855 = vmatpush.msra.mxu0 %v3008
    %6856 = vmatmul.f32.gmra.mxu0 %v217
    %v6857 = vpop.f32.mrf.mxu0
    %v6858 = vadd.f32 %v6838, %v6857
    %6859 = vdwg.mxu0
    %6860 = vmatpush.msra.mxu0 %v3039
    %6861 = vmatpush.msra.mxu0 %v3038
    %6862 = vmatpush.msra.mxu0 %v3037
    %6863 = vmatpush.msra.mxu0 %v3036
    %6864 = vmatpush.msra.mxu0 %v3035
    %6865 = vmatpush.msra.mxu0 %v3034
    %6866 = vmatpush.msra.mxu0 %v3033
    %6867 = vmatpush.msra.mxu0 %v3032
    %6868 = vmatpush.msra.mxu0 %v3031
    %6869 = vmatpush.msra.mxu0 %v3030
    %6870 = vmatpush.msra.mxu0 %v3029
    %6871 = vmatpush.msra.mxu0 %v3028
    %6872 = vmatpush.msra.mxu0 %v3027
    %6873 = vmatpush.msra.mxu0 %v3026
    %6874 = vmatpush.msra.mxu0 %v3025
    %6875 = vmatpush.msra.mxu0 %v3024
    %6876 = vmatmul.f32.gmra.mxu0 %v218
    %v6877 = vpop.f32.mrf.mxu0
    %v6878 = vadd.f32 %v6858, %v6877
    %6879 = vdwg.mxu0
    %6880 = vmatpush.msra.mxu0 %v3055
    %6881 = vmatpush.msra.mxu0 %v3054
    %6882 = vmatpush.msra.mxu0 %v3053
    %6883 = vmatpush.msra.mxu0 %v3052
    %6884 = vmatpush.msra.mxu0 %v3051
    %6885 = vmatpush.msra.mxu0 %v3050
    %6886 = vmatpush.msra.mxu0 %v3049
    %6887 = vmatpush.msra.mxu0 %v3048
    %6888 = vmatpush.msra.mxu0 %v3047
    %6889 = vmatpush.msra.mxu0 %v3046
    %6890 = vmatpush.msra.mxu0 %v3045
    %6891 = vmatpush.msra.mxu0 %v3044
    %6892 = vmatpush.msra.mxu0 %v3043
    %6893 = vmatpush.msra.mxu0 %v3042
    %6894 = vmatpush.msra.mxu0 %v3041
    %6895 = vmatpush.msra.mxu0 %v3040
    %6896 = vmatmul.f32.gmra.mxu0 %v219
    %v6897 = vpop.f32.mrf.mxu0
    %v6898 = vadd.f32 %v6878, %v6897
    %6899 = vdwg.mxu0
    %6900 = vmatpush.msra.mxu0 %v3071
    %6901 = vmatpush.msra.mxu0 %v3070
    %6902 = vmatpush.msra.mxu0 %v3069
    %6903 = vmatpush.msra.mxu0 %v3068
    %6904 = vmatpush.msra.mxu0 %v3067
    %6905 = vmatpush.msra.mxu0 %v3066
    %6906 = vmatpush.msra.mxu0 %v3065
    %6907 = vmatpush.msra.mxu0 %v3064
    %6908 = vmatpush.msra.mxu0 %v3063
    %6909 = vmatpush.msra.mxu0 %v3062
    %6910 = vmatpush.msra.mxu0 %v3061
    %6911 = vmatpush.msra.mxu0 %v3060
    %6912 = vmatpush.msra.mxu0 %v3059
    %6913 = vmatpush.msra.mxu0 %v3058
    %6914 = vmatpush.msra.mxu0 %v3057
    %6915 = vmatpush.msra.mxu0 %v3056
    %6916 = vmatmul.f32.gmra.mxu0 %v220
    %v6917 = vpop.f32.mrf.mxu0
    %v6918 = vadd.f32 %v6898, %v6917
    %6919 = vdwg.mxu0
    %6920 = vmatpush.msra.mxu0 %v3087
    %6921 = vmatpush.msra.mxu0 %v3086
    %6922 = vmatpush.msra.mxu0 %v3085
    %6923 = vmatpush.msra.mxu0 %v3084
    %6924 = vmatpush.msra.mxu0 %v3083
    %6925 = vmatpush.msra.mxu0 %v3082
    %6926 = vmatpush.msra.mxu0 %v3081
    %6927 = vmatpush.msra.mxu0 %v3080
    %6928 = vmatpush.msra.mxu0 %v3079
    %6929 = vmatpush.msra.mxu0 %v3078
    %6930 = vmatpush.msra.mxu0 %v3077
    %6931 = vmatpush.msra.mxu0 %v3076
    %6932 = vmatpush.msra.mxu0 %v3075
    %6933 = vmatpush.msra.mxu0 %v3074
    %6934 = vmatpush.msra.mxu0 %v3073
    %6935 = vmatpush.msra.mxu0 %v3072
    %6936 = vmatmul.f32.gmra.mxu0 %v221
    %v6937 = vpop.f32.mrf.mxu0
    %v6938 = vadd.f32 %v6918, %v6937
    %6939 = vdwg.mxu0
    %6940 = vmatpush.msra.mxu0 %v3103
    %6941 = vmatpush.msra.mxu0 %v3102
    %6942 = vmatpush.msra.mxu0 %v3101
    %6943 = vmatpush.msra.mxu0 %v3100
    %6944 = vmatpush.msra.mxu0 %v3099
    %6945 = vmatpush.msra.mxu0 %v3098
    %6946 = vmatpush.msra.mxu0 %v3097
    %6947 = vmatpush.msra.mxu0 %v3096
    %6948 = vmatpush.msra.mxu0 %v3095
    %6949 = vmatpush.msra.mxu0 %v3094
    %6950 = vmatpush.msra.mxu0 %v3093
    %6951 = vmatpush.msra.mxu0 %v3092
    %6952 = vmatpush.msra.mxu0 %v3091
    %6953 = vmatpush.msra.mxu0 %v3090
    %6954 = vmatpush.msra.mxu0 %v3089
    %6955 = vmatpush.msra.mxu0 %v3088
    %6956 = vmatmul.f32.gmra.mxu0 %v222
    %v6957 = vpop.f32.mrf.mxu0
    %v6958 = vadd.f32 %v6938, %v6957
    %6959 = vdwg.mxu0
    %6960 = vmatpush.msra.mxu0 %v3119
    %6961 = vmatpush.msra.mxu0 %v3118
    %6962 = vmatpush.msra.mxu0 %v3117
    %6963 = vmatpush.msra.mxu0 %v3116
    %6964 = vmatpush.msra.mxu0 %v3115
    %6965 = vmatpush.msra.mxu0 %v3114
    %6966 = vmatpush.msra.mxu0 %v3113
    %6967 = vmatpush.msra.mxu0 %v3112
    %6968 = vmatpush.msra.mxu0 %v3111
    %6969 = vmatpush.msra.mxu0 %v3110
    %6970 = vmatpush.msra.mxu0 %v3109
    %6971 = vmatpush.msra.mxu0 %v3108
    %6972 = vmatpush.msra.mxu0 %v3107
    %6973 = vmatpush.msra.mxu0 %v3106
    %6974 = vmatpush.msra.mxu0 %v3105
    %6975 = vmatpush.msra.mxu0 %v3104
    %6976 = vmatmul.f32.gmra.mxu0 %v223
    %v6977 = vpop.f32.mrf.mxu0
    %v6978 = vadd.f32 %v6958, %v6977
    %6979 = vdwg.mxu0
    %6980 = vmatpush.msra.mxu0 %v3135
    %6981 = vmatpush.msra.mxu0 %v3134
    %6982 = vmatpush.msra.mxu0 %v3133
    %6983 = vmatpush.msra.mxu0 %v3132
    %6984 = vmatpush.msra.mxu0 %v3131
    %6985 = vmatpush.msra.mxu0 %v3130
    %6986 = vmatpush.msra.mxu0 %v3129
    %6987 = vmatpush.msra.mxu0 %v3128
    %6988 = vmatpush.msra.mxu0 %v3127
    %6989 = vmatpush.msra.mxu0 %v3126
    %6990 = vmatpush.msra.mxu0 %v3125
    %6991 = vmatpush.msra.mxu0 %v3124
    %6992 = vmatpush.msra.mxu0 %v3123
    %6993 = vmatpush.msra.mxu0 %v3122
    %6994 = vmatpush.msra.mxu0 %v3121
    %6995 = vmatpush.msra.mxu0 %v3120
    %6996 = vmatmul.f32.gmra.mxu0 %v224
    %v6997 = vpop.f32.mrf.mxu0
    %v6998 = vadd.f32 %v6978, %v6997
    %6999 = vdwg.mxu0
    %7000 = vmatpush.msra.mxu0 %v3151
    %7001 = vmatpush.msra.mxu0 %v3150
    %7002 = vmatpush.msra.mxu0 %v3149
    %7003 = vmatpush.msra.mxu0 %v3148
    %7004 = vmatpush.msra.mxu0 %v3147
    %7005 = vmatpush.msra.mxu0 %v3146
    %7006 = vmatpush.msra.mxu0 %v3145
    %7007 = vmatpush.msra.mxu0 %v3144
    %7008 = vmatpush.msra.mxu0 %v3143
    %7009 = vmatpush.msra.mxu0 %v3142
    %7010 = vmatpush.msra.mxu0 %v3141
    %7011 = vmatpush.msra.mxu0 %v3140
    %7012 = vmatpush.msra.mxu0 %v3139
    %7013 = vmatpush.msra.mxu0 %v3138
    %7014 = vmatpush.msra.mxu0 %v3137
    %7015 = vmatpush.msra.mxu0 %v3136
    %7016 = vmatmul.f32.gmra.mxu0 %v225
    %v7017 = vpop.f32.mrf.mxu0
    %v7018 = vadd.f32 %v6998, %v7017
    %7019 = vdwg.mxu0
    %7020 = vmatpush.msra.mxu0 %v3167
    %7021 = vmatpush.msra.mxu0 %v3166
    %7022 = vmatpush.msra.mxu0 %v3165
    %7023 = vmatpush.msra.mxu0 %v3164
    %7024 = vmatpush.msra.mxu0 %v3163
    %7025 = vmatpush.msra.mxu0 %v3162
    %7026 = vmatpush.msra.mxu0 %v3161
    %7027 = vmatpush.msra.mxu0 %v3160
    %7028 = vmatpush.msra.mxu0 %v3159
    %7029 = vmatpush.msra.mxu0 %v3158
    %7030 = vmatpush.msra.mxu0 %v3157
    %7031 = vmatpush.msra.mxu0 %v3156
    %7032 = vmatpush.msra.mxu0 %v3155
    %7033 = vmatpush.msra.mxu0 %v3154
    %7034 = vmatpush.msra.mxu0 %v3153
    %7035 = vmatpush.msra.mxu0 %v3152
    %7036 = vmatmul.f32.gmra.mxu0 %v226
    %v7037 = vpop.f32.mrf.mxu0
    %v7038 = vadd.f32 %v7018, %v7037
    %7039 = vdwg.mxu0
    %7040 = vmatpush.msra.mxu0 %v3183
    %7041 = vmatpush.msra.mxu0 %v3182
    %7042 = vmatpush.msra.mxu0 %v3181
    %7043 = vmatpush.msra.mxu0 %v3180
    %7044 = vmatpush.msra.mxu0 %v3179
    %7045 = vmatpush.msra.mxu0 %v3178
    %7046 = vmatpush.msra.mxu0 %v3177
    %7047 = vmatpush.msra.mxu0 %v3176
    %7048 = vmatpush.msra.mxu0 %v3175
    %7049 = vmatpush.msra.mxu0 %v3174
    %7050 = vmatpush.msra.mxu0 %v3173
    %7051 = vmatpush.msra.mxu0 %v3172
    %7052 = vmatpush.msra.mxu0 %v3171
    %7053 = vmatpush.msra.mxu0 %v3170
    %7054 = vmatpush.msra.mxu0 %v3169
    %7055 = vmatpush.msra.mxu0 %v3168
    %7056 = vmatmul.f32.gmra.mxu0 %v227
    %v7057 = vpop.f32.mrf.mxu0
    %v7058 = vadd.f32 %v7038, %v7057
    %7059 = vdwg.mxu0
    %7060 = vmatpush.msra.mxu0 %v3199
    %7061 = vmatpush.msra.mxu0 %v3198
    %7062 = vmatpush.msra.mxu0 %v3197
    %7063 = vmatpush.msra.mxu0 %v3196
    %7064 = vmatpush.msra.mxu0 %v3195
    %7065 = vmatpush.msra.mxu0 %v3194
    %7066 = vmatpush.msra.mxu0 %v3193
    %7067 = vmatpush.msra.mxu0 %v3192
    %7068 = vmatpush.msra.mxu0 %v3191
    %7069 = vmatpush.msra.mxu0 %v3190
    %7070 = vmatpush.msra.mxu0 %v3189
    %7071 = vmatpush.msra.mxu0 %v3188
    %7072 = vmatpush.msra.mxu0 %v3187
    %7073 = vmatpush.msra.mxu0 %v3186
    %7074 = vmatpush.msra.mxu0 %v3185
    %7075 = vmatpush.msra.mxu0 %v3184
    %7076 = vmatmul.f32.gmra.mxu0 %v228
    %v7077 = vpop.f32.mrf.mxu0
    %v7078 = vadd.f32 %v7058, %v7077
    %7079 = vdwg.mxu0
    %7080 = vmatpush.msra.mxu0 %v3215
    %7081 = vmatpush.msra.mxu0 %v3214
    %7082 = vmatpush.msra.mxu0 %v3213
    %7083 = vmatpush.msra.mxu0 %v3212
    %7084 = vmatpush.msra.mxu0 %v3211
    %7085 = vmatpush.msra.mxu0 %v3210
    %7086 = vmatpush.msra.mxu0 %v3209
    %7087 = vmatpush.msra.mxu0 %v3208
    %7088 = vmatpush.msra.mxu0 %v3207
    %7089 = vmatpush.msra.mxu0 %v3206
    %7090 = vmatpush.msra.mxu0 %v3205
    %7091 = vmatpush.msra.mxu0 %v3204
    %7092 = vmatpush.msra.mxu0 %v3203
    %7093 = vmatpush.msra.mxu0 %v3202
    %7094 = vmatpush.msra.mxu0 %v3201
    %7095 = vmatpush.msra.mxu0 %v3200
    %7096 = vmatmul.f32.gmra.mxu0 %v229
    %v7097 = vpop.f32.mrf.mxu0
    %v7098 = vadd.f32 %v7078, %v7097
    %7099 = vdwg.mxu0
    %7100 = vmatpush.msra.mxu0 %v3231
    %7101 = vmatpush.msra.mxu0 %v3230
    %7102 = vmatpush.msra.mxu0 %v3229
    %7103 = vmatpush.msra.mxu0 %v3228
    %7104 = vmatpush.msra.mxu0 %v3227
    %7105 = vmatpush.msra.mxu0 %v3226
    %7106 = vmatpush.msra.mxu0 %v3225
    %7107 = vmatpush.msra.mxu0 %v3224
    %7108 = vmatpush.msra.mxu0 %v3223
    %7109 = vmatpush.msra.mxu0 %v3222
    %7110 = vmatpush.msra.mxu0 %v3221
    %7111 = vmatpush.msra.mxu0 %v3220
    %7112 = vmatpush.msra.mxu0 %v3219
    %7113 = vmatpush.msra.mxu0 %v3218
    %7114 = vmatpush.msra.mxu0 %v3217
    %7115 = vmatpush.msra.mxu0 %v3216
    %7116 = vmatmul.f32.gmra.mxu0 %v230
    %v7117 = vpop.f32.mrf.mxu0
    %v7118 = vadd.f32 %v7098, %v7117
    %7119 = vdwg.mxu0
    %7120 = vmatpush.msra.mxu0 %v3247
    %7121 = vmatpush.msra.mxu0 %v3246
    %7122 = vmatpush.msra.mxu0 %v3245
    %7123 = vmatpush.msra.mxu0 %v3244
    %7124 = vmatpush.msra.mxu0 %v3243
    %7125 = vmatpush.msra.mxu0 %v3242
    %7126 = vmatpush.msra.mxu0 %v3241
    %7127 = vmatpush.msra.mxu0 %v3240
    %7128 = vmatpush.msra.mxu0 %v3239
    %7129 = vmatpush.msra.mxu0 %v3238
    %7130 = vmatpush.msra.mxu0 %v3237
    %7131 = vmatpush.msra.mxu0 %v3236
    %7132 = vmatpush.msra.mxu0 %v3235
    %7133 = vmatpush.msra.mxu0 %v3234
    %7134 = vmatpush.msra.mxu0 %v3233
    %7135 = vmatpush.msra.mxu0 %v3232
    %7136 = vmatmul.f32.gmra.mxu0 %v231
    %v7137 = vpop.f32.mrf.mxu0
    %v7138 = vadd.f32 %v7118, %v7137
    %7139 = vdwg.mxu0
    %7140 = vmatpush.msra.mxu0 %v3263
    %7141 = vmatpush.msra.mxu0 %v3262
    %7142 = vmatpush.msra.mxu0 %v3261
    %7143 = vmatpush.msra.mxu0 %v3260
    %7144 = vmatpush.msra.mxu0 %v3259
    %7145 = vmatpush.msra.mxu0 %v3258
    %7146 = vmatpush.msra.mxu0 %v3257
    %7147 = vmatpush.msra.mxu0 %v3256
    %7148 = vmatpush.msra.mxu0 %v3255
    %7149 = vmatpush.msra.mxu0 %v3254
    %7150 = vmatpush.msra.mxu0 %v3253
    %7151 = vmatpush.msra.mxu0 %v3252
    %7152 = vmatpush.msra.mxu0 %v3251
    %7153 = vmatpush.msra.mxu0 %v3250
    %7154 = vmatpush.msra.mxu0 %v3249
    %7155 = vmatpush.msra.mxu0 %v3248
    %7156 = vmatmul.f32.gmra.mxu0 %v232
    %v7157 = vpop.f32.mrf.mxu0
    %v7158 = vadd.f32 %v7138, %v7157
    %7159 = vdwg.mxu0
    %7160 = vmatpush.msra.mxu0 %v3279
    %7161 = vmatpush.msra.mxu0 %v3278
    %7162 = vmatpush.msra.mxu0 %v3277
    %7163 = vmatpush.msra.mxu0 %v3276
    %7164 = vmatpush.msra.mxu0 %v3275
    %7165 = vmatpush.msra.mxu0 %v3274
    %7166 = vmatpush.msra.mxu0 %v3273
    %7167 = vmatpush.msra.mxu0 %v3272
    %7168 = vmatpush.msra.mxu0 %v3271
    %7169 = vmatpush.msra.mxu0 %v3270
    %7170 = vmatpush.msra.mxu0 %v3269
    %7171 = vmatpush.msra.mxu0 %v3268
    %7172 = vmatpush.msra.mxu0 %v3267
    %7173 = vmatpush.msra.mxu0 %v3266
    %7174 = vmatpush.msra.mxu0 %v3265
    %7175 = vmatpush.msra.mxu0 %v3264
    %7176 = vmatmul.f32.gmra.mxu0 %v233
    %v7177 = vpop.f32.mrf.mxu0
    %v7178 = vadd.f32 %v7158, %v7177
    %7179 = vdwg.mxu0
    %7180 = vmatpush.msra.mxu0 %v3295
    %7181 = vmatpush.msra.mxu0 %v3294
    %7182 = vmatpush.msra.mxu0 %v3293
    %7183 = vmatpush.msra.mxu0 %v3292
    %7184 = vmatpush.msra.mxu0 %v3291
    %7185 = vmatpush.msra.mxu0 %v3290
    %7186 = vmatpush.msra.mxu0 %v3289
    %7187 = vmatpush.msra.mxu0 %v3288
    %7188 = vmatpush.msra.mxu0 %v3287
    %7189 = vmatpush.msra.mxu0 %v3286
    %7190 = vmatpush.msra.mxu0 %v3285
    %7191 = vmatpush.msra.mxu0 %v3284
    %7192 = vmatpush.msra.mxu0 %v3283
    %7193 = vmatpush.msra.mxu0 %v3282
    %7194 = vmatpush.msra.mxu0 %v3281
    %7195 = vmatpush.msra.mxu0 %v3280
    %7196 = vmatmul.f32.gmra.mxu0 %v234
    %v7197 = vpop.f32.mrf.mxu0
    %v7198 = vadd.f32 %v7178, %v7197
    %7199 = vdwg.mxu0
    %7200 = vmatpush.msra.mxu0 %v3311
    %7201 = vmatpush.msra.mxu0 %v3310
    %7202 = vmatpush.msra.mxu0 %v3309
    %7203 = vmatpush.msra.mxu0 %v3308
    %7204 = vmatpush.msra.mxu0 %v3307
    %7205 = vmatpush.msra.mxu0 %v3306
    %7206 = vmatpush.msra.mxu0 %v3305
    %7207 = vmatpush.msra.mxu0 %v3304
    %7208 = vmatpush.msra.mxu0 %v3303
    %7209 = vmatpush.msra.mxu0 %v3302
    %7210 = vmatpush.msra.mxu0 %v3301
    %7211 = vmatpush.msra.mxu0 %v3300
    %7212 = vmatpush.msra.mxu0 %v3299
    %7213 = vmatpush.msra.mxu0 %v3298
    %7214 = vmatpush.msra.mxu0 %v3297
    %7215 = vmatpush.msra.mxu0 %v3296
    %7216 = vmatmul.f32.gmra.mxu0 %v235
    %v7217 = vpop.f32.mrf.mxu0
    %v7218 = vadd.f32 %v7198, %v7217
    %7219 = vdwg.mxu0
    %7220 = vmatpush.msra.mxu0 %v3327
    %7221 = vmatpush.msra.mxu0 %v3326
    %7222 = vmatpush.msra.mxu0 %v3325
    %7223 = vmatpush.msra.mxu0 %v3324
    %7224 = vmatpush.msra.mxu0 %v3323
    %7225 = vmatpush.msra.mxu0 %v3322
    %7226 = vmatpush.msra.mxu0 %v3321
    %7227 = vmatpush.msra.mxu0 %v3320
    %7228 = vmatpush.msra.mxu0 %v3319
    %7229 = vmatpush.msra.mxu0 %v3318
    %7230 = vmatpush.msra.mxu0 %v3317
    %7231 = vmatpush.msra.mxu0 %v3316
    %7232 = vmatpush.msra.mxu0 %v3315
    %7233 = vmatpush.msra.mxu0 %v3314
    %7234 = vmatpush.msra.mxu0 %v3313
    %7235 = vmatpush.msra.mxu0 %v3312
    %7236 = vmatmul.f32.gmra.mxu0 %v236
    %v7237 = vpop.f32.mrf.mxu0
    %v7238 = vadd.f32 %v7218, %v7237
    %7239 = vdwg.mxu0
    %7240 = vmatpush.msra.mxu0 %v3343
    %7241 = vmatpush.msra.mxu0 %v3342
    %7242 = vmatpush.msra.mxu0 %v3341
    %7243 = vmatpush.msra.mxu0 %v3340
    %7244 = vmatpush.msra.mxu0 %v3339
    %7245 = vmatpush.msra.mxu0 %v3338
    %7246 = vmatpush.msra.mxu0 %v3337
    %7247 = vmatpush.msra.mxu0 %v3336
    %7248 = vmatpush.msra.mxu0 %v3335
    %7249 = vmatpush.msra.mxu0 %v3334
    %7250 = vmatpush.msra.mxu0 %v3333
    %7251 = vmatpush.msra.mxu0 %v3332
    %7252 = vmatpush.msra.mxu0 %v3331
    %7253 = vmatpush.msra.mxu0 %v3330
    %7254 = vmatpush.msra.mxu0 %v3329
    %7255 = vmatpush.msra.mxu0 %v3328
    %7256 = vmatmul.f32.gmra.mxu0 %v237
    %v7257 = vpop.f32.mrf.mxu0
    %v7258 = vadd.f32 %v7238, %v7257
    %7259 = vdwg.mxu0
    %7260 = vmatpush.msra.mxu0 %v3359
    %7261 = vmatpush.msra.mxu0 %v3358
    %7262 = vmatpush.msra.mxu0 %v3357
    %7263 = vmatpush.msra.mxu0 %v3356
    %7264 = vmatpush.msra.mxu0 %v3355
    %7265 = vmatpush.msra.mxu0 %v3354
    %7266 = vmatpush.msra.mxu0 %v3353
    %7267 = vmatpush.msra.mxu0 %v3352
    %7268 = vmatpush.msra.mxu0 %v3351
    %7269 = vmatpush.msra.mxu0 %v3350
    %7270 = vmatpush.msra.mxu0 %v3349
    %7271 = vmatpush.msra.mxu0 %v3348
    %7272 = vmatpush.msra.mxu0 %v3347
    %7273 = vmatpush.msra.mxu0 %v3346
    %7274 = vmatpush.msra.mxu0 %v3345
    %7275 = vmatpush.msra.mxu0 %v3344
    %7276 = vmatmul.f32.gmra.mxu0 %v238
    %v7277 = vpop.f32.mrf.mxu0
    %v7278 = vadd.f32 %v7258, %v7277
    %7279 = vdwg.mxu0
    %7280 = vmatpush.msra.mxu0 %v3375
    %7281 = vmatpush.msra.mxu0 %v3374
    %7282 = vmatpush.msra.mxu0 %v3373
    %7283 = vmatpush.msra.mxu0 %v3372
    %7284 = vmatpush.msra.mxu0 %v3371
    %7285 = vmatpush.msra.mxu0 %v3370
    %7286 = vmatpush.msra.mxu0 %v3369
    %7287 = vmatpush.msra.mxu0 %v3368
    %7288 = vmatpush.msra.mxu0 %v3367
    %7289 = vmatpush.msra.mxu0 %v3366
    %7290 = vmatpush.msra.mxu0 %v3365
    %7291 = vmatpush.msra.mxu0 %v3364
    %7292 = vmatpush.msra.mxu0 %v3363
    %7293 = vmatpush.msra.mxu0 %v3362
    %7294 = vmatpush.msra.mxu0 %v3361
    %7295 = vmatpush.msra.mxu0 %v3360
    %7296 = vmatmul.f32.gmra.mxu0 %v239
    %v7297 = vpop.f32.mrf.mxu0
    %v7298 = vadd.f32 %v7278, %v7297
    %7299 = vdwg.mxu0
    %7300 = vst [vmem:[%s3] sm:$0xff] %v7298
    // Predicated region
    $region22: #{linear_layer_forward.1} parent=1 // pred_check
      _
    $region23: #{linear_layer_forward.1} parent=1 // pred_check_branch
      %7302 = sbr.rel (0) target = $region25
    $region24: #{linear_layer_forward.1} parent=1 // pred_region
      _
    $region25: #{linear_layer_forward.1} parent=1 // pred_fallthru
      _
    // Predicated region
    $region26: #{linear_layer_forward.1} parent=1 // pred_check
      _
    $region27: #{linear_layer_forward.1} parent=1 // pred_check_branch
      %7304 = sbr.rel (0) target = $region29
    $region28: #{linear_layer_forward.1} parent=1 // pred_region
      _
    $region29: #{linear_layer_forward.1} parent=1 // pred_fallthru
      _
    %7305 = vsyncpa [#allocation3], 1
    %7306 = vsyncpa [#allocation5], 1

</llo_original>
